<compile_context>
chip_gen: v6e
topology: v6e:2x2x1
jax: 0.10.0
libtpu: 0.0.40
codegen_flags: <defaults>
</compile_context>

<pallas_src>
import functools
import math

import jax
import jax.numpy as jnp
import numpy as np
from jax.experimental import pallas as pl
from jax.experimental.pallas import tpu as pltpu

K = 4  # k_size of the module (kernel_size = (4, 4))
C_SCALE = math.tanh(0.7)   # 'hand' importance scale for c (even output channels)
D_SCALE = math.tanh(0.3)   # 'hand' importance scale for d (odd output channels)


# ---------------------------------------------------------------------------
# Fused Pallas kernel: split + predict + update + scale + interleave
# ---------------------------------------------------------------------------
def _lifting_kernel(x_ref, wp_ref, wu_ref, out_ref, pad_ref, *,
                    C, H, W, c_scale, d_scale):
    # x_ref   : (C, 2, H, W)  channel-pair view of one batch element
    #           [:, 0] = even channels (x[:, ::2]), [:, 1] = odd channels.
    # wp_ref  : (C*C*K*K,) f32 in SMEM, row-major OIHW flatten of predictor conv.
    # wu_ref  : (C*C*K*K,) f32 in SMEM, same for updater conv.
    # out_ref : (C, 2, H, W)  [:, 0] = c*tanh(0.7), [:, 1] = d*tanh(0.3).
    # pad_ref : (C, H+3, W+3) f32 VMEM scratch, reused for both reflection pads.

    def reflect_pad_channel(ch, v):
        # nn.ReflectionPad2d((2, 1, 2, 1)): left=2, right=1, top=2, bottom=1.
        pad_ref[ch, 2:2 + H, 2:2 + W] = v
        # top rows 0,1 reflect interior rows 2,1 ; bottom row reflects H-2
        pad_ref[ch, 0:1, 2:2 + W] = v[2:3, :]
        pad_ref[ch, 1:2, 2:2 + W] = v[1:2, :]
        pad_ref[ch, 2 + H:3 + H, 2:2 + W] = v[H - 2:H - 1, :]
        # left cols 0,1 and right col (2+W) reflect already-row-padded columns
        pad_ref[ch, :, 0:1] = pad_ref[ch, :, 4:5]
        pad_ref[ch, :, 1:2] = pad_ref[ch, :, 3:4]
        pad_ref[ch, :, 2 + W:3 + W] = pad_ref[ch, :, W:W + 1]

    def conv_tanh(w_ref):
        # tanh(Conv2d(C, C, 4, bias=False)) on current pad_ref contents.
        # C is tiny: per-tap scalar FMAs on the VPU (review: skip the MXU).
        acc = [jnp.zeros((H, W), jnp.float32) for _ in range(C)]
        for ic in range(C):
            for kh in range(K):
                for kw in range(K):
                    slab = pad_ref[ic, kh:kh + H, kw:kw + W]      # (H, W)
                    base = (ic * K + kh) * K + kw
                    for oc in range(C):
                        wval = w_ref[oc * C * K * K + base]       # SMEM scalar
                        acc[oc] = acc[oc] + wval * slab
        return [jnp.tanh(a) for a in acc]

    # ---- predict: d = x_odd - tanh(P(reflect_pad(x_even))) ---------------
    for ch in range(C):
        reflect_pad_channel(ch, x_ref[ch, 0].astype(jnp.float32))
    p = conv_tanh(wp_ref)
    d = [x_ref[ch, 1].astype(jnp.float32) - p[ch] for ch in range(C)]

    # ---- update: c = x_even + tanh(U(reflect_pad(d))) --------------------
    # d stays in vregs / VMEM; pad_ref is fully overwritten and reused.
    for ch in range(C):
        reflect_pad_channel(ch, d[ch])
    u = conv_tanh(wu_ref)

    # ---- epilogue: 'hand' importance scaling + channel interleave --------
    for ch in range(C):
        c_val = x_ref[ch, 0].astype(jnp.float32) + u[ch]
        out_ref[ch, 0] = (c_val * c_scale).astype(out_ref.dtype)
        out_ref[ch, 1] = (d[ch] * d_scale).astype(out_ref.dtype)


def lifting_scheme_by_channel_forward(x, wP, wU):
    """x: (B, 2*in_planes, H, W) float32.  wP, wU: (C, C, K, K) OIHW."""
    B, C2, H, W = x.shape
    C = C2 // 2

    # Splitting_by_channel as a free contiguous reshape:
    #   (B, 2C, H, W) -> (B*C, 2, H, W);  [:, 0] = x[:, ::2], [:, 1] = x[:, 1::2]
    xr = x.reshape(B * C, 2, H, W)
    wp_flat = wP.reshape(-1)   # index ((oc*C + ic)*K + kh)*K + kw
    wu_flat = wU.reshape(-1)

    kern = functools.partial(_lifting_kernel, C=C, H=H, W=W,
                             c_scale=C_SCALE, d_scale=D_SCALE)
    out = pl.pallas_call(
        kern,
        out_shape=jax.ShapeDtypeStruct((B * C, 2, H, W), x.dtype),
        grid=(B,),
        in_specs=[
            pl.BlockSpec((C, 2, H, W), lambda b: (b, 0, 0, 0)),
            pl.BlockSpec(memory_space=pltpu.MemorySpace.SMEM),   # wP (scalars)
            pl.BlockSpec(memory_space=pltpu.MemorySpace.SMEM),   # wU (scalars)
        ],
        out_specs=pl.BlockSpec((C, 2, H, W), lambda b: (b, 0, 0, 0)),
        scratch_shapes=[pltpu.VMEM((C, H + 3, W + 3), jnp.float32)],
        compiler_params=pltpu.CompilerParams(dimension_semantics=("parallel",)),
    )(xr, wp_flat, wu_flat)

    # Interleaved (c0,d0,c1,d1,...) layout is already produced by the kernel;
    # this reshape is metadata-only (contiguous), no HBM pass.
    return out.reshape(B, C2, H, W)


# ---------------------------------------------------------------------------
# Pure-JAX reference (lax.conv) for validation
# ---------------------------------------------------------------------------
def _reference(x, wP, wU):
    B, C2, H, W = x.shape
    x_even = x[:, ::2]
    x_odd = x[:, 1::2]

    def conv(inp, w):
        ip = jnp.pad(inp, ((0, 0), (0, 0), (2, 1), (2, 1)), mode="reflect")
        return jax.lax.conv_general_dilated(
            ip, w, window_strides=(1, 1), padding="VALID",
            dimension_numbers=("NCHW", "OIHW", "NCHW"))

    d = x_odd - jnp.tanh(conv(x_even, wP))
    c = x_even + jnp.tanh(conv(d, wU))
    c_s = c * C_SCALE
    d_s = d * D_SCALE
    return jnp.stack((c_s, d_s), axis=2).reshape(B, C2, H, W)


if __name__ == "__main__":
    in_planes = 4                   # module constructor argument (= C of each half)
    B, H, W = 2, 16, 16
    C2 = 2 * in_planes              # input channels before the channel split

    key = jax.random.PRNGKey(0)
    kx, kp, ku = jax.random.split(key, 3)

    x = jax.random.normal(kx, (B, C2, H, W), dtype=jnp.float32)
    # Deterministic synthetic conv weights (Conv2d(in_planes, in_planes, 4, 4)),
    # scaled ~kaiming-style so tanh stays in a sensible range.
    scale = (2.0 / (in_planes * K * K)) ** 0.5
    wP = scale * jax.random.normal(kp, (in_planes, in_planes, K, K), dtype=jnp.float32)
    wU = scale * jax.random.normal(ku, (in_planes, in_planes, K, K), dtype=jnp.float32)

    # Sanity-check the Splitting_by_channel semantics of the pair-reshape.
    x_np = np.asarray(x)
    x_pairs = x_np.reshape(B, in_planes, 2, H, W)
    np.testing.assert_array_equal(x_pairs[:, :, 0], x_np[:, ::2])
    np.testing.assert_array_equal(x_pairs[:, :, 1], x_np[:, 1::2])

    out = jax.block_until_ready(lifting_scheme_by_channel_forward(x, wP, wU))
    ref = jax.block_until_ready(_reference(x, wP, wU))

    assert out.shape == (B, C2, H, W), out.shape
    np.testing.assert_allclose(np.asarray(out), np.asarray(ref), atol=2e-2, rtol=2e-2)

    print("KERNEL_OK")
</pallas_src>

<mosaic_0001>
module attributes {stable_mosaic.version = 11 : i64} {
  func.func @_lifting_kernel(%arg0: i32, %arg1: memref<4x2x16x16xf32, #tpu.memory_space<vmem>>, %arg2: memref<256xf32, #tpu.memory_space<smem>>, %arg3: memref<256xf32, #tpu.memory_space<smem>>, %arg4: memref<4x2x16x16xf32, #tpu.memory_space<vmem>>, %arg5: memref<4x19x19xf32, #tpu.memory_space<vmem>>) attributes {dimension_semantics = [#tpu.dimension_semantics<parallel>], iteration_bounds = array<i64: 2>, scalar_prefetch = 0 : i64, scratch_operands = 1 : i64, tpu.core_type = #tpu.core_type<tc>, window_params = [{transform_indices = @transform_0, window_bounds = array<i64: 4, 2, 16, 16>}, {transform_indices = @transform_1, window_bounds = array<i64: 256>}, {transform_indices = @transform_2, window_bounds = array<i64: 256>}, {transform_indices = @transform_3, window_bounds = array<i64: 4, 2, 16, 16>}]} {
    %c0 = arith.constant 0 : index
    %c0_0 = arith.constant 0 : index
    %c0_1 = arith.constant 0 : index
    %c0_2 = arith.constant 0 : index
    %0 = vector.load %arg1[%c0, %c0_0, %c0_1, %c0_2] : memref<4x2x16x16xf32, #tpu.memory_space<vmem>>, vector<1x1x16x16xf32>
    %1 = vector.shape_cast %0 : vector<1x1x16x16xf32> to vector<16x16xf32>
    %c0_3 = arith.constant 0 : index
    %c2 = arith.constant 2 : index
    %c2_4 = arith.constant 2 : index
    %2 = vector.load %arg5[%c0_3, %c2, %c2_4] : memref<4x19x19xf32, #tpu.memory_space<vmem>>, vector<1x16x16xf32>
    %3 = vector.shape_cast %2 : vector<1x16x16xf32> to vector<16x16xf32>
    %4 = vector.shape_cast %1 : vector<16x16xf32> to vector<1x16x16xf32>
    tpu.vector_store %arg5[%c0_3, %c2, %c2_4], %4 {strides = array<i32>} : memref<4x19x19xf32, #tpu.memory_space<vmem>>, vector<1x16x16xf32>,
    %5 = vector.extract_strided_slice %1 {offsets = [2, 0], sizes = [1, 16], strides = [1, 1]} : vector<16x16xf32> to vector<1x16xf32>
    %c0_5 = arith.constant 0 : index
    %c0_6 = arith.constant 0 : index
    %c2_7 = arith.constant 2 : index
    %6 = vector.load %arg5[%c0_5, %c0_6, %c2_7] : memref<4x19x19xf32, #tpu.memory_space<vmem>>, vector<1x1x16xf32>
    %7 = vector.shape_cast %6 : vector<1x1x16xf32> to vector<1x16xf32>
    %8 = vector.shape_cast %5 : vector<1x16xf32> to vector<1x1x16xf32>
    tpu.vector_store %arg5[%c0_5, %c0_6, %c2_7], %8 {strides = array<i32>} : memref<4x19x19xf32, #tpu.memory_space<vmem>>, vector<1x1x16xf32>,
    %9 = vector.extract_strided_slice %1 {offsets = [1, 0], sizes = [1, 16], strides = [1, 1]} : vector<16x16xf32> to vector<1x16xf32>
    %c0_8 = arith.constant 0 : index
    %c1 = arith.constant 1 : index
    %c2_9 = arith.constant 2 : index
    %10 = vector.load %arg5[%c0_8, %c1, %c2_9] : memref<4x19x19xf32, #tpu.memory_space<vmem>>, vector<1x1x16xf32>
    %11 = vector.shape_cast %10 : vector<1x1x16xf32> to vector<1x16xf32>
    %12 = vector.shape_cast %9 : vector<1x16xf32> to vector<1x1x16xf32>
    tpu.vector_store %arg5[%c0_8, %c1, %c2_9], %12 {strides = array<i32>} : memref<4x19x19xf32, #tpu.memory_space<vmem>>, vector<1x1x16xf32>,
    %13 = vector.extract_strided_slice %1 {offsets = [14, 0], sizes = [1, 16], strides = [1, 1]} : vector<16x16xf32> to vector<1x16xf32>
    %c0_10 = arith.constant 0 : index
    %c18 = arith.constant 18 : index
    %c2_11 = arith.constant 2 : index
    %14 = vector.load %arg5[%c0_10, %c18, %c2_11] : memref<4x19x19xf32, #tpu.memory_space<vmem>>, vector<1x1x16xf32>
    %15 = vector.shape_cast %14 : vector<1x1x16xf32> to vector<1x16xf32>
    %16 = vector.shape_cast %13 : vector<1x16xf32> to vector<1x1x16xf32>
    tpu.vector_store %arg5[%c0_10, %c18, %c2_11], %16 {strides = array<i32>} : memref<4x19x19xf32, #tpu.memory_space<vmem>>, vector<1x1x16xf32>,
    %c0_12 = arith.constant 0 : index
    %c0_13 = arith.constant 0 : index
    %c4 = arith.constant 4 : index
    %17 = vector.load %arg5[%c0_12, %c0_13, %c4] : memref<4x19x19xf32, #tpu.memory_space<vmem>>, vector<1x19x1xf32>
    %18 = vector.shape_cast %17 : vector<1x19x1xf32> to vector<19x1xf32>
    %c0_14 = arith.constant 0 : index
    %c0_15 = arith.constant 0 : index
    %c0_16 = arith.constant 0 : index
    %19 = vector.load %arg5[%c0_14, %c0_15, %c0_16] : memref<4x19x19xf32, #tpu.memory_space<vmem>>, vector<1x19x1xf32>
    %20 = vector.shape_cast %19 : vector<1x19x1xf32> to vector<19x1xf32>
    %21 = vector.shape_cast %18 : vector<19x1xf32> to vector<1x19x1xf32>
    tpu.vector_store %arg5[%c0_14, %c0_15, %c0_16], %21 {strides = array<i32>} : memref<4x19x19xf32, #tpu.memory_space<vmem>>, vector<1x19x1xf32>,
    %c0_17 = arith.constant 0 : index
    %c0_18 = arith.constant 0 : index
    %c3 = arith.constant 3 : index
    %22 = vector.load %arg5[%c0_17, %c0_18, %c3] : memref<4x19x19xf32, #tpu.memory_space<vmem>>, vector<1x19x1xf32>
    %23 = vector.shape_cast %22 : vector<1x19x1xf32> to vector<19x1xf32>
    %c0_19 = arith.constant 0 : index
    %c0_20 = arith.constant 0 : index
    %c1_21 = arith.constant 1 : index
    %24 = vector.load %arg5[%c0_19, %c0_20, %c1_21] : memref<4x19x19xf32, #tpu.memory_space<vmem>>, vector<1x19x1xf32>
    %25 = vector.shape_cast %24 : vector<1x19x1xf32> to vector<19x1xf32>
    %26 = vector.shape_cast %23 : vector<19x1xf32> to vector<1x19x1xf32>
    tpu.vector_store %arg5[%c0_19, %c0_20, %c1_21], %26 {strides = array<i32>} : memref<4x19x19xf32, #tpu.memory_space<vmem>>, vector<1x19x1xf32>,
    %c0_22 = arith.constant 0 : index
    %c0_23 = arith.constant 0 : index
    %c16 = arith.constant 16 : index
    %27 = vector.load %arg5[%c0_22, %c0_23, %c16] : memref<4x19x19xf32, #tpu.memory_space<vmem>>, vector<1x19x1xf32>
    %28 = vector.shape_cast %27 : vector<1x19x1xf32> to vector<19x1xf32>
    %c0_24 = arith.constant 0 : index
    %c0_25 = arith.constant 0 : index
    %c18_26 = arith.constant 18 : index
    %29 = vector.load %arg5[%c0_24, %c0_25, %c18_26] : memref<4x19x19xf32, #tpu.memory_space<vmem>>, vector<1x19x1xf32>
    %30 = vector.shape_cast %29 : vector<1x19x1xf32> to vector<19x1xf32>
    %31 = vector.shape_cast %28 : vector<19x1xf32> to vector<1x19x1xf32>
    tpu.vector_store %arg5[%c0_24, %c0_25, %c18_26], %31 {strides = array<i32>} : memref<4x19x19xf32, #tpu.memory_space<vmem>>, vector<1x19x1xf32>,
    %c1_27 = arith.constant 1 : index
    %c0_28 = arith.constant 0 : index
    %c0_29 = arith.constant 0 : index
    %c0_30 = arith.constant 0 : index
    %32 = vector.load %arg1[%c1_27, %c0_28, %c0_29, %c0_30] : memref<4x2x16x16xf32, #tpu.memory_space<vmem>>, vector<1x1x16x16xf32>
    %33 = vector.shape_cast %32 : vector<1x1x16x16xf32> to vector<16x16xf32>
    %c1_31 = arith.constant 1 : index
    %c2_32 = arith.constant 2 : index
    %c2_33 = arith.constant 2 : index
    %34 = vector.load %arg5[%c1_31, %c2_32, %c2_33] : memref<4x19x19xf32, #tpu.memory_space<vmem>>, vector<1x16x16xf32>
    %35 = vector.shape_cast %34 : vector<1x16x16xf32> to vector<16x16xf32>
    %36 = vector.shape_cast %33 : vector<16x16xf32> to vector<1x16x16xf32>
    tpu.vector_store %arg5[%c1_31, %c2_32, %c2_33], %36 {strides = array<i32>} : memref<4x19x19xf32, #tpu.memory_space<vmem>>, vector<1x16x16xf32>,
    %37 = vector.extract_strided_slice %33 {offsets = [2, 0], sizes = [1, 16], strides = [1, 1]} : vector<16x16xf32> to vector<1x16xf32>
    %c1_34 = arith.constant 1 : index
    %c0_35 = arith.constant 0 : index
    %c2_36 = arith.constant 2 : index
    %38 = vector.load %arg5[%c1_34, %c0_35, %c2_36] : memref<4x19x19xf32, #tpu.memory_space<vmem>>, vector<1x1x16xf32>
    %39 = vector.shape_cast %38 : vector<1x1x16xf32> to vector<1x16xf32>
    %40 = vector.shape_cast %37 : vector<1x16xf32> to vector<1x1x16xf32>
    tpu.vector_store %arg5[%c1_34, %c0_35, %c2_36], %40 {strides = array<i32>} : memref<4x19x19xf32, #tpu.memory_space<vmem>>, vector<1x1x16xf32>,
    %41 = vector.extract_strided_slice %33 {offsets = [1, 0], sizes = [1, 16], strides = [1, 1]} : vector<16x16xf32> to vector<1x16xf32>
    %c1_37 = arith.constant 1 : index
    %c1_38 = arith.constant 1 : index
    %c2_39 = arith.constant 2 : index
    %42 = vector.load %arg5[%c1_37, %c1_38, %c2_39] : memref<4x19x19xf32, #tpu.memory_space<vmem>>, vector<1x1x16xf32>
    %43 = vector.shape_cast %42 : vector<1x1x16xf32> to vector<1x16xf32>
    %44 = vector.shape_cast %41 : vector<1x16xf32> to vector<1x1x16xf32>
    tpu.vector_store %arg5[%c1_37, %c1_38, %c2_39], %44 {strides = array<i32>} : memref<4x19x19xf32, #tpu.memory_space<vmem>>, vector<1x1x16xf32>,
    %45 = vector.extract_strided_slice %33 {offsets = [14, 0], sizes = [1, 16], strides = [1, 1]} : vector<16x16xf32> to vector<1x16xf32>
    %c1_40 = arith.constant 1 : index
    %c18_41 = arith.constant 18 : index
    %c2_42 = arith.constant 2 : index
    %46 = vector.load %arg5[%c1_40, %c18_41, %c2_42] : memref<4x19x19xf32, #tpu.memory_space<vmem>>, vector<1x1x16xf32>
    %47 = vector.shape_cast %46 : vector<1x1x16xf32> to vector<1x16xf32>
    %48 = vector.shape_cast %45 : vector<1x16xf32> to vector<1x1x16xf32>
    tpu.vector_store %arg5[%c1_40, %c18_41, %c2_42], %48 {strides = array<i32>} : memref<4x19x19xf32, #tpu.memory_space<vmem>>, vector<1x1x16xf32>,
    %c1_43 = arith.constant 1 : index
    %c0_44 = arith.constant 0 : index
    %c4_45 = arith.constant 4 : index
    %49 = vector.load %arg5[%c1_43, %c0_44, %c4_45] : memref<4x19x19xf32, #tpu.memory_space<vmem>>, vector<1x19x1xf32>
    %50 = vector.shape_cast %49 : vector<1x19x1xf32> to vector<19x1xf32>
    %c1_46 = arith.constant 1 : index
    %c0_47 = arith.constant 0 : index
    %c0_48 = arith.constant 0 : index
    %51 = vector.load %arg5[%c1_46, %c0_47, %c0_48] : memref<4x19x19xf32, #tpu.memory_space<vmem>>, vector<1x19x1xf32>
    %52 = vector.shape_cast %51 : vector<1x19x1xf32> to vector<19x1xf32>
    %53 = vector.shape_cast %50 : vector<19x1xf32> to vector<1x19x1xf32>
    tpu.vector_store %arg5[%c1_46, %c0_47, %c0_48], %53 {strides = array<i32>} : memref<4x19x19xf32, #tpu.memory_space<vmem>>, vector<1x19x1xf32>,
    %c1_49 = arith.constant 1 : index
    %c0_50 = arith.constant 0 : index
    %c3_51 = arith.constant 3 : index
    %54 = vector.load %arg5[%c1_49, %c0_50, %c3_51] : memref<4x19x19xf32, #tpu.memory_space<vmem>>, vector<1x19x1xf32>
    %55 = vector.shape_cast %54 : vector<1x19x1xf32> to vector<19x1xf32>
    %c1_52 = arith.constant 1 : index
    %c0_53 = arith.constant 0 : index
    %c1_54 = arith.constant 1 : index
    %56 = vector.load %arg5[%c1_52, %c0_53, %c1_54] : memref<4x19x19xf32, #tpu.memory_space<vmem>>, vector<1x19x1xf32>
    %57 = vector.shape_cast %56 : vector<1x19x1xf32> to vector<19x1xf32>
    %58 = vector.shape_cast %55 : vector<19x1xf32> to vector<1x19x1xf32>
    tpu.vector_store %arg5[%c1_52, %c0_53, %c1_54], %58 {strides = array<i32>} : memref<4x19x19xf32, #tpu.memory_space<vmem>>, vector<1x19x1xf32>,
    %c1_55 = arith.constant 1 : index
    %c0_56 = arith.constant 0 : index
    %c16_57 = arith.constant 16 : index
    %59 = vector.load %arg5[%c1_55, %c0_56, %c16_57] : memref<4x19x19xf32, #tpu.memory_space<vmem>>, vector<1x19x1xf32>
    %60 = vector.shape_cast %59 : vector<1x19x1xf32> to vector<19x1xf32>
    %c1_58 = arith.constant 1 : index
    %c0_59 = arith.constant 0 : index
    %c18_60 = arith.constant 18 : index
    %61 = vector.load %arg5[%c1_58, %c0_59, %c18_60] : memref<4x19x19xf32, #tpu.memory_space<vmem>>, vector<1x19x1xf32>
    %62 = vector.shape_cast %61 : vector<1x19x1xf32> to vector<19x1xf32>
    %63 = vector.shape_cast %60 : vector<19x1xf32> to vector<1x19x1xf32>
    tpu.vector_store %arg5[%c1_58, %c0_59, %c18_60], %63 {strides = array<i32>} : memref<4x19x19xf32, #tpu.memory_space<vmem>>, vector<1x19x1xf32>,
    %c2_61 = arith.constant 2 : index
    %c0_62 = arith.constant 0 : index
    %c0_63 = arith.constant 0 : index
    %c0_64 = arith.constant 0 : index
    %64 = vector.load %arg1[%c2_61, %c0_62, %c0_63, %c0_64] : memref<4x2x16x16xf32, #tpu.memory_space<vmem>>, vector<1x1x16x16xf32>
    %65 = vector.shape_cast %64 : vector<1x1x16x16xf32> to vector<16x16xf32>
    %c2_65 = arith.constant 2 : index
    %c2_66 = arith.constant 2 : index
    %c2_67 = arith.constant 2 : index
    %66 = vector.load %arg5[%c2_65, %c2_66, %c2_67] : memref<4x19x19xf32, #tpu.memory_space<vmem>>, vector<1x16x16xf32>
    %67 = vector.shape_cast %66 : vector<1x16x16xf32> to vector<16x16xf32>
    %68 = vector.shape_cast %65 : vector<16x16xf32> to vector<1x16x16xf32>
    tpu.vector_store %arg5[%c2_65, %c2_66, %c2_67], %68 {strides = array<i32>} : memref<4x19x19xf32, #tpu.memory_space<vmem>>, vector<1x16x16xf32>,
    %69 = vector.extract_strided_slice %65 {offsets = [2, 0], sizes = [1, 16], strides = [1, 1]} : vector<16x16xf32> to vector<1x16xf32>
    %c2_68 = arith.constant 2 : index
    %c0_69 = arith.constant 0 : index
    %c2_70 = arith.constant 2 : index
    %70 = vector.load %arg5[%c2_68, %c0_69, %c2_70] : memref<4x19x19xf32, #tpu.memory_space<vmem>>, vector<1x1x16xf32>
    %71 = vector.shape_cast %70 : vector<1x1x16xf32> to vector<1x16xf32>
    %72 = vector.shape_cast %69 : vector<1x16xf32> to vector<1x1x16xf32>
    tpu.vector_store %arg5[%c2_68, %c0_69, %c2_70], %72 {strides = array<i32>} : memref<4x19x19xf32, #tpu.memory_space<vmem>>, vector<1x1x16xf32>,
    %73 = vector.extract_strided_slice %65 {offsets = [1, 0], sizes = [1, 16], strides = [1, 1]} : vector<16x16xf32> to vector<1x16xf32>
    %c2_71 = arith.constant 2 : index
    %c1_72 = arith.constant 1 : index
    %c2_73 = arith.constant 2 : index
    %74 = vector.load %arg5[%c2_71, %c1_72, %c2_73] : memref<4x19x19xf32, #tpu.memory_space<vmem>>, vector<1x1x16xf32>
    %75 = vector.shape_cast %74 : vector<1x1x16xf32> to vector<1x16xf32>
    %76 = vector.shape_cast %73 : vector<1x16xf32> to vector<1x1x16xf32>
    tpu.vector_store %arg5[%c2_71, %c1_72, %c2_73], %76 {strides = array<i32>} : memref<4x19x19xf32, #tpu.memory_space<vmem>>, vector<1x1x16xf32>,
    %77 = vector.extract_strided_slice %65 {offsets = [14, 0], sizes = [1, 16], strides = [1, 1]} : vector<16x16xf32> to vector<1x16xf32>
    %c2_74 = arith.constant 2 : index
    %c18_75 = arith.constant 18 : index
    %c2_76 = arith.constant 2 : index
    %78 = vector.load %arg5[%c2_74, %c18_75, %c2_76] : memref<4x19x19xf32, #tpu.memory_space<vmem>>, vector<1x1x16xf32>
    %79 = vector.shape_cast %78 : vector<1x1x16xf32> to vector<1x16xf32>
    %80 = vector.shape_cast %77 : vector<1x16xf32> to vector<1x1x16xf32>
    tpu.vector_store %arg5[%c2_74, %c18_75, %c2_76], %80 {strides = array<i32>} : memref<4x19x19xf32, #tpu.memory_space<vmem>>, vector<1x1x16xf32>,
    %c2_77 = arith.constant 2 : index
    %c0_78 = arith.constant 0 : index
    %c4_79 = arith.constant 4 : index
    %81 = vector.load %arg5[%c2_77, %c0_78, %c4_79] : memref<4x19x19xf32, #tpu.memory_space<vmem>>, vector<1x19x1xf32>
    %82 = vector.shape_cast %81 : vector<1x19x1xf32> to vector<19x1xf32>
    %c2_80 = arith.constant 2 : index
    %c0_81 = arith.constant 0 : index
    %c0_82 = arith.constant 0 : index
    %83 = vector.load %arg5[%c2_80, %c0_81, %c0_82] : memref<4x19x19xf32, #tpu.memory_space<vmem>>, vector<1x19x1xf32>
    %84 = vector.shape_cast %83 : vector<1x19x1xf32> to vector<19x1xf32>
    %85 = vector.shape_cast %82 : vector<19x1xf32> to vector<1x19x1xf32>
    tpu.vector_store %arg5[%c2_80, %c0_81, %c0_82], %85 {strides = array<i32>} : memref<4x19x19xf32, #tpu.memory_space<vmem>>, vector<1x19x1xf32>,
    %c2_83 = arith.constant 2 : index
    %c0_84 = arith.constant 0 : index
    %c3_85 = arith.constant 3 : index
    %86 = vector.load %arg5[%c2_83, %c0_84, %c3_85] : memref<4x19x19xf32, #tpu.memory_space<vmem>>, vector<1x19x1xf32>
    %87 = vector.shape_cast %86 : vector<1x19x1xf32> to vector<19x1xf32>
    %c2_86 = arith.constant 2 : index
    %c0_87 = arith.constant 0 : index
    %c1_88 = arith.constant 1 : index
    %88 = vector.load %arg5[%c2_86, %c0_87, %c1_88] : memref<4x19x19xf32, #tpu.memory_space<vmem>>, vector<1x19x1xf32>
    %89 = vector.shape_cast %88 : vector<1x19x1xf32> to vector<19x1xf32>
    %90 = vector.shape_cast %87 : vector<19x1xf32> to vector<1x19x1xf32>
    tpu.vector_store %arg5[%c2_86, %c0_87, %c1_88], %90 {strides = array<i32>} : memref<4x19x19xf32, #tpu.memory_space<vmem>>, vector<1x19x1xf32>,
    %c2_89 = arith.constant 2 : index
    %c0_90 = arith.constant 0 : index
    %c16_91 = arith.constant 16 : index
    %91 = vector.load %arg5[%c2_89, %c0_90, %c16_91] : memref<4x19x19xf32, #tpu.memory_space<vmem>>, vector<1x19x1xf32>
    %92 = vector.shape_cast %91 : vector<1x19x1xf32> to vector<19x1xf32>
    %c2_92 = arith.constant 2 : index
    %c0_93 = arith.constant 0 : index
    %c18_94 = arith.constant 18 : index
    %93 = vector.load %arg5[%c2_92, %c0_93, %c18_94] : memref<4x19x19xf32, #tpu.memory_space<vmem>>, vector<1x19x1xf32>
    %94 = vector.shape_cast %93 : vector<1x19x1xf32> to vector<19x1xf32>
    %95 = vector.shape_cast %92 : vector<19x1xf32> to vector<1x19x1xf32>
    tpu.vector_store %arg5[%c2_92, %c0_93, %c18_94], %95 {strides = array<i32>} : memref<4x19x19xf32, #tpu.memory_space<vmem>>, vector<1x19x1xf32>,
    %c3_95 = arith.constant 3 : index
    %c0_96 = arith.constant 0 : index
    %c0_97 = arith.constant 0 : index
    %c0_98 = arith.constant 0 : index
    %96 = vector.load %arg1[%c3_95, %c0_96, %c0_97, %c0_98] : memref<4x2x16x16xf32, #tpu.memory_space<vmem>>, vector<1x1x16x16xf32>
    %97 = vector.shape_cast %96 : vector<1x1x16x16xf32> to vector<16x16xf32>
    %c3_99 = arith.constant 3 : index
    %c2_100 = arith.constant 2 : index
    %c2_101 = arith.constant 2 : index
    %98 = vector.load %arg5[%c3_99, %c2_100, %c2_101] : memref<4x19x19xf32, #tpu.memory_space<vmem>>, vector<1x16x16xf32>
    %99 = vector.shape_cast %98 : vector<1x16x16xf32> to vector<16x16xf32>
    %100 = vector.shape_cast %97 : vector<16x16xf32> to vector<1x16x16xf32>
    tpu.vector_store %arg5[%c3_99, %c2_100, %c2_101], %100 {strides = array<i32>} : memref<4x19x19xf32, #tpu.memory_space<vmem>>, vector<1x16x16xf32>,
    %101 = vector.extract_strided_slice %97 {offsets = [2, 0], sizes = [1, 16], strides = [1, 1]} : vector<16x16xf32> to vector<1x16xf32>
    %c3_102 = arith.constant 3 : index
    %c0_103 = arith.constant 0 : index
    %c2_104 = arith.constant 2 : index
    %102 = vector.load %arg5[%c3_102, %c0_103, %c2_104] : memref<4x19x19xf32, #tpu.memory_space<vmem>>, vector<1x1x16xf32>
    %103 = vector.shape_cast %102 : vector<1x1x16xf32> to vector<1x16xf32>
    %104 = vector.shape_cast %101 : vector<1x16xf32> to vector<1x1x16xf32>
    tpu.vector_store %arg5[%c3_102, %c0_103, %c2_104], %104 {strides = array<i32>} : memref<4x19x19xf32, #tpu.memory_space<vmem>>, vector<1x1x16xf32>,
    %105 = vector.extract_strided_slice %97 {offsets = [1, 0], sizes = [1, 16], strides = [1, 1]} : vector<16x16xf32> to vector<1x16xf32>
    %c3_105 = arith.constant 3 : index
    %c1_106 = arith.constant 1 : index
    %c2_107 = arith.constant 2 : index
    %106 = vector.load %arg5[%c3_105, %c1_106, %c2_107] : memref<4x19x19xf32, #tpu.memory_space<vmem>>, vector<1x1x16xf32>
    %107 = vector.shape_cast %106 : vector<1x1x16xf32> to vector<1x16xf32>
    %108 = vector.shape_cast %105 : vector<1x16xf32> to vector<1x1x16xf32>
    tpu.vector_store %arg5[%c3_105, %c1_106, %c2_107], %108 {strides = array<i32>} : memref<4x19x19xf32, #tpu.memory_space<vmem>>, vector<1x1x16xf32>,
    %109 = vector.extract_strided_slice %97 {offsets = [14, 0], sizes = [1, 16], strides = [1, 1]} : vector<16x16xf32> to vector<1x16xf32>
    %c3_108 = arith.constant 3 : index
    %c18_109 = arith.constant 18 : index
    %c2_110 = arith.constant 2 : index
    %110 = vector.load %arg5[%c3_108, %c18_109, %c2_110] : memref<4x19x19xf32, #tpu.memory_space<vmem>>, vector<1x1x16xf32>
    %111 = vector.shape_cast %110 : vector<1x1x16xf32> to vector<1x16xf32>
    %112 = vector.shape_cast %109 : vector<1x16xf32> to vector<1x1x16xf32>
    tpu.vector_store %arg5[%c3_108, %c18_109, %c2_110], %112 {strides = array<i32>} : memref<4x19x19xf32, #tpu.memory_space<vmem>>, vector<1x1x16xf32>,
    %c3_111 = arith.constant 3 : index
    %c0_112 = arith.constant 0 : index
    %c4_113 = arith.constant 4 : index
    %113 = vector.load %arg5[%c3_111, %c0_112, %c4_113] : memref<4x19x19xf32, #tpu.memory_space<vmem>>, vector<1x19x1xf32>
    %114 = vector.shape_cast %113 : vector<1x19x1xf32> to vector<19x1xf32>
    %c3_114 = arith.constant 3 : index
    %c0_115 = arith.constant 0 : index
    %c0_116 = arith.constant 0 : index
    %115 = vector.load %arg5[%c3_114, %c0_115, %c0_116] : memref<4x19x19xf32, #tpu.memory_space<vmem>>, vector<1x19x1xf32>
    %116 = vector.shape_cast %115 : vector<1x19x1xf32> to vector<19x1xf32>
    %117 = vector.shape_cast %114 : vector<19x1xf32> to vector<1x19x1xf32>
    tpu.vector_store %arg5[%c3_114, %c0_115, %c0_116], %117 {strides = array<i32>} : memref<4x19x19xf32, #tpu.memory_space<vmem>>, vector<1x19x1xf32>,
    %c3_117 = arith.constant 3 : index
    %c0_118 = arith.constant 0 : index
    %c3_119 = arith.constant 3 : index
    %118 = vector.load %arg5[%c3_117, %c0_118, %c3_119] : memref<4x19x19xf32, #tpu.memory_space<vmem>>, vector<1x19x1xf32>
    %119 = vector.shape_cast %118 : vector<1x19x1xf32> to vector<19x1xf32>
    %c3_120 = arith.constant 3 : index
    %c0_121 = arith.constant 0 : index
    %c1_122 = arith.constant 1 : index
    %120 = vector.load %arg5[%c3_120, %c0_121, %c1_122] : memref<4x19x19xf32, #tpu.memory_space<vmem>>, vector<1x19x1xf32>
    %121 = vector.shape_cast %120 : vector<1x19x1xf32> to vector<19x1xf32>
    %122 = vector.shape_cast %119 : vector<19x1xf32> to vector<1x19x1xf32>
    tpu.vector_store %arg5[%c3_120, %c0_121, %c1_122], %122 {strides = array<i32>} : memref<4x19x19xf32, #tpu.memory_space<vmem>>, vector<1x19x1xf32>,
    %c3_123 = arith.constant 3 : index
    %c0_124 = arith.constant 0 : index
    %c16_125 = arith.constant 16 : index
    %123 = vector.load %arg5[%c3_123, %c0_124, %c16_125] : memref<4x19x19xf32, #tpu.memory_space<vmem>>, vector<1x19x1xf32>
    %124 = vector.shape_cast %123 : vector<1x19x1xf32> to vector<19x1xf32>
    %c3_126 = arith.constant 3 : index
    %c0_127 = arith.constant 0 : index
    %c18_128 = arith.constant 18 : index
    %125 = vector.load %arg5[%c3_126, %c0_127, %c18_128] : memref<4x19x19xf32, #tpu.memory_space<vmem>>, vector<1x19x1xf32>
    %126 = vector.shape_cast %125 : vector<1x19x1xf32> to vector<19x1xf32>
    %127 = vector.shape_cast %124 : vector<19x1xf32> to vector<1x19x1xf32>
    tpu.vector_store %arg5[%c3_126, %c0_127, %c18_128], %127 {strides = array<i32>} : memref<4x19x19xf32, #tpu.memory_space<vmem>>, vector<1x19x1xf32>,
    %cst = arith.constant 0.000000e+00 : f32
    %128 = vector.broadcast %cst : f32 to vector<16x16xf32>
    %cst_129 = arith.constant 0.000000e+00 : f32
    %129 = vector.broadcast %cst_129 : f32 to vector<16x16xf32>
    %cst_130 = arith.constant 0.000000e+00 : f32
    %130 = vector.broadcast %cst_130 : f32 to vector<16x16xf32>
    %cst_131 = arith.constant 0.000000e+00 : f32
    %131 = vector.broadcast %cst_131 : f32 to vector<16x16xf32>
    %c0_132 = arith.constant 0 : index
    %c0_133 = arith.constant 0 : index
    %c0_134 = arith.constant 0 : index
    %132 = vector.load %arg5[%c0_132, %c0_133, %c0_134] : memref<4x19x19xf32, #tpu.memory_space<vmem>>, vector<1x16x16xf32>
    %133 = vector.shape_cast %132 : vector<1x16x16xf32> to vector<16x16xf32>
    %c0_135 = arith.constant 0 : index
    %134 = memref.load %arg2[%c0_135] : memref<256xf32, #tpu.memory_space<smem>>
    %135 = vector.broadcast %134 : f32 to vector<16x16xf32>
    %136 = arith.mulf %135, %133 : vector<16x16xf32>
    %137 = arith.addf %128, %136 : vector<16x16xf32>
    %c64 = arith.constant 64 : index
    %138 = memref.load %arg2[%c64] : memref<256xf32, #tpu.memory_space<smem>>
    %139 = vector.broadcast %138 : f32 to vector<16x16xf32>
    %140 = arith.mulf %139, %133 : vector<16x16xf32>
    %141 = arith.addf %129, %140 : vector<16x16xf32>
    %c128 = arith.constant 128 : index
    %142 = memref.load %arg2[%c128] : memref<256xf32, #tpu.memory_space<smem>>
    %143 = vector.broadcast %142 : f32 to vector<16x16xf32>
    %144 = arith.mulf %143, %133 : vector<16x16xf32>
    %145 = arith.addf %130, %144 : vector<16x16xf32>
    %c192 = arith.constant 192 : index
    %146 = memref.load %arg2[%c192] : memref<256xf32, #tpu.memory_space<smem>>
    %147 = vector.broadcast %146 : f32 to vector<16x16xf32>
    %148 = arith.mulf %147, %133 : vector<16x16xf32>
    %149 = arith.addf %131, %148 : vector<16x16xf32>
    %c0_136 = arith.constant 0 : index
    %c0_137 = arith.constant 0 : index
    %c1_138 = arith.constant 1 : index
    %150 = vector.load %arg5[%c0_136, %c0_137, %c1_138] : memref<4x19x19xf32, #tpu.memory_space<vmem>>, vector<1x16x16xf32>
    %151 = vector.shape_cast %150 : vector<1x16x16xf32> to vector<16x16xf32>
    %c1_139 = arith.constant 1 : index
    %152 = memref.load %arg2[%c1_139] : memref<256xf32, #tpu.memory_space<smem>>
    %153 = vector.broadcast %152 : f32 to vector<16x16xf32>
    %154 = arith.mulf %153, %151 : vector<16x16xf32>
    %155 = arith.addf %137, %154 : vector<16x16xf32>
    %c65 = arith.constant 65 : index
    %156 = memref.load %arg2[%c65] : memref<256xf32, #tpu.memory_space<smem>>
    %157 = vector.broadcast %156 : f32 to vector<16x16xf32>
    %158 = arith.mulf %157, %151 : vector<16x16xf32>
    %159 = arith.addf %141, %158 : vector<16x16xf32>
    %c129 = arith.constant 129 : index
    %160 = memref.load %arg2[%c129] : memref<256xf32, #tpu.memory_space<smem>>
    %161 = vector.broadcast %160 : f32 to vector<16x16xf32>
    %162 = arith.mulf %161, %151 : vector<16x16xf32>
    %163 = arith.addf %145, %162 : vector<16x16xf32>
    %c193 = arith.constant 193 : index
    %164 = memref.load %arg2[%c193] : memref<256xf32, #tpu.memory_space<smem>>
    %165 = vector.broadcast %164 : f32 to vector<16x16xf32>
    %166 = arith.mulf %165, %151 : vector<16x16xf32>
    %167 = arith.addf %149, %166 : vector<16x16xf32>
    %c0_140 = arith.constant 0 : index
    %c0_141 = arith.constant 0 : index
    %c2_142 = arith.constant 2 : index
    %168 = vector.load %arg5[%c0_140, %c0_141, %c2_142] : memref<4x19x19xf32, #tpu.memory_space<vmem>>, vector<1x16x16xf32>
    %169 = vector.shape_cast %168 : vector<1x16x16xf32> to vector<16x16xf32>
    %c2_143 = arith.constant 2 : index
    %170 = memref.load %arg2[%c2_143] : memref<256xf32, #tpu.memory_space<smem>>
    %171 = vector.broadcast %170 : f32 to vector<16x16xf32>
    %172 = arith.mulf %171, %169 : vector<16x16xf32>
    %173 = arith.addf %155, %172 : vector<16x16xf32>
    %c66 = arith.constant 66 : index
    %174 = memref.load %arg2[%c66] : memref<256xf32, #tpu.memory_space<smem>>
    %175 = vector.broadcast %174 : f32 to vector<16x16xf32>
    %176 = arith.mulf %175, %169 : vector<16x16xf32>
    %177 = arith.addf %159, %176 : vector<16x16xf32>
    %c130 = arith.constant 130 : index
    %178 = memref.load %arg2[%c130] : memref<256xf32, #tpu.memory_space<smem>>
    %179 = vector.broadcast %178 : f32 to vector<16x16xf32>
    %180 = arith.mulf %179, %169 : vector<16x16xf32>
    %181 = arith.addf %163, %180 : vector<16x16xf32>
    %c194 = arith.constant 194 : index
    %182 = memref.load %arg2[%c194] : memref<256xf32, #tpu.memory_space<smem>>
    %183 = vector.broadcast %182 : f32 to vector<16x16xf32>
    %184 = arith.mulf %183, %169 : vector<16x16xf32>
    %185 = arith.addf %167, %184 : vector<16x16xf32>
    %c0_144 = arith.constant 0 : index
    %c0_145 = arith.constant 0 : index
    %c3_146 = arith.constant 3 : index
    %186 = vector.load %arg5[%c0_144, %c0_145, %c3_146] : memref<4x19x19xf32, #tpu.memory_space<vmem>>, vector<1x16x16xf32>
    %187 = vector.shape_cast %186 : vector<1x16x16xf32> to vector<16x16xf32>
    %c3_147 = arith.constant 3 : index
    %188 = memref.load %arg2[%c3_147] : memref<256xf32, #tpu.memory_space<smem>>
    %189 = vector.broadcast %188 : f32 to vector<16x16xf32>
    %190 = arith.mulf %189, %187 : vector<16x16xf32>
    %191 = arith.addf %173, %190 : vector<16x16xf32>
    %c67 = arith.constant 67 : index
    %192 = memref.load %arg2[%c67] : memref<256xf32, #tpu.memory_space<smem>>
    %193 = vector.broadcast %192 : f32 to vector<16x16xf32>
    %194 = arith.mulf %193, %187 : vector<16x16xf32>
    %195 = arith.addf %177, %194 : vector<16x16xf32>
    %c131 = arith.constant 131 : index
    %196 = memref.load %arg2[%c131] : memref<256xf32, #tpu.memory_space<smem>>
    %197 = vector.broadcast %196 : f32 to vector<16x16xf32>
    %198 = arith.mulf %197, %187 : vector<16x16xf32>
    %199 = arith.addf %181, %198 : vector<16x16xf32>
    %c195 = arith.constant 195 : index
    %200 = memref.load %arg2[%c195] : memref<256xf32, #tpu.memory_space<smem>>
    %201 = vector.broadcast %200 : f32 to vector<16x16xf32>
    %202 = arith.mulf %201, %187 : vector<16x16xf32>
    %203 = arith.addf %185, %202 : vector<16x16xf32>
    %c0_148 = arith.constant 0 : index
    %c1_149 = arith.constant 1 : index
    %c0_150 = arith.constant 0 : index
    %204 = vector.load %arg5[%c0_148, %c1_149, %c0_150] : memref<4x19x19xf32, #tpu.memory_space<vmem>>, vector<1x16x16xf32>
    %205 = vector.shape_cast %204 : vector<1x16x16xf32> to vector<16x16xf32>
    %c4_151 = arith.constant 4 : index
    %206 = memref.load %arg2[%c4_151] : memref<256xf32, #tpu.memory_space<smem>>
    %207 = vector.broadcast %206 : f32 to vector<16x16xf32>
    %208 = arith.mulf %207, %205 : vector<16x16xf32>
    %209 = arith.addf %191, %208 : vector<16x16xf32>
    %c68 = arith.constant 68 : index
    %210 = memref.load %arg2[%c68] : memref<256xf32, #tpu.memory_space<smem>>
    %211 = vector.broadcast %210 : f32 to vector<16x16xf32>
    %212 = arith.mulf %211, %205 : vector<16x16xf32>
    %213 = arith.addf %195, %212 : vector<16x16xf32>
    %c132 = arith.constant 132 : index
    %214 = memref.load %arg2[%c132] : memref<256xf32, #tpu.memory_space<smem>>
    %215 = vector.broadcast %214 : f32 to vector<16x16xf32>
    %216 = arith.mulf %215, %205 : vector<16x16xf32>
    %217 = arith.addf %199, %216 : vector<16x16xf32>
    %c196 = arith.constant 196 : index
    %218 = memref.load %arg2[%c196] : memref<256xf32, #tpu.memory_space<smem>>
    %219 = vector.broadcast %218 : f32 to vector<16x16xf32>
    %220 = arith.mulf %219, %205 : vector<16x16xf32>
    %221 = arith.addf %203, %220 : vector<16x16xf32>
    %c0_152 = arith.constant 0 : index
    %c1_153 = arith.constant 1 : index
    %c1_154 = arith.constant 1 : index
    %222 = vector.load %arg5[%c0_152, %c1_153, %c1_154] : memref<4x19x19xf32, #tpu.memory_space<vmem>>, vector<1x16x16xf32>
    %223 = vector.shape_cast %222 : vector<1x16x16xf32> to vector<16x16xf32>
    %c5 = arith.constant 5 : index
    %224 = memref.load %arg2[%c5] : memref<256xf32, #tpu.memory_space<smem>>
    %225 = vector.broadcast %224 : f32 to vector<16x16xf32>
    %226 = arith.mulf %225, %223 : vector<16x16xf32>
    %227 = arith.addf %209, %226 : vector<16x16xf32>
    %c69 = arith.constant 69 : index
    %228 = memref.load %arg2[%c69] : memref<256xf32, #tpu.memory_space<smem>>
    %229 = vector.broadcast %228 : f32 to vector<16x16xf32>
    %230 = arith.mulf %229, %223 : vector<16x16xf32>
    %231 = arith.addf %213, %230 : vector<16x16xf32>
    %c133 = arith.constant 133 : index
    %232 = memref.load %arg2[%c133] : memref<256xf32, #tpu.memory_space<smem>>
    %233 = vector.broadcast %232 : f32 to vector<16x16xf32>
    %234 = arith.mulf %233, %223 : vector<16x16xf32>
    %235 = arith.addf %217, %234 : vector<16x16xf32>
    %c197 = arith.constant 197 : index
    %236 = memref.load %arg2[%c197] : memref<256xf32, #tpu.memory_space<smem>>
    %237 = vector.broadcast %236 : f32 to vector<16x16xf32>
    %238 = arith.mulf %237, %223 : vector<16x16xf32>
    %239 = arith.addf %221, %238 : vector<16x16xf32>
    %c0_155 = arith.constant 0 : index
    %c1_156 = arith.constant 1 : index
    %c2_157 = arith.constant 2 : index
    %240 = vector.load %arg5[%c0_155, %c1_156, %c2_157] : memref<4x19x19xf32, #tpu.memory_space<vmem>>, vector<1x16x16xf32>
    %241 = vector.shape_cast %240 : vector<1x16x16xf32> to vector<16x16xf32>
    %c6 = arith.constant 6 : index
    %242 = memref.load %arg2[%c6] : memref<256xf32, #tpu.memory_space<smem>>
    %243 = vector.broadcast %242 : f32 to vector<16x16xf32>
    %244 = arith.mulf %243, %241 : vector<16x16xf32>
    %245 = arith.addf %227, %244 : vector<16x16xf32>
    %c70 = arith.constant 70 : index
    %246 = memref.load %arg2[%c70] : memref<256xf32, #tpu.memory_space<smem>>
    %247 = vector.broadcast %246 : f32 to vector<16x16xf32>
    %248 = arith.mulf %247, %241 : vector<16x16xf32>
    %249 = arith.addf %231, %248 : vector<16x16xf32>
    %c134 = arith.constant 134 : index
    %250 = memref.load %arg2[%c134] : memref<256xf32, #tpu.memory_space<smem>>
    %251 = vector.broadcast %250 : f32 to vector<16x16xf32>
    %252 = arith.mulf %251, %241 : vector<16x16xf32>
    %253 = arith.addf %235, %252 : vector<16x16xf32>
    %c198 = arith.constant 198 : index
    %254 = memref.load %arg2[%c198] : memref<256xf32, #tpu.memory_space<smem>>
    %255 = vector.broadcast %254 : f32 to vector<16x16xf32>
    %256 = arith.mulf %255, %241 : vector<16x16xf32>
    %257 = arith.addf %239, %256 : vector<16x16xf32>
    %c0_158 = arith.constant 0 : index
    %c1_159 = arith.constant 1 : index
    %c3_160 = arith.constant 3 : index
    %258 = vector.load %arg5[%c0_158, %c1_159, %c3_160] : memref<4x19x19xf32, #tpu.memory_space<vmem>>, vector<1x16x16xf32>
    %259 = vector.shape_cast %258 : vector<1x16x16xf32> to vector<16x16xf32>
    %c7 = arith.constant 7 : index
    %260 = memref.load %arg2[%c7] : memref<256xf32, #tpu.memory_space<smem>>
    %261 = vector.broadcast %260 : f32 to vector<16x16xf32>
    %262 = arith.mulf %261, %259 : vector<16x16xf32>
    %263 = arith.addf %245, %262 : vector<16x16xf32>
    %c71 = arith.constant 71 : index
    %264 = memref.load %arg2[%c71] : memref<256xf32, #tpu.memory_space<smem>>
    %265 = vector.broadcast %264 : f32 to vector<16x16xf32>
    %266 = arith.mulf %265, %259 : vector<16x16xf32>
    %267 = arith.addf %249, %266 : vector<16x16xf32>
    %c135 = arith.constant 135 : index
    %268 = memref.load %arg2[%c135] : memref<256xf32, #tpu.memory_space<smem>>
    %269 = vector.broadcast %268 : f32 to vector<16x16xf32>
    %270 = arith.mulf %269, %259 : vector<16x16xf32>
    %271 = arith.addf %253, %270 : vector<16x16xf32>
    %c199 = arith.constant 199 : index
    %272 = memref.load %arg2[%c199] : memref<256xf32, #tpu.memory_space<smem>>
    %273 = vector.broadcast %272 : f32 to vector<16x16xf32>
    %274 = arith.mulf %273, %259 : vector<16x16xf32>
    %275 = arith.addf %257, %274 : vector<16x16xf32>
    %c0_161 = arith.constant 0 : index
    %c2_162 = arith.constant 2 : index
    %c0_163 = arith.constant 0 : index
    %276 = vector.load %arg5[%c0_161, %c2_162, %c0_163] : memref<4x19x19xf32, #tpu.memory_space<vmem>>, vector<1x16x16xf32>
    %277 = vector.shape_cast %276 : vector<1x16x16xf32> to vector<16x16xf32>
    %c8 = arith.constant 8 : index
    %278 = memref.load %arg2[%c8] : memref<256xf32, #tpu.memory_space<smem>>
    %279 = vector.broadcast %278 : f32 to vector<16x16xf32>
    %280 = arith.mulf %279, %277 : vector<16x16xf32>
    %281 = arith.addf %263, %280 : vector<16x16xf32>
    %c72 = arith.constant 72 : index
    %282 = memref.load %arg2[%c72] : memref<256xf32, #tpu.memory_space<smem>>
    %283 = vector.broadcast %282 : f32 to vector<16x16xf32>
    %284 = arith.mulf %283, %277 : vector<16x16xf32>
    %285 = arith.addf %267, %284 : vector<16x16xf32>
    %c136 = arith.constant 136 : index
    %286 = memref.load %arg2[%c136] : memref<256xf32, #tpu.memory_space<smem>>
    %287 = vector.broadcast %286 : f32 to vector<16x16xf32>
    %288 = arith.mulf %287, %277 : vector<16x16xf32>
    %289 = arith.addf %271, %288 : vector<16x16xf32>
    %c200 = arith.constant 200 : index
    %290 = memref.load %arg2[%c200] : memref<256xf32, #tpu.memory_space<smem>>
    %291 = vector.broadcast %290 : f32 to vector<16x16xf32>
    %292 = arith.mulf %291, %277 : vector<16x16xf32>
    %293 = arith.addf %275, %292 : vector<16x16xf32>
    %c0_164 = arith.constant 0 : index
    %c2_165 = arith.constant 2 : index
    %c1_166 = arith.constant 1 : index
    %294 = vector.load %arg5[%c0_164, %c2_165, %c1_166] : memref<4x19x19xf32, #tpu.memory_space<vmem>>, vector<1x16x16xf32>
    %295 = vector.shape_cast %294 : vector<1x16x16xf32> to vector<16x16xf32>
    %c9 = arith.constant 9 : index
    %296 = memref.load %arg2[%c9] : memref<256xf32, #tpu.memory_space<smem>>
    %297 = vector.broadcast %296 : f32 to vector<16x16xf32>
    %298 = arith.mulf %297, %295 : vector<16x16xf32>
    %299 = arith.addf %281, %298 : vector<16x16xf32>
    %c73 = arith.constant 73 : index
    %300 = memref.load %arg2[%c73] : memref<256xf32, #tpu.memory_space<smem>>
    %301 = vector.broadcast %300 : f32 to vector<16x16xf32>
    %302 = arith.mulf %301, %295 : vector<16x16xf32>
    %303 = arith.addf %285, %302 : vector<16x16xf32>
    %c137 = arith.constant 137 : index
    %304 = memref.load %arg2[%c137] : memref<256xf32, #tpu.memory_space<smem>>
    %305 = vector.broadcast %304 : f32 to vector<16x16xf32>
    %306 = arith.mulf %305, %295 : vector<16x16xf32>
    %307 = arith.addf %289, %306 : vector<16x16xf32>
    %c201 = arith.constant 201 : index
    %308 = memref.load %arg2[%c201] : memref<256xf32, #tpu.memory_space<smem>>
    %309 = vector.broadcast %308 : f32 to vector<16x16xf32>
    %310 = arith.mulf %309, %295 : vector<16x16xf32>
    %311 = arith.addf %293, %310 : vector<16x16xf32>
    %c0_167 = arith.constant 0 : index
    %c2_168 = arith.constant 2 : index
    %c2_169 = arith.constant 2 : index
    %312 = vector.load %arg5[%c0_167, %c2_168, %c2_169] : memref<4x19x19xf32, #tpu.memory_space<vmem>>, vector<1x16x16xf32>
    %313 = vector.shape_cast %312 : vector<1x16x16xf32> to vector<16x16xf32>
    %c10 = arith.constant 10 : index
    %314 = memref.load %arg2[%c10] : memref<256xf32, #tpu.memory_space<smem>>
    %315 = vector.broadcast %314 : f32 to vector<16x16xf32>
    %316 = arith.mulf %315, %313 : vector<16x16xf32>
    %317 = arith.addf %299, %316 : vector<16x16xf32>
    %c74 = arith.constant 74 : index
    %318 = memref.load %arg2[%c74] : memref<256xf32, #tpu.memory_space<smem>>
    %319 = vector.broadcast %318 : f32 to vector<16x16xf32>
    %320 = arith.mulf %319, %313 : vector<16x16xf32>
    %321 = arith.addf %303, %320 : vector<16x16xf32>
    %c138 = arith.constant 138 : index
    %322 = memref.load %arg2[%c138] : memref<256xf32, #tpu.memory_space<smem>>
    %323 = vector.broadcast %322 : f32 to vector<16x16xf32>
    %324 = arith.mulf %323, %313 : vector<16x16xf32>
    %325 = arith.addf %307, %324 : vector<16x16xf32>
    %c202 = arith.constant 202 : index
    %326 = memref.load %arg2[%c202] : memref<256xf32, #tpu.memory_space<smem>>
    %327 = vector.broadcast %326 : f32 to vector<16x16xf32>
    %328 = arith.mulf %327, %313 : vector<16x16xf32>
    %329 = arith.addf %311, %328 : vector<16x16xf32>
    %c0_170 = arith.constant 0 : index
    %c2_171 = arith.constant 2 : index
    %c3_172 = arith.constant 3 : index
    %330 = vector.load %arg5[%c0_170, %c2_171, %c3_172] : memref<4x19x19xf32, #tpu.memory_space<vmem>>, vector<1x16x16xf32>
    %331 = vector.shape_cast %330 : vector<1x16x16xf32> to vector<16x16xf32>
    %c11 = arith.constant 11 : index
    %332 = memref.load %arg2[%c11] : memref<256xf32, #tpu.memory_space<smem>>
    %333 = vector.broadcast %332 : f32 to vector<16x16xf32>
    %334 = arith.mulf %333, %331 : vector<16x16xf32>
    %335 = arith.addf %317, %334 : vector<16x16xf32>
    %c75 = arith.constant 75 : index
    %336 = memref.load %arg2[%c75] : memref<256xf32, #tpu.memory_space<smem>>
    %337 = vector.broadcast %336 : f32 to vector<16x16xf32>
    %338 = arith.mulf %337, %331 : vector<16x16xf32>
    %339 = arith.addf %321, %338 : vector<16x16xf32>
    %c139 = arith.constant 139 : index
    %340 = memref.load %arg2[%c139] : memref<256xf32, #tpu.memory_space<smem>>
    %341 = vector.broadcast %340 : f32 to vector<16x16xf32>
    %342 = arith.mulf %341, %331 : vector<16x16xf32>
    %343 = arith.addf %325, %342 : vector<16x16xf32>
    %c203 = arith.constant 203 : index
    %344 = memref.load %arg2[%c203] : memref<256xf32, #tpu.memory_space<smem>>
    %345 = vector.broadcast %344 : f32 to vector<16x16xf32>
    %346 = arith.mulf %345, %331 : vector<16x16xf32>
    %347 = arith.addf %329, %346 : vector<16x16xf32>
    %c0_173 = arith.constant 0 : index
    %c3_174 = arith.constant 3 : index
    %c0_175 = arith.constant 0 : index
    %348 = vector.load %arg5[%c0_173, %c3_174, %c0_175] : memref<4x19x19xf32, #tpu.memory_space<vmem>>, vector<1x16x16xf32>
    %349 = vector.shape_cast %348 : vector<1x16x16xf32> to vector<16x16xf32>
    %c12 = arith.constant 12 : index
    %350 = memref.load %arg2[%c12] : memref<256xf32, #tpu.memory_space<smem>>
    %351 = vector.broadcast %350 : f32 to vector<16x16xf32>
    %352 = arith.mulf %351, %349 : vector<16x16xf32>
    %353 = arith.addf %335, %352 : vector<16x16xf32>
    %c76 = arith.constant 76 : index
    %354 = memref.load %arg2[%c76] : memref<256xf32, #tpu.memory_space<smem>>
    %355 = vector.broadcast %354 : f32 to vector<16x16xf32>
    %356 = arith.mulf %355, %349 : vector<16x16xf32>
    %357 = arith.addf %339, %356 : vector<16x16xf32>
    %c140 = arith.constant 140 : index
    %358 = memref.load %arg2[%c140] : memref<256xf32, #tpu.memory_space<smem>>
    %359 = vector.broadcast %358 : f32 to vector<16x16xf32>
    %360 = arith.mulf %359, %349 : vector<16x16xf32>
    %361 = arith.addf %343, %360 : vector<16x16xf32>
    %c204 = arith.constant 204 : index
    %362 = memref.load %arg2[%c204] : memref<256xf32, #tpu.memory_space<smem>>
    %363 = vector.broadcast %362 : f32 to vector<16x16xf32>
    %364 = arith.mulf %363, %349 : vector<16x16xf32>
    %365 = arith.addf %347, %364 : vector<16x16xf32>
    %c0_176 = arith.constant 0 : index
    %c3_177 = arith.constant 3 : index
    %c1_178 = arith.constant 1 : index
    %366 = vector.load %arg5[%c0_176, %c3_177, %c1_178] : memref<4x19x19xf32, #tpu.memory_space<vmem>>, vector<1x16x16xf32>
    %367 = vector.shape_cast %366 : vector<1x16x16xf32> to vector<16x16xf32>
    %c13 = arith.constant 13 : index
    %368 = memref.load %arg2[%c13] : memref<256xf32, #tpu.memory_space<smem>>
    %369 = vector.broadcast %368 : f32 to vector<16x16xf32>
    %370 = arith.mulf %369, %367 : vector<16x16xf32>
    %371 = arith.addf %353, %370 : vector<16x16xf32>
    %c77 = arith.constant 77 : index
    %372 = memref.load %arg2[%c77] : memref<256xf32, #tpu.memory_space<smem>>
    %373 = vector.broadcast %372 : f32 to vector<16x16xf32>
    %374 = arith.mulf %373, %367 : vector<16x16xf32>
    %375 = arith.addf %357, %374 : vector<16x16xf32>
    %c141 = arith.constant 141 : index
    %376 = memref.load %arg2[%c141] : memref<256xf32, #tpu.memory_space<smem>>
    %377 = vector.broadcast %376 : f32 to vector<16x16xf32>
    %378 = arith.mulf %377, %367 : vector<16x16xf32>
    %379 = arith.addf %361, %378 : vector<16x16xf32>
    %c205 = arith.constant 205 : index
    %380 = memref.load %arg2[%c205] : memref<256xf32, #tpu.memory_space<smem>>
    %381 = vector.broadcast %380 : f32 to vector<16x16xf32>
    %382 = arith.mulf %381, %367 : vector<16x16xf32>
    %383 = arith.addf %365, %382 : vector<16x16xf32>
    %c0_179 = arith.constant 0 : index
    %c3_180 = arith.constant 3 : index
    %c2_181 = arith.constant 2 : index
    %384 = vector.load %arg5[%c0_179, %c3_180, %c2_181] : memref<4x19x19xf32, #tpu.memory_space<vmem>>, vector<1x16x16xf32>
    %385 = vector.shape_cast %384 : vector<1x16x16xf32> to vector<16x16xf32>
    %c14 = arith.constant 14 : index
    %386 = memref.load %arg2[%c14] : memref<256xf32, #tpu.memory_space<smem>>
    %387 = vector.broadcast %386 : f32 to vector<16x16xf32>
    %388 = arith.mulf %387, %385 : vector<16x16xf32>
    %389 = arith.addf %371, %388 : vector<16x16xf32>
    %c78 = arith.constant 78 : index
    %390 = memref.load %arg2[%c78] : memref<256xf32, #tpu.memory_space<smem>>
    %391 = vector.broadcast %390 : f32 to vector<16x16xf32>
    %392 = arith.mulf %391, %385 : vector<16x16xf32>
    %393 = arith.addf %375, %392 : vector<16x16xf32>
    %c142 = arith.constant 142 : index
    %394 = memref.load %arg2[%c142] : memref<256xf32, #tpu.memory_space<smem>>
    %395 = vector.broadcast %394 : f32 to vector<16x16xf32>
    %396 = arith.mulf %395, %385 : vector<16x16xf32>
    %397 = arith.addf %379, %396 : vector<16x16xf32>
    %c206 = arith.constant 206 : index
    %398 = memref.load %arg2[%c206] : memref<256xf32, #tpu.memory_space<smem>>
    %399 = vector.broadcast %398 : f32 to vector<16x16xf32>
    %400 = arith.mulf %399, %385 : vector<16x16xf32>
    %401 = arith.addf %383, %400 : vector<16x16xf32>
    %c0_182 = arith.constant 0 : index
    %c3_183 = arith.constant 3 : index
    %c3_184 = arith.constant 3 : index
    %402 = vector.load %arg5[%c0_182, %c3_183, %c3_184] : memref<4x19x19xf32, #tpu.memory_space<vmem>>, vector<1x16x16xf32>
    %403 = vector.shape_cast %402 : vector<1x16x16xf32> to vector<16x16xf32>
    %c15 = arith.constant 15 : index
    %404 = memref.load %arg2[%c15] : memref<256xf32, #tpu.memory_space<smem>>
    %405 = vector.broadcast %404 : f32 to vector<16x16xf32>
    %406 = arith.mulf %405, %403 : vector<16x16xf32>
    %407 = arith.addf %389, %406 : vector<16x16xf32>
    %c79 = arith.constant 79 : index
    %408 = memref.load %arg2[%c79] : memref<256xf32, #tpu.memory_space<smem>>
    %409 = vector.broadcast %408 : f32 to vector<16x16xf32>
    %410 = arith.mulf %409, %403 : vector<16x16xf32>
    %411 = arith.addf %393, %410 : vector<16x16xf32>
    %c143 = arith.constant 143 : index
    %412 = memref.load %arg2[%c143] : memref<256xf32, #tpu.memory_space<smem>>
    %413 = vector.broadcast %412 : f32 to vector<16x16xf32>
    %414 = arith.mulf %413, %403 : vector<16x16xf32>
    %415 = arith.addf %397, %414 : vector<16x16xf32>
    %c207 = arith.constant 207 : index
    %416 = memref.load %arg2[%c207] : memref<256xf32, #tpu.memory_space<smem>>
    %417 = vector.broadcast %416 : f32 to vector<16x16xf32>
    %418 = arith.mulf %417, %403 : vector<16x16xf32>
    %419 = arith.addf %401, %418 : vector<16x16xf32>
    %c1_185 = arith.constant 1 : index
    %c0_186 = arith.constant 0 : index
    %c0_187 = arith.constant 0 : index
    %420 = vector.load %arg5[%c1_185, %c0_186, %c0_187] : memref<4x19x19xf32, #tpu.memory_space<vmem>>, vector<1x16x16xf32>
    %421 = vector.shape_cast %420 : vector<1x16x16xf32> to vector<16x16xf32>
    %c16_188 = arith.constant 16 : index
    %422 = memref.load %arg2[%c16_188] : memref<256xf32, #tpu.memory_space<smem>>
    %423 = vector.broadcast %422 : f32 to vector<16x16xf32>
    %424 = arith.mulf %423, %421 : vector<16x16xf32>
    %425 = arith.addf %407, %424 : vector<16x16xf32>
    %c80 = arith.constant 80 : index
    %426 = memref.load %arg2[%c80] : memref<256xf32, #tpu.memory_space<smem>>
    %427 = vector.broadcast %426 : f32 to vector<16x16xf32>
    %428 = arith.mulf %427, %421 : vector<16x16xf32>
    %429 = arith.addf %411, %428 : vector<16x16xf32>
    %c144 = arith.constant 144 : index
    %430 = memref.load %arg2[%c144] : memref<256xf32, #tpu.memory_space<smem>>
    %431 = vector.broadcast %430 : f32 to vector<16x16xf32>
    %432 = arith.mulf %431, %421 : vector<16x16xf32>
    %433 = arith.addf %415, %432 : vector<16x16xf32>
    %c208 = arith.constant 208 : index
    %434 = memref.load %arg2[%c208] : memref<256xf32, #tpu.memory_space<smem>>
    %435 = vector.broadcast %434 : f32 to vector<16x16xf32>
    %436 = arith.mulf %435, %421 : vector<16x16xf32>
    %437 = arith.addf %419, %436 : vector<16x16xf32>
    %c1_189 = arith.constant 1 : index
    %c0_190 = arith.constant 0 : index
    %c1_191 = arith.constant 1 : index
    %438 = vector.load %arg5[%c1_189, %c0_190, %c1_191] : memref<4x19x19xf32, #tpu.memory_space<vmem>>, vector<1x16x16xf32>
    %439 = vector.shape_cast %438 : vector<1x16x16xf32> to vector<16x16xf32>
    %c17 = arith.constant 17 : index
    %440 = memref.load %arg2[%c17] : memref<256xf32, #tpu.memory_space<smem>>
    %441 = vector.broadcast %440 : f32 to vector<16x16xf32>
    %442 = arith.mulf %441, %439 : vector<16x16xf32>
    %443 = arith.addf %425, %442 : vector<16x16xf32>
    %c81 = arith.constant 81 : index
    %444 = memref.load %arg2[%c81] : memref<256xf32, #tpu.memory_space<smem>>
    %445 = vector.broadcast %444 : f32 to vector<16x16xf32>
    %446 = arith.mulf %445, %439 : vector<16x16xf32>
    %447 = arith.addf %429, %446 : vector<16x16xf32>
    %c145 = arith.constant 145 : index
    %448 = memref.load %arg2[%c145] : memref<256xf32, #tpu.memory_space<smem>>
    %449 = vector.broadcast %448 : f32 to vector<16x16xf32>
    %450 = arith.mulf %449, %439 : vector<16x16xf32>
    %451 = arith.addf %433, %450 : vector<16x16xf32>
    %c209 = arith.constant 209 : index
    %452 = memref.load %arg2[%c209] : memref<256xf32, #tpu.memory_space<smem>>
    %453 = vector.broadcast %452 : f32 to vector<16x16xf32>
    %454 = arith.mulf %453, %439 : vector<16x16xf32>
    %455 = arith.addf %437, %454 : vector<16x16xf32>
    %c1_192 = arith.constant 1 : index
    %c0_193 = arith.constant 0 : index
    %c2_194 = arith.constant 2 : index
    %456 = vector.load %arg5[%c1_192, %c0_193, %c2_194] : memref<4x19x19xf32, #tpu.memory_space<vmem>>, vector<1x16x16xf32>
    %457 = vector.shape_cast %456 : vector<1x16x16xf32> to vector<16x16xf32>
    %c18_195 = arith.constant 18 : index
    %458 = memref.load %arg2[%c18_195] : memref<256xf32, #tpu.memory_space<smem>>
    %459 = vector.broadcast %458 : f32 to vector<16x16xf32>
    %460 = arith.mulf %459, %457 : vector<16x16xf32>
    %461 = arith.addf %443, %460 : vector<16x16xf32>
    %c82 = arith.constant 82 : index
    %462 = memref.load %arg2[%c82] : memref<256xf32, #tpu.memory_space<smem>>
    %463 = vector.broadcast %462 : f32 to vector<16x16xf32>
    %464 = arith.mulf %463, %457 : vector<16x16xf32>
    %465 = arith.addf %447, %464 : vector<16x16xf32>
    %c146 = arith.constant 146 : index
    %466 = memref.load %arg2[%c146] : memref<256xf32, #tpu.memory_space<smem>>
    %467 = vector.broadcast %466 : f32 to vector<16x16xf32>
    %468 = arith.mulf %467, %457 : vector<16x16xf32>
    %469 = arith.addf %451, %468 : vector<16x16xf32>
    %c210 = arith.constant 210 : index
    %470 = memref.load %arg2[%c210] : memref<256xf32, #tpu.memory_space<smem>>
    %471 = vector.broadcast %470 : f32 to vector<16x16xf32>
    %472 = arith.mulf %471, %457 : vector<16x16xf32>
    %473 = arith.addf %455, %472 : vector<16x16xf32>
    %c1_196 = arith.constant 1 : index
    %c0_197 = arith.constant 0 : index
    %c3_198 = arith.constant 3 : index
    %474 = vector.load %arg5[%c1_196, %c0_197, %c3_198] : memref<4x19x19xf32, #tpu.memory_space<vmem>>, vector<1x16x16xf32>
    %475 = vector.shape_cast %474 : vector<1x16x16xf32> to vector<16x16xf32>
    %c19 = arith.constant 19 : index
    %476 = memref.load %arg2[%c19] : memref<256xf32, #tpu.memory_space<smem>>
    %477 = vector.broadcast %476 : f32 to vector<16x16xf32>
    %478 = arith.mulf %477, %475 : vector<16x16xf32>
    %479 = arith.addf %461, %478 : vector<16x16xf32>
    %c83 = arith.constant 83 : index
    %480 = memref.load %arg2[%c83] : memref<256xf32, #tpu.memory_space<smem>>
    %481 = vector.broadcast %480 : f32 to vector<16x16xf32>
    %482 = arith.mulf %481, %475 : vector<16x16xf32>
    %483 = arith.addf %465, %482 : vector<16x16xf32>
    %c147 = arith.constant 147 : index
    %484 = memref.load %arg2[%c147] : memref<256xf32, #tpu.memory_space<smem>>
    %485 = vector.broadcast %484 : f32 to vector<16x16xf32>
    %486 = arith.mulf %485, %475 : vector<16x16xf32>
    %487 = arith.addf %469, %486 : vector<16x16xf32>
    %c211 = arith.constant 211 : index
    %488 = memref.load %arg2[%c211] : memref<256xf32, #tpu.memory_space<smem>>
    %489 = vector.broadcast %488 : f32 to vector<16x16xf32>
    %490 = arith.mulf %489, %475 : vector<16x16xf32>
    %491 = arith.addf %473, %490 : vector<16x16xf32>
    %c1_199 = arith.constant 1 : index
    %c1_200 = arith.constant 1 : index
    %c0_201 = arith.constant 0 : index
    %492 = vector.load %arg5[%c1_199, %c1_200, %c0_201] : memref<4x19x19xf32, #tpu.memory_space<vmem>>, vector<1x16x16xf32>
    %493 = vector.shape_cast %492 : vector<1x16x16xf32> to vector<16x16xf32>
    %c20 = arith.constant 20 : index
    %494 = memref.load %arg2[%c20] : memref<256xf32, #tpu.memory_space<smem>>
    %495 = vector.broadcast %494 : f32 to vector<16x16xf32>
    %496 = arith.mulf %495, %493 : vector<16x16xf32>
    %497 = arith.addf %479, %496 : vector<16x16xf32>
    %c84 = arith.constant 84 : index
    %498 = memref.load %arg2[%c84] : memref<256xf32, #tpu.memory_space<smem>>
    %499 = vector.broadcast %498 : f32 to vector<16x16xf32>
    %500 = arith.mulf %499, %493 : vector<16x16xf32>
    %501 = arith.addf %483, %500 : vector<16x16xf32>
    %c148 = arith.constant 148 : index
    %502 = memref.load %arg2[%c148] : memref<256xf32, #tpu.memory_space<smem>>
    %503 = vector.broadcast %502 : f32 to vector<16x16xf32>
    %504 = arith.mulf %503, %493 : vector<16x16xf32>
    %505 = arith.addf %487, %504 : vector<16x16xf32>
    %c212 = arith.constant 212 : index
    %506 = memref.load %arg2[%c212] : memref<256xf32, #tpu.memory_space<smem>>
    %507 = vector.broadcast %506 : f32 to vector<16x16xf32>
    %508 = arith.mulf %507, %493 : vector<16x16xf32>
    %509 = arith.addf %491, %508 : vector<16x16xf32>
    %c1_202 = arith.constant 1 : index
    %c1_203 = arith.constant 1 : index
    %c1_204 = arith.constant 1 : index
    %510 = vector.load %arg5[%c1_202, %c1_203, %c1_204] : memref<4x19x19xf32, #tpu.memory_space<vmem>>, vector<1x16x16xf32>
    %511 = vector.shape_cast %510 : vector<1x16x16xf32> to vector<16x16xf32>
    %c21 = arith.constant 21 : index
    %512 = memref.load %arg2[%c21] : memref<256xf32, #tpu.memory_space<smem>>
    %513 = vector.broadcast %512 : f32 to vector<16x16xf32>
    %514 = arith.mulf %513, %511 : vector<16x16xf32>
    %515 = arith.addf %497, %514 : vector<16x16xf32>
    %c85 = arith.constant 85 : index
    %516 = memref.load %arg2[%c85] : memref<256xf32, #tpu.memory_space<smem>>
    %517 = vector.broadcast %516 : f32 to vector<16x16xf32>
    %518 = arith.mulf %517, %511 : vector<16x16xf32>
    %519 = arith.addf %501, %518 : vector<16x16xf32>
    %c149 = arith.constant 149 : index
    %520 = memref.load %arg2[%c149] : memref<256xf32, #tpu.memory_space<smem>>
    %521 = vector.broadcast %520 : f32 to vector<16x16xf32>
    %522 = arith.mulf %521, %511 : vector<16x16xf32>
    %523 = arith.addf %505, %522 : vector<16x16xf32>
    %c213 = arith.constant 213 : index
    %524 = memref.load %arg2[%c213] : memref<256xf32, #tpu.memory_space<smem>>
    %525 = vector.broadcast %524 : f32 to vector<16x16xf32>
    %526 = arith.mulf %525, %511 : vector<16x16xf32>
    %527 = arith.addf %509, %526 : vector<16x16xf32>
    %c1_205 = arith.constant 1 : index
    %c1_206 = arith.constant 1 : index
    %c2_207 = arith.constant 2 : index
    %528 = vector.load %arg5[%c1_205, %c1_206, %c2_207] : memref<4x19x19xf32, #tpu.memory_space<vmem>>, vector<1x16x16xf32>
    %529 = vector.shape_cast %528 : vector<1x16x16xf32> to vector<16x16xf32>
    %c22 = arith.constant 22 : index
    %530 = memref.load %arg2[%c22] : memref<256xf32, #tpu.memory_space<smem>>
    %531 = vector.broadcast %530 : f32 to vector<16x16xf32>
    %532 = arith.mulf %531, %529 : vector<16x16xf32>
    %533 = arith.addf %515, %532 : vector<16x16xf32>
    %c86 = arith.constant 86 : index
    %534 = memref.load %arg2[%c86] : memref<256xf32, #tpu.memory_space<smem>>
    %535 = vector.broadcast %534 : f32 to vector<16x16xf32>
    %536 = arith.mulf %535, %529 : vector<16x16xf32>
    %537 = arith.addf %519, %536 : vector<16x16xf32>
    %c150 = arith.constant 150 : index
    %538 = memref.load %arg2[%c150] : memref<256xf32, #tpu.memory_space<smem>>
    %539 = vector.broadcast %538 : f32 to vector<16x16xf32>
    %540 = arith.mulf %539, %529 : vector<16x16xf32>
    %541 = arith.addf %523, %540 : vector<16x16xf32>
    %c214 = arith.constant 214 : index
    %542 = memref.load %arg2[%c214] : memref<256xf32, #tpu.memory_space<smem>>
    %543 = vector.broadcast %542 : f32 to vector<16x16xf32>
    %544 = arith.mulf %543, %529 : vector<16x16xf32>
    %545 = arith.addf %527, %544 : vector<16x16xf32>
    %c1_208 = arith.constant 1 : index
    %c1_209 = arith.constant 1 : index
    %c3_210 = arith.constant 3 : index
    %546 = vector.load %arg5[%c1_208, %c1_209, %c3_210] : memref<4x19x19xf32, #tpu.memory_space<vmem>>, vector<1x16x16xf32>
    %547 = vector.shape_cast %546 : vector<1x16x16xf32> to vector<16x16xf32>
    %c23 = arith.constant 23 : index
    %548 = memref.load %arg2[%c23] : memref<256xf32, #tpu.memory_space<smem>>
    %549 = vector.broadcast %548 : f32 to vector<16x16xf32>
    %550 = arith.mulf %549, %547 : vector<16x16xf32>
    %551 = arith.addf %533, %550 : vector<16x16xf32>
    %c87 = arith.constant 87 : index
    %552 = memref.load %arg2[%c87] : memref<256xf32, #tpu.memory_space<smem>>
    %553 = vector.broadcast %552 : f32 to vector<16x16xf32>
    %554 = arith.mulf %553, %547 : vector<16x16xf32>
    %555 = arith.addf %537, %554 : vector<16x16xf32>
    %c151 = arith.constant 151 : index
    %556 = memref.load %arg2[%c151] : memref<256xf32, #tpu.memory_space<smem>>
    %557 = vector.broadcast %556 : f32 to vector<16x16xf32>
    %558 = arith.mulf %557, %547 : vector<16x16xf32>
    %559 = arith.addf %541, %558 : vector<16x16xf32>
    %c215 = arith.constant 215 : index
    %560 = memref.load %arg2[%c215] : memref<256xf32, #tpu.memory_space<smem>>
    %561 = vector.broadcast %560 : f32 to vector<16x16xf32>
    %562 = arith.mulf %561, %547 : vector<16x16xf32>
    %563 = arith.addf %545, %562 : vector<16x16xf32>
    %c1_211 = arith.constant 1 : index
    %c2_212 = arith.constant 2 : index
    %c0_213 = arith.constant 0 : index
    %564 = vector.load %arg5[%c1_211, %c2_212, %c0_213] : memref<4x19x19xf32, #tpu.memory_space<vmem>>, vector<1x16x16xf32>
    %565 = vector.shape_cast %564 : vector<1x16x16xf32> to vector<16x16xf32>
    %c24 = arith.constant 24 : index
    %566 = memref.load %arg2[%c24] : memref<256xf32, #tpu.memory_space<smem>>
    %567 = vector.broadcast %566 : f32 to vector<16x16xf32>
    %568 = arith.mulf %567, %565 : vector<16x16xf32>
    %569 = arith.addf %551, %568 : vector<16x16xf32>
    %c88 = arith.constant 88 : index
    %570 = memref.load %arg2[%c88] : memref<256xf32, #tpu.memory_space<smem>>
    %571 = vector.broadcast %570 : f32 to vector<16x16xf32>
    %572 = arith.mulf %571, %565 : vector<16x16xf32>
    %573 = arith.addf %555, %572 : vector<16x16xf32>
    %c152 = arith.constant 152 : index
    %574 = memref.load %arg2[%c152] : memref<256xf32, #tpu.memory_space<smem>>
    %575 = vector.broadcast %574 : f32 to vector<16x16xf32>
    %576 = arith.mulf %575, %565 : vector<16x16xf32>
    %577 = arith.addf %559, %576 : vector<16x16xf32>
    %c216 = arith.constant 216 : index
    %578 = memref.load %arg2[%c216] : memref<256xf32, #tpu.memory_space<smem>>
    %579 = vector.broadcast %578 : f32 to vector<16x16xf32>
    %580 = arith.mulf %579, %565 : vector<16x16xf32>
    %581 = arith.addf %563, %580 : vector<16x16xf32>
    %c1_214 = arith.constant 1 : index
    %c2_215 = arith.constant 2 : index
    %c1_216 = arith.constant 1 : index
    %582 = vector.load %arg5[%c1_214, %c2_215, %c1_216] : memref<4x19x19xf32, #tpu.memory_space<vmem>>, vector<1x16x16xf32>
    %583 = vector.shape_cast %582 : vector<1x16x16xf32> to vector<16x16xf32>
    %c25 = arith.constant 25 : index
    %584 = memref.load %arg2[%c25] : memref<256xf32, #tpu.memory_space<smem>>
    %585 = vector.broadcast %584 : f32 to vector<16x16xf32>
    %586 = arith.mulf %585, %583 : vector<16x16xf32>
    %587 = arith.addf %569, %586 : vector<16x16xf32>
    %c89 = arith.constant 89 : index
    %588 = memref.load %arg2[%c89] : memref<256xf32, #tpu.memory_space<smem>>
    %589 = vector.broadcast %588 : f32 to vector<16x16xf32>
    %590 = arith.mulf %589, %583 : vector<16x16xf32>
    %591 = arith.addf %573, %590 : vector<16x16xf32>
    %c153 = arith.constant 153 : index
    %592 = memref.load %arg2[%c153] : memref<256xf32, #tpu.memory_space<smem>>
    %593 = vector.broadcast %592 : f32 to vector<16x16xf32>
    %594 = arith.mulf %593, %583 : vector<16x16xf32>
    %595 = arith.addf %577, %594 : vector<16x16xf32>
    %c217 = arith.constant 217 : index
    %596 = memref.load %arg2[%c217] : memref<256xf32, #tpu.memory_space<smem>>
    %597 = vector.broadcast %596 : f32 to vector<16x16xf32>
    %598 = arith.mulf %597, %583 : vector<16x16xf32>
    %599 = arith.addf %581, %598 : vector<16x16xf32>
    %c1_217 = arith.constant 1 : index
    %c2_218 = arith.constant 2 : index
    %c2_219 = arith.constant 2 : index
    %600 = vector.load %arg5[%c1_217, %c2_218, %c2_219] : memref<4x19x19xf32, #tpu.memory_space<vmem>>, vector<1x16x16xf32>
    %601 = vector.shape_cast %600 : vector<1x16x16xf32> to vector<16x16xf32>
    %c26 = arith.constant 26 : index
    %602 = memref.load %arg2[%c26] : memref<256xf32, #tpu.memory_space<smem>>
    %603 = vector.broadcast %602 : f32 to vector<16x16xf32>
    %604 = arith.mulf %603, %601 : vector<16x16xf32>
    %605 = arith.addf %587, %604 : vector<16x16xf32>
    %c90 = arith.constant 90 : index
    %606 = memref.load %arg2[%c90] : memref<256xf32, #tpu.memory_space<smem>>
    %607 = vector.broadcast %606 : f32 to vector<16x16xf32>
    %608 = arith.mulf %607, %601 : vector<16x16xf32>
    %609 = arith.addf %591, %608 : vector<16x16xf32>
    %c154 = arith.constant 154 : index
    %610 = memref.load %arg2[%c154] : memref<256xf32, #tpu.memory_space<smem>>
    %611 = vector.broadcast %610 : f32 to vector<16x16xf32>
    %612 = arith.mulf %611, %601 : vector<16x16xf32>
    %613 = arith.addf %595, %612 : vector<16x16xf32>
    %c218 = arith.constant 218 : index
    %614 = memref.load %arg2[%c218] : memref<256xf32, #tpu.memory_space<smem>>
    %615 = vector.broadcast %614 : f32 to vector<16x16xf32>
    %616 = arith.mulf %615, %601 : vector<16x16xf32>
    %617 = arith.addf %599, %616 : vector<16x16xf32>
    %c1_220 = arith.constant 1 : index
    %c2_221 = arith.constant 2 : index
    %c3_222 = arith.constant 3 : index
    %618 = vector.load %arg5[%c1_220, %c2_221, %c3_222] : memref<4x19x19xf32, #tpu.memory_space<vmem>>, vector<1x16x16xf32>
    %619 = vector.shape_cast %618 : vector<1x16x16xf32> to vector<16x16xf32>
    %c27 = arith.constant 27 : index
    %620 = memref.load %arg2[%c27] : memref<256xf32, #tpu.memory_space<smem>>
    %621 = vector.broadcast %620 : f32 to vector<16x16xf32>
    %622 = arith.mulf %621, %619 : vector<16x16xf32>
    %623 = arith.addf %605, %622 : vector<16x16xf32>
    %c91 = arith.constant 91 : index
    %624 = memref.load %arg2[%c91] : memref<256xf32, #tpu.memory_space<smem>>
    %625 = vector.broadcast %624 : f32 to vector<16x16xf32>
    %626 = arith.mulf %625, %619 : vector<16x16xf32>
    %627 = arith.addf %609, %626 : vector<16x16xf32>
    %c155 = arith.constant 155 : index
    %628 = memref.load %arg2[%c155] : memref<256xf32, #tpu.memory_space<smem>>
    %629 = vector.broadcast %628 : f32 to vector<16x16xf32>
    %630 = arith.mulf %629, %619 : vector<16x16xf32>
    %631 = arith.addf %613, %630 : vector<16x16xf32>
    %c219 = arith.constant 219 : index
    %632 = memref.load %arg2[%c219] : memref<256xf32, #tpu.memory_space<smem>>
    %633 = vector.broadcast %632 : f32 to vector<16x16xf32>
    %634 = arith.mulf %633, %619 : vector<16x16xf32>
    %635 = arith.addf %617, %634 : vector<16x16xf32>
    %c1_223 = arith.constant 1 : index
    %c3_224 = arith.constant 3 : index
    %c0_225 = arith.constant 0 : index
    %636 = vector.load %arg5[%c1_223, %c3_224, %c0_225] : memref<4x19x19xf32, #tpu.memory_space<vmem>>, vector<1x16x16xf32>
    %637 = vector.shape_cast %636 : vector<1x16x16xf32> to vector<16x16xf32>
    %c28 = arith.constant 28 : index
    %638 = memref.load %arg2[%c28] : memref<256xf32, #tpu.memory_space<smem>>
    %639 = vector.broadcast %638 : f32 to vector<16x16xf32>
    %640 = arith.mulf %639, %637 : vector<16x16xf32>
    %641 = arith.addf %623, %640 : vector<16x16xf32>
    %c92 = arith.constant 92 : index
    %642 = memref.load %arg2[%c92] : memref<256xf32, #tpu.memory_space<smem>>
    %643 = vector.broadcast %642 : f32 to vector<16x16xf32>
    %644 = arith.mulf %643, %637 : vector<16x16xf32>
    %645 = arith.addf %627, %644 : vector<16x16xf32>
    %c156 = arith.constant 156 : index
    %646 = memref.load %arg2[%c156] : memref<256xf32, #tpu.memory_space<smem>>
    %647 = vector.broadcast %646 : f32 to vector<16x16xf32>
    %648 = arith.mulf %647, %637 : vector<16x16xf32>
    %649 = arith.addf %631, %648 : vector<16x16xf32>
    %c220 = arith.constant 220 : index
    %650 = memref.load %arg2[%c220] : memref<256xf32, #tpu.memory_space<smem>>
    %651 = vector.broadcast %650 : f32 to vector<16x16xf32>
    %652 = arith.mulf %651, %637 : vector<16x16xf32>
    %653 = arith.addf %635, %652 : vector<16x16xf32>
    %c1_226 = arith.constant 1 : index
    %c3_227 = arith.constant 3 : index
    %c1_228 = arith.constant 1 : index
    %654 = vector.load %arg5[%c1_226, %c3_227, %c1_228] : memref<4x19x19xf32, #tpu.memory_space<vmem>>, vector<1x16x16xf32>
    %655 = vector.shape_cast %654 : vector<1x16x16xf32> to vector<16x16xf32>
    %c29 = arith.constant 29 : index
    %656 = memref.load %arg2[%c29] : memref<256xf32, #tpu.memory_space<smem>>
    %657 = vector.broadcast %656 : f32 to vector<16x16xf32>
    %658 = arith.mulf %657, %655 : vector<16x16xf32>
    %659 = arith.addf %641, %658 : vector<16x16xf32>
    %c93 = arith.constant 93 : index
    %660 = memref.load %arg2[%c93] : memref<256xf32, #tpu.memory_space<smem>>
    %661 = vector.broadcast %660 : f32 to vector<16x16xf32>
    %662 = arith.mulf %661, %655 : vector<16x16xf32>
    %663 = arith.addf %645, %662 : vector<16x16xf32>
    %c157 = arith.constant 157 : index
    %664 = memref.load %arg2[%c157] : memref<256xf32, #tpu.memory_space<smem>>
    %665 = vector.broadcast %664 : f32 to vector<16x16xf32>
    %666 = arith.mulf %665, %655 : vector<16x16xf32>
    %667 = arith.addf %649, %666 : vector<16x16xf32>
    %c221 = arith.constant 221 : index
    %668 = memref.load %arg2[%c221] : memref<256xf32, #tpu.memory_space<smem>>
    %669 = vector.broadcast %668 : f32 to vector<16x16xf32>
    %670 = arith.mulf %669, %655 : vector<16x16xf32>
    %671 = arith.addf %653, %670 : vector<16x16xf32>
    %c1_229 = arith.constant 1 : index
    %c3_230 = arith.constant 3 : index
    %c2_231 = arith.constant 2 : index
    %672 = vector.load %arg5[%c1_229, %c3_230, %c2_231] : memref<4x19x19xf32, #tpu.memory_space<vmem>>, vector<1x16x16xf32>
    %673 = vector.shape_cast %672 : vector<1x16x16xf32> to vector<16x16xf32>
    %c30 = arith.constant 30 : index
    %674 = memref.load %arg2[%c30] : memref<256xf32, #tpu.memory_space<smem>>
    %675 = vector.broadcast %674 : f32 to vector<16x16xf32>
    %676 = arith.mulf %675, %673 : vector<16x16xf32>
    %677 = arith.addf %659, %676 : vector<16x16xf32>
    %c94 = arith.constant 94 : index
    %678 = memref.load %arg2[%c94] : memref<256xf32, #tpu.memory_space<smem>>
    %679 = vector.broadcast %678 : f32 to vector<16x16xf32>
    %680 = arith.mulf %679, %673 : vector<16x16xf32>
    %681 = arith.addf %663, %680 : vector<16x16xf32>
    %c158 = arith.constant 158 : index
    %682 = memref.load %arg2[%c158] : memref<256xf32, #tpu.memory_space<smem>>
    %683 = vector.broadcast %682 : f32 to vector<16x16xf32>
    %684 = arith.mulf %683, %673 : vector<16x16xf32>
    %685 = arith.addf %667, %684 : vector<16x16xf32>
    %c222 = arith.constant 222 : index
    %686 = memref.load %arg2[%c222] : memref<256xf32, #tpu.memory_space<smem>>
    %687 = vector.broadcast %686 : f32 to vector<16x16xf32>
    %688 = arith.mulf %687, %673 : vector<16x16xf32>
    %689 = arith.addf %671, %688 : vector<16x16xf32>
    %c1_232 = arith.constant 1 : index
    %c3_233 = arith.constant 3 : index
    %c3_234 = arith.constant 3 : index
    %690 = vector.load %arg5[%c1_232, %c3_233, %c3_234] : memref<4x19x19xf32, #tpu.memory_space<vmem>>, vector<1x16x16xf32>
    %691 = vector.shape_cast %690 : vector<1x16x16xf32> to vector<16x16xf32>
    %c31 = arith.constant 31 : index
    %692 = memref.load %arg2[%c31] : memref<256xf32, #tpu.memory_space<smem>>
    %693 = vector.broadcast %692 : f32 to vector<16x16xf32>
    %694 = arith.mulf %693, %691 : vector<16x16xf32>
    %695 = arith.addf %677, %694 : vector<16x16xf32>
    %c95 = arith.constant 95 : index
    %696 = memref.load %arg2[%c95] : memref<256xf32, #tpu.memory_space<smem>>
    %697 = vector.broadcast %696 : f32 to vector<16x16xf32>
    %698 = arith.mulf %697, %691 : vector<16x16xf32>
    %699 = arith.addf %681, %698 : vector<16x16xf32>
    %c159 = arith.constant 159 : index
    %700 = memref.load %arg2[%c159] : memref<256xf32, #tpu.memory_space<smem>>
    %701 = vector.broadcast %700 : f32 to vector<16x16xf32>
    %702 = arith.mulf %701, %691 : vector<16x16xf32>
    %703 = arith.addf %685, %702 : vector<16x16xf32>
    %c223 = arith.constant 223 : index
    %704 = memref.load %arg2[%c223] : memref<256xf32, #tpu.memory_space<smem>>
    %705 = vector.broadcast %704 : f32 to vector<16x16xf32>
    %706 = arith.mulf %705, %691 : vector<16x16xf32>
    %707 = arith.addf %689, %706 : vector<16x16xf32>
    %c2_235 = arith.constant 2 : index
    %c0_236 = arith.constant 0 : index
    %c0_237 = arith.constant 0 : index
    %708 = vector.load %arg5[%c2_235, %c0_236, %c0_237] : memref<4x19x19xf32, #tpu.memory_space<vmem>>, vector<1x16x16xf32>
    %709 = vector.shape_cast %708 : vector<1x16x16xf32> to vector<16x16xf32>
    %c32 = arith.constant 32 : index
    %710 = memref.load %arg2[%c32] : memref<256xf32, #tpu.memory_space<smem>>
    %711 = vector.broadcast %710 : f32 to vector<16x16xf32>
    %712 = arith.mulf %711, %709 : vector<16x16xf32>
    %713 = arith.addf %695, %712 : vector<16x16xf32>
    %c96 = arith.constant 96 : index
    %714 = memref.load %arg2[%c96] : memref<256xf32, #tpu.memory_space<smem>>
    %715 = vector.broadcast %714 : f32 to vector<16x16xf32>
    %716 = arith.mulf %715, %709 : vector<16x16xf32>
    %717 = arith.addf %699, %716 : vector<16x16xf32>
    %c160 = arith.constant 160 : index
    %718 = memref.load %arg2[%c160] : memref<256xf32, #tpu.memory_space<smem>>
    %719 = vector.broadcast %718 : f32 to vector<16x16xf32>
    %720 = arith.mulf %719, %709 : vector<16x16xf32>
    %721 = arith.addf %703, %720 : vector<16x16xf32>
    %c224 = arith.constant 224 : index
    %722 = memref.load %arg2[%c224] : memref<256xf32, #tpu.memory_space<smem>>
    %723 = vector.broadcast %722 : f32 to vector<16x16xf32>
    %724 = arith.mulf %723, %709 : vector<16x16xf32>
    %725 = arith.addf %707, %724 : vector<16x16xf32>
    %c2_238 = arith.constant 2 : index
    %c0_239 = arith.constant 0 : index
    %c1_240 = arith.constant 1 : index
    %726 = vector.load %arg5[%c2_238, %c0_239, %c1_240] : memref<4x19x19xf32, #tpu.memory_space<vmem>>, vector<1x16x16xf32>
    %727 = vector.shape_cast %726 : vector<1x16x16xf32> to vector<16x16xf32>
    %c33 = arith.constant 33 : index
    %728 = memref.load %arg2[%c33] : memref<256xf32, #tpu.memory_space<smem>>
    %729 = vector.broadcast %728 : f32 to vector<16x16xf32>
    %730 = arith.mulf %729, %727 : vector<16x16xf32>
    %731 = arith.addf %713, %730 : vector<16x16xf32>
    %c97 = arith.constant 97 : index
    %732 = memref.load %arg2[%c97] : memref<256xf32, #tpu.memory_space<smem>>
    %733 = vector.broadcast %732 : f32 to vector<16x16xf32>
    %734 = arith.mulf %733, %727 : vector<16x16xf32>
    %735 = arith.addf %717, %734 : vector<16x16xf32>
    %c161 = arith.constant 161 : index
    %736 = memref.load %arg2[%c161] : memref<256xf32, #tpu.memory_space<smem>>
    %737 = vector.broadcast %736 : f32 to vector<16x16xf32>
    %738 = arith.mulf %737, %727 : vector<16x16xf32>
    %739 = arith.addf %721, %738 : vector<16x16xf32>
    %c225 = arith.constant 225 : index
    %740 = memref.load %arg2[%c225] : memref<256xf32, #tpu.memory_space<smem>>
    %741 = vector.broadcast %740 : f32 to vector<16x16xf32>
    %742 = arith.mulf %741, %727 : vector<16x16xf32>
    %743 = arith.addf %725, %742 : vector<16x16xf32>
    %c2_241 = arith.constant 2 : index
    %c0_242 = arith.constant 0 : index
    %c2_243 = arith.constant 2 : index
    %744 = vector.load %arg5[%c2_241, %c0_242, %c2_243] : memref<4x19x19xf32, #tpu.memory_space<vmem>>, vector<1x16x16xf32>
    %745 = vector.shape_cast %744 : vector<1x16x16xf32> to vector<16x16xf32>
    %c34 = arith.constant 34 : index
    %746 = memref.load %arg2[%c34] : memref<256xf32, #tpu.memory_space<smem>>
    %747 = vector.broadcast %746 : f32 to vector<16x16xf32>
    %748 = arith.mulf %747, %745 : vector<16x16xf32>
    %749 = arith.addf %731, %748 : vector<16x16xf32>
    %c98 = arith.constant 98 : index
    %750 = memref.load %arg2[%c98] : memref<256xf32, #tpu.memory_space<smem>>
    %751 = vector.broadcast %750 : f32 to vector<16x16xf32>
    %752 = arith.mulf %751, %745 : vector<16x16xf32>
    %753 = arith.addf %735, %752 : vector<16x16xf32>
    %c162 = arith.constant 162 : index
    %754 = memref.load %arg2[%c162] : memref<256xf32, #tpu.memory_space<smem>>
    %755 = vector.broadcast %754 : f32 to vector<16x16xf32>
    %756 = arith.mulf %755, %745 : vector<16x16xf32>
    %757 = arith.addf %739, %756 : vector<16x16xf32>
    %c226 = arith.constant 226 : index
    %758 = memref.load %arg2[%c226] : memref<256xf32, #tpu.memory_space<smem>>
    %759 = vector.broadcast %758 : f32 to vector<16x16xf32>
    %760 = arith.mulf %759, %745 : vector<16x16xf32>
    %761 = arith.addf %743, %760 : vector<16x16xf32>
    %c2_244 = arith.constant 2 : index
    %c0_245 = arith.constant 0 : index
    %c3_246 = arith.constant 3 : index
    %762 = vector.load %arg5[%c2_244, %c0_245, %c3_246] : memref<4x19x19xf32, #tpu.memory_space<vmem>>, vector<1x16x16xf32>
    %763 = vector.shape_cast %762 : vector<1x16x16xf32> to vector<16x16xf32>
    %c35 = arith.constant 35 : index
    %764 = memref.load %arg2[%c35] : memref<256xf32, #tpu.memory_space<smem>>
    %765 = vector.broadcast %764 : f32 to vector<16x16xf32>
    %766 = arith.mulf %765, %763 : vector<16x16xf32>
    %767 = arith.addf %749, %766 : vector<16x16xf32>
    %c99 = arith.constant 99 : index
    %768 = memref.load %arg2[%c99] : memref<256xf32, #tpu.memory_space<smem>>
    %769 = vector.broadcast %768 : f32 to vector<16x16xf32>
    %770 = arith.mulf %769, %763 : vector<16x16xf32>
    %771 = arith.addf %753, %770 : vector<16x16xf32>
    %c163 = arith.constant 163 : index
    %772 = memref.load %arg2[%c163] : memref<256xf32, #tpu.memory_space<smem>>
    %773 = vector.broadcast %772 : f32 to vector<16x16xf32>
    %774 = arith.mulf %773, %763 : vector<16x16xf32>
    %775 = arith.addf %757, %774 : vector<16x16xf32>
    %c227 = arith.constant 227 : index
    %776 = memref.load %arg2[%c227] : memref<256xf32, #tpu.memory_space<smem>>
    %777 = vector.broadcast %776 : f32 to vector<16x16xf32>
    %778 = arith.mulf %777, %763 : vector<16x16xf32>
    %779 = arith.addf %761, %778 : vector<16x16xf32>
    %c2_247 = arith.constant 2 : index
    %c1_248 = arith.constant 1 : index
    %c0_249 = arith.constant 0 : index
    %780 = vector.load %arg5[%c2_247, %c1_248, %c0_249] : memref<4x19x19xf32, #tpu.memory_space<vmem>>, vector<1x16x16xf32>
    %781 = vector.shape_cast %780 : vector<1x16x16xf32> to vector<16x16xf32>
    %c36 = arith.constant 36 : index
    %782 = memref.load %arg2[%c36] : memref<256xf32, #tpu.memory_space<smem>>
    %783 = vector.broadcast %782 : f32 to vector<16x16xf32>
    %784 = arith.mulf %783, %781 : vector<16x16xf32>
    %785 = arith.addf %767, %784 : vector<16x16xf32>
    %c100 = arith.constant 100 : index
    %786 = memref.load %arg2[%c100] : memref<256xf32, #tpu.memory_space<smem>>
    %787 = vector.broadcast %786 : f32 to vector<16x16xf32>
    %788 = arith.mulf %787, %781 : vector<16x16xf32>
    %789 = arith.addf %771, %788 : vector<16x16xf32>
    %c164 = arith.constant 164 : index
    %790 = memref.load %arg2[%c164] : memref<256xf32, #tpu.memory_space<smem>>
    %791 = vector.broadcast %790 : f32 to vector<16x16xf32>
    %792 = arith.mulf %791, %781 : vector<16x16xf32>
    %793 = arith.addf %775, %792 : vector<16x16xf32>
    %c228 = arith.constant 228 : index
    %794 = memref.load %arg2[%c228] : memref<256xf32, #tpu.memory_space<smem>>
    %795 = vector.broadcast %794 : f32 to vector<16x16xf32>
    %796 = arith.mulf %795, %781 : vector<16x16xf32>
    %797 = arith.addf %779, %796 : vector<16x16xf32>
    %c2_250 = arith.constant 2 : index
    %c1_251 = arith.constant 1 : index
    %c1_252 = arith.constant 1 : index
    %798 = vector.load %arg5[%c2_250, %c1_251, %c1_252] : memref<4x19x19xf32, #tpu.memory_space<vmem>>, vector<1x16x16xf32>
    %799 = vector.shape_cast %798 : vector<1x16x16xf32> to vector<16x16xf32>
    %c37 = arith.constant 37 : index
    %800 = memref.load %arg2[%c37] : memref<256xf32, #tpu.memory_space<smem>>
    %801 = vector.broadcast %800 : f32 to vector<16x16xf32>
    %802 = arith.mulf %801, %799 : vector<16x16xf32>
    %803 = arith.addf %785, %802 : vector<16x16xf32>
    %c101 = arith.constant 101 : index
    %804 = memref.load %arg2[%c101] : memref<256xf32, #tpu.memory_space<smem>>
    %805 = vector.broadcast %804 : f32 to vector<16x16xf32>
    %806 = arith.mulf %805, %799 : vector<16x16xf32>
    %807 = arith.addf %789, %806 : vector<16x16xf32>
    %c165 = arith.constant 165 : index
    %808 = memref.load %arg2[%c165] : memref<256xf32, #tpu.memory_space<smem>>
    %809 = vector.broadcast %808 : f32 to vector<16x16xf32>
    %810 = arith.mulf %809, %799 : vector<16x16xf32>
    %811 = arith.addf %793, %810 : vector<16x16xf32>
    %c229 = arith.constant 229 : index
    %812 = memref.load %arg2[%c229] : memref<256xf32, #tpu.memory_space<smem>>
    %813 = vector.broadcast %812 : f32 to vector<16x16xf32>
    %814 = arith.mulf %813, %799 : vector<16x16xf32>
    %815 = arith.addf %797, %814 : vector<16x16xf32>
    %c2_253 = arith.constant 2 : index
    %c1_254 = arith.constant 1 : index
    %c2_255 = arith.constant 2 : index
    %816 = vector.load %arg5[%c2_253, %c1_254, %c2_255] : memref<4x19x19xf32, #tpu.memory_space<vmem>>, vector<1x16x16xf32>
    %817 = vector.shape_cast %816 : vector<1x16x16xf32> to vector<16x16xf32>
    %c38 = arith.constant 38 : index
    %818 = memref.load %arg2[%c38] : memref<256xf32, #tpu.memory_space<smem>>
    %819 = vector.broadcast %818 : f32 to vector<16x16xf32>
    %820 = arith.mulf %819, %817 : vector<16x16xf32>
    %821 = arith.addf %803, %820 : vector<16x16xf32>
    %c102 = arith.constant 102 : index
    %822 = memref.load %arg2[%c102] : memref<256xf32, #tpu.memory_space<smem>>
    %823 = vector.broadcast %822 : f32 to vector<16x16xf32>
    %824 = arith.mulf %823, %817 : vector<16x16xf32>
    %825 = arith.addf %807, %824 : vector<16x16xf32>
    %c166 = arith.constant 166 : index
    %826 = memref.load %arg2[%c166] : memref<256xf32, #tpu.memory_space<smem>>
    %827 = vector.broadcast %826 : f32 to vector<16x16xf32>
    %828 = arith.mulf %827, %817 : vector<16x16xf32>
    %829 = arith.addf %811, %828 : vector<16x16xf32>
    %c230 = arith.constant 230 : index
    %830 = memref.load %arg2[%c230] : memref<256xf32, #tpu.memory_space<smem>>
    %831 = vector.broadcast %830 : f32 to vector<16x16xf32>
    %832 = arith.mulf %831, %817 : vector<16x16xf32>
    %833 = arith.addf %815, %832 : vector<16x16xf32>
    %c2_256 = arith.constant 2 : index
    %c1_257 = arith.constant 1 : index
    %c3_258 = arith.constant 3 : index
    %834 = vector.load %arg5[%c2_256, %c1_257, %c3_258] : memref<4x19x19xf32, #tpu.memory_space<vmem>>, vector<1x16x16xf32>
    %835 = vector.shape_cast %834 : vector<1x16x16xf32> to vector<16x16xf32>
    %c39 = arith.constant 39 : index
    %836 = memref.load %arg2[%c39] : memref<256xf32, #tpu.memory_space<smem>>
    %837 = vector.broadcast %836 : f32 to vector<16x16xf32>
    %838 = arith.mulf %837, %835 : vector<16x16xf32>
    %839 = arith.addf %821, %838 : vector<16x16xf32>
    %c103 = arith.constant 103 : index
    %840 = memref.load %arg2[%c103] : memref<256xf32, #tpu.memory_space<smem>>
    %841 = vector.broadcast %840 : f32 to vector<16x16xf32>
    %842 = arith.mulf %841, %835 : vector<16x16xf32>
    %843 = arith.addf %825, %842 : vector<16x16xf32>
    %c167 = arith.constant 167 : index
    %844 = memref.load %arg2[%c167] : memref<256xf32, #tpu.memory_space<smem>>
    %845 = vector.broadcast %844 : f32 to vector<16x16xf32>
    %846 = arith.mulf %845, %835 : vector<16x16xf32>
    %847 = arith.addf %829, %846 : vector<16x16xf32>
    %c231 = arith.constant 231 : index
    %848 = memref.load %arg2[%c231] : memref<256xf32, #tpu.memory_space<smem>>
    %849 = vector.broadcast %848 : f32 to vector<16x16xf32>
    %850 = arith.mulf %849, %835 : vector<16x16xf32>
    %851 = arith.addf %833, %850 : vector<16x16xf32>
    %c2_259 = arith.constant 2 : index
    %c2_260 = arith.constant 2 : index
    %c0_261 = arith.constant 0 : index
    %852 = vector.load %arg5[%c2_259, %c2_260, %c0_261] : memref<4x19x19xf32, #tpu.memory_space<vmem>>, vector<1x16x16xf32>
    %853 = vector.shape_cast %852 : vector<1x16x16xf32> to vector<16x16xf32>
    %c40 = arith.constant 40 : index
    %854 = memref.load %arg2[%c40] : memref<256xf32, #tpu.memory_space<smem>>
    %855 = vector.broadcast %854 : f32 to vector<16x16xf32>
    %856 = arith.mulf %855, %853 : vector<16x16xf32>
    %857 = arith.addf %839, %856 : vector<16x16xf32>
    %c104 = arith.constant 104 : index
    %858 = memref.load %arg2[%c104] : memref<256xf32, #tpu.memory_space<smem>>
    %859 = vector.broadcast %858 : f32 to vector<16x16xf32>
    %860 = arith.mulf %859, %853 : vector<16x16xf32>
    %861 = arith.addf %843, %860 : vector<16x16xf32>
    %c168 = arith.constant 168 : index
    %862 = memref.load %arg2[%c168] : memref<256xf32, #tpu.memory_space<smem>>
    %863 = vector.broadcast %862 : f32 to vector<16x16xf32>
    %864 = arith.mulf %863, %853 : vector<16x16xf32>
    %865 = arith.addf %847, %864 : vector<16x16xf32>
    %c232 = arith.constant 232 : index
    %866 = memref.load %arg2[%c232] : memref<256xf32, #tpu.memory_space<smem>>
    %867 = vector.broadcast %866 : f32 to vector<16x16xf32>
    %868 = arith.mulf %867, %853 : vector<16x16xf32>
    %869 = arith.addf %851, %868 : vector<16x16xf32>
    %c2_262 = arith.constant 2 : index
    %c2_263 = arith.constant 2 : index
    %c1_264 = arith.constant 1 : index
    %870 = vector.load %arg5[%c2_262, %c2_263, %c1_264] : memref<4x19x19xf32, #tpu.memory_space<vmem>>, vector<1x16x16xf32>
    %871 = vector.shape_cast %870 : vector<1x16x16xf32> to vector<16x16xf32>
    %c41 = arith.constant 41 : index
    %872 = memref.load %arg2[%c41] : memref<256xf32, #tpu.memory_space<smem>>
    %873 = vector.broadcast %872 : f32 to vector<16x16xf32>
    %874 = arith.mulf %873, %871 : vector<16x16xf32>
    %875 = arith.addf %857, %874 : vector<16x16xf32>
    %c105 = arith.constant 105 : index
    %876 = memref.load %arg2[%c105] : memref<256xf32, #tpu.memory_space<smem>>
    %877 = vector.broadcast %876 : f32 to vector<16x16xf32>
    %878 = arith.mulf %877, %871 : vector<16x16xf32>
    %879 = arith.addf %861, %878 : vector<16x16xf32>
    %c169 = arith.constant 169 : index
    %880 = memref.load %arg2[%c169] : memref<256xf32, #tpu.memory_space<smem>>
    %881 = vector.broadcast %880 : f32 to vector<16x16xf32>
    %882 = arith.mulf %881, %871 : vector<16x16xf32>
    %883 = arith.addf %865, %882 : vector<16x16xf32>
    %c233 = arith.constant 233 : index
    %884 = memref.load %arg2[%c233] : memref<256xf32, #tpu.memory_space<smem>>
    %885 = vector.broadcast %884 : f32 to vector<16x16xf32>
    %886 = arith.mulf %885, %871 : vector<16x16xf32>
    %887 = arith.addf %869, %886 : vector<16x16xf32>
    %c2_265 = arith.constant 2 : index
    %c2_266 = arith.constant 2 : index
    %c2_267 = arith.constant 2 : index
    %888 = vector.load %arg5[%c2_265, %c2_266, %c2_267] : memref<4x19x19xf32, #tpu.memory_space<vmem>>, vector<1x16x16xf32>
    %889 = vector.shape_cast %888 : vector<1x16x16xf32> to vector<16x16xf32>
    %c42 = arith.constant 42 : index
    %890 = memref.load %arg2[%c42] : memref<256xf32, #tpu.memory_space<smem>>
    %891 = vector.broadcast %890 : f32 to vector<16x16xf32>
    %892 = arith.mulf %891, %889 : vector<16x16xf32>
    %893 = arith.addf %875, %892 : vector<16x16xf32>
    %c106 = arith.constant 106 : index
    %894 = memref.load %arg2[%c106] : memref<256xf32, #tpu.memory_space<smem>>
    %895 = vector.broadcast %894 : f32 to vector<16x16xf32>
    %896 = arith.mulf %895, %889 : vector<16x16xf32>
    %897 = arith.addf %879, %896 : vector<16x16xf32>
    %c170 = arith.constant 170 : index
    %898 = memref.load %arg2[%c170] : memref<256xf32, #tpu.memory_space<smem>>
    %899 = vector.broadcast %898 : f32 to vector<16x16xf32>
    %900 = arith.mulf %899, %889 : vector<16x16xf32>
    %901 = arith.addf %883, %900 : vector<16x16xf32>
    %c234 = arith.constant 234 : index
    %902 = memref.load %arg2[%c234] : memref<256xf32, #tpu.memory_space<smem>>
    %903 = vector.broadcast %902 : f32 to vector<16x16xf32>
    %904 = arith.mulf %903, %889 : vector<16x16xf32>
    %905 = arith.addf %887, %904 : vector<16x16xf32>
    %c2_268 = arith.constant 2 : index
    %c2_269 = arith.constant 2 : index
    %c3_270 = arith.constant 3 : index
    %906 = vector.load %arg5[%c2_268, %c2_269, %c3_270] : memref<4x19x19xf32, #tpu.memory_space<vmem>>, vector<1x16x16xf32>
    %907 = vector.shape_cast %906 : vector<1x16x16xf32> to vector<16x16xf32>
    %c43 = arith.constant 43 : index
    %908 = memref.load %arg2[%c43] : memref<256xf32, #tpu.memory_space<smem>>
    %909 = vector.broadcast %908 : f32 to vector<16x16xf32>
    %910 = arith.mulf %909, %907 : vector<16x16xf32>
    %911 = arith.addf %893, %910 : vector<16x16xf32>
    %c107 = arith.constant 107 : index
    %912 = memref.load %arg2[%c107] : memref<256xf32, #tpu.memory_space<smem>>
    %913 = vector.broadcast %912 : f32 to vector<16x16xf32>
    %914 = arith.mulf %913, %907 : vector<16x16xf32>
    %915 = arith.addf %897, %914 : vector<16x16xf32>
    %c171 = arith.constant 171 : index
    %916 = memref.load %arg2[%c171] : memref<256xf32, #tpu.memory_space<smem>>
    %917 = vector.broadcast %916 : f32 to vector<16x16xf32>
    %918 = arith.mulf %917, %907 : vector<16x16xf32>
    %919 = arith.addf %901, %918 : vector<16x16xf32>
    %c235 = arith.constant 235 : index
    %920 = memref.load %arg2[%c235] : memref<256xf32, #tpu.memory_space<smem>>
    %921 = vector.broadcast %920 : f32 to vector<16x16xf32>
    %922 = arith.mulf %921, %907 : vector<16x16xf32>
    %923 = arith.addf %905, %922 : vector<16x16xf32>
    %c2_271 = arith.constant 2 : index
    %c3_272 = arith.constant 3 : index
    %c0_273 = arith.constant 0 : index
    %924 = vector.load %arg5[%c2_271, %c3_272, %c0_273] : memref<4x19x19xf32, #tpu.memory_space<vmem>>, vector<1x16x16xf32>
    %925 = vector.shape_cast %924 : vector<1x16x16xf32> to vector<16x16xf32>
    %c44 = arith.constant 44 : index
    %926 = memref.load %arg2[%c44] : memref<256xf32, #tpu.memory_space<smem>>
    %927 = vector.broadcast %926 : f32 to vector<16x16xf32>
    %928 = arith.mulf %927, %925 : vector<16x16xf32>
    %929 = arith.addf %911, %928 : vector<16x16xf32>
    %c108 = arith.constant 108 : index
    %930 = memref.load %arg2[%c108] : memref<256xf32, #tpu.memory_space<smem>>
    %931 = vector.broadcast %930 : f32 to vector<16x16xf32>
    %932 = arith.mulf %931, %925 : vector<16x16xf32>
    %933 = arith.addf %915, %932 : vector<16x16xf32>
    %c172 = arith.constant 172 : index
    %934 = memref.load %arg2[%c172] : memref<256xf32, #tpu.memory_space<smem>>
    %935 = vector.broadcast %934 : f32 to vector<16x16xf32>
    %936 = arith.mulf %935, %925 : vector<16x16xf32>
    %937 = arith.addf %919, %936 : vector<16x16xf32>
    %c236 = arith.constant 236 : index
    %938 = memref.load %arg2[%c236] : memref<256xf32, #tpu.memory_space<smem>>
    %939 = vector.broadcast %938 : f32 to vector<16x16xf32>
    %940 = arith.mulf %939, %925 : vector<16x16xf32>
    %941 = arith.addf %923, %940 : vector<16x16xf32>
    %c2_274 = arith.constant 2 : index
    %c3_275 = arith.constant 3 : index
    %c1_276 = arith.constant 1 : index
    %942 = vector.load %arg5[%c2_274, %c3_275, %c1_276] : memref<4x19x19xf32, #tpu.memory_space<vmem>>, vector<1x16x16xf32>
    %943 = vector.shape_cast %942 : vector<1x16x16xf32> to vector<16x16xf32>
    %c45 = arith.constant 45 : index
    %944 = memref.load %arg2[%c45] : memref<256xf32, #tpu.memory_space<smem>>
    %945 = vector.broadcast %944 : f32 to vector<16x16xf32>
    %946 = arith.mulf %945, %943 : vector<16x16xf32>
    %947 = arith.addf %929, %946 : vector<16x16xf32>
    %c109 = arith.constant 109 : index
    %948 = memref.load %arg2[%c109] : memref<256xf32, #tpu.memory_space<smem>>
    %949 = vector.broadcast %948 : f32 to vector<16x16xf32>
    %950 = arith.mulf %949, %943 : vector<16x16xf32>
    %951 = arith.addf %933, %950 : vector<16x16xf32>
    %c173 = arith.constant 173 : index
    %952 = memref.load %arg2[%c173] : memref<256xf32, #tpu.memory_space<smem>>
    %953 = vector.broadcast %952 : f32 to vector<16x16xf32>
    %954 = arith.mulf %953, %943 : vector<16x16xf32>
    %955 = arith.addf %937, %954 : vector<16x16xf32>
    %c237 = arith.constant 237 : index
    %956 = memref.load %arg2[%c237] : memref<256xf32, #tpu.memory_space<smem>>
    %957 = vector.broadcast %956 : f32 to vector<16x16xf32>
    %958 = arith.mulf %957, %943 : vector<16x16xf32>
    %959 = arith.addf %941, %958 : vector<16x16xf32>
    %c2_277 = arith.constant 2 : index
    %c3_278 = arith.constant 3 : index
    %c2_279 = arith.constant 2 : index
    %960 = vector.load %arg5[%c2_277, %c3_278, %c2_279] : memref<4x19x19xf32, #tpu.memory_space<vmem>>, vector<1x16x16xf32>
    %961 = vector.shape_cast %960 : vector<1x16x16xf32> to vector<16x16xf32>
    %c46 = arith.constant 46 : index
    %962 = memref.load %arg2[%c46] : memref<256xf32, #tpu.memory_space<smem>>
    %963 = vector.broadcast %962 : f32 to vector<16x16xf32>
    %964 = arith.mulf %963, %961 : vector<16x16xf32>
    %965 = arith.addf %947, %964 : vector<16x16xf32>
    %c110 = arith.constant 110 : index
    %966 = memref.load %arg2[%c110] : memref<256xf32, #tpu.memory_space<smem>>
    %967 = vector.broadcast %966 : f32 to vector<16x16xf32>
    %968 = arith.mulf %967, %961 : vector<16x16xf32>
    %969 = arith.addf %951, %968 : vector<16x16xf32>
    %c174 = arith.constant 174 : index
    %970 = memref.load %arg2[%c174] : memref<256xf32, #tpu.memory_space<smem>>
    %971 = vector.broadcast %970 : f32 to vector<16x16xf32>
    %972 = arith.mulf %971, %961 : vector<16x16xf32>
    %973 = arith.addf %955, %972 : vector<16x16xf32>
    %c238 = arith.constant 238 : index
    %974 = memref.load %arg2[%c238] : memref<256xf32, #tpu.memory_space<smem>>
    %975 = vector.broadcast %974 : f32 to vector<16x16xf32>
    %976 = arith.mulf %975, %961 : vector<16x16xf32>
    %977 = arith.addf %959, %976 : vector<16x16xf32>
    %c2_280 = arith.constant 2 : index
    %c3_281 = arith.constant 3 : index
    %c3_282 = arith.constant 3 : index
    %978 = vector.load %arg5[%c2_280, %c3_281, %c3_282] : memref<4x19x19xf32, #tpu.memory_space<vmem>>, vector<1x16x16xf32>
    %979 = vector.shape_cast %978 : vector<1x16x16xf32> to vector<16x16xf32>
    %c47 = arith.constant 47 : index
    %980 = memref.load %arg2[%c47] : memref<256xf32, #tpu.memory_space<smem>>
    %981 = vector.broadcast %980 : f32 to vector<16x16xf32>
    %982 = arith.mulf %981, %979 : vector<16x16xf32>
    %983 = arith.addf %965, %982 : vector<16x16xf32>
    %c111 = arith.constant 111 : index
    %984 = memref.load %arg2[%c111] : memref<256xf32, #tpu.memory_space<smem>>
    %985 = vector.broadcast %984 : f32 to vector<16x16xf32>
    %986 = arith.mulf %985, %979 : vector<16x16xf32>
    %987 = arith.addf %969, %986 : vector<16x16xf32>
    %c175 = arith.constant 175 : index
    %988 = memref.load %arg2[%c175] : memref<256xf32, #tpu.memory_space<smem>>
    %989 = vector.broadcast %988 : f32 to vector<16x16xf32>
    %990 = arith.mulf %989, %979 : vector<16x16xf32>
    %991 = arith.addf %973, %990 : vector<16x16xf32>
    %c239 = arith.constant 239 : index
    %992 = memref.load %arg2[%c239] : memref<256xf32, #tpu.memory_space<smem>>
    %993 = vector.broadcast %992 : f32 to vector<16x16xf32>
    %994 = arith.mulf %993, %979 : vector<16x16xf32>
    %995 = arith.addf %977, %994 : vector<16x16xf32>
    %c3_283 = arith.constant 3 : index
    %c0_284 = arith.constant 0 : index
    %c0_285 = arith.constant 0 : index
    %996 = vector.load %arg5[%c3_283, %c0_284, %c0_285] : memref<4x19x19xf32, #tpu.memory_space<vmem>>, vector<1x16x16xf32>
    %997 = vector.shape_cast %996 : vector<1x16x16xf32> to vector<16x16xf32>
    %c48 = arith.constant 48 : index
    %998 = memref.load %arg2[%c48] : memref<256xf32, #tpu.memory_space<smem>>
    %999 = vector.broadcast %998 : f32 to vector<16x16xf32>
    %1000 = arith.mulf %999, %997 : vector<16x16xf32>
    %1001 = arith.addf %983, %1000 : vector<16x16xf32>
    %c112 = arith.constant 112 : index
    %1002 = memref.load %arg2[%c112] : memref<256xf32, #tpu.memory_space<smem>>
    %1003 = vector.broadcast %1002 : f32 to vector<16x16xf32>
    %1004 = arith.mulf %1003, %997 : vector<16x16xf32>
    %1005 = arith.addf %987, %1004 : vector<16x16xf32>
    %c176 = arith.constant 176 : index
    %1006 = memref.load %arg2[%c176] : memref<256xf32, #tpu.memory_space<smem>>
    %1007 = vector.broadcast %1006 : f32 to vector<16x16xf32>
    %1008 = arith.mulf %1007, %997 : vector<16x16xf32>
    %1009 = arith.addf %991, %1008 : vector<16x16xf32>
    %c240 = arith.constant 240 : index
    %1010 = memref.load %arg2[%c240] : memref<256xf32, #tpu.memory_space<smem>>
    %1011 = vector.broadcast %1010 : f32 to vector<16x16xf32>
    %1012 = arith.mulf %1011, %997 : vector<16x16xf32>
    %1013 = arith.addf %995, %1012 : vector<16x16xf32>
    %c3_286 = arith.constant 3 : index
    %c0_287 = arith.constant 0 : index
    %c1_288 = arith.constant 1 : index
    %1014 = vector.load %arg5[%c3_286, %c0_287, %c1_288] : memref<4x19x19xf32, #tpu.memory_space<vmem>>, vector<1x16x16xf32>
    %1015 = vector.shape_cast %1014 : vector<1x16x16xf32> to vector<16x16xf32>
    %c49 = arith.constant 49 : index
    %1016 = memref.load %arg2[%c49] : memref<256xf32, #tpu.memory_space<smem>>
    %1017 = vector.broadcast %1016 : f32 to vector<16x16xf32>
    %1018 = arith.mulf %1017, %1015 : vector<16x16xf32>
    %1019 = arith.addf %1001, %1018 : vector<16x16xf32>
    %c113 = arith.constant 113 : index
    %1020 = memref.load %arg2[%c113] : memref<256xf32, #tpu.memory_space<smem>>
    %1021 = vector.broadcast %1020 : f32 to vector<16x16xf32>
    %1022 = arith.mulf %1021, %1015 : vector<16x16xf32>
    %1023 = arith.addf %1005, %1022 : vector<16x16xf32>
    %c177 = arith.constant 177 : index
    %1024 = memref.load %arg2[%c177] : memref<256xf32, #tpu.memory_space<smem>>
    %1025 = vector.broadcast %1024 : f32 to vector<16x16xf32>
    %1026 = arith.mulf %1025, %1015 : vector<16x16xf32>
    %1027 = arith.addf %1009, %1026 : vector<16x16xf32>
    %c241 = arith.constant 241 : index
    %1028 = memref.load %arg2[%c241] : memref<256xf32, #tpu.memory_space<smem>>
    %1029 = vector.broadcast %1028 : f32 to vector<16x16xf32>
    %1030 = arith.mulf %1029, %1015 : vector<16x16xf32>
    %1031 = arith.addf %1013, %1030 : vector<16x16xf32>
    %c3_289 = arith.constant 3 : index
    %c0_290 = arith.constant 0 : index
    %c2_291 = arith.constant 2 : index
    %1032 = vector.load %arg5[%c3_289, %c0_290, %c2_291] : memref<4x19x19xf32, #tpu.memory_space<vmem>>, vector<1x16x16xf32>
    %1033 = vector.shape_cast %1032 : vector<1x16x16xf32> to vector<16x16xf32>
    %c50 = arith.constant 50 : index
    %1034 = memref.load %arg2[%c50] : memref<256xf32, #tpu.memory_space<smem>>
    %1035 = vector.broadcast %1034 : f32 to vector<16x16xf32>
    %1036 = arith.mulf %1035, %1033 : vector<16x16xf32>
    %1037 = arith.addf %1019, %1036 : vector<16x16xf32>
    %c114 = arith.constant 114 : index
    %1038 = memref.load %arg2[%c114] : memref<256xf32, #tpu.memory_space<smem>>
    %1039 = vector.broadcast %1038 : f32 to vector<16x16xf32>
    %1040 = arith.mulf %1039, %1033 : vector<16x16xf32>
    %1041 = arith.addf %1023, %1040 : vector<16x16xf32>
    %c178 = arith.constant 178 : index
    %1042 = memref.load %arg2[%c178] : memref<256xf32, #tpu.memory_space<smem>>
    %1043 = vector.broadcast %1042 : f32 to vector<16x16xf32>
    %1044 = arith.mulf %1043, %1033 : vector<16x16xf32>
    %1045 = arith.addf %1027, %1044 : vector<16x16xf32>
    %c242 = arith.constant 242 : index
    %1046 = memref.load %arg2[%c242] : memref<256xf32, #tpu.memory_space<smem>>
    %1047 = vector.broadcast %1046 : f32 to vector<16x16xf32>
    %1048 = arith.mulf %1047, %1033 : vector<16x16xf32>
    %1049 = arith.addf %1031, %1048 : vector<16x16xf32>
    %c3_292 = arith.constant 3 : index
    %c0_293 = arith.constant 0 : index
    %c3_294 = arith.constant 3 : index
    %1050 = vector.load %arg5[%c3_292, %c0_293, %c3_294] : memref<4x19x19xf32, #tpu.memory_space<vmem>>, vector<1x16x16xf32>
    %1051 = vector.shape_cast %1050 : vector<1x16x16xf32> to vector<16x16xf32>
    %c51 = arith.constant 51 : index
    %1052 = memref.load %arg2[%c51] : memref<256xf32, #tpu.memory_space<smem>>
    %1053 = vector.broadcast %1052 : f32 to vector<16x16xf32>
    %1054 = arith.mulf %1053, %1051 : vector<16x16xf32>
    %1055 = arith.addf %1037, %1054 : vector<16x16xf32>
    %c115 = arith.constant 115 : index
    %1056 = memref.load %arg2[%c115] : memref<256xf32, #tpu.memory_space<smem>>
    %1057 = vector.broadcast %1056 : f32 to vector<16x16xf32>
    %1058 = arith.mulf %1057, %1051 : vector<16x16xf32>
    %1059 = arith.addf %1041, %1058 : vector<16x16xf32>
    %c179 = arith.constant 179 : index
    %1060 = memref.load %arg2[%c179] : memref<256xf32, #tpu.memory_space<smem>>
    %1061 = vector.broadcast %1060 : f32 to vector<16x16xf32>
    %1062 = arith.mulf %1061, %1051 : vector<16x16xf32>
    %1063 = arith.addf %1045, %1062 : vector<16x16xf32>
    %c243 = arith.constant 243 : index
    %1064 = memref.load %arg2[%c243] : memref<256xf32, #tpu.memory_space<smem>>
    %1065 = vector.broadcast %1064 : f32 to vector<16x16xf32>
    %1066 = arith.mulf %1065, %1051 : vector<16x16xf32>
    %1067 = arith.addf %1049, %1066 : vector<16x16xf32>
    %c3_295 = arith.constant 3 : index
    %c1_296 = arith.constant 1 : index
    %c0_297 = arith.constant 0 : index
    %1068 = vector.load %arg5[%c3_295, %c1_296, %c0_297] : memref<4x19x19xf32, #tpu.memory_space<vmem>>, vector<1x16x16xf32>
    %1069 = vector.shape_cast %1068 : vector<1x16x16xf32> to vector<16x16xf32>
    %c52 = arith.constant 52 : index
    %1070 = memref.load %arg2[%c52] : memref<256xf32, #tpu.memory_space<smem>>
    %1071 = vector.broadcast %1070 : f32 to vector<16x16xf32>
    %1072 = arith.mulf %1071, %1069 : vector<16x16xf32>
    %1073 = arith.addf %1055, %1072 : vector<16x16xf32>
    %c116 = arith.constant 116 : index
    %1074 = memref.load %arg2[%c116] : memref<256xf32, #tpu.memory_space<smem>>
    %1075 = vector.broadcast %1074 : f32 to vector<16x16xf32>
    %1076 = arith.mulf %1075, %1069 : vector<16x16xf32>
    %1077 = arith.addf %1059, %1076 : vector<16x16xf32>
    %c180 = arith.constant 180 : index
    %1078 = memref.load %arg2[%c180] : memref<256xf32, #tpu.memory_space<smem>>
    %1079 = vector.broadcast %1078 : f32 to vector<16x16xf32>
    %1080 = arith.mulf %1079, %1069 : vector<16x16xf32>
    %1081 = arith.addf %1063, %1080 : vector<16x16xf32>
    %c244 = arith.constant 244 : index
    %1082 = memref.load %arg2[%c244] : memref<256xf32, #tpu.memory_space<smem>>
    %1083 = vector.broadcast %1082 : f32 to vector<16x16xf32>
    %1084 = arith.mulf %1083, %1069 : vector<16x16xf32>
    %1085 = arith.addf %1067, %1084 : vector<16x16xf32>
    %c3_298 = arith.constant 3 : index
    %c1_299 = arith.constant 1 : index
    %c1_300 = arith.constant 1 : index
    %1086 = vector.load %arg5[%c3_298, %c1_299, %c1_300] : memref<4x19x19xf32, #tpu.memory_space<vmem>>, vector<1x16x16xf32>
    %1087 = vector.shape_cast %1086 : vector<1x16x16xf32> to vector<16x16xf32>
    %c53 = arith.constant 53 : index
    %1088 = memref.load %arg2[%c53] : memref<256xf32, #tpu.memory_space<smem>>
    %1089 = vector.broadcast %1088 : f32 to vector<16x16xf32>
    %1090 = arith.mulf %1089, %1087 : vector<16x16xf32>
    %1091 = arith.addf %1073, %1090 : vector<16x16xf32>
    %c117 = arith.constant 117 : index
    %1092 = memref.load %arg2[%c117] : memref<256xf32, #tpu.memory_space<smem>>
    %1093 = vector.broadcast %1092 : f32 to vector<16x16xf32>
    %1094 = arith.mulf %1093, %1087 : vector<16x16xf32>
    %1095 = arith.addf %1077, %1094 : vector<16x16xf32>
    %c181 = arith.constant 181 : index
    %1096 = memref.load %arg2[%c181] : memref<256xf32, #tpu.memory_space<smem>>
    %1097 = vector.broadcast %1096 : f32 to vector<16x16xf32>
    %1098 = arith.mulf %1097, %1087 : vector<16x16xf32>
    %1099 = arith.addf %1081, %1098 : vector<16x16xf32>
    %c245 = arith.constant 245 : index
    %1100 = memref.load %arg2[%c245] : memref<256xf32, #tpu.memory_space<smem>>
    %1101 = vector.broadcast %1100 : f32 to vector<16x16xf32>
    %1102 = arith.mulf %1101, %1087 : vector<16x16xf32>
    %1103 = arith.addf %1085, %1102 : vector<16x16xf32>
    %c3_301 = arith.constant 3 : index
    %c1_302 = arith.constant 1 : index
    %c2_303 = arith.constant 2 : index
    %1104 = vector.load %arg5[%c3_301, %c1_302, %c2_303] : memref<4x19x19xf32, #tpu.memory_space<vmem>>, vector<1x16x16xf32>
    %1105 = vector.shape_cast %1104 : vector<1x16x16xf32> to vector<16x16xf32>
    %c54 = arith.constant 54 : index
    %1106 = memref.load %arg2[%c54] : memref<256xf32, #tpu.memory_space<smem>>
    %1107 = vector.broadcast %1106 : f32 to vector<16x16xf32>
    %1108 = arith.mulf %1107, %1105 : vector<16x16xf32>
    %1109 = arith.addf %1091, %1108 : vector<16x16xf32>
    %c118 = arith.constant 118 : index
    %1110 = memref.load %arg2[%c118] : memref<256xf32, #tpu.memory_space<smem>>
    %1111 = vector.broadcast %1110 : f32 to vector<16x16xf32>
    %1112 = arith.mulf %1111, %1105 : vector<16x16xf32>
    %1113 = arith.addf %1095, %1112 : vector<16x16xf32>
    %c182 = arith.constant 182 : index
    %1114 = memref.load %arg2[%c182] : memref<256xf32, #tpu.memory_space<smem>>
    %1115 = vector.broadcast %1114 : f32 to vector<16x16xf32>
    %1116 = arith.mulf %1115, %1105 : vector<16x16xf32>
    %1117 = arith.addf %1099, %1116 : vector<16x16xf32>
    %c246 = arith.constant 246 : index
    %1118 = memref.load %arg2[%c246] : memref<256xf32, #tpu.memory_space<smem>>
    %1119 = vector.broadcast %1118 : f32 to vector<16x16xf32>
    %1120 = arith.mulf %1119, %1105 : vector<16x16xf32>
    %1121 = arith.addf %1103, %1120 : vector<16x16xf32>
    %c3_304 = arith.constant 3 : index
    %c1_305 = arith.constant 1 : index
    %c3_306 = arith.constant 3 : index
    %1122 = vector.load %arg5[%c3_304, %c1_305, %c3_306] : memref<4x19x19xf32, #tpu.memory_space<vmem>>, vector<1x16x16xf32>
    %1123 = vector.shape_cast %1122 : vector<1x16x16xf32> to vector<16x16xf32>
    %c55 = arith.constant 55 : index
    %1124 = memref.load %arg2[%c55] : memref<256xf32, #tpu.memory_space<smem>>
    %1125 = vector.broadcast %1124 : f32 to vector<16x16xf32>
    %1126 = arith.mulf %1125, %1123 : vector<16x16xf32>
    %1127 = arith.addf %1109, %1126 : vector<16x16xf32>
    %c119 = arith.constant 119 : index
    %1128 = memref.load %arg2[%c119] : memref<256xf32, #tpu.memory_space<smem>>
    %1129 = vector.broadcast %1128 : f32 to vector<16x16xf32>
    %1130 = arith.mulf %1129, %1123 : vector<16x16xf32>
    %1131 = arith.addf %1113, %1130 : vector<16x16xf32>
    %c183 = arith.constant 183 : index
    %1132 = memref.load %arg2[%c183] : memref<256xf32, #tpu.memory_space<smem>>
    %1133 = vector.broadcast %1132 : f32 to vector<16x16xf32>
    %1134 = arith.mulf %1133, %1123 : vector<16x16xf32>
    %1135 = arith.addf %1117, %1134 : vector<16x16xf32>
    %c247 = arith.constant 247 : index
    %1136 = memref.load %arg2[%c247] : memref<256xf32, #tpu.memory_space<smem>>
    %1137 = vector.broadcast %1136 : f32 to vector<16x16xf32>
    %1138 = arith.mulf %1137, %1123 : vector<16x16xf32>
    %1139 = arith.addf %1121, %1138 : vector<16x16xf32>
    %c3_307 = arith.constant 3 : index
    %c2_308 = arith.constant 2 : index
    %c0_309 = arith.constant 0 : index
    %1140 = vector.load %arg5[%c3_307, %c2_308, %c0_309] : memref<4x19x19xf32, #tpu.memory_space<vmem>>, vector<1x16x16xf32>
    %1141 = vector.shape_cast %1140 : vector<1x16x16xf32> to vector<16x16xf32>
    %c56 = arith.constant 56 : index
    %1142 = memref.load %arg2[%c56] : memref<256xf32, #tpu.memory_space<smem>>
    %1143 = vector.broadcast %1142 : f32 to vector<16x16xf32>
    %1144 = arith.mulf %1143, %1141 : vector<16x16xf32>
    %1145 = arith.addf %1127, %1144 : vector<16x16xf32>
    %c120 = arith.constant 120 : index
    %1146 = memref.load %arg2[%c120] : memref<256xf32, #tpu.memory_space<smem>>
    %1147 = vector.broadcast %1146 : f32 to vector<16x16xf32>
    %1148 = arith.mulf %1147, %1141 : vector<16x16xf32>
    %1149 = arith.addf %1131, %1148 : vector<16x16xf32>
    %c184 = arith.constant 184 : index
    %1150 = memref.load %arg2[%c184] : memref<256xf32, #tpu.memory_space<smem>>
    %1151 = vector.broadcast %1150 : f32 to vector<16x16xf32>
    %1152 = arith.mulf %1151, %1141 : vector<16x16xf32>
    %1153 = arith.addf %1135, %1152 : vector<16x16xf32>
    %c248 = arith.constant 248 : index
    %1154 = memref.load %arg2[%c248] : memref<256xf32, #tpu.memory_space<smem>>
    %1155 = vector.broadcast %1154 : f32 to vector<16x16xf32>
    %1156 = arith.mulf %1155, %1141 : vector<16x16xf32>
    %1157 = arith.addf %1139, %1156 : vector<16x16xf32>
    %c3_310 = arith.constant 3 : index
    %c2_311 = arith.constant 2 : index
    %c1_312 = arith.constant 1 : index
    %1158 = vector.load %arg5[%c3_310, %c2_311, %c1_312] : memref<4x19x19xf32, #tpu.memory_space<vmem>>, vector<1x16x16xf32>
    %1159 = vector.shape_cast %1158 : vector<1x16x16xf32> to vector<16x16xf32>
    %c57 = arith.constant 57 : index
    %1160 = memref.load %arg2[%c57] : memref<256xf32, #tpu.memory_space<smem>>
    %1161 = vector.broadcast %1160 : f32 to vector<16x16xf32>
    %1162 = arith.mulf %1161, %1159 : vector<16x16xf32>
    %1163 = arith.addf %1145, %1162 : vector<16x16xf32>
    %c121 = arith.constant 121 : index
    %1164 = memref.load %arg2[%c121] : memref<256xf32, #tpu.memory_space<smem>>
    %1165 = vector.broadcast %1164 : f32 to vector<16x16xf32>
    %1166 = arith.mulf %1165, %1159 : vector<16x16xf32>
    %1167 = arith.addf %1149, %1166 : vector<16x16xf32>
    %c185 = arith.constant 185 : index
    %1168 = memref.load %arg2[%c185] : memref<256xf32, #tpu.memory_space<smem>>
    %1169 = vector.broadcast %1168 : f32 to vector<16x16xf32>
    %1170 = arith.mulf %1169, %1159 : vector<16x16xf32>
    %1171 = arith.addf %1153, %1170 : vector<16x16xf32>
    %c249 = arith.constant 249 : index
    %1172 = memref.load %arg2[%c249] : memref<256xf32, #tpu.memory_space<smem>>
    %1173 = vector.broadcast %1172 : f32 to vector<16x16xf32>
    %1174 = arith.mulf %1173, %1159 : vector<16x16xf32>
    %1175 = arith.addf %1157, %1174 : vector<16x16xf32>
    %c3_313 = arith.constant 3 : index
    %c2_314 = arith.constant 2 : index
    %c2_315 = arith.constant 2 : index
    %1176 = vector.load %arg5[%c3_313, %c2_314, %c2_315] : memref<4x19x19xf32, #tpu.memory_space<vmem>>, vector<1x16x16xf32>
    %1177 = vector.shape_cast %1176 : vector<1x16x16xf32> to vector<16x16xf32>
    %c58 = arith.constant 58 : index
    %1178 = memref.load %arg2[%c58] : memref<256xf32, #tpu.memory_space<smem>>
    %1179 = vector.broadcast %1178 : f32 to vector<16x16xf32>
    %1180 = arith.mulf %1179, %1177 : vector<16x16xf32>
    %1181 = arith.addf %1163, %1180 : vector<16x16xf32>
    %c122 = arith.constant 122 : index
    %1182 = memref.load %arg2[%c122] : memref<256xf32, #tpu.memory_space<smem>>
    %1183 = vector.broadcast %1182 : f32 to vector<16x16xf32>
    %1184 = arith.mulf %1183, %1177 : vector<16x16xf32>
    %1185 = arith.addf %1167, %1184 : vector<16x16xf32>
    %c186 = arith.constant 186 : index
    %1186 = memref.load %arg2[%c186] : memref<256xf32, #tpu.memory_space<smem>>
    %1187 = vector.broadcast %1186 : f32 to vector<16x16xf32>
    %1188 = arith.mulf %1187, %1177 : vector<16x16xf32>
    %1189 = arith.addf %1171, %1188 : vector<16x16xf32>
    %c250 = arith.constant 250 : index
    %1190 = memref.load %arg2[%c250] : memref<256xf32, #tpu.memory_space<smem>>
    %1191 = vector.broadcast %1190 : f32 to vector<16x16xf32>
    %1192 = arith.mulf %1191, %1177 : vector<16x16xf32>
    %1193 = arith.addf %1175, %1192 : vector<16x16xf32>
    %c3_316 = arith.constant 3 : index
    %c2_317 = arith.constant 2 : index
    %c3_318 = arith.constant 3 : index
    %1194 = vector.load %arg5[%c3_316, %c2_317, %c3_318] : memref<4x19x19xf32, #tpu.memory_space<vmem>>, vector<1x16x16xf32>
    %1195 = vector.shape_cast %1194 : vector<1x16x16xf32> to vector<16x16xf32>
    %c59 = arith.constant 59 : index
    %1196 = memref.load %arg2[%c59] : memref<256xf32, #tpu.memory_space<smem>>
    %1197 = vector.broadcast %1196 : f32 to vector<16x16xf32>
    %1198 = arith.mulf %1197, %1195 : vector<16x16xf32>
    %1199 = arith.addf %1181, %1198 : vector<16x16xf32>
    %c123 = arith.constant 123 : index
    %1200 = memref.load %arg2[%c123] : memref<256xf32, #tpu.memory_space<smem>>
    %1201 = vector.broadcast %1200 : f32 to vector<16x16xf32>
    %1202 = arith.mulf %1201, %1195 : vector<16x16xf32>
    %1203 = arith.addf %1185, %1202 : vector<16x16xf32>
    %c187 = arith.constant 187 : index
    %1204 = memref.load %arg2[%c187] : memref<256xf32, #tpu.memory_space<smem>>
    %1205 = vector.broadcast %1204 : f32 to vector<16x16xf32>
    %1206 = arith.mulf %1205, %1195 : vector<16x16xf32>
    %1207 = arith.addf %1189, %1206 : vector<16x16xf32>
    %c251 = arith.constant 251 : index
    %1208 = memref.load %arg2[%c251] : memref<256xf32, #tpu.memory_space<smem>>
    %1209 = vector.broadcast %1208 : f32 to vector<16x16xf32>
    %1210 = arith.mulf %1209, %1195 : vector<16x16xf32>
    %1211 = arith.addf %1193, %1210 : vector<16x16xf32>
    %c3_319 = arith.constant 3 : index
    %c3_320 = arith.constant 3 : index
    %c0_321 = arith.constant 0 : index
    %1212 = vector.load %arg5[%c3_319, %c3_320, %c0_321] : memref<4x19x19xf32, #tpu.memory_space<vmem>>, vector<1x16x16xf32>
    %1213 = vector.shape_cast %1212 : vector<1x16x16xf32> to vector<16x16xf32>
    %c60 = arith.constant 60 : index
    %1214 = memref.load %arg2[%c60] : memref<256xf32, #tpu.memory_space<smem>>
    %1215 = vector.broadcast %1214 : f32 to vector<16x16xf32>
    %1216 = arith.mulf %1215, %1213 : vector<16x16xf32>
    %1217 = arith.addf %1199, %1216 : vector<16x16xf32>
    %c124 = arith.constant 124 : index
    %1218 = memref.load %arg2[%c124] : memref<256xf32, #tpu.memory_space<smem>>
    %1219 = vector.broadcast %1218 : f32 to vector<16x16xf32>
    %1220 = arith.mulf %1219, %1213 : vector<16x16xf32>
    %1221 = arith.addf %1203, %1220 : vector<16x16xf32>
    %c188 = arith.constant 188 : index
    %1222 = memref.load %arg2[%c188] : memref<256xf32, #tpu.memory_space<smem>>
    %1223 = vector.broadcast %1222 : f32 to vector<16x16xf32>
    %1224 = arith.mulf %1223, %1213 : vector<16x16xf32>
    %1225 = arith.addf %1207, %1224 : vector<16x16xf32>
    %c252 = arith.constant 252 : index
    %1226 = memref.load %arg2[%c252] : memref<256xf32, #tpu.memory_space<smem>>
    %1227 = vector.broadcast %1226 : f32 to vector<16x16xf32>
    %1228 = arith.mulf %1227, %1213 : vector<16x16xf32>
    %1229 = arith.addf %1211, %1228 : vector<16x16xf32>
    %c3_322 = arith.constant 3 : index
    %c3_323 = arith.constant 3 : index
    %c1_324 = arith.constant 1 : index
    %1230 = vector.load %arg5[%c3_322, %c3_323, %c1_324] : memref<4x19x19xf32, #tpu.memory_space<vmem>>, vector<1x16x16xf32>
    %1231 = vector.shape_cast %1230 : vector<1x16x16xf32> to vector<16x16xf32>
    %c61 = arith.constant 61 : index
    %1232 = memref.load %arg2[%c61] : memref<256xf32, #tpu.memory_space<smem>>
    %1233 = vector.broadcast %1232 : f32 to vector<16x16xf32>
    %1234 = arith.mulf %1233, %1231 : vector<16x16xf32>
    %1235 = arith.addf %1217, %1234 : vector<16x16xf32>
    %c125 = arith.constant 125 : index
    %1236 = memref.load %arg2[%c125] : memref<256xf32, #tpu.memory_space<smem>>
    %1237 = vector.broadcast %1236 : f32 to vector<16x16xf32>
    %1238 = arith.mulf %1237, %1231 : vector<16x16xf32>
    %1239 = arith.addf %1221, %1238 : vector<16x16xf32>
    %c189 = arith.constant 189 : index
    %1240 = memref.load %arg2[%c189] : memref<256xf32, #tpu.memory_space<smem>>
    %1241 = vector.broadcast %1240 : f32 to vector<16x16xf32>
    %1242 = arith.mulf %1241, %1231 : vector<16x16xf32>
    %1243 = arith.addf %1225, %1242 : vector<16x16xf32>
    %c253 = arith.constant 253 : index
    %1244 = memref.load %arg2[%c253] : memref<256xf32, #tpu.memory_space<smem>>
    %1245 = vector.broadcast %1244 : f32 to vector<16x16xf32>
    %1246 = arith.mulf %1245, %1231 : vector<16x16xf32>
    %1247 = arith.addf %1229, %1246 : vector<16x16xf32>
    %c3_325 = arith.constant 3 : index
    %c3_326 = arith.constant 3 : index
    %c2_327 = arith.constant 2 : index
    %1248 = vector.load %arg5[%c3_325, %c3_326, %c2_327] : memref<4x19x19xf32, #tpu.memory_space<vmem>>, vector<1x16x16xf32>
    %1249 = vector.shape_cast %1248 : vector<1x16x16xf32> to vector<16x16xf32>
    %c62 = arith.constant 62 : index
    %1250 = memref.load %arg2[%c62] : memref<256xf32, #tpu.memory_space<smem>>
    %1251 = vector.broadcast %1250 : f32 to vector<16x16xf32>
    %1252 = arith.mulf %1251, %1249 : vector<16x16xf32>
    %1253 = arith.addf %1235, %1252 : vector<16x16xf32>
    %c126 = arith.constant 126 : index
    %1254 = memref.load %arg2[%c126] : memref<256xf32, #tpu.memory_space<smem>>
    %1255 = vector.broadcast %1254 : f32 to vector<16x16xf32>
    %1256 = arith.mulf %1255, %1249 : vector<16x16xf32>
    %1257 = arith.addf %1239, %1256 : vector<16x16xf32>
    %c190 = arith.constant 190 : index
    %1258 = memref.load %arg2[%c190] : memref<256xf32, #tpu.memory_space<smem>>
    %1259 = vector.broadcast %1258 : f32 to vector<16x16xf32>
    %1260 = arith.mulf %1259, %1249 : vector<16x16xf32>
    %1261 = arith.addf %1243, %1260 : vector<16x16xf32>
    %c254 = arith.constant 254 : index
    %1262 = memref.load %arg2[%c254] : memref<256xf32, #tpu.memory_space<smem>>
    %1263 = vector.broadcast %1262 : f32 to vector<16x16xf32>
    %1264 = arith.mulf %1263, %1249 : vector<16x16xf32>
    %1265 = arith.addf %1247, %1264 : vector<16x16xf32>
    %c3_328 = arith.constant 3 : index
    %c3_329 = arith.constant 3 : index
    %c3_330 = arith.constant 3 : index
    %1266 = vector.load %arg5[%c3_328, %c3_329, %c3_330] : memref<4x19x19xf32, #tpu.memory_space<vmem>>, vector<1x16x16xf32>
    %1267 = vector.shape_cast %1266 : vector<1x16x16xf32> to vector<16x16xf32>
    %c63 = arith.constant 63 : index
    %1268 = memref.load %arg2[%c63] : memref<256xf32, #tpu.memory_space<smem>>
    %1269 = vector.broadcast %1268 : f32 to vector<16x16xf32>
    %1270 = arith.mulf %1269, %1267 : vector<16x16xf32>
    %1271 = arith.addf %1253, %1270 : vector<16x16xf32>
    %c127 = arith.constant 127 : index
    %1272 = memref.load %arg2[%c127] : memref<256xf32, #tpu.memory_space<smem>>
    %1273 = vector.broadcast %1272 : f32 to vector<16x16xf32>
    %1274 = arith.mulf %1273, %1267 : vector<16x16xf32>
    %1275 = arith.addf %1257, %1274 : vector<16x16xf32>
    %c191 = arith.constant 191 : index
    %1276 = memref.load %arg2[%c191] : memref<256xf32, #tpu.memory_space<smem>>
    %1277 = vector.broadcast %1276 : f32 to vector<16x16xf32>
    %1278 = arith.mulf %1277, %1267 : vector<16x16xf32>
    %1279 = arith.addf %1261, %1278 : vector<16x16xf32>
    %c255 = arith.constant 255 : index
    %1280 = memref.load %arg2[%c255] : memref<256xf32, #tpu.memory_space<smem>>
    %1281 = vector.broadcast %1280 : f32 to vector<16x16xf32>
    %1282 = arith.mulf %1281, %1267 : vector<16x16xf32>
    %1283 = arith.addf %1265, %1282 : vector<16x16xf32>
    %1284 = math.tanh %1271 : vector<16x16xf32>
    %1285 = math.tanh %1275 : vector<16x16xf32>
    %1286 = math.tanh %1279 : vector<16x16xf32>
    %1287 = math.tanh %1283 : vector<16x16xf32>
    %c0_331 = arith.constant 0 : index
    %c1_332 = arith.constant 1 : index
    %c0_333 = arith.constant 0 : index
    %c0_334 = arith.constant 0 : index
    %1288 = vector.load %arg1[%c0_331, %c1_332, %c0_333, %c0_334] : memref<4x2x16x16xf32, #tpu.memory_space<vmem>>, vector<1x1x16x16xf32>
    %1289 = vector.shape_cast %1288 : vector<1x1x16x16xf32> to vector<16x16xf32>
    %1290 = arith.subf %1289, %1284 : vector<16x16xf32>
    %c1_335 = arith.constant 1 : index
    %c1_336 = arith.constant 1 : index
    %c0_337 = arith.constant 0 : index
    %c0_338 = arith.constant 0 : index
    %1291 = vector.load %arg1[%c1_335, %c1_336, %c0_337, %c0_338] : memref<4x2x16x16xf32, #tpu.memory_space<vmem>>, vector<1x1x16x16xf32>
    %1292 = vector.shape_cast %1291 : vector<1x1x16x16xf32> to vector<16x16xf32>
    %1293 = arith.subf %1292, %1285 : vector<16x16xf32>
    %c2_339 = arith.constant 2 : index
    %c1_340 = arith.constant 1 : index
    %c0_341 = arith.constant 0 : index
    %c0_342 = arith.constant 0 : index
    %1294 = vector.load %arg1[%c2_339, %c1_340, %c0_341, %c0_342] : memref<4x2x16x16xf32, #tpu.memory_space<vmem>>, vector<1x1x16x16xf32>
    %1295 = vector.shape_cast %1294 : vector<1x1x16x16xf32> to vector<16x16xf32>
    %1296 = arith.subf %1295, %1286 : vector<16x16xf32>
    %c3_343 = arith.constant 3 : index
    %c1_344 = arith.constant 1 : index
    %c0_345 = arith.constant 0 : index
    %c0_346 = arith.constant 0 : index
    %1297 = vector.load %arg1[%c3_343, %c1_344, %c0_345, %c0_346] : memref<4x2x16x16xf32, #tpu.memory_space<vmem>>, vector<1x1x16x16xf32>
    %1298 = vector.shape_cast %1297 : vector<1x1x16x16xf32> to vector<16x16xf32>
    %1299 = arith.subf %1298, %1287 : vector<16x16xf32>
    %c0_347 = arith.constant 0 : index
    %c2_348 = arith.constant 2 : index
    %c2_349 = arith.constant 2 : index
    %1300 = vector.load %arg5[%c0_347, %c2_348, %c2_349] : memref<4x19x19xf32, #tpu.memory_space<vmem>>, vector<1x16x16xf32>
    %1301 = vector.shape_cast %1300 : vector<1x16x16xf32> to vector<16x16xf32>
    %1302 = vector.shape_cast %1290 : vector<16x16xf32> to vector<1x16x16xf32>
    tpu.vector_store %arg5[%c0_347, %c2_348, %c2_349], %1302 {strides = array<i32>} : memref<4x19x19xf32, #tpu.memory_space<vmem>>, vector<1x16x16xf32>,
    %1303 = vector.extract_strided_slice %1290 {offsets = [2, 0], sizes = [1, 16], strides = [1, 1]} : vector<16x16xf32> to vector<1x16xf32>
    %c0_350 = arith.constant 0 : index
    %c0_351 = arith.constant 0 : index
    %c2_352 = arith.constant 2 : index
    %1304 = vector.load %arg5[%c0_350, %c0_351, %c2_352] : memref<4x19x19xf32, #tpu.memory_space<vmem>>, vector<1x1x16xf32>
    %1305 = vector.shape_cast %1304 : vector<1x1x16xf32> to vector<1x16xf32>
    %1306 = vector.shape_cast %1303 : vector<1x16xf32> to vector<1x1x16xf32>
    tpu.vector_store %arg5[%c0_350, %c0_351, %c2_352], %1306 {strides = array<i32>} : memref<4x19x19xf32, #tpu.memory_space<vmem>>, vector<1x1x16xf32>,
    %1307 = vector.extract_strided_slice %1290 {offsets = [1, 0], sizes = [1, 16], strides = [1, 1]} : vector<16x16xf32> to vector<1x16xf32>
    %c0_353 = arith.constant 0 : index
    %c1_354 = arith.constant 1 : index
    %c2_355 = arith.constant 2 : index
    %1308 = vector.load %arg5[%c0_353, %c1_354, %c2_355] : memref<4x19x19xf32, #tpu.memory_space<vmem>>, vector<1x1x16xf32>
    %1309 = vector.shape_cast %1308 : vector<1x1x16xf32> to vector<1x16xf32>
    %1310 = vector.shape_cast %1307 : vector<1x16xf32> to vector<1x1x16xf32>
    tpu.vector_store %arg5[%c0_353, %c1_354, %c2_355], %1310 {strides = array<i32>} : memref<4x19x19xf32, #tpu.memory_space<vmem>>, vector<1x1x16xf32>,
    %1311 = vector.extract_strided_slice %1290 {offsets = [14, 0], sizes = [1, 16], strides = [1, 1]} : vector<16x16xf32> to vector<1x16xf32>
    %c0_356 = arith.constant 0 : index
    %c18_357 = arith.constant 18 : index
    %c2_358 = arith.constant 2 : index
    %1312 = vector.load %arg5[%c0_356, %c18_357, %c2_358] : memref<4x19x19xf32, #tpu.memory_space<vmem>>, vector<1x1x16xf32>
    %1313 = vector.shape_cast %1312 : vector<1x1x16xf32> to vector<1x16xf32>
    %1314 = vector.shape_cast %1311 : vector<1x16xf32> to vector<1x1x16xf32>
    tpu.vector_store %arg5[%c0_356, %c18_357, %c2_358], %1314 {strides = array<i32>} : memref<4x19x19xf32, #tpu.memory_space<vmem>>, vector<1x1x16xf32>,
    %c0_359 = arith.constant 0 : index
    %c0_360 = arith.constant 0 : index
    %c4_361 = arith.constant 4 : index
    %1315 = vector.load %arg5[%c0_359, %c0_360, %c4_361] : memref<4x19x19xf32, #tpu.memory_space<vmem>>, vector<1x19x1xf32>
    %1316 = vector.shape_cast %1315 : vector<1x19x1xf32> to vector<19x1xf32>
    %c0_362 = arith.constant 0 : index
    %c0_363 = arith.constant 0 : index
    %c0_364 = arith.constant 0 : index
    %1317 = vector.load %arg5[%c0_362, %c0_363, %c0_364] : memref<4x19x19xf32, #tpu.memory_space<vmem>>, vector<1x19x1xf32>
    %1318 = vector.shape_cast %1317 : vector<1x19x1xf32> to vector<19x1xf32>
    %1319 = vector.shape_cast %1316 : vector<19x1xf32> to vector<1x19x1xf32>
    tpu.vector_store %arg5[%c0_362, %c0_363, %c0_364], %1319 {strides = array<i32>} : memref<4x19x19xf32, #tpu.memory_space<vmem>>, vector<1x19x1xf32>,
    %c0_365 = arith.constant 0 : index
    %c0_366 = arith.constant 0 : index
    %c3_367 = arith.constant 3 : index
    %1320 = vector.load %arg5[%c0_365, %c0_366, %c3_367] : memref<4x19x19xf32, #tpu.memory_space<vmem>>, vector<1x19x1xf32>
    %1321 = vector.shape_cast %1320 : vector<1x19x1xf32> to vector<19x1xf32>
    %c0_368 = arith.constant 0 : index
    %c0_369 = arith.constant 0 : index
    %c1_370 = arith.constant 1 : index
    %1322 = vector.load %arg5[%c0_368, %c0_369, %c1_370] : memref<4x19x19xf32, #tpu.memory_space<vmem>>, vector<1x19x1xf32>
    %1323 = vector.shape_cast %1322 : vector<1x19x1xf32> to vector<19x1xf32>
    %1324 = vector.shape_cast %1321 : vector<19x1xf32> to vector<1x19x1xf32>
    tpu.vector_store %arg5[%c0_368, %c0_369, %c1_370], %1324 {strides = array<i32>} : memref<4x19x19xf32, #tpu.memory_space<vmem>>, vector<1x19x1xf32>,
    %c0_371 = arith.constant 0 : index
    %c0_372 = arith.constant 0 : index
    %c16_373 = arith.constant 16 : index
    %1325 = vector.load %arg5[%c0_371, %c0_372, %c16_373] : memref<4x19x19xf32, #tpu.memory_space<vmem>>, vector<1x19x1xf32>
    %1326 = vector.shape_cast %1325 : vector<1x19x1xf32> to vector<19x1xf32>
    %c0_374 = arith.constant 0 : index
    %c0_375 = arith.constant 0 : index
    %c18_376 = arith.constant 18 : index
    %1327 = vector.load %arg5[%c0_374, %c0_375, %c18_376] : memref<4x19x19xf32, #tpu.memory_space<vmem>>, vector<1x19x1xf32>
    %1328 = vector.shape_cast %1327 : vector<1x19x1xf32> to vector<19x1xf32>
    %1329 = vector.shape_cast %1326 : vector<19x1xf32> to vector<1x19x1xf32>
    tpu.vector_store %arg5[%c0_374, %c0_375, %c18_376], %1329 {strides = array<i32>} : memref<4x19x19xf32, #tpu.memory_space<vmem>>, vector<1x19x1xf32>,
    %c1_377 = arith.constant 1 : index
    %c2_378 = arith.constant 2 : index
    %c2_379 = arith.constant 2 : index
    %1330 = vector.load %arg5[%c1_377, %c2_378, %c2_379] : memref<4x19x19xf32, #tpu.memory_space<vmem>>, vector<1x16x16xf32>
    %1331 = vector.shape_cast %1330 : vector<1x16x16xf32> to vector<16x16xf32>
    %1332 = vector.shape_cast %1293 : vector<16x16xf32> to vector<1x16x16xf32>
    tpu.vector_store %arg5[%c1_377, %c2_378, %c2_379], %1332 {strides = array<i32>} : memref<4x19x19xf32, #tpu.memory_space<vmem>>, vector<1x16x16xf32>,
    %1333 = vector.extract_strided_slice %1293 {offsets = [2, 0], sizes = [1, 16], strides = [1, 1]} : vector<16x16xf32> to vector<1x16xf32>
    %c1_380 = arith.constant 1 : index
    %c0_381 = arith.constant 0 : index
    %c2_382 = arith.constant 2 : index
    %1334 = vector.load %arg5[%c1_380, %c0_381, %c2_382] : memref<4x19x19xf32, #tpu.memory_space<vmem>>, vector<1x1x16xf32>
    %1335 = vector.shape_cast %1334 : vector<1x1x16xf32> to vector<1x16xf32>
    %1336 = vector.shape_cast %1333 : vector<1x16xf32> to vector<1x1x16xf32>
    tpu.vector_store %arg5[%c1_380, %c0_381, %c2_382], %1336 {strides = array<i32>} : memref<4x19x19xf32, #tpu.memory_space<vmem>>, vector<1x1x16xf32>,
    %1337 = vector.extract_strided_slice %1293 {offsets = [1, 0], sizes = [1, 16], strides = [1, 1]} : vector<16x16xf32> to vector<1x16xf32>
    %c1_383 = arith.constant 1 : index
    %c1_384 = arith.constant 1 : index
    %c2_385 = arith.constant 2 : index
    %1338 = vector.load %arg5[%c1_383, %c1_384, %c2_385] : memref<4x19x19xf32, #tpu.memory_space<vmem>>, vector<1x1x16xf32>
    %1339 = vector.shape_cast %1338 : vector<1x1x16xf32> to vector<1x16xf32>
    %1340 = vector.shape_cast %1337 : vector<1x16xf32> to vector<1x1x16xf32>
    tpu.vector_store %arg5[%c1_383, %c1_384, %c2_385], %1340 {strides = array<i32>} : memref<4x19x19xf32, #tpu.memory_space<vmem>>, vector<1x1x16xf32>,
    %1341 = vector.extract_strided_slice %1293 {offsets = [14, 0], sizes = [1, 16], strides = [1, 1]} : vector<16x16xf32> to vector<1x16xf32>
    %c1_386 = arith.constant 1 : index
    %c18_387 = arith.constant 18 : index
    %c2_388 = arith.constant 2 : index
    %1342 = vector.load %arg5[%c1_386, %c18_387, %c2_388] : memref<4x19x19xf32, #tpu.memory_space<vmem>>, vector<1x1x16xf32>
    %1343 = vector.shape_cast %1342 : vector<1x1x16xf32> to vector<1x16xf32>
    %1344 = vector.shape_cast %1341 : vector<1x16xf32> to vector<1x1x16xf32>
    tpu.vector_store %arg5[%c1_386, %c18_387, %c2_388], %1344 {strides = array<i32>} : memref<4x19x19xf32, #tpu.memory_space<vmem>>, vector<1x1x16xf32>,
    %c1_389 = arith.constant 1 : index
    %c0_390 = arith.constant 0 : index
    %c4_391 = arith.constant 4 : index
    %1345 = vector.load %arg5[%c1_389, %c0_390, %c4_391] : memref<4x19x19xf32, #tpu.memory_space<vmem>>, vector<1x19x1xf32>
    %1346 = vector.shape_cast %1345 : vector<1x19x1xf32> to vector<19x1xf32>
    %c1_392 = arith.constant 1 : index
    %c0_393 = arith.constant 0 : index
    %c0_394 = arith.constant 0 : index
    %1347 = vector.load %arg5[%c1_392, %c0_393, %c0_394] : memref<4x19x19xf32, #tpu.memory_space<vmem>>, vector<1x19x1xf32>
    %1348 = vector.shape_cast %1347 : vector<1x19x1xf32> to vector<19x1xf32>
    %1349 = vector.shape_cast %1346 : vector<19x1xf32> to vector<1x19x1xf32>
    tpu.vector_store %arg5[%c1_392, %c0_393, %c0_394], %1349 {strides = array<i32>} : memref<4x19x19xf32, #tpu.memory_space<vmem>>, vector<1x19x1xf32>,
    %c1_395 = arith.constant 1 : index
    %c0_396 = arith.constant 0 : index
    %c3_397 = arith.constant 3 : index
    %1350 = vector.load %arg5[%c1_395, %c0_396, %c3_397] : memref<4x19x19xf32, #tpu.memory_space<vmem>>, vector<1x19x1xf32>
    %1351 = vector.shape_cast %1350 : vector<1x19x1xf32> to vector<19x1xf32>
    %c1_398 = arith.constant 1 : index
    %c0_399 = arith.constant 0 : index
    %c1_400 = arith.constant 1 : index
    %1352 = vector.load %arg5[%c1_398, %c0_399, %c1_400] : memref<4x19x19xf32, #tpu.memory_space<vmem>>, vector<1x19x1xf32>
    %1353 = vector.shape_cast %1352 : vector<1x19x1xf32> to vector<19x1xf32>
    %1354 = vector.shape_cast %1351 : vector<19x1xf32> to vector<1x19x1xf32>
    tpu.vector_store %arg5[%c1_398, %c0_399, %c1_400], %1354 {strides = array<i32>} : memref<4x19x19xf32, #tpu.memory_space<vmem>>, vector<1x19x1xf32>,
    %c1_401 = arith.constant 1 : index
    %c0_402 = arith.constant 0 : index
    %c16_403 = arith.constant 16 : index
    %1355 = vector.load %arg5[%c1_401, %c0_402, %c16_403] : memref<4x19x19xf32, #tpu.memory_space<vmem>>, vector<1x19x1xf32>
    %1356 = vector.shape_cast %1355 : vector<1x19x1xf32> to vector<19x1xf32>
    %c1_404 = arith.constant 1 : index
    %c0_405 = arith.constant 0 : index
    %c18_406 = arith.constant 18 : index
    %1357 = vector.load %arg5[%c1_404, %c0_405, %c18_406] : memref<4x19x19xf32, #tpu.memory_space<vmem>>, vector<1x19x1xf32>
    %1358 = vector.shape_cast %1357 : vector<1x19x1xf32> to vector<19x1xf32>
    %1359 = vector.shape_cast %1356 : vector<19x1xf32> to vector<1x19x1xf32>
    tpu.vector_store %arg5[%c1_404, %c0_405, %c18_406], %1359 {strides = array<i32>} : memref<4x19x19xf32, #tpu.memory_space<vmem>>, vector<1x19x1xf32>,
    %c2_407 = arith.constant 2 : index
    %c2_408 = arith.constant 2 : index
    %c2_409 = arith.constant 2 : index
    %1360 = vector.load %arg5[%c2_407, %c2_408, %c2_409] : memref<4x19x19xf32, #tpu.memory_space<vmem>>, vector<1x16x16xf32>
    %1361 = vector.shape_cast %1360 : vector<1x16x16xf32> to vector<16x16xf32>
    %1362 = vector.shape_cast %1296 : vector<16x16xf32> to vector<1x16x16xf32>
    tpu.vector_store %arg5[%c2_407, %c2_408, %c2_409], %1362 {strides = array<i32>} : memref<4x19x19xf32, #tpu.memory_space<vmem>>, vector<1x16x16xf32>,
    %1363 = vector.extract_strided_slice %1296 {offsets = [2, 0], sizes = [1, 16], strides = [1, 1]} : vector<16x16xf32> to vector<1x16xf32>
    %c2_410 = arith.constant 2 : index
    %c0_411 = arith.constant 0 : index
    %c2_412 = arith.constant 2 : index
    %1364 = vector.load %arg5[%c2_410, %c0_411, %c2_412] : memref<4x19x19xf32, #tpu.memory_space<vmem>>, vector<1x1x16xf32>
    %1365 = vector.shape_cast %1364 : vector<1x1x16xf32> to vector<1x16xf32>
    %1366 = vector.shape_cast %1363 : vector<1x16xf32> to vector<1x1x16xf32>
    tpu.vector_store %arg5[%c2_410, %c0_411, %c2_412], %1366 {strides = array<i32>} : memref<4x19x19xf32, #tpu.memory_space<vmem>>, vector<1x1x16xf32>,
    %1367 = vector.extract_strided_slice %1296 {offsets = [1, 0], sizes = [1, 16], strides = [1, 1]} : vector<16x16xf32> to vector<1x16xf32>
    %c2_413 = arith.constant 2 : index
    %c1_414 = arith.constant 1 : index
    %c2_415 = arith.constant 2 : index
    %1368 = vector.load %arg5[%c2_413, %c1_414, %c2_415] : memref<4x19x19xf32, #tpu.memory_space<vmem>>, vector<1x1x16xf32>
    %1369 = vector.shape_cast %1368 : vector<1x1x16xf32> to vector<1x16xf32>
    %1370 = vector.shape_cast %1367 : vector<1x16xf32> to vector<1x1x16xf32>
    tpu.vector_store %arg5[%c2_413, %c1_414, %c2_415], %1370 {strides = array<i32>} : memref<4x19x19xf32, #tpu.memory_space<vmem>>, vector<1x1x16xf32>,
    %1371 = vector.extract_strided_slice %1296 {offsets = [14, 0], sizes = [1, 16], strides = [1, 1]} : vector<16x16xf32> to vector<1x16xf32>
    %c2_416 = arith.constant 2 : index
    %c18_417 = arith.constant 18 : index
    %c2_418 = arith.constant 2 : index
    %1372 = vector.load %arg5[%c2_416, %c18_417, %c2_418] : memref<4x19x19xf32, #tpu.memory_space<vmem>>, vector<1x1x16xf32>
    %1373 = vector.shape_cast %1372 : vector<1x1x16xf32> to vector<1x16xf32>
    %1374 = vector.shape_cast %1371 : vector<1x16xf32> to vector<1x1x16xf32>
    tpu.vector_store %arg5[%c2_416, %c18_417, %c2_418], %1374 {strides = array<i32>} : memref<4x19x19xf32, #tpu.memory_space<vmem>>, vector<1x1x16xf32>,
    %c2_419 = arith.constant 2 : index
    %c0_420 = arith.constant 0 : index
    %c4_421 = arith.constant 4 : index
    %1375 = vector.load %arg5[%c2_419, %c0_420, %c4_421] : memref<4x19x19xf32, #tpu.memory_space<vmem>>, vector<1x19x1xf32>
    %1376 = vector.shape_cast %1375 : vector<1x19x1xf32> to vector<19x1xf32>
    %c2_422 = arith.constant 2 : index
    %c0_423 = arith.constant 0 : index
    %c0_424 = arith.constant 0 : index
    %1377 = vector.load %arg5[%c2_422, %c0_423, %c0_424] : memref<4x19x19xf32, #tpu.memory_space<vmem>>, vector<1x19x1xf32>
    %1378 = vector.shape_cast %1377 : vector<1x19x1xf32> to vector<19x1xf32>
    %1379 = vector.shape_cast %1376 : vector<19x1xf32> to vector<1x19x1xf32>
    tpu.vector_store %arg5[%c2_422, %c0_423, %c0_424], %1379 {strides = array<i32>} : memref<4x19x19xf32, #tpu.memory_space<vmem>>, vector<1x19x1xf32>,
    %c2_425 = arith.constant 2 : index
    %c0_426 = arith.constant 0 : index
    %c3_427 = arith.constant 3 : index
    %1380 = vector.load %arg5[%c2_425, %c0_426, %c3_427] : memref<4x19x19xf32, #tpu.memory_space<vmem>>, vector<1x19x1xf32>
    %1381 = vector.shape_cast %1380 : vector<1x19x1xf32> to vector<19x1xf32>
    %c2_428 = arith.constant 2 : index
    %c0_429 = arith.constant 0 : index
    %c1_430 = arith.constant 1 : index
    %1382 = vector.load %arg5[%c2_428, %c0_429, %c1_430] : memref<4x19x19xf32, #tpu.memory_space<vmem>>, vector<1x19x1xf32>
    %1383 = vector.shape_cast %1382 : vector<1x19x1xf32> to vector<19x1xf32>
    %1384 = vector.shape_cast %1381 : vector<19x1xf32> to vector<1x19x1xf32>
    tpu.vector_store %arg5[%c2_428, %c0_429, %c1_430], %1384 {strides = array<i32>} : memref<4x19x19xf32, #tpu.memory_space<vmem>>, vector<1x19x1xf32>,
    %c2_431 = arith.constant 2 : index
    %c0_432 = arith.constant 0 : index
    %c16_433 = arith.constant 16 : index
    %1385 = vector.load %arg5[%c2_431, %c0_432, %c16_433] : memref<4x19x19xf32, #tpu.memory_space<vmem>>, vector<1x19x1xf32>
    %1386 = vector.shape_cast %1385 : vector<1x19x1xf32> to vector<19x1xf32>
    %c2_434 = arith.constant 2 : index
    %c0_435 = arith.constant 0 : index
    %c18_436 = arith.constant 18 : index
    %1387 = vector.load %arg5[%c2_434, %c0_435, %c18_436] : memref<4x19x19xf32, #tpu.memory_space<vmem>>, vector<1x19x1xf32>
    %1388 = vector.shape_cast %1387 : vector<1x19x1xf32> to vector<19x1xf32>
    %1389 = vector.shape_cast %1386 : vector<19x1xf32> to vector<1x19x1xf32>
    tpu.vector_store %arg5[%c2_434, %c0_435, %c18_436], %1389 {strides = array<i32>} : memref<4x19x19xf32, #tpu.memory_space<vmem>>, vector<1x19x1xf32>,
    %c3_437 = arith.constant 3 : index
    %c2_438 = arith.constant 2 : index
    %c2_439 = arith.constant 2 : index
    %1390 = vector.load %arg5[%c3_437, %c2_438, %c2_439] : memref<4x19x19xf32, #tpu.memory_space<vmem>>, vector<1x16x16xf32>
    %1391 = vector.shape_cast %1390 : vector<1x16x16xf32> to vector<16x16xf32>
    %1392 = vector.shape_cast %1299 : vector<16x16xf32> to vector<1x16x16xf32>
    tpu.vector_store %arg5[%c3_437, %c2_438, %c2_439], %1392 {strides = array<i32>} : memref<4x19x19xf32, #tpu.memory_space<vmem>>, vector<1x16x16xf32>,
    %1393 = vector.extract_strided_slice %1299 {offsets = [2, 0], sizes = [1, 16], strides = [1, 1]} : vector<16x16xf32> to vector<1x16xf32>
    %c3_440 = arith.constant 3 : index
    %c0_441 = arith.constant 0 : index
    %c2_442 = arith.constant 2 : index
    %1394 = vector.load %arg5[%c3_440, %c0_441, %c2_442] : memref<4x19x19xf32, #tpu.memory_space<vmem>>, vector<1x1x16xf32>
    %1395 = vector.shape_cast %1394 : vector<1x1x16xf32> to vector<1x16xf32>
    %1396 = vector.shape_cast %1393 : vector<1x16xf32> to vector<1x1x16xf32>
    tpu.vector_store %arg5[%c3_440, %c0_441, %c2_442], %1396 {strides = array<i32>} : memref<4x19x19xf32, #tpu.memory_space<vmem>>, vector<1x1x16xf32>,
    %1397 = vector.extract_strided_slice %1299 {offsets = [1, 0], sizes = [1, 16], strides = [1, 1]} : vector<16x16xf32> to vector<1x16xf32>
    %c3_443 = arith.constant 3 : index
    %c1_444 = arith.constant 1 : index
    %c2_445 = arith.constant 2 : index
    %1398 = vector.load %arg5[%c3_443, %c1_444, %c2_445] : memref<4x19x19xf32, #tpu.memory_space<vmem>>, vector<1x1x16xf32>
    %1399 = vector.shape_cast %1398 : vector<1x1x16xf32> to vector<1x16xf32>
    %1400 = vector.shape_cast %1397 : vector<1x16xf32> to vector<1x1x16xf32>
    tpu.vector_store %arg5[%c3_443, %c1_444, %c2_445], %1400 {strides = array<i32>} : memref<4x19x19xf32, #tpu.memory_space<vmem>>, vector<1x1x16xf32>,
    %1401 = vector.extract_strided_slice %1299 {offsets = [14, 0], sizes = [1, 16], strides = [1, 1]} : vector<16x16xf32> to vector<1x16xf32>
    %c3_446 = arith.constant 3 : index
    %c18_447 = arith.constant 18 : index
    %c2_448 = arith.constant 2 : index
    %1402 = vector.load %arg5[%c3_446, %c18_447, %c2_448] : memref<4x19x19xf32, #tpu.memory_space<vmem>>, vector<1x1x16xf32>
    %1403 = vector.shape_cast %1402 : vector<1x1x16xf32> to vector<1x16xf32>
    %1404 = vector.shape_cast %1401 : vector<1x16xf32> to vector<1x1x16xf32>
    tpu.vector_store %arg5[%c3_446, %c18_447, %c2_448], %1404 {strides = array<i32>} : memref<4x19x19xf32, #tpu.memory_space<vmem>>, vector<1x1x16xf32>,
    %c3_449 = arith.constant 3 : index
    %c0_450 = arith.constant 0 : index
    %c4_451 = arith.constant 4 : index
    %1405 = vector.load %arg5[%c3_449, %c0_450, %c4_451] : memref<4x19x19xf32, #tpu.memory_space<vmem>>, vector<1x19x1xf32>
    %1406 = vector.shape_cast %1405 : vector<1x19x1xf32> to vector<19x1xf32>
    %c3_452 = arith.constant 3 : index
    %c0_453 = arith.constant 0 : index
    %c0_454 = arith.constant 0 : index
    %1407 = vector.load %arg5[%c3_452, %c0_453, %c0_454] : memref<4x19x19xf32, #tpu.memory_space<vmem>>, vector<1x19x1xf32>
    %1408 = vector.shape_cast %1407 : vector<1x19x1xf32> to vector<19x1xf32>
    %1409 = vector.shape_cast %1406 : vector<19x1xf32> to vector<1x19x1xf32>
    tpu.vector_store %arg5[%c3_452, %c0_453, %c0_454], %1409 {strides = array<i32>} : memref<4x19x19xf32, #tpu.memory_space<vmem>>, vector<1x19x1xf32>,
    %c3_455 = arith.constant 3 : index
    %c0_456 = arith.constant 0 : index
    %c3_457 = arith.constant 3 : index
    %1410 = vector.load %arg5[%c3_455, %c0_456, %c3_457] : memref<4x19x19xf32, #tpu.memory_space<vmem>>, vector<1x19x1xf32>
    %1411 = vector.shape_cast %1410 : vector<1x19x1xf32> to vector<19x1xf32>
    %c3_458 = arith.constant 3 : index
    %c0_459 = arith.constant 0 : index
    %c1_460 = arith.constant 1 : index
    %1412 = vector.load %arg5[%c3_458, %c0_459, %c1_460] : memref<4x19x19xf32, #tpu.memory_space<vmem>>, vector<1x19x1xf32>
    %1413 = vector.shape_cast %1412 : vector<1x19x1xf32> to vector<19x1xf32>
    %1414 = vector.shape_cast %1411 : vector<19x1xf32> to vector<1x19x1xf32>
    tpu.vector_store %arg5[%c3_458, %c0_459, %c1_460], %1414 {strides = array<i32>} : memref<4x19x19xf32, #tpu.memory_space<vmem>>, vector<1x19x1xf32>,
    %c3_461 = arith.constant 3 : index
    %c0_462 = arith.constant 0 : index
    %c16_463 = arith.constant 16 : index
    %1415 = vector.load %arg5[%c3_461, %c0_462, %c16_463] : memref<4x19x19xf32, #tpu.memory_space<vmem>>, vector<1x19x1xf32>
    %1416 = vector.shape_cast %1415 : vector<1x19x1xf32> to vector<19x1xf32>
    %c3_464 = arith.constant 3 : index
    %c0_465 = arith.constant 0 : index
    %c18_466 = arith.constant 18 : index
    %1417 = vector.load %arg5[%c3_464, %c0_465, %c18_466] : memref<4x19x19xf32, #tpu.memory_space<vmem>>, vector<1x19x1xf32>
    %1418 = vector.shape_cast %1417 : vector<1x19x1xf32> to vector<19x1xf32>
    %1419 = vector.shape_cast %1416 : vector<19x1xf32> to vector<1x19x1xf32>
    tpu.vector_store %arg5[%c3_464, %c0_465, %c18_466], %1419 {strides = array<i32>} : memref<4x19x19xf32, #tpu.memory_space<vmem>>, vector<1x19x1xf32>,
    %cst_467 = arith.constant 0.000000e+00 : f32
    %1420 = vector.broadcast %cst_467 : f32 to vector<16x16xf32>
    %cst_468 = arith.constant 0.000000e+00 : f32
    %1421 = vector.broadcast %cst_468 : f32 to vector<16x16xf32>
    %cst_469 = arith.constant 0.000000e+00 : f32
    %1422 = vector.broadcast %cst_469 : f32 to vector<16x16xf32>
    %cst_470 = arith.constant 0.000000e+00 : f32
    %1423 = vector.broadcast %cst_470 : f32 to vector<16x16xf32>
    %c0_471 = arith.constant 0 : index
    %c0_472 = arith.constant 0 : index
    %c0_473 = arith.constant 0 : index
    %1424 = vector.load %arg5[%c0_471, %c0_472, %c0_473] : memref<4x19x19xf32, #tpu.memory_space<vmem>>, vector<1x16x16xf32>
    %1425 = vector.shape_cast %1424 : vector<1x16x16xf32> to vector<16x16xf32>
    %c0_474 = arith.constant 0 : index
    %1426 = memref.load %arg3[%c0_474] : memref<256xf32, #tpu.memory_space<smem>>
    %1427 = vector.broadcast %1426 : f32 to vector<16x16xf32>
    %1428 = arith.mulf %1427, %1425 : vector<16x16xf32>
    %1429 = arith.addf %1420, %1428 : vector<16x16xf32>
    %c64_475 = arith.constant 64 : index
    %1430 = memref.load %arg3[%c64_475] : memref<256xf32, #tpu.memory_space<smem>>
    %1431 = vector.broadcast %1430 : f32 to vector<16x16xf32>
    %1432 = arith.mulf %1431, %1425 : vector<16x16xf32>
    %1433 = arith.addf %1421, %1432 : vector<16x16xf32>
    %c128_476 = arith.constant 128 : index
    %1434 = memref.load %arg3[%c128_476] : memref<256xf32, #tpu.memory_space<smem>>
    %1435 = vector.broadcast %1434 : f32 to vector<16x16xf32>
    %1436 = arith.mulf %1435, %1425 : vector<16x16xf32>
    %1437 = arith.addf %1422, %1436 : vector<16x16xf32>
    %c192_477 = arith.constant 192 : index
    %1438 = memref.load %arg3[%c192_477] : memref<256xf32, #tpu.memory_space<smem>>
    %1439 = vector.broadcast %1438 : f32 to vector<16x16xf32>
    %1440 = arith.mulf %1439, %1425 : vector<16x16xf32>
    %1441 = arith.addf %1423, %1440 : vector<16x16xf32>
    %c0_478 = arith.constant 0 : index
    %c0_479 = arith.constant 0 : index
    %c1_480 = arith.constant 1 : index
    %1442 = vector.load %arg5[%c0_478, %c0_479, %c1_480] : memref<4x19x19xf32, #tpu.memory_space<vmem>>, vector<1x16x16xf32>
    %1443 = vector.shape_cast %1442 : vector<1x16x16xf32> to vector<16x16xf32>
    %c1_481 = arith.constant 1 : index
    %1444 = memref.load %arg3[%c1_481] : memref<256xf32, #tpu.memory_space<smem>>
    %1445 = vector.broadcast %1444 : f32 to vector<16x16xf32>
    %1446 = arith.mulf %1445, %1443 : vector<16x16xf32>
    %1447 = arith.addf %1429, %1446 : vector<16x16xf32>
    %c65_482 = arith.constant 65 : index
    %1448 = memref.load %arg3[%c65_482] : memref<256xf32, #tpu.memory_space<smem>>
    %1449 = vector.broadcast %1448 : f32 to vector<16x16xf32>
    %1450 = arith.mulf %1449, %1443 : vector<16x16xf32>
    %1451 = arith.addf %1433, %1450 : vector<16x16xf32>
    %c129_483 = arith.constant 129 : index
    %1452 = memref.load %arg3[%c129_483] : memref<256xf32, #tpu.memory_space<smem>>
    %1453 = vector.broadcast %1452 : f32 to vector<16x16xf32>
    %1454 = arith.mulf %1453, %1443 : vector<16x16xf32>
    %1455 = arith.addf %1437, %1454 : vector<16x16xf32>
    %c193_484 = arith.constant 193 : index
    %1456 = memref.load %arg3[%c193_484] : memref<256xf32, #tpu.memory_space<smem>>
    %1457 = vector.broadcast %1456 : f32 to vector<16x16xf32>
    %1458 = arith.mulf %1457, %1443 : vector<16x16xf32>
    %1459 = arith.addf %1441, %1458 : vector<16x16xf32>
    %c0_485 = arith.constant 0 : index
    %c0_486 = arith.constant 0 : index
    %c2_487 = arith.constant 2 : index
    %1460 = vector.load %arg5[%c0_485, %c0_486, %c2_487] : memref<4x19x19xf32, #tpu.memory_space<vmem>>, vector<1x16x16xf32>
    %1461 = vector.shape_cast %1460 : vector<1x16x16xf32> to vector<16x16xf32>
    %c2_488 = arith.constant 2 : index
    %1462 = memref.load %arg3[%c2_488] : memref<256xf32, #tpu.memory_space<smem>>
    %1463 = vector.broadcast %1462 : f32 to vector<16x16xf32>
    %1464 = arith.mulf %1463, %1461 : vector<16x16xf32>
    %1465 = arith.addf %1447, %1464 : vector<16x16xf32>
    %c66_489 = arith.constant 66 : index
    %1466 = memref.load %arg3[%c66_489] : memref<256xf32, #tpu.memory_space<smem>>
    %1467 = vector.broadcast %1466 : f32 to vector<16x16xf32>
    %1468 = arith.mulf %1467, %1461 : vector<16x16xf32>
    %1469 = arith.addf %1451, %1468 : vector<16x16xf32>
    %c130_490 = arith.constant 130 : index
    %1470 = memref.load %arg3[%c130_490] : memref<256xf32, #tpu.memory_space<smem>>
    %1471 = vector.broadcast %1470 : f32 to vector<16x16xf32>
    %1472 = arith.mulf %1471, %1461 : vector<16x16xf32>
    %1473 = arith.addf %1455, %1472 : vector<16x16xf32>
    %c194_491 = arith.constant 194 : index
    %1474 = memref.load %arg3[%c194_491] : memref<256xf32, #tpu.memory_space<smem>>
    %1475 = vector.broadcast %1474 : f32 to vector<16x16xf32>
    %1476 = arith.mulf %1475, %1461 : vector<16x16xf32>
    %1477 = arith.addf %1459, %1476 : vector<16x16xf32>
    %c0_492 = arith.constant 0 : index
    %c0_493 = arith.constant 0 : index
    %c3_494 = arith.constant 3 : index
    %1478 = vector.load %arg5[%c0_492, %c0_493, %c3_494] : memref<4x19x19xf32, #tpu.memory_space<vmem>>, vector<1x16x16xf32>
    %1479 = vector.shape_cast %1478 : vector<1x16x16xf32> to vector<16x16xf32>
    %c3_495 = arith.constant 3 : index
    %1480 = memref.load %arg3[%c3_495] : memref<256xf32, #tpu.memory_space<smem>>
    %1481 = vector.broadcast %1480 : f32 to vector<16x16xf32>
    %1482 = arith.mulf %1481, %1479 : vector<16x16xf32>
    %1483 = arith.addf %1465, %1482 : vector<16x16xf32>
    %c67_496 = arith.constant 67 : index
    %1484 = memref.load %arg3[%c67_496] : memref<256xf32, #tpu.memory_space<smem>>
    %1485 = vector.broadcast %1484 : f32 to vector<16x16xf32>
    %1486 = arith.mulf %1485, %1479 : vector<16x16xf32>
    %1487 = arith.addf %1469, %1486 : vector<16x16xf32>
    %c131_497 = arith.constant 131 : index
    %1488 = memref.load %arg3[%c131_497] : memref<256xf32, #tpu.memory_space<smem>>
    %1489 = vector.broadcast %1488 : f32 to vector<16x16xf32>
    %1490 = arith.mulf %1489, %1479 : vector<16x16xf32>
    %1491 = arith.addf %1473, %1490 : vector<16x16xf32>
    %c195_498 = arith.constant 195 : index
    %1492 = memref.load %arg3[%c195_498] : memref<256xf32, #tpu.memory_space<smem>>
    %1493 = vector.broadcast %1492 : f32 to vector<16x16xf32>
    %1494 = arith.mulf %1493, %1479 : vector<16x16xf32>
    %1495 = arith.addf %1477, %1494 : vector<16x16xf32>
    %c0_499 = arith.constant 0 : index
    %c1_500 = arith.constant 1 : index
    %c0_501 = arith.constant 0 : index
    %1496 = vector.load %arg5[%c0_499, %c1_500, %c0_501] : memref<4x19x19xf32, #tpu.memory_space<vmem>>, vector<1x16x16xf32>
    %1497 = vector.shape_cast %1496 : vector<1x16x16xf32> to vector<16x16xf32>
    %c4_502 = arith.constant 4 : index
    %1498 = memref.load %arg3[%c4_502] : memref<256xf32, #tpu.memory_space<smem>>
    %1499 = vector.broadcast %1498 : f32 to vector<16x16xf32>
    %1500 = arith.mulf %1499, %1497 : vector<16x16xf32>
    %1501 = arith.addf %1483, %1500 : vector<16x16xf32>
    %c68_503 = arith.constant 68 : index
    %1502 = memref.load %arg3[%c68_503] : memref<256xf32, #tpu.memory_space<smem>>
    %1503 = vector.broadcast %1502 : f32 to vector<16x16xf32>
    %1504 = arith.mulf %1503, %1497 : vector<16x16xf32>
    %1505 = arith.addf %1487, %1504 : vector<16x16xf32>
    %c132_504 = arith.constant 132 : index
    %1506 = memref.load %arg3[%c132_504] : memref<256xf32, #tpu.memory_space<smem>>
    %1507 = vector.broadcast %1506 : f32 to vector<16x16xf32>
    %1508 = arith.mulf %1507, %1497 : vector<16x16xf32>
    %1509 = arith.addf %1491, %1508 : vector<16x16xf32>
    %c196_505 = arith.constant 196 : index
    %1510 = memref.load %arg3[%c196_505] : memref<256xf32, #tpu.memory_space<smem>>
    %1511 = vector.broadcast %1510 : f32 to vector<16x16xf32>
    %1512 = arith.mulf %1511, %1497 : vector<16x16xf32>
    %1513 = arith.addf %1495, %1512 : vector<16x16xf32>
    %c0_506 = arith.constant 0 : index
    %c1_507 = arith.constant 1 : index
    %c1_508 = arith.constant 1 : index
    %1514 = vector.load %arg5[%c0_506, %c1_507, %c1_508] : memref<4x19x19xf32, #tpu.memory_space<vmem>>, vector<1x16x16xf32>
    %1515 = vector.shape_cast %1514 : vector<1x16x16xf32> to vector<16x16xf32>
    %c5_509 = arith.constant 5 : index
    %1516 = memref.load %arg3[%c5_509] : memref<256xf32, #tpu.memory_space<smem>>
    %1517 = vector.broadcast %1516 : f32 to vector<16x16xf32>
    %1518 = arith.mulf %1517, %1515 : vector<16x16xf32>
    %1519 = arith.addf %1501, %1518 : vector<16x16xf32>
    %c69_510 = arith.constant 69 : index
    %1520 = memref.load %arg3[%c69_510] : memref<256xf32, #tpu.memory_space<smem>>
    %1521 = vector.broadcast %1520 : f32 to vector<16x16xf32>
    %1522 = arith.mulf %1521, %1515 : vector<16x16xf32>
    %1523 = arith.addf %1505, %1522 : vector<16x16xf32>
    %c133_511 = arith.constant 133 : index
    %1524 = memref.load %arg3[%c133_511] : memref<256xf32, #tpu.memory_space<smem>>
    %1525 = vector.broadcast %1524 : f32 to vector<16x16xf32>
    %1526 = arith.mulf %1525, %1515 : vector<16x16xf32>
    %1527 = arith.addf %1509, %1526 : vector<16x16xf32>
    %c197_512 = arith.constant 197 : index
    %1528 = memref.load %arg3[%c197_512] : memref<256xf32, #tpu.memory_space<smem>>
    %1529 = vector.broadcast %1528 : f32 to vector<16x16xf32>
    %1530 = arith.mulf %1529, %1515 : vector<16x16xf32>
    %1531 = arith.addf %1513, %1530 : vector<16x16xf32>
    %c0_513 = arith.constant 0 : index
    %c1_514 = arith.constant 1 : index
    %c2_515 = arith.constant 2 : index
    %1532 = vector.load %arg5[%c0_513, %c1_514, %c2_515] : memref<4x19x19xf32, #tpu.memory_space<vmem>>, vector<1x16x16xf32>
    %1533 = vector.shape_cast %1532 : vector<1x16x16xf32> to vector<16x16xf32>
    %c6_516 = arith.constant 6 : index
    %1534 = memref.load %arg3[%c6_516] : memref<256xf32, #tpu.memory_space<smem>>
    %1535 = vector.broadcast %1534 : f32 to vector<16x16xf32>
    %1536 = arith.mulf %1535, %1533 : vector<16x16xf32>
    %1537 = arith.addf %1519, %1536 : vector<16x16xf32>
    %c70_517 = arith.constant 70 : index
    %1538 = memref.load %arg3[%c70_517] : memref<256xf32, #tpu.memory_space<smem>>
    %1539 = vector.broadcast %1538 : f32 to vector<16x16xf32>
    %1540 = arith.mulf %1539, %1533 : vector<16x16xf32>
    %1541 = arith.addf %1523, %1540 : vector<16x16xf32>
    %c134_518 = arith.constant 134 : index
    %1542 = memref.load %arg3[%c134_518] : memref<256xf32, #tpu.memory_space<smem>>
    %1543 = vector.broadcast %1542 : f32 to vector<16x16xf32>
    %1544 = arith.mulf %1543, %1533 : vector<16x16xf32>
    %1545 = arith.addf %1527, %1544 : vector<16x16xf32>
    %c198_519 = arith.constant 198 : index
    %1546 = memref.load %arg3[%c198_519] : memref<256xf32, #tpu.memory_space<smem>>
    %1547 = vector.broadcast %1546 : f32 to vector<16x16xf32>
    %1548 = arith.mulf %1547, %1533 : vector<16x16xf32>
    %1549 = arith.addf %1531, %1548 : vector<16x16xf32>
    %c0_520 = arith.constant 0 : index
    %c1_521 = arith.constant 1 : index
    %c3_522 = arith.constant 3 : index
    %1550 = vector.load %arg5[%c0_520, %c1_521, %c3_522] : memref<4x19x19xf32, #tpu.memory_space<vmem>>, vector<1x16x16xf32>
    %1551 = vector.shape_cast %1550 : vector<1x16x16xf32> to vector<16x16xf32>
    %c7_523 = arith.constant 7 : index
    %1552 = memref.load %arg3[%c7_523] : memref<256xf32, #tpu.memory_space<smem>>
    %1553 = vector.broadcast %1552 : f32 to vector<16x16xf32>
    %1554 = arith.mulf %1553, %1551 : vector<16x16xf32>
    %1555 = arith.addf %1537, %1554 : vector<16x16xf32>
    %c71_524 = arith.constant 71 : index
    %1556 = memref.load %arg3[%c71_524] : memref<256xf32, #tpu.memory_space<smem>>
    %1557 = vector.broadcast %1556 : f32 to vector<16x16xf32>
    %1558 = arith.mulf %1557, %1551 : vector<16x16xf32>
    %1559 = arith.addf %1541, %1558 : vector<16x16xf32>
    %c135_525 = arith.constant 135 : index
    %1560 = memref.load %arg3[%c135_525] : memref<256xf32, #tpu.memory_space<smem>>
    %1561 = vector.broadcast %1560 : f32 to vector<16x16xf32>
    %1562 = arith.mulf %1561, %1551 : vector<16x16xf32>
    %1563 = arith.addf %1545, %1562 : vector<16x16xf32>
    %c199_526 = arith.constant 199 : index
    %1564 = memref.load %arg3[%c199_526] : memref<256xf32, #tpu.memory_space<smem>>
    %1565 = vector.broadcast %1564 : f32 to vector<16x16xf32>
    %1566 = arith.mulf %1565, %1551 : vector<16x16xf32>
    %1567 = arith.addf %1549, %1566 : vector<16x16xf32>
    %c0_527 = arith.constant 0 : index
    %c2_528 = arith.constant 2 : index
    %c0_529 = arith.constant 0 : index
    %1568 = vector.load %arg5[%c0_527, %c2_528, %c0_529] : memref<4x19x19xf32, #tpu.memory_space<vmem>>, vector<1x16x16xf32>
    %1569 = vector.shape_cast %1568 : vector<1x16x16xf32> to vector<16x16xf32>
    %c8_530 = arith.constant 8 : index
    %1570 = memref.load %arg3[%c8_530] : memref<256xf32, #tpu.memory_space<smem>>
    %1571 = vector.broadcast %1570 : f32 to vector<16x16xf32>
    %1572 = arith.mulf %1571, %1569 : vector<16x16xf32>
    %1573 = arith.addf %1555, %1572 : vector<16x16xf32>
    %c72_531 = arith.constant 72 : index
    %1574 = memref.load %arg3[%c72_531] : memref<256xf32, #tpu.memory_space<smem>>
    %1575 = vector.broadcast %1574 : f32 to vector<16x16xf32>
    %1576 = arith.mulf %1575, %1569 : vector<16x16xf32>
    %1577 = arith.addf %1559, %1576 : vector<16x16xf32>
    %c136_532 = arith.constant 136 : index
    %1578 = memref.load %arg3[%c136_532] : memref<256xf32, #tpu.memory_space<smem>>
    %1579 = vector.broadcast %1578 : f32 to vector<16x16xf32>
    %1580 = arith.mulf %1579, %1569 : vector<16x16xf32>
    %1581 = arith.addf %1563, %1580 : vector<16x16xf32>
    %c200_533 = arith.constant 200 : index
    %1582 = memref.load %arg3[%c200_533] : memref<256xf32, #tpu.memory_space<smem>>
    %1583 = vector.broadcast %1582 : f32 to vector<16x16xf32>
    %1584 = arith.mulf %1583, %1569 : vector<16x16xf32>
    %1585 = arith.addf %1567, %1584 : vector<16x16xf32>
    %c0_534 = arith.constant 0 : index
    %c2_535 = arith.constant 2 : index
    %c1_536 = arith.constant 1 : index
    %1586 = vector.load %arg5[%c0_534, %c2_535, %c1_536] : memref<4x19x19xf32, #tpu.memory_space<vmem>>, vector<1x16x16xf32>
    %1587 = vector.shape_cast %1586 : vector<1x16x16xf32> to vector<16x16xf32>
    %c9_537 = arith.constant 9 : index
    %1588 = memref.load %arg3[%c9_537] : memref<256xf32, #tpu.memory_space<smem>>
    %1589 = vector.broadcast %1588 : f32 to vector<16x16xf32>
    %1590 = arith.mulf %1589, %1587 : vector<16x16xf32>
    %1591 = arith.addf %1573, %1590 : vector<16x16xf32>
    %c73_538 = arith.constant 73 : index
    %1592 = memref.load %arg3[%c73_538] : memref<256xf32, #tpu.memory_space<smem>>
    %1593 = vector.broadcast %1592 : f32 to vector<16x16xf32>
    %1594 = arith.mulf %1593, %1587 : vector<16x16xf32>
    %1595 = arith.addf %1577, %1594 : vector<16x16xf32>
    %c137_539 = arith.constant 137 : index
    %1596 = memref.load %arg3[%c137_539] : memref<256xf32, #tpu.memory_space<smem>>
    %1597 = vector.broadcast %1596 : f32 to vector<16x16xf32>
    %1598 = arith.mulf %1597, %1587 : vector<16x16xf32>
    %1599 = arith.addf %1581, %1598 : vector<16x16xf32>
    %c201_540 = arith.constant 201 : index
    %1600 = memref.load %arg3[%c201_540] : memref<256xf32, #tpu.memory_space<smem>>
    %1601 = vector.broadcast %1600 : f32 to vector<16x16xf32>
    %1602 = arith.mulf %1601, %1587 : vector<16x16xf32>
    %1603 = arith.addf %1585, %1602 : vector<16x16xf32>
    %c0_541 = arith.constant 0 : index
    %c2_542 = arith.constant 2 : index
    %c2_543 = arith.constant 2 : index
    %1604 = vector.load %arg5[%c0_541, %c2_542, %c2_543] : memref<4x19x19xf32, #tpu.memory_space<vmem>>, vector<1x16x16xf32>
    %1605 = vector.shape_cast %1604 : vector<1x16x16xf32> to vector<16x16xf32>
    %c10_544 = arith.constant 10 : index
    %1606 = memref.load %arg3[%c10_544] : memref<256xf32, #tpu.memory_space<smem>>
    %1607 = vector.broadcast %1606 : f32 to vector<16x16xf32>
    %1608 = arith.mulf %1607, %1605 : vector<16x16xf32>
    %1609 = arith.addf %1591, %1608 : vector<16x16xf32>
    %c74_545 = arith.constant 74 : index
    %1610 = memref.load %arg3[%c74_545] : memref<256xf32, #tpu.memory_space<smem>>
    %1611 = vector.broadcast %1610 : f32 to vector<16x16xf32>
    %1612 = arith.mulf %1611, %1605 : vector<16x16xf32>
    %1613 = arith.addf %1595, %1612 : vector<16x16xf32>
    %c138_546 = arith.constant 138 : index
    %1614 = memref.load %arg3[%c138_546] : memref<256xf32, #tpu.memory_space<smem>>
    %1615 = vector.broadcast %1614 : f32 to vector<16x16xf32>
    %1616 = arith.mulf %1615, %1605 : vector<16x16xf32>
    %1617 = arith.addf %1599, %1616 : vector<16x16xf32>
    %c202_547 = arith.constant 202 : index
    %1618 = memref.load %arg3[%c202_547] : memref<256xf32, #tpu.memory_space<smem>>
    %1619 = vector.broadcast %1618 : f32 to vector<16x16xf32>
    %1620 = arith.mulf %1619, %1605 : vector<16x16xf32>
    %1621 = arith.addf %1603, %1620 : vector<16x16xf32>
    %c0_548 = arith.constant 0 : index
    %c2_549 = arith.constant 2 : index
    %c3_550 = arith.constant 3 : index
    %1622 = vector.load %arg5[%c0_548, %c2_549, %c3_550] : memref<4x19x19xf32, #tpu.memory_space<vmem>>, vector<1x16x16xf32>
    %1623 = vector.shape_cast %1622 : vector<1x16x16xf32> to vector<16x16xf32>
    %c11_551 = arith.constant 11 : index
    %1624 = memref.load %arg3[%c11_551] : memref<256xf32, #tpu.memory_space<smem>>
    %1625 = vector.broadcast %1624 : f32 to vector<16x16xf32>
    %1626 = arith.mulf %1625, %1623 : vector<16x16xf32>
    %1627 = arith.addf %1609, %1626 : vector<16x16xf32>
    %c75_552 = arith.constant 75 : index
    %1628 = memref.load %arg3[%c75_552] : memref<256xf32, #tpu.memory_space<smem>>
    %1629 = vector.broadcast %1628 : f32 to vector<16x16xf32>
    %1630 = arith.mulf %1629, %1623 : vector<16x16xf32>
    %1631 = arith.addf %1613, %1630 : vector<16x16xf32>
    %c139_553 = arith.constant 139 : index
    %1632 = memref.load %arg3[%c139_553] : memref<256xf32, #tpu.memory_space<smem>>
    %1633 = vector.broadcast %1632 : f32 to vector<16x16xf32>
    %1634 = arith.mulf %1633, %1623 : vector<16x16xf32>
    %1635 = arith.addf %1617, %1634 : vector<16x16xf32>
    %c203_554 = arith.constant 203 : index
    %1636 = memref.load %arg3[%c203_554] : memref<256xf32, #tpu.memory_space<smem>>
    %1637 = vector.broadcast %1636 : f32 to vector<16x16xf32>
    %1638 = arith.mulf %1637, %1623 : vector<16x16xf32>
    %1639 = arith.addf %1621, %1638 : vector<16x16xf32>
    %c0_555 = arith.constant 0 : index
    %c3_556 = arith.constant 3 : index
    %c0_557 = arith.constant 0 : index
    %1640 = vector.load %arg5[%c0_555, %c3_556, %c0_557] : memref<4x19x19xf32, #tpu.memory_space<vmem>>, vector<1x16x16xf32>
    %1641 = vector.shape_cast %1640 : vector<1x16x16xf32> to vector<16x16xf32>
    %c12_558 = arith.constant 12 : index
    %1642 = memref.load %arg3[%c12_558] : memref<256xf32, #tpu.memory_space<smem>>
    %1643 = vector.broadcast %1642 : f32 to vector<16x16xf32>
    %1644 = arith.mulf %1643, %1641 : vector<16x16xf32>
    %1645 = arith.addf %1627, %1644 : vector<16x16xf32>
    %c76_559 = arith.constant 76 : index
    %1646 = memref.load %arg3[%c76_559] : memref<256xf32, #tpu.memory_space<smem>>
    %1647 = vector.broadcast %1646 : f32 to vector<16x16xf32>
    %1648 = arith.mulf %1647, %1641 : vector<16x16xf32>
    %1649 = arith.addf %1631, %1648 : vector<16x16xf32>
    %c140_560 = arith.constant 140 : index
    %1650 = memref.load %arg3[%c140_560] : memref<256xf32, #tpu.memory_space<smem>>
    %1651 = vector.broadcast %1650 : f32 to vector<16x16xf32>
    %1652 = arith.mulf %1651, %1641 : vector<16x16xf32>
    %1653 = arith.addf %1635, %1652 : vector<16x16xf32>
    %c204_561 = arith.constant 204 : index
    %1654 = memref.load %arg3[%c204_561] : memref<256xf32, #tpu.memory_space<smem>>
    %1655 = vector.broadcast %1654 : f32 to vector<16x16xf32>
    %1656 = arith.mulf %1655, %1641 : vector<16x16xf32>
    %1657 = arith.addf %1639, %1656 : vector<16x16xf32>
    %c0_562 = arith.constant 0 : index
    %c3_563 = arith.constant 3 : index
    %c1_564 = arith.constant 1 : index
    %1658 = vector.load %arg5[%c0_562, %c3_563, %c1_564] : memref<4x19x19xf32, #tpu.memory_space<vmem>>, vector<1x16x16xf32>
    %1659 = vector.shape_cast %1658 : vector<1x16x16xf32> to vector<16x16xf32>
    %c13_565 = arith.constant 13 : index
    %1660 = memref.load %arg3[%c13_565] : memref<256xf32, #tpu.memory_space<smem>>
    %1661 = vector.broadcast %1660 : f32 to vector<16x16xf32>
    %1662 = arith.mulf %1661, %1659 : vector<16x16xf32>
    %1663 = arith.addf %1645, %1662 : vector<16x16xf32>
    %c77_566 = arith.constant 77 : index
    %1664 = memref.load %arg3[%c77_566] : memref<256xf32, #tpu.memory_space<smem>>
    %1665 = vector.broadcast %1664 : f32 to vector<16x16xf32>
    %1666 = arith.mulf %1665, %1659 : vector<16x16xf32>
    %1667 = arith.addf %1649, %1666 : vector<16x16xf32>
    %c141_567 = arith.constant 141 : index
    %1668 = memref.load %arg3[%c141_567] : memref<256xf32, #tpu.memory_space<smem>>
    %1669 = vector.broadcast %1668 : f32 to vector<16x16xf32>
    %1670 = arith.mulf %1669, %1659 : vector<16x16xf32>
    %1671 = arith.addf %1653, %1670 : vector<16x16xf32>
    %c205_568 = arith.constant 205 : index
    %1672 = memref.load %arg3[%c205_568] : memref<256xf32, #tpu.memory_space<smem>>
    %1673 = vector.broadcast %1672 : f32 to vector<16x16xf32>
    %1674 = arith.mulf %1673, %1659 : vector<16x16xf32>
    %1675 = arith.addf %1657, %1674 : vector<16x16xf32>
    %c0_569 = arith.constant 0 : index
    %c3_570 = arith.constant 3 : index
    %c2_571 = arith.constant 2 : index
    %1676 = vector.load %arg5[%c0_569, %c3_570, %c2_571] : memref<4x19x19xf32, #tpu.memory_space<vmem>>, vector<1x16x16xf32>
    %1677 = vector.shape_cast %1676 : vector<1x16x16xf32> to vector<16x16xf32>
    %c14_572 = arith.constant 14 : index
    %1678 = memref.load %arg3[%c14_572] : memref<256xf32, #tpu.memory_space<smem>>
    %1679 = vector.broadcast %1678 : f32 to vector<16x16xf32>
    %1680 = arith.mulf %1679, %1677 : vector<16x16xf32>
    %1681 = arith.addf %1663, %1680 : vector<16x16xf32>
    %c78_573 = arith.constant 78 : index
    %1682 = memref.load %arg3[%c78_573] : memref<256xf32, #tpu.memory_space<smem>>
    %1683 = vector.broadcast %1682 : f32 to vector<16x16xf32>
    %1684 = arith.mulf %1683, %1677 : vector<16x16xf32>
    %1685 = arith.addf %1667, %1684 : vector<16x16xf32>
    %c142_574 = arith.constant 142 : index
    %1686 = memref.load %arg3[%c142_574] : memref<256xf32, #tpu.memory_space<smem>>
    %1687 = vector.broadcast %1686 : f32 to vector<16x16xf32>
    %1688 = arith.mulf %1687, %1677 : vector<16x16xf32>
    %1689 = arith.addf %1671, %1688 : vector<16x16xf32>
    %c206_575 = arith.constant 206 : index
    %1690 = memref.load %arg3[%c206_575] : memref<256xf32, #tpu.memory_space<smem>>
    %1691 = vector.broadcast %1690 : f32 to vector<16x16xf32>
    %1692 = arith.mulf %1691, %1677 : vector<16x16xf32>
    %1693 = arith.addf %1675, %1692 : vector<16x16xf32>
    %c0_576 = arith.constant 0 : index
    %c3_577 = arith.constant 3 : index
    %c3_578 = arith.constant 3 : index
    %1694 = vector.load %arg5[%c0_576, %c3_577, %c3_578] : memref<4x19x19xf32, #tpu.memory_space<vmem>>, vector<1x16x16xf32>
    %1695 = vector.shape_cast %1694 : vector<1x16x16xf32> to vector<16x16xf32>
    %c15_579 = arith.constant 15 : index
    %1696 = memref.load %arg3[%c15_579] : memref<256xf32, #tpu.memory_space<smem>>
    %1697 = vector.broadcast %1696 : f32 to vector<16x16xf32>
    %1698 = arith.mulf %1697, %1695 : vector<16x16xf32>
    %1699 = arith.addf %1681, %1698 : vector<16x16xf32>
    %c79_580 = arith.constant 79 : index
    %1700 = memref.load %arg3[%c79_580] : memref<256xf32, #tpu.memory_space<smem>>
    %1701 = vector.broadcast %1700 : f32 to vector<16x16xf32>
    %1702 = arith.mulf %1701, %1695 : vector<16x16xf32>
    %1703 = arith.addf %1685, %1702 : vector<16x16xf32>
    %c143_581 = arith.constant 143 : index
    %1704 = memref.load %arg3[%c143_581] : memref<256xf32, #tpu.memory_space<smem>>
    %1705 = vector.broadcast %1704 : f32 to vector<16x16xf32>
    %1706 = arith.mulf %1705, %1695 : vector<16x16xf32>
    %1707 = arith.addf %1689, %1706 : vector<16x16xf32>
    %c207_582 = arith.constant 207 : index
    %1708 = memref.load %arg3[%c207_582] : memref<256xf32, #tpu.memory_space<smem>>
    %1709 = vector.broadcast %1708 : f32 to vector<16x16xf32>
    %1710 = arith.mulf %1709, %1695 : vector<16x16xf32>
    %1711 = arith.addf %1693, %1710 : vector<16x16xf32>
    %c1_583 = arith.constant 1 : index
    %c0_584 = arith.constant 0 : index
    %c0_585 = arith.constant 0 : index
    %1712 = vector.load %arg5[%c1_583, %c0_584, %c0_585] : memref<4x19x19xf32, #tpu.memory_space<vmem>>, vector<1x16x16xf32>
    %1713 = vector.shape_cast %1712 : vector<1x16x16xf32> to vector<16x16xf32>
    %c16_586 = arith.constant 16 : index
    %1714 = memref.load %arg3[%c16_586] : memref<256xf32, #tpu.memory_space<smem>>
    %1715 = vector.broadcast %1714 : f32 to vector<16x16xf32>
    %1716 = arith.mulf %1715, %1713 : vector<16x16xf32>
    %1717 = arith.addf %1699, %1716 : vector<16x16xf32>
    %c80_587 = arith.constant 80 : index
    %1718 = memref.load %arg3[%c80_587] : memref<256xf32, #tpu.memory_space<smem>>
    %1719 = vector.broadcast %1718 : f32 to vector<16x16xf32>
    %1720 = arith.mulf %1719, %1713 : vector<16x16xf32>
    %1721 = arith.addf %1703, %1720 : vector<16x16xf32>
    %c144_588 = arith.constant 144 : index
    %1722 = memref.load %arg3[%c144_588] : memref<256xf32, #tpu.memory_space<smem>>
    %1723 = vector.broadcast %1722 : f32 to vector<16x16xf32>
    %1724 = arith.mulf %1723, %1713 : vector<16x16xf32>
    %1725 = arith.addf %1707, %1724 : vector<16x16xf32>
    %c208_589 = arith.constant 208 : index
    %1726 = memref.load %arg3[%c208_589] : memref<256xf32, #tpu.memory_space<smem>>
    %1727 = vector.broadcast %1726 : f32 to vector<16x16xf32>
    %1728 = arith.mulf %1727, %1713 : vector<16x16xf32>
    %1729 = arith.addf %1711, %1728 : vector<16x16xf32>
    %c1_590 = arith.constant 1 : index
    %c0_591 = arith.constant 0 : index
    %c1_592 = arith.constant 1 : index
    %1730 = vector.load %arg5[%c1_590, %c0_591, %c1_592] : memref<4x19x19xf32, #tpu.memory_space<vmem>>, vector<1x16x16xf32>
    %1731 = vector.shape_cast %1730 : vector<1x16x16xf32> to vector<16x16xf32>
    %c17_593 = arith.constant 17 : index
    %1732 = memref.load %arg3[%c17_593] : memref<256xf32, #tpu.memory_space<smem>>
    %1733 = vector.broadcast %1732 : f32 to vector<16x16xf32>
    %1734 = arith.mulf %1733, %1731 : vector<16x16xf32>
    %1735 = arith.addf %1717, %1734 : vector<16x16xf32>
    %c81_594 = arith.constant 81 : index
    %1736 = memref.load %arg3[%c81_594] : memref<256xf32, #tpu.memory_space<smem>>
    %1737 = vector.broadcast %1736 : f32 to vector<16x16xf32>
    %1738 = arith.mulf %1737, %1731 : vector<16x16xf32>
    %1739 = arith.addf %1721, %1738 : vector<16x16xf32>
    %c145_595 = arith.constant 145 : index
    %1740 = memref.load %arg3[%c145_595] : memref<256xf32, #tpu.memory_space<smem>>
    %1741 = vector.broadcast %1740 : f32 to vector<16x16xf32>
    %1742 = arith.mulf %1741, %1731 : vector<16x16xf32>
    %1743 = arith.addf %1725, %1742 : vector<16x16xf32>
    %c209_596 = arith.constant 209 : index
    %1744 = memref.load %arg3[%c209_596] : memref<256xf32, #tpu.memory_space<smem>>
    %1745 = vector.broadcast %1744 : f32 to vector<16x16xf32>
    %1746 = arith.mulf %1745, %1731 : vector<16x16xf32>
    %1747 = arith.addf %1729, %1746 : vector<16x16xf32>
    %c1_597 = arith.constant 1 : index
    %c0_598 = arith.constant 0 : index
    %c2_599 = arith.constant 2 : index
    %1748 = vector.load %arg5[%c1_597, %c0_598, %c2_599] : memref<4x19x19xf32, #tpu.memory_space<vmem>>, vector<1x16x16xf32>
    %1749 = vector.shape_cast %1748 : vector<1x16x16xf32> to vector<16x16xf32>
    %c18_600 = arith.constant 18 : index
    %1750 = memref.load %arg3[%c18_600] : memref<256xf32, #tpu.memory_space<smem>>
    %1751 = vector.broadcast %1750 : f32 to vector<16x16xf32>
    %1752 = arith.mulf %1751, %1749 : vector<16x16xf32>
    %1753 = arith.addf %1735, %1752 : vector<16x16xf32>
    %c82_601 = arith.constant 82 : index
    %1754 = memref.load %arg3[%c82_601] : memref<256xf32, #tpu.memory_space<smem>>
    %1755 = vector.broadcast %1754 : f32 to vector<16x16xf32>
    %1756 = arith.mulf %1755, %1749 : vector<16x16xf32>
    %1757 = arith.addf %1739, %1756 : vector<16x16xf32>
    %c146_602 = arith.constant 146 : index
    %1758 = memref.load %arg3[%c146_602] : memref<256xf32, #tpu.memory_space<smem>>
    %1759 = vector.broadcast %1758 : f32 to vector<16x16xf32>
    %1760 = arith.mulf %1759, %1749 : vector<16x16xf32>
    %1761 = arith.addf %1743, %1760 : vector<16x16xf32>
    %c210_603 = arith.constant 210 : index
    %1762 = memref.load %arg3[%c210_603] : memref<256xf32, #tpu.memory_space<smem>>
    %1763 = vector.broadcast %1762 : f32 to vector<16x16xf32>
    %1764 = arith.mulf %1763, %1749 : vector<16x16xf32>
    %1765 = arith.addf %1747, %1764 : vector<16x16xf32>
    %c1_604 = arith.constant 1 : index
    %c0_605 = arith.constant 0 : index
    %c3_606 = arith.constant 3 : index
    %1766 = vector.load %arg5[%c1_604, %c0_605, %c3_606] : memref<4x19x19xf32, #tpu.memory_space<vmem>>, vector<1x16x16xf32>
    %1767 = vector.shape_cast %1766 : vector<1x16x16xf32> to vector<16x16xf32>
    %c19_607 = arith.constant 19 : index
    %1768 = memref.load %arg3[%c19_607] : memref<256xf32, #tpu.memory_space<smem>>
    %1769 = vector.broadcast %1768 : f32 to vector<16x16xf32>
    %1770 = arith.mulf %1769, %1767 : vector<16x16xf32>
    %1771 = arith.addf %1753, %1770 : vector<16x16xf32>
    %c83_608 = arith.constant 83 : index
    %1772 = memref.load %arg3[%c83_608] : memref<256xf32, #tpu.memory_space<smem>>
    %1773 = vector.broadcast %1772 : f32 to vector<16x16xf32>
    %1774 = arith.mulf %1773, %1767 : vector<16x16xf32>
    %1775 = arith.addf %1757, %1774 : vector<16x16xf32>
    %c147_609 = arith.constant 147 : index
    %1776 = memref.load %arg3[%c147_609] : memref<256xf32, #tpu.memory_space<smem>>
    %1777 = vector.broadcast %1776 : f32 to vector<16x16xf32>
    %1778 = arith.mulf %1777, %1767 : vector<16x16xf32>
    %1779 = arith.addf %1761, %1778 : vector<16x16xf32>
    %c211_610 = arith.constant 211 : index
    %1780 = memref.load %arg3[%c211_610] : memref<256xf32, #tpu.memory_space<smem>>
    %1781 = vector.broadcast %1780 : f32 to vector<16x16xf32>
    %1782 = arith.mulf %1781, %1767 : vector<16x16xf32>
    %1783 = arith.addf %1765, %1782 : vector<16x16xf32>
    %c1_611 = arith.constant 1 : index
    %c1_612 = arith.constant 1 : index
    %c0_613 = arith.constant 0 : index
    %1784 = vector.load %arg5[%c1_611, %c1_612, %c0_613] : memref<4x19x19xf32, #tpu.memory_space<vmem>>, vector<1x16x16xf32>
    %1785 = vector.shape_cast %1784 : vector<1x16x16xf32> to vector<16x16xf32>
    %c20_614 = arith.constant 20 : index
    %1786 = memref.load %arg3[%c20_614] : memref<256xf32, #tpu.memory_space<smem>>
    %1787 = vector.broadcast %1786 : f32 to vector<16x16xf32>
    %1788 = arith.mulf %1787, %1785 : vector<16x16xf32>
    %1789 = arith.addf %1771, %1788 : vector<16x16xf32>
    %c84_615 = arith.constant 84 : index
    %1790 = memref.load %arg3[%c84_615] : memref<256xf32, #tpu.memory_space<smem>>
    %1791 = vector.broadcast %1790 : f32 to vector<16x16xf32>
    %1792 = arith.mulf %1791, %1785 : vector<16x16xf32>
    %1793 = arith.addf %1775, %1792 : vector<16x16xf32>
    %c148_616 = arith.constant 148 : index
    %1794 = memref.load %arg3[%c148_616] : memref<256xf32, #tpu.memory_space<smem>>
    %1795 = vector.broadcast %1794 : f32 to vector<16x16xf32>
    %1796 = arith.mulf %1795, %1785 : vector<16x16xf32>
    %1797 = arith.addf %1779, %1796 : vector<16x16xf32>
    %c212_617 = arith.constant 212 : index
    %1798 = memref.load %arg3[%c212_617] : memref<256xf32, #tpu.memory_space<smem>>
    %1799 = vector.broadcast %1798 : f32 to vector<16x16xf32>
    %1800 = arith.mulf %1799, %1785 : vector<16x16xf32>
    %1801 = arith.addf %1783, %1800 : vector<16x16xf32>
    %c1_618 = arith.constant 1 : index
    %c1_619 = arith.constant 1 : index
    %c1_620 = arith.constant 1 : index
    %1802 = vector.load %arg5[%c1_618, %c1_619, %c1_620] : memref<4x19x19xf32, #tpu.memory_space<vmem>>, vector<1x16x16xf32>
    %1803 = vector.shape_cast %1802 : vector<1x16x16xf32> to vector<16x16xf32>
    %c21_621 = arith.constant 21 : index
    %1804 = memref.load %arg3[%c21_621] : memref<256xf32, #tpu.memory_space<smem>>
    %1805 = vector.broadcast %1804 : f32 to vector<16x16xf32>
    %1806 = arith.mulf %1805, %1803 : vector<16x16xf32>
    %1807 = arith.addf %1789, %1806 : vector<16x16xf32>
    %c85_622 = arith.constant 85 : index
    %1808 = memref.load %arg3[%c85_622] : memref<256xf32, #tpu.memory_space<smem>>
    %1809 = vector.broadcast %1808 : f32 to vector<16x16xf32>
    %1810 = arith.mulf %1809, %1803 : vector<16x16xf32>
    %1811 = arith.addf %1793, %1810 : vector<16x16xf32>
    %c149_623 = arith.constant 149 : index
    %1812 = memref.load %arg3[%c149_623] : memref<256xf32, #tpu.memory_space<smem>>
    %1813 = vector.broadcast %1812 : f32 to vector<16x16xf32>
    %1814 = arith.mulf %1813, %1803 : vector<16x16xf32>
    %1815 = arith.addf %1797, %1814 : vector<16x16xf32>
    %c213_624 = arith.constant 213 : index
    %1816 = memref.load %arg3[%c213_624] : memref<256xf32, #tpu.memory_space<smem>>
    %1817 = vector.broadcast %1816 : f32 to vector<16x16xf32>
    %1818 = arith.mulf %1817, %1803 : vector<16x16xf32>
    %1819 = arith.addf %1801, %1818 : vector<16x16xf32>
    %c1_625 = arith.constant 1 : index
    %c1_626 = arith.constant 1 : index
    %c2_627 = arith.constant 2 : index
    %1820 = vector.load %arg5[%c1_625, %c1_626, %c2_627] : memref<4x19x19xf32, #tpu.memory_space<vmem>>, vector<1x16x16xf32>
    %1821 = vector.shape_cast %1820 : vector<1x16x16xf32> to vector<16x16xf32>
    %c22_628 = arith.constant 22 : index
    %1822 = memref.load %arg3[%c22_628] : memref<256xf32, #tpu.memory_space<smem>>
    %1823 = vector.broadcast %1822 : f32 to vector<16x16xf32>
    %1824 = arith.mulf %1823, %1821 : vector<16x16xf32>
    %1825 = arith.addf %1807, %1824 : vector<16x16xf32>
    %c86_629 = arith.constant 86 : index
    %1826 = memref.load %arg3[%c86_629] : memref<256xf32, #tpu.memory_space<smem>>
    %1827 = vector.broadcast %1826 : f32 to vector<16x16xf32>
    %1828 = arith.mulf %1827, %1821 : vector<16x16xf32>
    %1829 = arith.addf %1811, %1828 : vector<16x16xf32>
    %c150_630 = arith.constant 150 : index
    %1830 = memref.load %arg3[%c150_630] : memref<256xf32, #tpu.memory_space<smem>>
    %1831 = vector.broadcast %1830 : f32 to vector<16x16xf32>
    %1832 = arith.mulf %1831, %1821 : vector<16x16xf32>
    %1833 = arith.addf %1815, %1832 : vector<16x16xf32>
    %c214_631 = arith.constant 214 : index
    %1834 = memref.load %arg3[%c214_631] : memref<256xf32, #tpu.memory_space<smem>>
    %1835 = vector.broadcast %1834 : f32 to vector<16x16xf32>
    %1836 = arith.mulf %1835, %1821 : vector<16x16xf32>
    %1837 = arith.addf %1819, %1836 : vector<16x16xf32>
    %c1_632 = arith.constant 1 : index
    %c1_633 = arith.constant 1 : index
    %c3_634 = arith.constant 3 : index
    %1838 = vector.load %arg5[%c1_632, %c1_633, %c3_634] : memref<4x19x19xf32, #tpu.memory_space<vmem>>, vector<1x16x16xf32>
    %1839 = vector.shape_cast %1838 : vector<1x16x16xf32> to vector<16x16xf32>
    %c23_635 = arith.constant 23 : index
    %1840 = memref.load %arg3[%c23_635] : memref<256xf32, #tpu.memory_space<smem>>
    %1841 = vector.broadcast %1840 : f32 to vector<16x16xf32>
    %1842 = arith.mulf %1841, %1839 : vector<16x16xf32>
    %1843 = arith.addf %1825, %1842 : vector<16x16xf32>
    %c87_636 = arith.constant 87 : index
    %1844 = memref.load %arg3[%c87_636] : memref<256xf32, #tpu.memory_space<smem>>
    %1845 = vector.broadcast %1844 : f32 to vector<16x16xf32>
    %1846 = arith.mulf %1845, %1839 : vector<16x16xf32>
    %1847 = arith.addf %1829, %1846 : vector<16x16xf32>
    %c151_637 = arith.constant 151 : index
    %1848 = memref.load %arg3[%c151_637] : memref<256xf32, #tpu.memory_space<smem>>
    %1849 = vector.broadcast %1848 : f32 to vector<16x16xf32>
    %1850 = arith.mulf %1849, %1839 : vector<16x16xf32>
    %1851 = arith.addf %1833, %1850 : vector<16x16xf32>
    %c215_638 = arith.constant 215 : index
    %1852 = memref.load %arg3[%c215_638] : memref<256xf32, #tpu.memory_space<smem>>
    %1853 = vector.broadcast %1852 : f32 to vector<16x16xf32>
    %1854 = arith.mulf %1853, %1839 : vector<16x16xf32>
    %1855 = arith.addf %1837, %1854 : vector<16x16xf32>
    %c1_639 = arith.constant 1 : index
    %c2_640 = arith.constant 2 : index
    %c0_641 = arith.constant 0 : index
    %1856 = vector.load %arg5[%c1_639, %c2_640, %c0_641] : memref<4x19x19xf32, #tpu.memory_space<vmem>>, vector<1x16x16xf32>
    %1857 = vector.shape_cast %1856 : vector<1x16x16xf32> to vector<16x16xf32>
    %c24_642 = arith.constant 24 : index
    %1858 = memref.load %arg3[%c24_642] : memref<256xf32, #tpu.memory_space<smem>>
    %1859 = vector.broadcast %1858 : f32 to vector<16x16xf32>
    %1860 = arith.mulf %1859, %1857 : vector<16x16xf32>
    %1861 = arith.addf %1843, %1860 : vector<16x16xf32>
    %c88_643 = arith.constant 88 : index
    %1862 = memref.load %arg3[%c88_643] : memref<256xf32, #tpu.memory_space<smem>>
    %1863 = vector.broadcast %1862 : f32 to vector<16x16xf32>
    %1864 = arith.mulf %1863, %1857 : vector<16x16xf32>
    %1865 = arith.addf %1847, %1864 : vector<16x16xf32>
    %c152_644 = arith.constant 152 : index
    %1866 = memref.load %arg3[%c152_644] : memref<256xf32, #tpu.memory_space<smem>>
    %1867 = vector.broadcast %1866 : f32 to vector<16x16xf32>
    %1868 = arith.mulf %1867, %1857 : vector<16x16xf32>
    %1869 = arith.addf %1851, %1868 : vector<16x16xf32>
    %c216_645 = arith.constant 216 : index
    %1870 = memref.load %arg3[%c216_645] : memref<256xf32, #tpu.memory_space<smem>>
    %1871 = vector.broadcast %1870 : f32 to vector<16x16xf32>
    %1872 = arith.mulf %1871, %1857 : vector<16x16xf32>
    %1873 = arith.addf %1855, %1872 : vector<16x16xf32>
    %c1_646 = arith.constant 1 : index
    %c2_647 = arith.constant 2 : index
    %c1_648 = arith.constant 1 : index
    %1874 = vector.load %arg5[%c1_646, %c2_647, %c1_648] : memref<4x19x19xf32, #tpu.memory_space<vmem>>, vector<1x16x16xf32>
    %1875 = vector.shape_cast %1874 : vector<1x16x16xf32> to vector<16x16xf32>
    %c25_649 = arith.constant 25 : index
    %1876 = memref.load %arg3[%c25_649] : memref<256xf32, #tpu.memory_space<smem>>
    %1877 = vector.broadcast %1876 : f32 to vector<16x16xf32>
    %1878 = arith.mulf %1877, %1875 : vector<16x16xf32>
    %1879 = arith.addf %1861, %1878 : vector<16x16xf32>
    %c89_650 = arith.constant 89 : index
    %1880 = memref.load %arg3[%c89_650] : memref<256xf32, #tpu.memory_space<smem>>
    %1881 = vector.broadcast %1880 : f32 to vector<16x16xf32>
    %1882 = arith.mulf %1881, %1875 : vector<16x16xf32>
    %1883 = arith.addf %1865, %1882 : vector<16x16xf32>
    %c153_651 = arith.constant 153 : index
    %1884 = memref.load %arg3[%c153_651] : memref<256xf32, #tpu.memory_space<smem>>
    %1885 = vector.broadcast %1884 : f32 to vector<16x16xf32>
    %1886 = arith.mulf %1885, %1875 : vector<16x16xf32>
    %1887 = arith.addf %1869, %1886 : vector<16x16xf32>
    %c217_652 = arith.constant 217 : index
    %1888 = memref.load %arg3[%c217_652] : memref<256xf32, #tpu.memory_space<smem>>
    %1889 = vector.broadcast %1888 : f32 to vector<16x16xf32>
    %1890 = arith.mulf %1889, %1875 : vector<16x16xf32>
    %1891 = arith.addf %1873, %1890 : vector<16x16xf32>
    %c1_653 = arith.constant 1 : index
    %c2_654 = arith.constant 2 : index
    %c2_655 = arith.constant 2 : index
    %1892 = vector.load %arg5[%c1_653, %c2_654, %c2_655] : memref<4x19x19xf32, #tpu.memory_space<vmem>>, vector<1x16x16xf32>
    %1893 = vector.shape_cast %1892 : vector<1x16x16xf32> to vector<16x16xf32>
    %c26_656 = arith.constant 26 : index
    %1894 = memref.load %arg3[%c26_656] : memref<256xf32, #tpu.memory_space<smem>>
    %1895 = vector.broadcast %1894 : f32 to vector<16x16xf32>
    %1896 = arith.mulf %1895, %1893 : vector<16x16xf32>
    %1897 = arith.addf %1879, %1896 : vector<16x16xf32>
    %c90_657 = arith.constant 90 : index
    %1898 = memref.load %arg3[%c90_657] : memref<256xf32, #tpu.memory_space<smem>>
    %1899 = vector.broadcast %1898 : f32 to vector<16x16xf32>
    %1900 = arith.mulf %1899, %1893 : vector<16x16xf32>
    %1901 = arith.addf %1883, %1900 : vector<16x16xf32>
    %c154_658 = arith.constant 154 : index
    %1902 = memref.load %arg3[%c154_658] : memref<256xf32, #tpu.memory_space<smem>>
    %1903 = vector.broadcast %1902 : f32 to vector<16x16xf32>
    %1904 = arith.mulf %1903, %1893 : vector<16x16xf32>
    %1905 = arith.addf %1887, %1904 : vector<16x16xf32>
    %c218_659 = arith.constant 218 : index
    %1906 = memref.load %arg3[%c218_659] : memref<256xf32, #tpu.memory_space<smem>>
    %1907 = vector.broadcast %1906 : f32 to vector<16x16xf32>
    %1908 = arith.mulf %1907, %1893 : vector<16x16xf32>
    %1909 = arith.addf %1891, %1908 : vector<16x16xf32>
    %c1_660 = arith.constant 1 : index
    %c2_661 = arith.constant 2 : index
    %c3_662 = arith.constant 3 : index
    %1910 = vector.load %arg5[%c1_660, %c2_661, %c3_662] : memref<4x19x19xf32, #tpu.memory_space<vmem>>, vector<1x16x16xf32>
    %1911 = vector.shape_cast %1910 : vector<1x16x16xf32> to vector<16x16xf32>
    %c27_663 = arith.constant 27 : index
    %1912 = memref.load %arg3[%c27_663] : memref<256xf32, #tpu.memory_space<smem>>
    %1913 = vector.broadcast %1912 : f32 to vector<16x16xf32>
    %1914 = arith.mulf %1913, %1911 : vector<16x16xf32>
    %1915 = arith.addf %1897, %1914 : vector<16x16xf32>
    %c91_664 = arith.constant 91 : index
    %1916 = memref.load %arg3[%c91_664] : memref<256xf32, #tpu.memory_space<smem>>
    %1917 = vector.broadcast %1916 : f32 to vector<16x16xf32>
    %1918 = arith.mulf %1917, %1911 : vector<16x16xf32>
    %1919 = arith.addf %1901, %1918 : vector<16x16xf32>
    %c155_665 = arith.constant 155 : index
    %1920 = memref.load %arg3[%c155_665] : memref<256xf32, #tpu.memory_space<smem>>
    %1921 = vector.broadcast %1920 : f32 to vector<16x16xf32>
    %1922 = arith.mulf %1921, %1911 : vector<16x16xf32>
    %1923 = arith.addf %1905, %1922 : vector<16x16xf32>
    %c219_666 = arith.constant 219 : index
    %1924 = memref.load %arg3[%c219_666] : memref<256xf32, #tpu.memory_space<smem>>
    %1925 = vector.broadcast %1924 : f32 to vector<16x16xf32>
    %1926 = arith.mulf %1925, %1911 : vector<16x16xf32>
    %1927 = arith.addf %1909, %1926 : vector<16x16xf32>
    %c1_667 = arith.constant 1 : index
    %c3_668 = arith.constant 3 : index
    %c0_669 = arith.constant 0 : index
    %1928 = vector.load %arg5[%c1_667, %c3_668, %c0_669] : memref<4x19x19xf32, #tpu.memory_space<vmem>>, vector<1x16x16xf32>
    %1929 = vector.shape_cast %1928 : vector<1x16x16xf32> to vector<16x16xf32>
    %c28_670 = arith.constant 28 : index
    %1930 = memref.load %arg3[%c28_670] : memref<256xf32, #tpu.memory_space<smem>>
    %1931 = vector.broadcast %1930 : f32 to vector<16x16xf32>
    %1932 = arith.mulf %1931, %1929 : vector<16x16xf32>
    %1933 = arith.addf %1915, %1932 : vector<16x16xf32>
    %c92_671 = arith.constant 92 : index
    %1934 = memref.load %arg3[%c92_671] : memref<256xf32, #tpu.memory_space<smem>>
    %1935 = vector.broadcast %1934 : f32 to vector<16x16xf32>
    %1936 = arith.mulf %1935, %1929 : vector<16x16xf32>
    %1937 = arith.addf %1919, %1936 : vector<16x16xf32>
    %c156_672 = arith.constant 156 : index
    %1938 = memref.load %arg3[%c156_672] : memref<256xf32, #tpu.memory_space<smem>>
    %1939 = vector.broadcast %1938 : f32 to vector<16x16xf32>
    %1940 = arith.mulf %1939, %1929 : vector<16x16xf32>
    %1941 = arith.addf %1923, %1940 : vector<16x16xf32>
    %c220_673 = arith.constant 220 : index
    %1942 = memref.load %arg3[%c220_673] : memref<256xf32, #tpu.memory_space<smem>>
    %1943 = vector.broadcast %1942 : f32 to vector<16x16xf32>
    %1944 = arith.mulf %1943, %1929 : vector<16x16xf32>
    %1945 = arith.addf %1927, %1944 : vector<16x16xf32>
    %c1_674 = arith.constant 1 : index
    %c3_675 = arith.constant 3 : index
    %c1_676 = arith.constant 1 : index
    %1946 = vector.load %arg5[%c1_674, %c3_675, %c1_676] : memref<4x19x19xf32, #tpu.memory_space<vmem>>, vector<1x16x16xf32>
    %1947 = vector.shape_cast %1946 : vector<1x16x16xf32> to vector<16x16xf32>
    %c29_677 = arith.constant 29 : index
    %1948 = memref.load %arg3[%c29_677] : memref<256xf32, #tpu.memory_space<smem>>
    %1949 = vector.broadcast %1948 : f32 to vector<16x16xf32>
    %1950 = arith.mulf %1949, %1947 : vector<16x16xf32>
    %1951 = arith.addf %1933, %1950 : vector<16x16xf32>
    %c93_678 = arith.constant 93 : index
    %1952 = memref.load %arg3[%c93_678] : memref<256xf32, #tpu.memory_space<smem>>
    %1953 = vector.broadcast %1952 : f32 to vector<16x16xf32>
    %1954 = arith.mulf %1953, %1947 : vector<16x16xf32>
    %1955 = arith.addf %1937, %1954 : vector<16x16xf32>
    %c157_679 = arith.constant 157 : index
    %1956 = memref.load %arg3[%c157_679] : memref<256xf32, #tpu.memory_space<smem>>
    %1957 = vector.broadcast %1956 : f32 to vector<16x16xf32>
    %1958 = arith.mulf %1957, %1947 : vector<16x16xf32>
    %1959 = arith.addf %1941, %1958 : vector<16x16xf32>
    %c221_680 = arith.constant 221 : index
    %1960 = memref.load %arg3[%c221_680] : memref<256xf32, #tpu.memory_space<smem>>
    %1961 = vector.broadcast %1960 : f32 to vector<16x16xf32>
    %1962 = arith.mulf %1961, %1947 : vector<16x16xf32>
    %1963 = arith.addf %1945, %1962 : vector<16x16xf32>
    %c1_681 = arith.constant 1 : index
    %c3_682 = arith.constant 3 : index
    %c2_683 = arith.constant 2 : index
    %1964 = vector.load %arg5[%c1_681, %c3_682, %c2_683] : memref<4x19x19xf32, #tpu.memory_space<vmem>>, vector<1x16x16xf32>
    %1965 = vector.shape_cast %1964 : vector<1x16x16xf32> to vector<16x16xf32>
    %c30_684 = arith.constant 30 : index
    %1966 = memref.load %arg3[%c30_684] : memref<256xf32, #tpu.memory_space<smem>>
    %1967 = vector.broadcast %1966 : f32 to vector<16x16xf32>
    %1968 = arith.mulf %1967, %1965 : vector<16x16xf32>
    %1969 = arith.addf %1951, %1968 : vector<16x16xf32>
    %c94_685 = arith.constant 94 : index
    %1970 = memref.load %arg3[%c94_685] : memref<256xf32, #tpu.memory_space<smem>>
    %1971 = vector.broadcast %1970 : f32 to vector<16x16xf32>
    %1972 = arith.mulf %1971, %1965 : vector<16x16xf32>
    %1973 = arith.addf %1955, %1972 : vector<16x16xf32>
    %c158_686 = arith.constant 158 : index
    %1974 = memref.load %arg3[%c158_686] : memref<256xf32, #tpu.memory_space<smem>>
    %1975 = vector.broadcast %1974 : f32 to vector<16x16xf32>
    %1976 = arith.mulf %1975, %1965 : vector<16x16xf32>
    %1977 = arith.addf %1959, %1976 : vector<16x16xf32>
    %c222_687 = arith.constant 222 : index
    %1978 = memref.load %arg3[%c222_687] : memref<256xf32, #tpu.memory_space<smem>>
    %1979 = vector.broadcast %1978 : f32 to vector<16x16xf32>
    %1980 = arith.mulf %1979, %1965 : vector<16x16xf32>
    %1981 = arith.addf %1963, %1980 : vector<16x16xf32>
    %c1_688 = arith.constant 1 : index
    %c3_689 = arith.constant 3 : index
    %c3_690 = arith.constant 3 : index
    %1982 = vector.load %arg5[%c1_688, %c3_689, %c3_690] : memref<4x19x19xf32, #tpu.memory_space<vmem>>, vector<1x16x16xf32>
    %1983 = vector.shape_cast %1982 : vector<1x16x16xf32> to vector<16x16xf32>
    %c31_691 = arith.constant 31 : index
    %1984 = memref.load %arg3[%c31_691] : memref<256xf32, #tpu.memory_space<smem>>
    %1985 = vector.broadcast %1984 : f32 to vector<16x16xf32>
    %1986 = arith.mulf %1985, %1983 : vector<16x16xf32>
    %1987 = arith.addf %1969, %1986 : vector<16x16xf32>
    %c95_692 = arith.constant 95 : index
    %1988 = memref.load %arg3[%c95_692] : memref<256xf32, #tpu.memory_space<smem>>
    %1989 = vector.broadcast %1988 : f32 to vector<16x16xf32>
    %1990 = arith.mulf %1989, %1983 : vector<16x16xf32>
    %1991 = arith.addf %1973, %1990 : vector<16x16xf32>
    %c159_693 = arith.constant 159 : index
    %1992 = memref.load %arg3[%c159_693] : memref<256xf32, #tpu.memory_space<smem>>
    %1993 = vector.broadcast %1992 : f32 to vector<16x16xf32>
    %1994 = arith.mulf %1993, %1983 : vector<16x16xf32>
    %1995 = arith.addf %1977, %1994 : vector<16x16xf32>
    %c223_694 = arith.constant 223 : index
    %1996 = memref.load %arg3[%c223_694] : memref<256xf32, #tpu.memory_space<smem>>
    %1997 = vector.broadcast %1996 : f32 to vector<16x16xf32>
    %1998 = arith.mulf %1997, %1983 : vector<16x16xf32>
    %1999 = arith.addf %1981, %1998 : vector<16x16xf32>
    %c2_695 = arith.constant 2 : index
    %c0_696 = arith.constant 0 : index
    %c0_697 = arith.constant 0 : index
    %2000 = vector.load %arg5[%c2_695, %c0_696, %c0_697] : memref<4x19x19xf32, #tpu.memory_space<vmem>>, vector<1x16x16xf32>
    %2001 = vector.shape_cast %2000 : vector<1x16x16xf32> to vector<16x16xf32>
    %c32_698 = arith.constant 32 : index
    %2002 = memref.load %arg3[%c32_698] : memref<256xf32, #tpu.memory_space<smem>>
    %2003 = vector.broadcast %2002 : f32 to vector<16x16xf32>
    %2004 = arith.mulf %2003, %2001 : vector<16x16xf32>
    %2005 = arith.addf %1987, %2004 : vector<16x16xf32>
    %c96_699 = arith.constant 96 : index
    %2006 = memref.load %arg3[%c96_699] : memref<256xf32, #tpu.memory_space<smem>>
    %2007 = vector.broadcast %2006 : f32 to vector<16x16xf32>
    %2008 = arith.mulf %2007, %2001 : vector<16x16xf32>
    %2009 = arith.addf %1991, %2008 : vector<16x16xf32>
    %c160_700 = arith.constant 160 : index
    %2010 = memref.load %arg3[%c160_700] : memref<256xf32, #tpu.memory_space<smem>>
    %2011 = vector.broadcast %2010 : f32 to vector<16x16xf32>
    %2012 = arith.mulf %2011, %2001 : vector<16x16xf32>
    %2013 = arith.addf %1995, %2012 : vector<16x16xf32>
    %c224_701 = arith.constant 224 : index
    %2014 = memref.load %arg3[%c224_701] : memref<256xf32, #tpu.memory_space<smem>>
    %2015 = vector.broadcast %2014 : f32 to vector<16x16xf32>
    %2016 = arith.mulf %2015, %2001 : vector<16x16xf32>
    %2017 = arith.addf %1999, %2016 : vector<16x16xf32>
    %c2_702 = arith.constant 2 : index
    %c0_703 = arith.constant 0 : index
    %c1_704 = arith.constant 1 : index
    %2018 = vector.load %arg5[%c2_702, %c0_703, %c1_704] : memref<4x19x19xf32, #tpu.memory_space<vmem>>, vector<1x16x16xf32>
    %2019 = vector.shape_cast %2018 : vector<1x16x16xf32> to vector<16x16xf32>
    %c33_705 = arith.constant 33 : index
    %2020 = memref.load %arg3[%c33_705] : memref<256xf32, #tpu.memory_space<smem>>
    %2021 = vector.broadcast %2020 : f32 to vector<16x16xf32>
    %2022 = arith.mulf %2021, %2019 : vector<16x16xf32>
    %2023 = arith.addf %2005, %2022 : vector<16x16xf32>
    %c97_706 = arith.constant 97 : index
    %2024 = memref.load %arg3[%c97_706] : memref<256xf32, #tpu.memory_space<smem>>
    %2025 = vector.broadcast %2024 : f32 to vector<16x16xf32>
    %2026 = arith.mulf %2025, %2019 : vector<16x16xf32>
    %2027 = arith.addf %2009, %2026 : vector<16x16xf32>
    %c161_707 = arith.constant 161 : index
    %2028 = memref.load %arg3[%c161_707] : memref<256xf32, #tpu.memory_space<smem>>
    %2029 = vector.broadcast %2028 : f32 to vector<16x16xf32>
    %2030 = arith.mulf %2029, %2019 : vector<16x16xf32>
    %2031 = arith.addf %2013, %2030 : vector<16x16xf32>
    %c225_708 = arith.constant 225 : index
    %2032 = memref.load %arg3[%c225_708] : memref<256xf32, #tpu.memory_space<smem>>
    %2033 = vector.broadcast %2032 : f32 to vector<16x16xf32>
    %2034 = arith.mulf %2033, %2019 : vector<16x16xf32>
    %2035 = arith.addf %2017, %2034 : vector<16x16xf32>
    %c2_709 = arith.constant 2 : index
    %c0_710 = arith.constant 0 : index
    %c2_711 = arith.constant 2 : index
    %2036 = vector.load %arg5[%c2_709, %c0_710, %c2_711] : memref<4x19x19xf32, #tpu.memory_space<vmem>>, vector<1x16x16xf32>
    %2037 = vector.shape_cast %2036 : vector<1x16x16xf32> to vector<16x16xf32>
    %c34_712 = arith.constant 34 : index
    %2038 = memref.load %arg3[%c34_712] : memref<256xf32, #tpu.memory_space<smem>>
    %2039 = vector.broadcast %2038 : f32 to vector<16x16xf32>
    %2040 = arith.mulf %2039, %2037 : vector<16x16xf32>
    %2041 = arith.addf %2023, %2040 : vector<16x16xf32>
    %c98_713 = arith.constant 98 : index
    %2042 = memref.load %arg3[%c98_713] : memref<256xf32, #tpu.memory_space<smem>>
    %2043 = vector.broadcast %2042 : f32 to vector<16x16xf32>
    %2044 = arith.mulf %2043, %2037 : vector<16x16xf32>
    %2045 = arith.addf %2027, %2044 : vector<16x16xf32>
    %c162_714 = arith.constant 162 : index
    %2046 = memref.load %arg3[%c162_714] : memref<256xf32, #tpu.memory_space<smem>>
    %2047 = vector.broadcast %2046 : f32 to vector<16x16xf32>
    %2048 = arith.mulf %2047, %2037 : vector<16x16xf32>
    %2049 = arith.addf %2031, %2048 : vector<16x16xf32>
    %c226_715 = arith.constant 226 : index
    %2050 = memref.load %arg3[%c226_715] : memref<256xf32, #tpu.memory_space<smem>>
    %2051 = vector.broadcast %2050 : f32 to vector<16x16xf32>
    %2052 = arith.mulf %2051, %2037 : vector<16x16xf32>
    %2053 = arith.addf %2035, %2052 : vector<16x16xf32>
    %c2_716 = arith.constant 2 : index
    %c0_717 = arith.constant 0 : index
    %c3_718 = arith.constant 3 : index
    %2054 = vector.load %arg5[%c2_716, %c0_717, %c3_718] : memref<4x19x19xf32, #tpu.memory_space<vmem>>, vector<1x16x16xf32>
    %2055 = vector.shape_cast %2054 : vector<1x16x16xf32> to vector<16x16xf32>
    %c35_719 = arith.constant 35 : index
    %2056 = memref.load %arg3[%c35_719] : memref<256xf32, #tpu.memory_space<smem>>
    %2057 = vector.broadcast %2056 : f32 to vector<16x16xf32>
    %2058 = arith.mulf %2057, %2055 : vector<16x16xf32>
    %2059 = arith.addf %2041, %2058 : vector<16x16xf32>
    %c99_720 = arith.constant 99 : index
    %2060 = memref.load %arg3[%c99_720] : memref<256xf32, #tpu.memory_space<smem>>
    %2061 = vector.broadcast %2060 : f32 to vector<16x16xf32>
    %2062 = arith.mulf %2061, %2055 : vector<16x16xf32>
    %2063 = arith.addf %2045, %2062 : vector<16x16xf32>
    %c163_721 = arith.constant 163 : index
    %2064 = memref.load %arg3[%c163_721] : memref<256xf32, #tpu.memory_space<smem>>
    %2065 = vector.broadcast %2064 : f32 to vector<16x16xf32>
    %2066 = arith.mulf %2065, %2055 : vector<16x16xf32>
    %2067 = arith.addf %2049, %2066 : vector<16x16xf32>
    %c227_722 = arith.constant 227 : index
    %2068 = memref.load %arg3[%c227_722] : memref<256xf32, #tpu.memory_space<smem>>
    %2069 = vector.broadcast %2068 : f32 to vector<16x16xf32>
    %2070 = arith.mulf %2069, %2055 : vector<16x16xf32>
    %2071 = arith.addf %2053, %2070 : vector<16x16xf32>
    %c2_723 = arith.constant 2 : index
    %c1_724 = arith.constant 1 : index
    %c0_725 = arith.constant 0 : index
    %2072 = vector.load %arg5[%c2_723, %c1_724, %c0_725] : memref<4x19x19xf32, #tpu.memory_space<vmem>>, vector<1x16x16xf32>
    %2073 = vector.shape_cast %2072 : vector<1x16x16xf32> to vector<16x16xf32>
    %c36_726 = arith.constant 36 : index
    %2074 = memref.load %arg3[%c36_726] : memref<256xf32, #tpu.memory_space<smem>>
    %2075 = vector.broadcast %2074 : f32 to vector<16x16xf32>
    %2076 = arith.mulf %2075, %2073 : vector<16x16xf32>
    %2077 = arith.addf %2059, %2076 : vector<16x16xf32>
    %c100_727 = arith.constant 100 : index
    %2078 = memref.load %arg3[%c100_727] : memref<256xf32, #tpu.memory_space<smem>>
    %2079 = vector.broadcast %2078 : f32 to vector<16x16xf32>
    %2080 = arith.mulf %2079, %2073 : vector<16x16xf32>
    %2081 = arith.addf %2063, %2080 : vector<16x16xf32>
    %c164_728 = arith.constant 164 : index
    %2082 = memref.load %arg3[%c164_728] : memref<256xf32, #tpu.memory_space<smem>>
    %2083 = vector.broadcast %2082 : f32 to vector<16x16xf32>
    %2084 = arith.mulf %2083, %2073 : vector<16x16xf32>
    %2085 = arith.addf %2067, %2084 : vector<16x16xf32>
    %c228_729 = arith.constant 228 : index
    %2086 = memref.load %arg3[%c228_729] : memref<256xf32, #tpu.memory_space<smem>>
    %2087 = vector.broadcast %2086 : f32 to vector<16x16xf32>
    %2088 = arith.mulf %2087, %2073 : vector<16x16xf32>
    %2089 = arith.addf %2071, %2088 : vector<16x16xf32>
    %c2_730 = arith.constant 2 : index
    %c1_731 = arith.constant 1 : index
    %c1_732 = arith.constant 1 : index
    %2090 = vector.load %arg5[%c2_730, %c1_731, %c1_732] : memref<4x19x19xf32, #tpu.memory_space<vmem>>, vector<1x16x16xf32>
    %2091 = vector.shape_cast %2090 : vector<1x16x16xf32> to vector<16x16xf32>
    %c37_733 = arith.constant 37 : index
    %2092 = memref.load %arg3[%c37_733] : memref<256xf32, #tpu.memory_space<smem>>
    %2093 = vector.broadcast %2092 : f32 to vector<16x16xf32>
    %2094 = arith.mulf %2093, %2091 : vector<16x16xf32>
    %2095 = arith.addf %2077, %2094 : vector<16x16xf32>
    %c101_734 = arith.constant 101 : index
    %2096 = memref.load %arg3[%c101_734] : memref<256xf32, #tpu.memory_space<smem>>
    %2097 = vector.broadcast %2096 : f32 to vector<16x16xf32>
    %2098 = arith.mulf %2097, %2091 : vector<16x16xf32>
    %2099 = arith.addf %2081, %2098 : vector<16x16xf32>
    %c165_735 = arith.constant 165 : index
    %2100 = memref.load %arg3[%c165_735] : memref<256xf32, #tpu.memory_space<smem>>
    %2101 = vector.broadcast %2100 : f32 to vector<16x16xf32>
    %2102 = arith.mulf %2101, %2091 : vector<16x16xf32>
    %2103 = arith.addf %2085, %2102 : vector<16x16xf32>
    %c229_736 = arith.constant 229 : index
    %2104 = memref.load %arg3[%c229_736] : memref<256xf32, #tpu.memory_space<smem>>
    %2105 = vector.broadcast %2104 : f32 to vector<16x16xf32>
    %2106 = arith.mulf %2105, %2091 : vector<16x16xf32>
    %2107 = arith.addf %2089, %2106 : vector<16x16xf32>
    %c2_737 = arith.constant 2 : index
    %c1_738 = arith.constant 1 : index
    %c2_739 = arith.constant 2 : index
    %2108 = vector.load %arg5[%c2_737, %c1_738, %c2_739] : memref<4x19x19xf32, #tpu.memory_space<vmem>>, vector<1x16x16xf32>
    %2109 = vector.shape_cast %2108 : vector<1x16x16xf32> to vector<16x16xf32>
    %c38_740 = arith.constant 38 : index
    %2110 = memref.load %arg3[%c38_740] : memref<256xf32, #tpu.memory_space<smem>>
    %2111 = vector.broadcast %2110 : f32 to vector<16x16xf32>
    %2112 = arith.mulf %2111, %2109 : vector<16x16xf32>
    %2113 = arith.addf %2095, %2112 : vector<16x16xf32>
    %c102_741 = arith.constant 102 : index
    %2114 = memref.load %arg3[%c102_741] : memref<256xf32, #tpu.memory_space<smem>>
    %2115 = vector.broadcast %2114 : f32 to vector<16x16xf32>
    %2116 = arith.mulf %2115, %2109 : vector<16x16xf32>
    %2117 = arith.addf %2099, %2116 : vector<16x16xf32>
    %c166_742 = arith.constant 166 : index
    %2118 = memref.load %arg3[%c166_742] : memref<256xf32, #tpu.memory_space<smem>>
    %2119 = vector.broadcast %2118 : f32 to vector<16x16xf32>
    %2120 = arith.mulf %2119, %2109 : vector<16x16xf32>
    %2121 = arith.addf %2103, %2120 : vector<16x16xf32>
    %c230_743 = arith.constant 230 : index
    %2122 = memref.load %arg3[%c230_743] : memref<256xf32, #tpu.memory_space<smem>>
    %2123 = vector.broadcast %2122 : f32 to vector<16x16xf32>
    %2124 = arith.mulf %2123, %2109 : vector<16x16xf32>
    %2125 = arith.addf %2107, %2124 : vector<16x16xf32>
    %c2_744 = arith.constant 2 : index
    %c1_745 = arith.constant 1 : index
    %c3_746 = arith.constant 3 : index
    %2126 = vector.load %arg5[%c2_744, %c1_745, %c3_746] : memref<4x19x19xf32, #tpu.memory_space<vmem>>, vector<1x16x16xf32>
    %2127 = vector.shape_cast %2126 : vector<1x16x16xf32> to vector<16x16xf32>
    %c39_747 = arith.constant 39 : index
    %2128 = memref.load %arg3[%c39_747] : memref<256xf32, #tpu.memory_space<smem>>
    %2129 = vector.broadcast %2128 : f32 to vector<16x16xf32>
    %2130 = arith.mulf %2129, %2127 : vector<16x16xf32>
    %2131 = arith.addf %2113, %2130 : vector<16x16xf32>
    %c103_748 = arith.constant 103 : index
    %2132 = memref.load %arg3[%c103_748] : memref<256xf32, #tpu.memory_space<smem>>
    %2133 = vector.broadcast %2132 : f32 to vector<16x16xf32>
    %2134 = arith.mulf %2133, %2127 : vector<16x16xf32>
    %2135 = arith.addf %2117, %2134 : vector<16x16xf32>
    %c167_749 = arith.constant 167 : index
    %2136 = memref.load %arg3[%c167_749] : memref<256xf32, #tpu.memory_space<smem>>
    %2137 = vector.broadcast %2136 : f32 to vector<16x16xf32>
    %2138 = arith.mulf %2137, %2127 : vector<16x16xf32>
    %2139 = arith.addf %2121, %2138 : vector<16x16xf32>
    %c231_750 = arith.constant 231 : index
    %2140 = memref.load %arg3[%c231_750] : memref<256xf32, #tpu.memory_space<smem>>
    %2141 = vector.broadcast %2140 : f32 to vector<16x16xf32>
    %2142 = arith.mulf %2141, %2127 : vector<16x16xf32>
    %2143 = arith.addf %2125, %2142 : vector<16x16xf32>
    %c2_751 = arith.constant 2 : index
    %c2_752 = arith.constant 2 : index
    %c0_753 = arith.constant 0 : index
    %2144 = vector.load %arg5[%c2_751, %c2_752, %c0_753] : memref<4x19x19xf32, #tpu.memory_space<vmem>>, vector<1x16x16xf32>
    %2145 = vector.shape_cast %2144 : vector<1x16x16xf32> to vector<16x16xf32>
    %c40_754 = arith.constant 40 : index
    %2146 = memref.load %arg3[%c40_754] : memref<256xf32, #tpu.memory_space<smem>>
    %2147 = vector.broadcast %2146 : f32 to vector<16x16xf32>
    %2148 = arith.mulf %2147, %2145 : vector<16x16xf32>
    %2149 = arith.addf %2131, %2148 : vector<16x16xf32>
    %c104_755 = arith.constant 104 : index
    %2150 = memref.load %arg3[%c104_755] : memref<256xf32, #tpu.memory_space<smem>>
    %2151 = vector.broadcast %2150 : f32 to vector<16x16xf32>
    %2152 = arith.mulf %2151, %2145 : vector<16x16xf32>
    %2153 = arith.addf %2135, %2152 : vector<16x16xf32>
    %c168_756 = arith.constant 168 : index
    %2154 = memref.load %arg3[%c168_756] : memref<256xf32, #tpu.memory_space<smem>>
    %2155 = vector.broadcast %2154 : f32 to vector<16x16xf32>
    %2156 = arith.mulf %2155, %2145 : vector<16x16xf32>
    %2157 = arith.addf %2139, %2156 : vector<16x16xf32>
    %c232_757 = arith.constant 232 : index
    %2158 = memref.load %arg3[%c232_757] : memref<256xf32, #tpu.memory_space<smem>>
    %2159 = vector.broadcast %2158 : f32 to vector<16x16xf32>
    %2160 = arith.mulf %2159, %2145 : vector<16x16xf32>
    %2161 = arith.addf %2143, %2160 : vector<16x16xf32>
    %c2_758 = arith.constant 2 : index
    %c2_759 = arith.constant 2 : index
    %c1_760 = arith.constant 1 : index
    %2162 = vector.load %arg5[%c2_758, %c2_759, %c1_760] : memref<4x19x19xf32, #tpu.memory_space<vmem>>, vector<1x16x16xf32>
    %2163 = vector.shape_cast %2162 : vector<1x16x16xf32> to vector<16x16xf32>
    %c41_761 = arith.constant 41 : index
    %2164 = memref.load %arg3[%c41_761] : memref<256xf32, #tpu.memory_space<smem>>
    %2165 = vector.broadcast %2164 : f32 to vector<16x16xf32>
    %2166 = arith.mulf %2165, %2163 : vector<16x16xf32>
    %2167 = arith.addf %2149, %2166 : vector<16x16xf32>
    %c105_762 = arith.constant 105 : index
    %2168 = memref.load %arg3[%c105_762] : memref<256xf32, #tpu.memory_space<smem>>
    %2169 = vector.broadcast %2168 : f32 to vector<16x16xf32>
    %2170 = arith.mulf %2169, %2163 : vector<16x16xf32>
    %2171 = arith.addf %2153, %2170 : vector<16x16xf32>
    %c169_763 = arith.constant 169 : index
    %2172 = memref.load %arg3[%c169_763] : memref<256xf32, #tpu.memory_space<smem>>
    %2173 = vector.broadcast %2172 : f32 to vector<16x16xf32>
    %2174 = arith.mulf %2173, %2163 : vector<16x16xf32>
    %2175 = arith.addf %2157, %2174 : vector<16x16xf32>
    %c233_764 = arith.constant 233 : index
    %2176 = memref.load %arg3[%c233_764] : memref<256xf32, #tpu.memory_space<smem>>
    %2177 = vector.broadcast %2176 : f32 to vector<16x16xf32>
    %2178 = arith.mulf %2177, %2163 : vector<16x16xf32>
    %2179 = arith.addf %2161, %2178 : vector<16x16xf32>
    %c2_765 = arith.constant 2 : index
    %c2_766 = arith.constant 2 : index
    %c2_767 = arith.constant 2 : index
    %2180 = vector.load %arg5[%c2_765, %c2_766, %c2_767] : memref<4x19x19xf32, #tpu.memory_space<vmem>>, vector<1x16x16xf32>
    %2181 = vector.shape_cast %2180 : vector<1x16x16xf32> to vector<16x16xf32>
    %c42_768 = arith.constant 42 : index
    %2182 = memref.load %arg3[%c42_768] : memref<256xf32, #tpu.memory_space<smem>>
    %2183 = vector.broadcast %2182 : f32 to vector<16x16xf32>
    %2184 = arith.mulf %2183, %2181 : vector<16x16xf32>
    %2185 = arith.addf %2167, %2184 : vector<16x16xf32>
    %c106_769 = arith.constant 106 : index
    %2186 = memref.load %arg3[%c106_769] : memref<256xf32, #tpu.memory_space<smem>>
    %2187 = vector.broadcast %2186 : f32 to vector<16x16xf32>
    %2188 = arith.mulf %2187, %2181 : vector<16x16xf32>
    %2189 = arith.addf %2171, %2188 : vector<16x16xf32>
    %c170_770 = arith.constant 170 : index
    %2190 = memref.load %arg3[%c170_770] : memref<256xf32, #tpu.memory_space<smem>>
    %2191 = vector.broadcast %2190 : f32 to vector<16x16xf32>
    %2192 = arith.mulf %2191, %2181 : vector<16x16xf32>
    %2193 = arith.addf %2175, %2192 : vector<16x16xf32>
    %c234_771 = arith.constant 234 : index
    %2194 = memref.load %arg3[%c234_771] : memref<256xf32, #tpu.memory_space<smem>>
    %2195 = vector.broadcast %2194 : f32 to vector<16x16xf32>
    %2196 = arith.mulf %2195, %2181 : vector<16x16xf32>
    %2197 = arith.addf %2179, %2196 : vector<16x16xf32>
    %c2_772 = arith.constant 2 : index
    %c2_773 = arith.constant 2 : index
    %c3_774 = arith.constant 3 : index
    %2198 = vector.load %arg5[%c2_772, %c2_773, %c3_774] : memref<4x19x19xf32, #tpu.memory_space<vmem>>, vector<1x16x16xf32>
    %2199 = vector.shape_cast %2198 : vector<1x16x16xf32> to vector<16x16xf32>
    %c43_775 = arith.constant 43 : index
    %2200 = memref.load %arg3[%c43_775] : memref<256xf32, #tpu.memory_space<smem>>
    %2201 = vector.broadcast %2200 : f32 to vector<16x16xf32>
    %2202 = arith.mulf %2201, %2199 : vector<16x16xf32>
    %2203 = arith.addf %2185, %2202 : vector<16x16xf32>
    %c107_776 = arith.constant 107 : index
    %2204 = memref.load %arg3[%c107_776] : memref<256xf32, #tpu.memory_space<smem>>
    %2205 = vector.broadcast %2204 : f32 to vector<16x16xf32>
    %2206 = arith.mulf %2205, %2199 : vector<16x16xf32>
    %2207 = arith.addf %2189, %2206 : vector<16x16xf32>
    %c171_777 = arith.constant 171 : index
    %2208 = memref.load %arg3[%c171_777] : memref<256xf32, #tpu.memory_space<smem>>
    %2209 = vector.broadcast %2208 : f32 to vector<16x16xf32>
    %2210 = arith.mulf %2209, %2199 : vector<16x16xf32>
    %2211 = arith.addf %2193, %2210 : vector<16x16xf32>
    %c235_778 = arith.constant 235 : index
    %2212 = memref.load %arg3[%c235_778] : memref<256xf32, #tpu.memory_space<smem>>
    %2213 = vector.broadcast %2212 : f32 to vector<16x16xf32>
    %2214 = arith.mulf %2213, %2199 : vector<16x16xf32>
    %2215 = arith.addf %2197, %2214 : vector<16x16xf32>
    %c2_779 = arith.constant 2 : index
    %c3_780 = arith.constant 3 : index
    %c0_781 = arith.constant 0 : index
    %2216 = vector.load %arg5[%c2_779, %c3_780, %c0_781] : memref<4x19x19xf32, #tpu.memory_space<vmem>>, vector<1x16x16xf32>
    %2217 = vector.shape_cast %2216 : vector<1x16x16xf32> to vector<16x16xf32>
    %c44_782 = arith.constant 44 : index
    %2218 = memref.load %arg3[%c44_782] : memref<256xf32, #tpu.memory_space<smem>>
    %2219 = vector.broadcast %2218 : f32 to vector<16x16xf32>
    %2220 = arith.mulf %2219, %2217 : vector<16x16xf32>
    %2221 = arith.addf %2203, %2220 : vector<16x16xf32>
    %c108_783 = arith.constant 108 : index
    %2222 = memref.load %arg3[%c108_783] : memref<256xf32, #tpu.memory_space<smem>>
    %2223 = vector.broadcast %2222 : f32 to vector<16x16xf32>
    %2224 = arith.mulf %2223, %2217 : vector<16x16xf32>
    %2225 = arith.addf %2207, %2224 : vector<16x16xf32>
    %c172_784 = arith.constant 172 : index
    %2226 = memref.load %arg3[%c172_784] : memref<256xf32, #tpu.memory_space<smem>>
    %2227 = vector.broadcast %2226 : f32 to vector<16x16xf32>
    %2228 = arith.mulf %2227, %2217 : vector<16x16xf32>
    %2229 = arith.addf %2211, %2228 : vector<16x16xf32>
    %c236_785 = arith.constant 236 : index
    %2230 = memref.load %arg3[%c236_785] : memref<256xf32, #tpu.memory_space<smem>>
    %2231 = vector.broadcast %2230 : f32 to vector<16x16xf32>
    %2232 = arith.mulf %2231, %2217 : vector<16x16xf32>
    %2233 = arith.addf %2215, %2232 : vector<16x16xf32>
    %c2_786 = arith.constant 2 : index
    %c3_787 = arith.constant 3 : index
    %c1_788 = arith.constant 1 : index
    %2234 = vector.load %arg5[%c2_786, %c3_787, %c1_788] : memref<4x19x19xf32, #tpu.memory_space<vmem>>, vector<1x16x16xf32>
    %2235 = vector.shape_cast %2234 : vector<1x16x16xf32> to vector<16x16xf32>
    %c45_789 = arith.constant 45 : index
    %2236 = memref.load %arg3[%c45_789] : memref<256xf32, #tpu.memory_space<smem>>
    %2237 = vector.broadcast %2236 : f32 to vector<16x16xf32>
    %2238 = arith.mulf %2237, %2235 : vector<16x16xf32>
    %2239 = arith.addf %2221, %2238 : vector<16x16xf32>
    %c109_790 = arith.constant 109 : index
    %2240 = memref.load %arg3[%c109_790] : memref<256xf32, #tpu.memory_space<smem>>
    %2241 = vector.broadcast %2240 : f32 to vector<16x16xf32>
    %2242 = arith.mulf %2241, %2235 : vector<16x16xf32>
    %2243 = arith.addf %2225, %2242 : vector<16x16xf32>
    %c173_791 = arith.constant 173 : index
    %2244 = memref.load %arg3[%c173_791] : memref<256xf32, #tpu.memory_space<smem>>
    %2245 = vector.broadcast %2244 : f32 to vector<16x16xf32>
    %2246 = arith.mulf %2245, %2235 : vector<16x16xf32>
    %2247 = arith.addf %2229, %2246 : vector<16x16xf32>
    %c237_792 = arith.constant 237 : index
    %2248 = memref.load %arg3[%c237_792] : memref<256xf32, #tpu.memory_space<smem>>
    %2249 = vector.broadcast %2248 : f32 to vector<16x16xf32>
    %2250 = arith.mulf %2249, %2235 : vector<16x16xf32>
    %2251 = arith.addf %2233, %2250 : vector<16x16xf32>
    %c2_793 = arith.constant 2 : index
    %c3_794 = arith.constant 3 : index
    %c2_795 = arith.constant 2 : index
    %2252 = vector.load %arg5[%c2_793, %c3_794, %c2_795] : memref<4x19x19xf32, #tpu.memory_space<vmem>>, vector<1x16x16xf32>
    %2253 = vector.shape_cast %2252 : vector<1x16x16xf32> to vector<16x16xf32>
    %c46_796 = arith.constant 46 : index
    %2254 = memref.load %arg3[%c46_796] : memref<256xf32, #tpu.memory_space<smem>>
    %2255 = vector.broadcast %2254 : f32 to vector<16x16xf32>
    %2256 = arith.mulf %2255, %2253 : vector<16x16xf32>
    %2257 = arith.addf %2239, %2256 : vector<16x16xf32>
    %c110_797 = arith.constant 110 : index
    %2258 = memref.load %arg3[%c110_797] : memref<256xf32, #tpu.memory_space<smem>>
    %2259 = vector.broadcast %2258 : f32 to vector<16x16xf32>
    %2260 = arith.mulf %2259, %2253 : vector<16x16xf32>
    %2261 = arith.addf %2243, %2260 : vector<16x16xf32>
    %c174_798 = arith.constant 174 : index
    %2262 = memref.load %arg3[%c174_798] : memref<256xf32, #tpu.memory_space<smem>>
    %2263 = vector.broadcast %2262 : f32 to vector<16x16xf32>
    %2264 = arith.mulf %2263, %2253 : vector<16x16xf32>
    %2265 = arith.addf %2247, %2264 : vector<16x16xf32>
    %c238_799 = arith.constant 238 : index
    %2266 = memref.load %arg3[%c238_799] : memref<256xf32, #tpu.memory_space<smem>>
    %2267 = vector.broadcast %2266 : f32 to vector<16x16xf32>
    %2268 = arith.mulf %2267, %2253 : vector<16x16xf32>
    %2269 = arith.addf %2251, %2268 : vector<16x16xf32>
    %c2_800 = arith.constant 2 : index
    %c3_801 = arith.constant 3 : index
    %c3_802 = arith.constant 3 : index
    %2270 = vector.load %arg5[%c2_800, %c3_801, %c3_802] : memref<4x19x19xf32, #tpu.memory_space<vmem>>, vector<1x16x16xf32>
    %2271 = vector.shape_cast %2270 : vector<1x16x16xf32> to vector<16x16xf32>
    %c47_803 = arith.constant 47 : index
    %2272 = memref.load %arg3[%c47_803] : memref<256xf32, #tpu.memory_space<smem>>
    %2273 = vector.broadcast %2272 : f32 to vector<16x16xf32>
    %2274 = arith.mulf %2273, %2271 : vector<16x16xf32>
    %2275 = arith.addf %2257, %2274 : vector<16x16xf32>
    %c111_804 = arith.constant 111 : index
    %2276 = memref.load %arg3[%c111_804] : memref<256xf32, #tpu.memory_space<smem>>
    %2277 = vector.broadcast %2276 : f32 to vector<16x16xf32>
    %2278 = arith.mulf %2277, %2271 : vector<16x16xf32>
    %2279 = arith.addf %2261, %2278 : vector<16x16xf32>
    %c175_805 = arith.constant 175 : index
    %2280 = memref.load %arg3[%c175_805] : memref<256xf32, #tpu.memory_space<smem>>
    %2281 = vector.broadcast %2280 : f32 to vector<16x16xf32>
    %2282 = arith.mulf %2281, %2271 : vector<16x16xf32>
    %2283 = arith.addf %2265, %2282 : vector<16x16xf32>
    %c239_806 = arith.constant 239 : index
    %2284 = memref.load %arg3[%c239_806] : memref<256xf32, #tpu.memory_space<smem>>
    %2285 = vector.broadcast %2284 : f32 to vector<16x16xf32>
    %2286 = arith.mulf %2285, %2271 : vector<16x16xf32>
    %2287 = arith.addf %2269, %2286 : vector<16x16xf32>
    %c3_807 = arith.constant 3 : index
    %c0_808 = arith.constant 0 : index
    %c0_809 = arith.constant 0 : index
    %2288 = vector.load %arg5[%c3_807, %c0_808, %c0_809] : memref<4x19x19xf32, #tpu.memory_space<vmem>>, vector<1x16x16xf32>
    %2289 = vector.shape_cast %2288 : vector<1x16x16xf32> to vector<16x16xf32>
    %c48_810 = arith.constant 48 : index
    %2290 = memref.load %arg3[%c48_810] : memref<256xf32, #tpu.memory_space<smem>>
    %2291 = vector.broadcast %2290 : f32 to vector<16x16xf32>
    %2292 = arith.mulf %2291, %2289 : vector<16x16xf32>
    %2293 = arith.addf %2275, %2292 : vector<16x16xf32>
    %c112_811 = arith.constant 112 : index
    %2294 = memref.load %arg3[%c112_811] : memref<256xf32, #tpu.memory_space<smem>>
    %2295 = vector.broadcast %2294 : f32 to vector<16x16xf32>
    %2296 = arith.mulf %2295, %2289 : vector<16x16xf32>
    %2297 = arith.addf %2279, %2296 : vector<16x16xf32>
    %c176_812 = arith.constant 176 : index
    %2298 = memref.load %arg3[%c176_812] : memref<256xf32, #tpu.memory_space<smem>>
    %2299 = vector.broadcast %2298 : f32 to vector<16x16xf32>
    %2300 = arith.mulf %2299, %2289 : vector<16x16xf32>
    %2301 = arith.addf %2283, %2300 : vector<16x16xf32>
    %c240_813 = arith.constant 240 : index
    %2302 = memref.load %arg3[%c240_813] : memref<256xf32, #tpu.memory_space<smem>>
    %2303 = vector.broadcast %2302 : f32 to vector<16x16xf32>
    %2304 = arith.mulf %2303, %2289 : vector<16x16xf32>
    %2305 = arith.addf %2287, %2304 : vector<16x16xf32>
    %c3_814 = arith.constant 3 : index
    %c0_815 = arith.constant 0 : index
    %c1_816 = arith.constant 1 : index
    %2306 = vector.load %arg5[%c3_814, %c0_815, %c1_816] : memref<4x19x19xf32, #tpu.memory_space<vmem>>, vector<1x16x16xf32>
    %2307 = vector.shape_cast %2306 : vector<1x16x16xf32> to vector<16x16xf32>
    %c49_817 = arith.constant 49 : index
    %2308 = memref.load %arg3[%c49_817] : memref<256xf32, #tpu.memory_space<smem>>
    %2309 = vector.broadcast %2308 : f32 to vector<16x16xf32>
    %2310 = arith.mulf %2309, %2307 : vector<16x16xf32>
    %2311 = arith.addf %2293, %2310 : vector<16x16xf32>
    %c113_818 = arith.constant 113 : index
    %2312 = memref.load %arg3[%c113_818] : memref<256xf32, #tpu.memory_space<smem>>
    %2313 = vector.broadcast %2312 : f32 to vector<16x16xf32>
    %2314 = arith.mulf %2313, %2307 : vector<16x16xf32>
    %2315 = arith.addf %2297, %2314 : vector<16x16xf32>
    %c177_819 = arith.constant 177 : index
    %2316 = memref.load %arg3[%c177_819] : memref<256xf32, #tpu.memory_space<smem>>
    %2317 = vector.broadcast %2316 : f32 to vector<16x16xf32>
    %2318 = arith.mulf %2317, %2307 : vector<16x16xf32>
    %2319 = arith.addf %2301, %2318 : vector<16x16xf32>
    %c241_820 = arith.constant 241 : index
    %2320 = memref.load %arg3[%c241_820] : memref<256xf32, #tpu.memory_space<smem>>
    %2321 = vector.broadcast %2320 : f32 to vector<16x16xf32>
    %2322 = arith.mulf %2321, %2307 : vector<16x16xf32>
    %2323 = arith.addf %2305, %2322 : vector<16x16xf32>
    %c3_821 = arith.constant 3 : index
    %c0_822 = arith.constant 0 : index
    %c2_823 = arith.constant 2 : index
    %2324 = vector.load %arg5[%c3_821, %c0_822, %c2_823] : memref<4x19x19xf32, #tpu.memory_space<vmem>>, vector<1x16x16xf32>
    %2325 = vector.shape_cast %2324 : vector<1x16x16xf32> to vector<16x16xf32>
    %c50_824 = arith.constant 50 : index
    %2326 = memref.load %arg3[%c50_824] : memref<256xf32, #tpu.memory_space<smem>>
    %2327 = vector.broadcast %2326 : f32 to vector<16x16xf32>
    %2328 = arith.mulf %2327, %2325 : vector<16x16xf32>
    %2329 = arith.addf %2311, %2328 : vector<16x16xf32>
    %c114_825 = arith.constant 114 : index
    %2330 = memref.load %arg3[%c114_825] : memref<256xf32, #tpu.memory_space<smem>>
    %2331 = vector.broadcast %2330 : f32 to vector<16x16xf32>
    %2332 = arith.mulf %2331, %2325 : vector<16x16xf32>
    %2333 = arith.addf %2315, %2332 : vector<16x16xf32>
    %c178_826 = arith.constant 178 : index
    %2334 = memref.load %arg3[%c178_826] : memref<256xf32, #tpu.memory_space<smem>>
    %2335 = vector.broadcast %2334 : f32 to vector<16x16xf32>
    %2336 = arith.mulf %2335, %2325 : vector<16x16xf32>
    %2337 = arith.addf %2319, %2336 : vector<16x16xf32>
    %c242_827 = arith.constant 242 : index
    %2338 = memref.load %arg3[%c242_827] : memref<256xf32, #tpu.memory_space<smem>>
    %2339 = vector.broadcast %2338 : f32 to vector<16x16xf32>
    %2340 = arith.mulf %2339, %2325 : vector<16x16xf32>
    %2341 = arith.addf %2323, %2340 : vector<16x16xf32>
    %c3_828 = arith.constant 3 : index
    %c0_829 = arith.constant 0 : index
    %c3_830 = arith.constant 3 : index
    %2342 = vector.load %arg5[%c3_828, %c0_829, %c3_830] : memref<4x19x19xf32, #tpu.memory_space<vmem>>, vector<1x16x16xf32>
    %2343 = vector.shape_cast %2342 : vector<1x16x16xf32> to vector<16x16xf32>
    %c51_831 = arith.constant 51 : index
    %2344 = memref.load %arg3[%c51_831] : memref<256xf32, #tpu.memory_space<smem>>
    %2345 = vector.broadcast %2344 : f32 to vector<16x16xf32>
    %2346 = arith.mulf %2345, %2343 : vector<16x16xf32>
    %2347 = arith.addf %2329, %2346 : vector<16x16xf32>
    %c115_832 = arith.constant 115 : index
    %2348 = memref.load %arg3[%c115_832] : memref<256xf32, #tpu.memory_space<smem>>
    %2349 = vector.broadcast %2348 : f32 to vector<16x16xf32>
    %2350 = arith.mulf %2349, %2343 : vector<16x16xf32>
    %2351 = arith.addf %2333, %2350 : vector<16x16xf32>
    %c179_833 = arith.constant 179 : index
    %2352 = memref.load %arg3[%c179_833] : memref<256xf32, #tpu.memory_space<smem>>
    %2353 = vector.broadcast %2352 : f32 to vector<16x16xf32>
    %2354 = arith.mulf %2353, %2343 : vector<16x16xf32>
    %2355 = arith.addf %2337, %2354 : vector<16x16xf32>
    %c243_834 = arith.constant 243 : index
    %2356 = memref.load %arg3[%c243_834] : memref<256xf32, #tpu.memory_space<smem>>
    %2357 = vector.broadcast %2356 : f32 to vector<16x16xf32>
    %2358 = arith.mulf %2357, %2343 : vector<16x16xf32>
    %2359 = arith.addf %2341, %2358 : vector<16x16xf32>
    %c3_835 = arith.constant 3 : index
    %c1_836 = arith.constant 1 : index
    %c0_837 = arith.constant 0 : index
    %2360 = vector.load %arg5[%c3_835, %c1_836, %c0_837] : memref<4x19x19xf32, #tpu.memory_space<vmem>>, vector<1x16x16xf32>
    %2361 = vector.shape_cast %2360 : vector<1x16x16xf32> to vector<16x16xf32>
    %c52_838 = arith.constant 52 : index
    %2362 = memref.load %arg3[%c52_838] : memref<256xf32, #tpu.memory_space<smem>>
    %2363 = vector.broadcast %2362 : f32 to vector<16x16xf32>
    %2364 = arith.mulf %2363, %2361 : vector<16x16xf32>
    %2365 = arith.addf %2347, %2364 : vector<16x16xf32>
    %c116_839 = arith.constant 116 : index
    %2366 = memref.load %arg3[%c116_839] : memref<256xf32, #tpu.memory_space<smem>>
    %2367 = vector.broadcast %2366 : f32 to vector<16x16xf32>
    %2368 = arith.mulf %2367, %2361 : vector<16x16xf32>
    %2369 = arith.addf %2351, %2368 : vector<16x16xf32>
    %c180_840 = arith.constant 180 : index
    %2370 = memref.load %arg3[%c180_840] : memref<256xf32, #tpu.memory_space<smem>>
    %2371 = vector.broadcast %2370 : f32 to vector<16x16xf32>
    %2372 = arith.mulf %2371, %2361 : vector<16x16xf32>
    %2373 = arith.addf %2355, %2372 : vector<16x16xf32>
    %c244_841 = arith.constant 244 : index
    %2374 = memref.load %arg3[%c244_841] : memref<256xf32, #tpu.memory_space<smem>>
    %2375 = vector.broadcast %2374 : f32 to vector<16x16xf32>
    %2376 = arith.mulf %2375, %2361 : vector<16x16xf32>
    %2377 = arith.addf %2359, %2376 : vector<16x16xf32>
    %c3_842 = arith.constant 3 : index
    %c1_843 = arith.constant 1 : index
    %c1_844 = arith.constant 1 : index
    %2378 = vector.load %arg5[%c3_842, %c1_843, %c1_844] : memref<4x19x19xf32, #tpu.memory_space<vmem>>, vector<1x16x16xf32>
    %2379 = vector.shape_cast %2378 : vector<1x16x16xf32> to vector<16x16xf32>
    %c53_845 = arith.constant 53 : index
    %2380 = memref.load %arg3[%c53_845] : memref<256xf32, #tpu.memory_space<smem>>
    %2381 = vector.broadcast %2380 : f32 to vector<16x16xf32>
    %2382 = arith.mulf %2381, %2379 : vector<16x16xf32>
    %2383 = arith.addf %2365, %2382 : vector<16x16xf32>
    %c117_846 = arith.constant 117 : index
    %2384 = memref.load %arg3[%c117_846] : memref<256xf32, #tpu.memory_space<smem>>
    %2385 = vector.broadcast %2384 : f32 to vector<16x16xf32>
    %2386 = arith.mulf %2385, %2379 : vector<16x16xf32>
    %2387 = arith.addf %2369, %2386 : vector<16x16xf32>
    %c181_847 = arith.constant 181 : index
    %2388 = memref.load %arg3[%c181_847] : memref<256xf32, #tpu.memory_space<smem>>
    %2389 = vector.broadcast %2388 : f32 to vector<16x16xf32>
    %2390 = arith.mulf %2389, %2379 : vector<16x16xf32>
    %2391 = arith.addf %2373, %2390 : vector<16x16xf32>
    %c245_848 = arith.constant 245 : index
    %2392 = memref.load %arg3[%c245_848] : memref<256xf32, #tpu.memory_space<smem>>
    %2393 = vector.broadcast %2392 : f32 to vector<16x16xf32>
    %2394 = arith.mulf %2393, %2379 : vector<16x16xf32>
    %2395 = arith.addf %2377, %2394 : vector<16x16xf32>
    %c3_849 = arith.constant 3 : index
    %c1_850 = arith.constant 1 : index
    %c2_851 = arith.constant 2 : index
    %2396 = vector.load %arg5[%c3_849, %c1_850, %c2_851] : memref<4x19x19xf32, #tpu.memory_space<vmem>>, vector<1x16x16xf32>
    %2397 = vector.shape_cast %2396 : vector<1x16x16xf32> to vector<16x16xf32>
    %c54_852 = arith.constant 54 : index
    %2398 = memref.load %arg3[%c54_852] : memref<256xf32, #tpu.memory_space<smem>>
    %2399 = vector.broadcast %2398 : f32 to vector<16x16xf32>
    %2400 = arith.mulf %2399, %2397 : vector<16x16xf32>
    %2401 = arith.addf %2383, %2400 : vector<16x16xf32>
    %c118_853 = arith.constant 118 : index
    %2402 = memref.load %arg3[%c118_853] : memref<256xf32, #tpu.memory_space<smem>>
    %2403 = vector.broadcast %2402 : f32 to vector<16x16xf32>
    %2404 = arith.mulf %2403, %2397 : vector<16x16xf32>
    %2405 = arith.addf %2387, %2404 : vector<16x16xf32>
    %c182_854 = arith.constant 182 : index
    %2406 = memref.load %arg3[%c182_854] : memref<256xf32, #tpu.memory_space<smem>>
    %2407 = vector.broadcast %2406 : f32 to vector<16x16xf32>
    %2408 = arith.mulf %2407, %2397 : vector<16x16xf32>
    %2409 = arith.addf %2391, %2408 : vector<16x16xf32>
    %c246_855 = arith.constant 246 : index
    %2410 = memref.load %arg3[%c246_855] : memref<256xf32, #tpu.memory_space<smem>>
    %2411 = vector.broadcast %2410 : f32 to vector<16x16xf32>
    %2412 = arith.mulf %2411, %2397 : vector<16x16xf32>
    %2413 = arith.addf %2395, %2412 : vector<16x16xf32>
    %c3_856 = arith.constant 3 : index
    %c1_857 = arith.constant 1 : index
    %c3_858 = arith.constant 3 : index
    %2414 = vector.load %arg5[%c3_856, %c1_857, %c3_858] : memref<4x19x19xf32, #tpu.memory_space<vmem>>, vector<1x16x16xf32>
    %2415 = vector.shape_cast %2414 : vector<1x16x16xf32> to vector<16x16xf32>
    %c55_859 = arith.constant 55 : index
    %2416 = memref.load %arg3[%c55_859] : memref<256xf32, #tpu.memory_space<smem>>
    %2417 = vector.broadcast %2416 : f32 to vector<16x16xf32>
    %2418 = arith.mulf %2417, %2415 : vector<16x16xf32>
    %2419 = arith.addf %2401, %2418 : vector<16x16xf32>
    %c119_860 = arith.constant 119 : index
    %2420 = memref.load %arg3[%c119_860] : memref<256xf32, #tpu.memory_space<smem>>
    %2421 = vector.broadcast %2420 : f32 to vector<16x16xf32>
    %2422 = arith.mulf %2421, %2415 : vector<16x16xf32>
    %2423 = arith.addf %2405, %2422 : vector<16x16xf32>
    %c183_861 = arith.constant 183 : index
    %2424 = memref.load %arg3[%c183_861] : memref<256xf32, #tpu.memory_space<smem>>
    %2425 = vector.broadcast %2424 : f32 to vector<16x16xf32>
    %2426 = arith.mulf %2425, %2415 : vector<16x16xf32>
    %2427 = arith.addf %2409, %2426 : vector<16x16xf32>
    %c247_862 = arith.constant 247 : index
    %2428 = memref.load %arg3[%c247_862] : memref<256xf32, #tpu.memory_space<smem>>
    %2429 = vector.broadcast %2428 : f32 to vector<16x16xf32>
    %2430 = arith.mulf %2429, %2415 : vector<16x16xf32>
    %2431 = arith.addf %2413, %2430 : vector<16x16xf32>
    %c3_863 = arith.constant 3 : index
    %c2_864 = arith.constant 2 : index
    %c0_865 = arith.constant 0 : index
    %2432 = vector.load %arg5[%c3_863, %c2_864, %c0_865] : memref<4x19x19xf32, #tpu.memory_space<vmem>>, vector<1x16x16xf32>
    %2433 = vector.shape_cast %2432 : vector<1x16x16xf32> to vector<16x16xf32>
    %c56_866 = arith.constant 56 : index
    %2434 = memref.load %arg3[%c56_866] : memref<256xf32, #tpu.memory_space<smem>>
    %2435 = vector.broadcast %2434 : f32 to vector<16x16xf32>
    %2436 = arith.mulf %2435, %2433 : vector<16x16xf32>
    %2437 = arith.addf %2419, %2436 : vector<16x16xf32>
    %c120_867 = arith.constant 120 : index
    %2438 = memref.load %arg3[%c120_867] : memref<256xf32, #tpu.memory_space<smem>>
    %2439 = vector.broadcast %2438 : f32 to vector<16x16xf32>
    %2440 = arith.mulf %2439, %2433 : vector<16x16xf32>
    %2441 = arith.addf %2423, %2440 : vector<16x16xf32>
    %c184_868 = arith.constant 184 : index
    %2442 = memref.load %arg3[%c184_868] : memref<256xf32, #tpu.memory_space<smem>>
    %2443 = vector.broadcast %2442 : f32 to vector<16x16xf32>
    %2444 = arith.mulf %2443, %2433 : vector<16x16xf32>
    %2445 = arith.addf %2427, %2444 : vector<16x16xf32>
    %c248_869 = arith.constant 248 : index
    %2446 = memref.load %arg3[%c248_869] : memref<256xf32, #tpu.memory_space<smem>>
    %2447 = vector.broadcast %2446 : f32 to vector<16x16xf32>
    %2448 = arith.mulf %2447, %2433 : vector<16x16xf32>
    %2449 = arith.addf %2431, %2448 : vector<16x16xf32>
    %c3_870 = arith.constant 3 : index
    %c2_871 = arith.constant 2 : index
    %c1_872 = arith.constant 1 : index
    %2450 = vector.load %arg5[%c3_870, %c2_871, %c1_872] : memref<4x19x19xf32, #tpu.memory_space<vmem>>, vector<1x16x16xf32>
    %2451 = vector.shape_cast %2450 : vector<1x16x16xf32> to vector<16x16xf32>
    %c57_873 = arith.constant 57 : index
    %2452 = memref.load %arg3[%c57_873] : memref<256xf32, #tpu.memory_space<smem>>
    %2453 = vector.broadcast %2452 : f32 to vector<16x16xf32>
    %2454 = arith.mulf %2453, %2451 : vector<16x16xf32>
    %2455 = arith.addf %2437, %2454 : vector<16x16xf32>
    %c121_874 = arith.constant 121 : index
    %2456 = memref.load %arg3[%c121_874] : memref<256xf32, #tpu.memory_space<smem>>
    %2457 = vector.broadcast %2456 : f32 to vector<16x16xf32>
    %2458 = arith.mulf %2457, %2451 : vector<16x16xf32>
    %2459 = arith.addf %2441, %2458 : vector<16x16xf32>
    %c185_875 = arith.constant 185 : index
    %2460 = memref.load %arg3[%c185_875] : memref<256xf32, #tpu.memory_space<smem>>
    %2461 = vector.broadcast %2460 : f32 to vector<16x16xf32>
    %2462 = arith.mulf %2461, %2451 : vector<16x16xf32>
    %2463 = arith.addf %2445, %2462 : vector<16x16xf32>
    %c249_876 = arith.constant 249 : index
    %2464 = memref.load %arg3[%c249_876] : memref<256xf32, #tpu.memory_space<smem>>
    %2465 = vector.broadcast %2464 : f32 to vector<16x16xf32>
    %2466 = arith.mulf %2465, %2451 : vector<16x16xf32>
    %2467 = arith.addf %2449, %2466 : vector<16x16xf32>
    %c3_877 = arith.constant 3 : index
    %c2_878 = arith.constant 2 : index
    %c2_879 = arith.constant 2 : index
    %2468 = vector.load %arg5[%c3_877, %c2_878, %c2_879] : memref<4x19x19xf32, #tpu.memory_space<vmem>>, vector<1x16x16xf32>
    %2469 = vector.shape_cast %2468 : vector<1x16x16xf32> to vector<16x16xf32>
    %c58_880 = arith.constant 58 : index
    %2470 = memref.load %arg3[%c58_880] : memref<256xf32, #tpu.memory_space<smem>>
    %2471 = vector.broadcast %2470 : f32 to vector<16x16xf32>
    %2472 = arith.mulf %2471, %2469 : vector<16x16xf32>
    %2473 = arith.addf %2455, %2472 : vector<16x16xf32>
    %c122_881 = arith.constant 122 : index
    %2474 = memref.load %arg3[%c122_881] : memref<256xf32, #tpu.memory_space<smem>>
    %2475 = vector.broadcast %2474 : f32 to vector<16x16xf32>
    %2476 = arith.mulf %2475, %2469 : vector<16x16xf32>
    %2477 = arith.addf %2459, %2476 : vector<16x16xf32>
    %c186_882 = arith.constant 186 : index
    %2478 = memref.load %arg3[%c186_882] : memref<256xf32, #tpu.memory_space<smem>>
    %2479 = vector.broadcast %2478 : f32 to vector<16x16xf32>
    %2480 = arith.mulf %2479, %2469 : vector<16x16xf32>
    %2481 = arith.addf %2463, %2480 : vector<16x16xf32>
    %c250_883 = arith.constant 250 : index
    %2482 = memref.load %arg3[%c250_883] : memref<256xf32, #tpu.memory_space<smem>>
    %2483 = vector.broadcast %2482 : f32 to vector<16x16xf32>
    %2484 = arith.mulf %2483, %2469 : vector<16x16xf32>
    %2485 = arith.addf %2467, %2484 : vector<16x16xf32>
    %c3_884 = arith.constant 3 : index
    %c2_885 = arith.constant 2 : index
    %c3_886 = arith.constant 3 : index
    %2486 = vector.load %arg5[%c3_884, %c2_885, %c3_886] : memref<4x19x19xf32, #tpu.memory_space<vmem>>, vector<1x16x16xf32>
    %2487 = vector.shape_cast %2486 : vector<1x16x16xf32> to vector<16x16xf32>
    %c59_887 = arith.constant 59 : index
    %2488 = memref.load %arg3[%c59_887] : memref<256xf32, #tpu.memory_space<smem>>
    %2489 = vector.broadcast %2488 : f32 to vector<16x16xf32>
    %2490 = arith.mulf %2489, %2487 : vector<16x16xf32>
    %2491 = arith.addf %2473, %2490 : vector<16x16xf32>
    %c123_888 = arith.constant 123 : index
    %2492 = memref.load %arg3[%c123_888] : memref<256xf32, #tpu.memory_space<smem>>
    %2493 = vector.broadcast %2492 : f32 to vector<16x16xf32>
    %2494 = arith.mulf %2493, %2487 : vector<16x16xf32>
    %2495 = arith.addf %2477, %2494 : vector<16x16xf32>
    %c187_889 = arith.constant 187 : index
    %2496 = memref.load %arg3[%c187_889] : memref<256xf32, #tpu.memory_space<smem>>
    %2497 = vector.broadcast %2496 : f32 to vector<16x16xf32>
    %2498 = arith.mulf %2497, %2487 : vector<16x16xf32>
    %2499 = arith.addf %2481, %2498 : vector<16x16xf32>
    %c251_890 = arith.constant 251 : index
    %2500 = memref.load %arg3[%c251_890] : memref<256xf32, #tpu.memory_space<smem>>
    %2501 = vector.broadcast %2500 : f32 to vector<16x16xf32>
    %2502 = arith.mulf %2501, %2487 : vector<16x16xf32>
    %2503 = arith.addf %2485, %2502 : vector<16x16xf32>
    %c3_891 = arith.constant 3 : index
    %c3_892 = arith.constant 3 : index
    %c0_893 = arith.constant 0 : index
    %2504 = vector.load %arg5[%c3_891, %c3_892, %c0_893] : memref<4x19x19xf32, #tpu.memory_space<vmem>>, vector<1x16x16xf32>
    %2505 = vector.shape_cast %2504 : vector<1x16x16xf32> to vector<16x16xf32>
    %c60_894 = arith.constant 60 : index
    %2506 = memref.load %arg3[%c60_894] : memref<256xf32, #tpu.memory_space<smem>>
    %2507 = vector.broadcast %2506 : f32 to vector<16x16xf32>
    %2508 = arith.mulf %2507, %2505 : vector<16x16xf32>
    %2509 = arith.addf %2491, %2508 : vector<16x16xf32>
    %c124_895 = arith.constant 124 : index
    %2510 = memref.load %arg3[%c124_895] : memref<256xf32, #tpu.memory_space<smem>>
    %2511 = vector.broadcast %2510 : f32 to vector<16x16xf32>
    %2512 = arith.mulf %2511, %2505 : vector<16x16xf32>
    %2513 = arith.addf %2495, %2512 : vector<16x16xf32>
    %c188_896 = arith.constant 188 : index
    %2514 = memref.load %arg3[%c188_896] : memref<256xf32, #tpu.memory_space<smem>>
    %2515 = vector.broadcast %2514 : f32 to vector<16x16xf32>
    %2516 = arith.mulf %2515, %2505 : vector<16x16xf32>
    %2517 = arith.addf %2499, %2516 : vector<16x16xf32>
    %c252_897 = arith.constant 252 : index
    %2518 = memref.load %arg3[%c252_897] : memref<256xf32, #tpu.memory_space<smem>>
    %2519 = vector.broadcast %2518 : f32 to vector<16x16xf32>
    %2520 = arith.mulf %2519, %2505 : vector<16x16xf32>
    %2521 = arith.addf %2503, %2520 : vector<16x16xf32>
    %c3_898 = arith.constant 3 : index
    %c3_899 = arith.constant 3 : index
    %c1_900 = arith.constant 1 : index
    %2522 = vector.load %arg5[%c3_898, %c3_899, %c1_900] : memref<4x19x19xf32, #tpu.memory_space<vmem>>, vector<1x16x16xf32>
    %2523 = vector.shape_cast %2522 : vector<1x16x16xf32> to vector<16x16xf32>
    %c61_901 = arith.constant 61 : index
    %2524 = memref.load %arg3[%c61_901] : memref<256xf32, #tpu.memory_space<smem>>
    %2525 = vector.broadcast %2524 : f32 to vector<16x16xf32>
    %2526 = arith.mulf %2525, %2523 : vector<16x16xf32>
    %2527 = arith.addf %2509, %2526 : vector<16x16xf32>
    %c125_902 = arith.constant 125 : index
    %2528 = memref.load %arg3[%c125_902] : memref<256xf32, #tpu.memory_space<smem>>
    %2529 = vector.broadcast %2528 : f32 to vector<16x16xf32>
    %2530 = arith.mulf %2529, %2523 : vector<16x16xf32>
    %2531 = arith.addf %2513, %2530 : vector<16x16xf32>
    %c189_903 = arith.constant 189 : index
    %2532 = memref.load %arg3[%c189_903] : memref<256xf32, #tpu.memory_space<smem>>
    %2533 = vector.broadcast %2532 : f32 to vector<16x16xf32>
    %2534 = arith.mulf %2533, %2523 : vector<16x16xf32>
    %2535 = arith.addf %2517, %2534 : vector<16x16xf32>
    %c253_904 = arith.constant 253 : index
    %2536 = memref.load %arg3[%c253_904] : memref<256xf32, #tpu.memory_space<smem>>
    %2537 = vector.broadcast %2536 : f32 to vector<16x16xf32>
    %2538 = arith.mulf %2537, %2523 : vector<16x16xf32>
    %2539 = arith.addf %2521, %2538 : vector<16x16xf32>
    %c3_905 = arith.constant 3 : index
    %c3_906 = arith.constant 3 : index
    %c2_907 = arith.constant 2 : index
    %2540 = vector.load %arg5[%c3_905, %c3_906, %c2_907] : memref<4x19x19xf32, #tpu.memory_space<vmem>>, vector<1x16x16xf32>
    %2541 = vector.shape_cast %2540 : vector<1x16x16xf32> to vector<16x16xf32>
    %c62_908 = arith.constant 62 : index
    %2542 = memref.load %arg3[%c62_908] : memref<256xf32, #tpu.memory_space<smem>>
    %2543 = vector.broadcast %2542 : f32 to vector<16x16xf32>
    %2544 = arith.mulf %2543, %2541 : vector<16x16xf32>
    %2545 = arith.addf %2527, %2544 : vector<16x16xf32>
    %c126_909 = arith.constant 126 : index
    %2546 = memref.load %arg3[%c126_909] : memref<256xf32, #tpu.memory_space<smem>>
    %2547 = vector.broadcast %2546 : f32 to vector<16x16xf32>
    %2548 = arith.mulf %2547, %2541 : vector<16x16xf32>
    %2549 = arith.addf %2531, %2548 : vector<16x16xf32>
    %c190_910 = arith.constant 190 : index
    %2550 = memref.load %arg3[%c190_910] : memref<256xf32, #tpu.memory_space<smem>>
    %2551 = vector.broadcast %2550 : f32 to vector<16x16xf32>
    %2552 = arith.mulf %2551, %2541 : vector<16x16xf32>
    %2553 = arith.addf %2535, %2552 : vector<16x16xf32>
    %c254_911 = arith.constant 254 : index
    %2554 = memref.load %arg3[%c254_911] : memref<256xf32, #tpu.memory_space<smem>>
    %2555 = vector.broadcast %2554 : f32 to vector<16x16xf32>
    %2556 = arith.mulf %2555, %2541 : vector<16x16xf32>
    %2557 = arith.addf %2539, %2556 : vector<16x16xf32>
    %c3_912 = arith.constant 3 : index
    %c3_913 = arith.constant 3 : index
    %c3_914 = arith.constant 3 : index
    %2558 = vector.load %arg5[%c3_912, %c3_913, %c3_914] : memref<4x19x19xf32, #tpu.memory_space<vmem>>, vector<1x16x16xf32>
    %2559 = vector.shape_cast %2558 : vector<1x16x16xf32> to vector<16x16xf32>
    %c63_915 = arith.constant 63 : index
    %2560 = memref.load %arg3[%c63_915] : memref<256xf32, #tpu.memory_space<smem>>
    %2561 = vector.broadcast %2560 : f32 to vector<16x16xf32>
    %2562 = arith.mulf %2561, %2559 : vector<16x16xf32>
    %2563 = arith.addf %2545, %2562 : vector<16x16xf32>
    %c127_916 = arith.constant 127 : index
    %2564 = memref.load %arg3[%c127_916] : memref<256xf32, #tpu.memory_space<smem>>
    %2565 = vector.broadcast %2564 : f32 to vector<16x16xf32>
    %2566 = arith.mulf %2565, %2559 : vector<16x16xf32>
    %2567 = arith.addf %2549, %2566 : vector<16x16xf32>
    %c191_917 = arith.constant 191 : index
    %2568 = memref.load %arg3[%c191_917] : memref<256xf32, #tpu.memory_space<smem>>
    %2569 = vector.broadcast %2568 : f32 to vector<16x16xf32>
    %2570 = arith.mulf %2569, %2559 : vector<16x16xf32>
    %2571 = arith.addf %2553, %2570 : vector<16x16xf32>
    %c255_918 = arith.constant 255 : index
    %2572 = memref.load %arg3[%c255_918] : memref<256xf32, #tpu.memory_space<smem>>
    %2573 = vector.broadcast %2572 : f32 to vector<16x16xf32>
    %2574 = arith.mulf %2573, %2559 : vector<16x16xf32>
    %2575 = arith.addf %2557, %2574 : vector<16x16xf32>
    %2576 = math.tanh %2563 : vector<16x16xf32>
    %2577 = math.tanh %2567 : vector<16x16xf32>
    %2578 = math.tanh %2571 : vector<16x16xf32>
    %2579 = math.tanh %2575 : vector<16x16xf32>
    %c0_919 = arith.constant 0 : index
    %c0_920 = arith.constant 0 : index
    %c0_921 = arith.constant 0 : index
    %c0_922 = arith.constant 0 : index
    %2580 = vector.load %arg1[%c0_919, %c0_920, %c0_921, %c0_922] : memref<4x2x16x16xf32, #tpu.memory_space<vmem>>, vector<1x1x16x16xf32>
    %2581 = vector.shape_cast %2580 : vector<1x1x16x16xf32> to vector<16x16xf32>
    %2582 = arith.addf %2581, %2576 : vector<16x16xf32>
    %cst_923 = arith.constant 0.604367793 : f32
    %2583 = vector.broadcast %cst_923 : f32 to vector<16x16xf32>
    %2584 = arith.mulf %2582, %2583 : vector<16x16xf32>
    %c0_924 = arith.constant 0 : index
    %c0_925 = arith.constant 0 : index
    %c0_926 = arith.constant 0 : index
    %c0_927 = arith.constant 0 : index
    %2585 = vector.load %arg4[%c0_924, %c0_925, %c0_926, %c0_927] : memref<4x2x16x16xf32, #tpu.memory_space<vmem>>, vector<1x1x16x16xf32>
    %2586 = vector.shape_cast %2585 : vector<1x1x16x16xf32> to vector<16x16xf32>
    %2587 = vector.shape_cast %2584 : vector<16x16xf32> to vector<1x1x16x16xf32>
    tpu.vector_store %arg4[%c0_924, %c0_925, %c0_926, %c0_927], %2587 {strides = array<i32>} : memref<4x2x16x16xf32, #tpu.memory_space<vmem>>, vector<1x1x16x16xf32>,
    %cst_928 = arith.constant 0.291312605 : f32
    %2588 = vector.broadcast %cst_928 : f32 to vector<16x16xf32>
    %2589 = arith.mulf %1290, %2588 : vector<16x16xf32>
    %c0_929 = arith.constant 0 : index
    %c1_930 = arith.constant 1 : index
    %c0_931 = arith.constant 0 : index
    %c0_932 = arith.constant 0 : index
    %2590 = vector.load %arg4[%c0_929, %c1_930, %c0_931, %c0_932] : memref<4x2x16x16xf32, #tpu.memory_space<vmem>>, vector<1x1x16x16xf32>
    %2591 = vector.shape_cast %2590 : vector<1x1x16x16xf32> to vector<16x16xf32>
    %2592 = vector.shape_cast %2589 : vector<16x16xf32> to vector<1x1x16x16xf32>
    tpu.vector_store %arg4[%c0_929, %c1_930, %c0_931, %c0_932], %2592 {strides = array<i32>} : memref<4x2x16x16xf32, #tpu.memory_space<vmem>>, vector<1x1x16x16xf32>,
    %c1_933 = arith.constant 1 : index
    %c0_934 = arith.constant 0 : index
    %c0_935 = arith.constant 0 : index
    %c0_936 = arith.constant 0 : index
    %2593 = vector.load %arg1[%c1_933, %c0_934, %c0_935, %c0_936] : memref<4x2x16x16xf32, #tpu.memory_space<vmem>>, vector<1x1x16x16xf32>
    %2594 = vector.shape_cast %2593 : vector<1x1x16x16xf32> to vector<16x16xf32>
    %2595 = arith.addf %2594, %2577 : vector<16x16xf32>
    %cst_937 = arith.constant 0.604367793 : f32
    %2596 = vector.broadcast %cst_937 : f32 to vector<16x16xf32>
    %2597 = arith.mulf %2595, %2596 : vector<16x16xf32>
    %c1_938 = arith.constant 1 : index
    %c0_939 = arith.constant 0 : index
    %c0_940 = arith.constant 0 : index
    %c0_941 = arith.constant 0 : index
    %2598 = vector.load %arg4[%c1_938, %c0_939, %c0_940, %c0_941] : memref<4x2x16x16xf32, #tpu.memory_space<vmem>>, vector<1x1x16x16xf32>
    %2599 = vector.shape_cast %2598 : vector<1x1x16x16xf32> to vector<16x16xf32>
    %2600 = vector.shape_cast %2597 : vector<16x16xf32> to vector<1x1x16x16xf32>
    tpu.vector_store %arg4[%c1_938, %c0_939, %c0_940, %c0_941], %2600 {strides = array<i32>} : memref<4x2x16x16xf32, #tpu.memory_space<vmem>>, vector<1x1x16x16xf32>,
    %cst_942 = arith.constant 0.291312605 : f32
    %2601 = vector.broadcast %cst_942 : f32 to vector<16x16xf32>
    %2602 = arith.mulf %1293, %2601 : vector<16x16xf32>
    %c1_943 = arith.constant 1 : index
    %c1_944 = arith.constant 1 : index
    %c0_945 = arith.constant 0 : index
    %c0_946 = arith.constant 0 : index
    %2603 = vector.load %arg4[%c1_943, %c1_944, %c0_945, %c0_946] : memref<4x2x16x16xf32, #tpu.memory_space<vmem>>, vector<1x1x16x16xf32>
    %2604 = vector.shape_cast %2603 : vector<1x1x16x16xf32> to vector<16x16xf32>
    %2605 = vector.shape_cast %2602 : vector<16x16xf32> to vector<1x1x16x16xf32>
    tpu.vector_store %arg4[%c1_943, %c1_944, %c0_945, %c0_946], %2605 {strides = array<i32>} : memref<4x2x16x16xf32, #tpu.memory_space<vmem>>, vector<1x1x16x16xf32>,
    %c2_947 = arith.constant 2 : index
    %c0_948 = arith.constant 0 : index
    %c0_949 = arith.constant 0 : index
    %c0_950 = arith.constant 0 : index
    %2606 = vector.load %arg1[%c2_947, %c0_948, %c0_949, %c0_950] : memref<4x2x16x16xf32, #tpu.memory_space<vmem>>, vector<1x1x16x16xf32>
    %2607 = vector.shape_cast %2606 : vector<1x1x16x16xf32> to vector<16x16xf32>
    %2608 = arith.addf %2607, %2578 : vector<16x16xf32>
    %cst_951 = arith.constant 0.604367793 : f32
    %2609 = vector.broadcast %cst_951 : f32 to vector<16x16xf32>
    %2610 = arith.mulf %2608, %2609 : vector<16x16xf32>
    %c2_952 = arith.constant 2 : index
    %c0_953 = arith.constant 0 : index
    %c0_954 = arith.constant 0 : index
    %c0_955 = arith.constant 0 : index
    %2611 = vector.load %arg4[%c2_952, %c0_953, %c0_954, %c0_955] : memref<4x2x16x16xf32, #tpu.memory_space<vmem>>, vector<1x1x16x16xf32>
    %2612 = vector.shape_cast %2611 : vector<1x1x16x16xf32> to vector<16x16xf32>
    %2613 = vector.shape_cast %2610 : vector<16x16xf32> to vector<1x1x16x16xf32>
    tpu.vector_store %arg4[%c2_952, %c0_953, %c0_954, %c0_955], %2613 {strides = array<i32>} : memref<4x2x16x16xf32, #tpu.memory_space<vmem>>, vector<1x1x16x16xf32>,
    %cst_956 = arith.constant 0.291312605 : f32
    %2614 = vector.broadcast %cst_956 : f32 to vector<16x16xf32>
    %2615 = arith.mulf %1296, %2614 : vector<16x16xf32>
    %c2_957 = arith.constant 2 : index
    %c1_958 = arith.constant 1 : index
    %c0_959 = arith.constant 0 : index
    %c0_960 = arith.constant 0 : index
    %2616 = vector.load %arg4[%c2_957, %c1_958, %c0_959, %c0_960] : memref<4x2x16x16xf32, #tpu.memory_space<vmem>>, vector<1x1x16x16xf32>
    %2617 = vector.shape_cast %2616 : vector<1x1x16x16xf32> to vector<16x16xf32>
    %2618 = vector.shape_cast %2615 : vector<16x16xf32> to vector<1x1x16x16xf32>
    tpu.vector_store %arg4[%c2_957, %c1_958, %c0_959, %c0_960], %2618 {strides = array<i32>} : memref<4x2x16x16xf32, #tpu.memory_space<vmem>>, vector<1x1x16x16xf32>,
    %c3_961 = arith.constant 3 : index
    %c0_962 = arith.constant 0 : index
    %c0_963 = arith.constant 0 : index
    %c0_964 = arith.constant 0 : index
    %2619 = vector.load %arg1[%c3_961, %c0_962, %c0_963, %c0_964] : memref<4x2x16x16xf32, #tpu.memory_space<vmem>>, vector<1x1x16x16xf32>
    %2620 = vector.shape_cast %2619 : vector<1x1x16x16xf32> to vector<16x16xf32>
    %2621 = arith.addf %2620, %2579 : vector<16x16xf32>
    %cst_965 = arith.constant 0.604367793 : f32
    %2622 = vector.broadcast %cst_965 : f32 to vector<16x16xf32>
    %2623 = arith.mulf %2621, %2622 : vector<16x16xf32>
    %c3_966 = arith.constant 3 : index
    %c0_967 = arith.constant 0 : index
    %c0_968 = arith.constant 0 : index
    %c0_969 = arith.constant 0 : index
    %2624 = vector.load %arg4[%c3_966, %c0_967, %c0_968, %c0_969] : memref<4x2x16x16xf32, #tpu.memory_space<vmem>>, vector<1x1x16x16xf32>
    %2625 = vector.shape_cast %2624 : vector<1x1x16x16xf32> to vector<16x16xf32>
    %2626 = vector.shape_cast %2623 : vector<16x16xf32> to vector<1x1x16x16xf32>
    tpu.vector_store %arg4[%c3_966, %c0_967, %c0_968, %c0_969], %2626 {strides = array<i32>} : memref<4x2x16x16xf32, #tpu.memory_space<vmem>>, vector<1x1x16x16xf32>,
    %cst_970 = arith.constant 0.291312605 : f32
    %2627 = vector.broadcast %cst_970 : f32 to vector<16x16xf32>
    %2628 = arith.mulf %1299, %2627 : vector<16x16xf32>
    %c3_971 = arith.constant 3 : index
    %c1_972 = arith.constant 1 : index
    %c0_973 = arith.constant 0 : index
    %c0_974 = arith.constant 0 : index
    %2629 = vector.load %arg4[%c3_971, %c1_972, %c0_973, %c0_974] : memref<4x2x16x16xf32, #tpu.memory_space<vmem>>, vector<1x1x16x16xf32>
    %2630 = vector.shape_cast %2629 : vector<1x1x16x16xf32> to vector<16x16xf32>
    %2631 = vector.shape_cast %2628 : vector<16x16xf32> to vector<1x1x16x16xf32>
    tpu.vector_store %arg4[%c3_971, %c1_972, %c0_973, %c0_974], %2631 {strides = array<i32>} : memref<4x2x16x16xf32, #tpu.memory_space<vmem>>, vector<1x1x16x16xf32>,
    return
  }
  func.func @transform_0(%arg0: i32) -> (i32, i32, i32, i32) {
    %c0_i32 = arith.constant 0 : i32
    %c0_i32_0 = arith.constant 0 : i32
    %c0_i32_1 = arith.constant 0 : i32
    %c0_i32_2 = arith.constant 0 : i32
    return %arg0, %c0_i32, %c0_i32_0, %c0_i32_1 : i32, i32, i32, i32
  }
  func.func @transform_1(%arg0: i32) -> i32 {
    %c0_i32 = arith.constant 0 : i32
    %c0_i32_0 = arith.constant 0 : i32
    return %c0_i32 : i32
  }
  func.func @transform_2(%arg0: i32) -> i32 {
    %c0_i32 = arith.constant 0 : i32
    %c0_i32_0 = arith.constant 0 : i32
    return %c0_i32 : i32
  }
  func.func @transform_3(%arg0: i32) -> (i32, i32, i32, i32) {
    %c0_i32 = arith.constant 0 : i32
    %c0_i32_0 = arith.constant 0 : i32
    %c0_i32_1 = arith.constant 0 : i32
    %c0_i32_2 = arith.constant 0 : i32
    return %arg0, %c0_i32, %c0_i32_0, %c0_i32_1 : i32, i32, i32, i32
  }
}

</mosaic_0001>

<llo_original>
// kernel: tpu_custom_call.1
$region0: #{tpu_custom_call.1}
  #allocation0 [shape = 'u32[]', space=smem, size = 0x4, offset = 0x4, fixed_abs, tag = 'smem constant byte address 0x4 - core index']
  #allocation1 [shape = 'u32[144,128]{1,0:T(1,128)}', space=vmem, size = 0x12000, scoped, tag = 'internal scratch']
  #allocation2 [shape = 'f32[4,19,19]{2,1,0:T(8,128)}', space=vmem, size = 0xc000, scoped, tag = 'scratch operand']
  %s0 = inlined_call_operand.hbm [shape: f32[8,2,16,16], index: 0, kind: input, shape index: {}]
  %s1 = inlined_call_operand.hbm [shape: f32[256], index: 1, kind: input, shape index: {}]
  %s2 = inlined_call_operand.vmem [shape: f32[256], index: 2, kind: input, shape index: {}]
  %s3 = inlined_call_operand.hbm [shape: f32[8,2,16,16], index: 3, kind: output, shape index: {}]
  %s4 = sld [smem:[#allocation0]]
  $region57: #{tpu_custom_call.1} parent=0
    _
  %s6 = ssub.s32 1, %s4
  %s7 = scalar_select 0, %s6, %s4
  $region1: #{tpu_custom_call.1} parent=0
    #allocation3 [shape = 'u8[131072]{0}', space=vmem, size = 0x20000, scoped, tag = 'input window, operand 0']
    #allocation4 [shape = 's32[2]{0}', space=sflag, size = 0x8, scoped, tag = 'scoped memory for tpu_custom_call.1']
    #allocation5 [shape = 's32[2]{0}', space=sflag, size = 0x8, scoped, tag = 'scoped memory for tpu_custom_call.1']
    #allocation6 [shape = 's32[2]{0}', space=sflag, size = 0x8, scoped, tag = 'scoped memory for tpu_custom_call.1']
    #allocation7 [shape = 's32[2]{0}', space=sflag, size = 0x8, scoped, tag = 'scoped memory for tpu_custom_call.1']
    #allocation8 [shape = 'u8[1024]{0}', space=smem, size = 0x400, scoped, tag = 'input window, operand 1, single buffered']
    #allocation9 [shape = 'u8[1024]{0}', space=smem, size = 0x400, scoped, tag = 'input window, operand 2, single buffered']
    #allocation10 [shape = 'u8[131072]{0}', space=vmem, size = 0x20000, scoped, tag = 'output window, operand 0']
    %8 = vsyncpa [#allocation4], 0
    %s9 = scalar_lea.sflag [#allocation4], 1
    %10 = vsyncpa %s9, 0
    %11 = vsyncpa [#allocation6], 0
    %12 = vsyncpa [#allocation7], 0
    %13 = vsyncpa [#allocation5], 0
    %s14 = scalar_lea.sflag [#allocation5], 1
    %15 = vsyncpa %s14, 0
    loop: start=0, step=1, limit=4
    $region2: #{tpu_custom_call.1} parent=1 // loop_pre_header
      _
    $region3: #{tpu_custom_call.1} parent=1 // loop_header
      %s17 = sphi 0, %s21
      %p18 = scmp.ge.s32.totalorder %s17, 4
      %s27 = sphi 0, %s29
      %s30 = sphi 0, %s27
      %s31 = sphi 0, %s30
      %s47 = sphi 0, %s31
      %s51 = sphi 0, %s51
      %s53 = sphi 0, %s51
      %s54 = sphi 0, %s53
      %s68 = sphi 0, %s54
      %s72 = sphi 0, %s72
      %s74 = sphi 0, %s72
      %s75 = sphi 0, %s74
      %s89 = sphi 0, %s75
      %s95 = sphi 0, %s97
      %s98 = sphi 0, %s95
      %s99 = sphi 0, %s98
      %s115 = sphi 0, %s99
    $region4: #{tpu_custom_call.1} parent=1 // loop_header_branch
      %20 = sbr.rel (%p18) target = $region8
    $region5: #{tpu_custom_call.1} parent=1 // loop_body
      %s22 = ssub.s32 %s17, 1
      %s23 = ssub.s32 %s17, 2
      %s24 = sadd.s32 %s17, 1
      %s25 = ssub.s32 %s17, %s24
      %p26 = scmp.eq.s32.totalorder %s25, 0
      %s28 = sadd.s32 %s27, 1
      %s29 = scalar_select %p26, %s27, %s28
      %p32 = pneg %p26
      %p33 = scmp.eq.s32.totalorder %s17, 1
      %p34 = por %p32, %p33
      %p35 = scmp.ne.s32.totalorder %s27, %s30
      %p36 = scmp.eq.s32.totalorder %s17, 0
      %p37 = por %p35, %p36
      %p38 = scmp.ne.s32.totalorder %s27, %s30
      %p39 = scmp.eq.s32.totalorder %s22, 1
      %p40 = por %p38, %p39
      %p41 = scmp.ne.s32.totalorder %s30, %s31
      %p42 = scmp.eq.s32.totalorder %s22, 0
      %p43 = por %p41, %p42
      %p44 = scmp.ne.s32.totalorder %s30, %s31
      %p45 = scmp.eq.s32.totalorder %s23, 1
      %p46 = por %p44, %p45
      %p48 = scmp.ne.s32.totalorder %s31, %s47
      %p49 = scmp.eq.s32.totalorder %s23, 0
      %p50 = por %p48, %p49
      %s52 = sadd.s32 %s51, 1
      %p55 = scmp.eq.s32.totalorder %s17, 1
      %p56 = scmp.ne.s32.totalorder %s51, %s53
      %p57 = scmp.eq.s32.totalorder %s17, 0
      %p58 = por %p56, %p57
      %p59 = scmp.ne.s32.totalorder %s51, %s53
      %p60 = scmp.eq.s32.totalorder %s22, 1
      %p61 = por %p59, %p60
      %p62 = scmp.ne.s32.totalorder %s53, %s54
      %p63 = scmp.eq.s32.totalorder %s22, 0
      %p64 = por %p62, %p63
      %p65 = scmp.ne.s32.totalorder %s53, %s54
      %p66 = scmp.eq.s32.totalorder %s23, 1
      %p67 = por %p65, %p66
      %p69 = scmp.ne.s32.totalorder %s54, %s68
      %p70 = scmp.eq.s32.totalorder %s23, 0
      %p71 = por %p69, %p70
      %s73 = sadd.s32 %s72, 1
      %p76 = scmp.eq.s32.totalorder %s17, 1
      %p77 = scmp.ne.s32.totalorder %s72, %s74
      %p78 = scmp.eq.s32.totalorder %s17, 0
      %p79 = por %p77, %p78
      %p80 = scmp.ne.s32.totalorder %s72, %s74
      %p81 = scmp.eq.s32.totalorder %s22, 1
      %p82 = por %p80, %p81
      %p83 = scmp.ne.s32.totalorder %s74, %s75
      %p84 = scmp.eq.s32.totalorder %s22, 0
      %p85 = por %p83, %p84
      %p86 = scmp.ne.s32.totalorder %s74, %s75
      %p87 = scmp.eq.s32.totalorder %s23, 1
      %p88 = por %p86, %p87
      %p90 = scmp.ne.s32.totalorder %s75, %s89
      %p91 = scmp.eq.s32.totalorder %s23, 0
      %p92 = por %p90, %p91
      %s93 = ssub.s32 %s17, %s24
      %p94 = scmp.eq.s32.totalorder %s93, 0
      %s96 = sadd.s32 %s95, 1
      %s97 = scalar_select %p94, %s95, %s96
      %p100 = pneg %p94
      %p101 = scmp.eq.s32.totalorder %s17, 1
      %p102 = por %p100, %p101
      %p103 = scmp.ne.s32.totalorder %s95, %s98
      %p104 = scmp.eq.s32.totalorder %s17, 0
      %p105 = por %p103, %p104
      %p106 = scmp.ne.s32.totalorder %s95, %s98
      %p107 = scmp.eq.s32.totalorder %s22, 1
      %p108 = por %p106, %p107
      %p109 = scmp.ne.s32.totalorder %s98, %s99
      %p110 = scmp.eq.s32.totalorder %s22, 0
      %p111 = por %p109, %p110
      %p112 = scmp.ne.s32.totalorder %s98, %s99
      %p113 = scmp.eq.s32.totalorder %s23, 1
      %p114 = por %p112, %p113
      %p116 = scmp.ne.s32.totalorder %s99, %s115
      %p117 = scmp.eq.s32.totalorder %s23, 0
      %p118 = por %p116, %p117
      %p119 = scmp.le.s32.totalorder 1, %s17
      %p120 = scmp.lt.s32.totalorder %s17, 3
      %p121 = pnand %p119, %p120
      %p122 = pneg %p121
      // Predicated region
      $region9: #{tpu_custom_call.1} parent=5 // pred_check
        _
      $region10: #{tpu_custom_call.1} parent=5 // pred_check_branch
        %124 = sbr.rel (%p121) target = $region12
      $region11: #{tpu_custom_call.1} parent=5 // pred_region
        %s125 = ssub.s32 %s17, 1
        // Predicated region
        $region13: #{tpu_custom_call.1} parent=11 // pred_check
          %p126 = pneg %p64
        $region14: #{tpu_custom_call.1} parent=11 // pred_check_branch
          %128 = sbr.rel (%p126) target = $region16
        $region15: #{tpu_custom_call.1} parent=11 // pred_region
          %s130 = ssub.s32 32, 32
          %131 = vsyncadd [#allocation6], %s130
          %134 = dma.hbm_to_smem %s1, 32, [#allocation8], [#allocation6]
        $region16: #{tpu_custom_call.1} parent=11 // pred_fallthru
          _
        // Predicated region
        $region17: #{tpu_custom_call.1} parent=11 // pred_check
          %p135 = pneg %p85
        $region18: #{tpu_custom_call.1} parent=11 // pred_check_branch
          %137 = sbr.rel (%p135) target = $region20
        $region19: #{tpu_custom_call.1} parent=11 // pred_region
          %s139 = ssub.s32 32, 32
          %140 = vsyncadd [#allocation7], %s139
          %s142 = sshll.u32 %s2, 4
          %s143 = int_to_ptr.vmem [resolvable:$true] %s142
          %145 = dma.vmem_to_smem %s143, 32, [#allocation9], [#allocation7]
        $region20: #{tpu_custom_call.1} parent=11 // pred_fallthru
          _
      $region12: #{tpu_custom_call.1} parent=5 // pred_fallthru
        _
      %p146 = scmp.lt.s32.totalorder %s17, 2
      // Predicated region
      $region21: #{tpu_custom_call.1} parent=5 // pred_check
        %p147 = pneg %p146
      $region22: #{tpu_custom_call.1} parent=5 // pred_check_branch
        %149 = sbr.rel (%p147) target = $region24
      $region23: #{tpu_custom_call.1} parent=5 // pred_region
        // Predicated region
        $region25: #{tpu_custom_call.1} parent=23 // pred_check
          %p150 = pneg %p37
        $region26: #{tpu_custom_call.1} parent=23 // pred_check_branch
          %152 = sbr.rel (%p150) target = $region28
        $region27: #{tpu_custom_call.1} parent=23 // pred_region
          %s153 = sand.u32 %s27, 1
          %s154 = scalar_lea.sflag [#allocation4], %s153
          %s155 = sand.u32 %s27, 1
          %s156 = smul.addr %s155, 128
          %s157 = scalar_lea.vmem [#allocation3], %s156
          %s158 = smul.u32 4, %s17
          %s160 = ssub.s32 2048, 2048
          %161 = vsyncadd %s154, %s160
          %s162 = smul.addr %s158, 4
          %s163 = smul.addr %s162, 128
          %s164 = scalar_lea.hbm %s0, %s163
          %s165 = sshll.u32 %s157, 4
          %s166 = int_to_ptr.vmem [resolvable:$true] %s165
          %171 = dma.hbm_to_vmem [thread:$0]  %s164, 2048, %s166, %s154, 128, 128, 8
        $region28: #{tpu_custom_call.1} parent=23 // pred_fallthru
          _
      $region24: #{tpu_custom_call.1} parent=5 // pred_fallthru
        _
      %p172 = scmp.le.s32.totalorder 1, %s17
      %p173 = scmp.lt.s32.totalorder %s17, 3
      %p174 = pnand %p172, %p173
      %p175 = pneg %p174
      // Predicated region
      $region29: #{tpu_custom_call.1} parent=5 // pred_check
        _
      $region30: #{tpu_custom_call.1} parent=5 // pred_check_branch
        %177 = sbr.rel (%p174) target = $region32
      $region31: #{tpu_custom_call.1} parent=5 // pred_region
        %s178 = ssub.s32 %s17, 1
        %s179 = sand.u32 %s30, 1
        %s180 = scalar_lea.sflag [#allocation4], %s179
        %s181 = sand.u32 %s30, 1
        %s182 = smul.addr %s181, 128
        %s183 = scalar_lea.vmem [#allocation3], %s182
        // Predicated region
        $region33: #{tpu_custom_call.1} parent=31 // pred_check
          %p184 = pneg %p43
        $region34: #{tpu_custom_call.1} parent=31 // pred_check_branch
          %186 = sbr.rel (%p184) target = $region36
        $region35: #{tpu_custom_call.1} parent=31 // pred_region
          %187 = dma.done %s180, 2048
        $region36: #{tpu_custom_call.1} parent=31 // pred_fallthru
          _
        // Predicated region
        $region37: #{tpu_custom_call.1} parent=31 // pred_check
          %p188 = pneg %p64
        $region38: #{tpu_custom_call.1} parent=31 // pred_check_branch
          %190 = sbr.rel (%p188) target = $region40
        $region39: #{tpu_custom_call.1} parent=31 // pred_region
          %191 = dma.done [#allocation6], 32
        $region40: #{tpu_custom_call.1} parent=31 // pred_fallthru
          _
        // Predicated region
        $region41: #{tpu_custom_call.1} parent=31 // pred_check
          %p192 = pneg %p85
        $region42: #{tpu_custom_call.1} parent=31 // pred_check_branch
          %194 = sbr.rel (%p192) target = $region44
        $region43: #{tpu_custom_call.1} parent=31 // pred_region
          %195 = dma.done [#allocation7], 32
        $region44: #{tpu_custom_call.1} parent=31 // pred_fallthru
          _
        %196 = sfence
        %s197 = sand.u32 %s30, 1
        %s198 = scalar_lea.sflag [#allocation4], %s197
        %s199 = sand.u32 %s30, 1
        %s200 = smul.addr %s199, 128
        %s201 = scalar_lea.vmem [#allocation3], %s200
        %p202 = pneg %p43
        %p203 = pneg %p40
        %p204 = pneg %p64
        %p205 = pneg %p61
        %p206 = pneg %p85
        %p207 = pneg %p82
        %p208 = pneg %p111
        %p209 = pneg %p108
        %s210 = sand.u32 %s98, 1
        %s211 = scalar_lea.sflag [#allocation5], %s210
        %s212 = sand.u32 %s98, 1
        %s213 = smul.addr %s212, 128
        %s214 = scalar_lea.vmem [#allocation10], %s213
        %s215 = smul.u32 4, %s22
        %s216 = smul.u32 4, %s22
        %v217 = vld [vmem:[%s183] sm:$0xff]
        %v218 = vld [vmem:[%s183 + $0x8] sm:$0xff]
        %221 = vrot.lane.b32.xlu0 %v217, 2
        %v222 = vpop.permute.xlu0 %221
        %223 = vrot.lane.b32.xlu0 %v218, 2
        %v224 = vpop.permute.xlu0 %223
        %vm227 = vcmask 146448
        %228 = vst.msk [vmem:[#allocation2 + $0x2] sm:$0xff] %vm227, %v222
        %229 = vst.msk [vmem:[#allocation2 + $0xa] sm:$0xff] %vm227, %v224
        %vm230 = vcmask 141330
        %231 = vst.msk [vmem:[#allocation2 - $0x2] sm:$0x4] %vm230, %v222
        %vm232 = vcmask 140305
        %233 = vst.msk [vmem:[#allocation2] sm:$0x2] %vm232, %v222
        %vm234 = vcmask 145430
        %235 = vst.msk [vmem:[#allocation2 + $0xc] sm:$0x40] %vm234, %v224
        %v236 = vld [vmem:[#allocation2] sm:$0xff]
        %v237 = vld [vmem:[#allocation2 + $0x8] sm:$0xff]
        %v238 = vld [vmem:[#allocation2 + $0x10] sm:$0x7]
        %242 = vrot.lane.b32.xlu0 %v236, 124
        %v243 = vpop.permute.xlu0 %242
        %244 = vrot.lane.b32.xlu0 %v237, 124
        %v245 = vpop.permute.xlu0 %244
        %246 = vrot.lane.b32.xlu0 %v238, 124
        %v247 = vpop.permute.xlu0 %246
        %vm251 = vcmask 7168
        %252 = vst.msk [vmem:[#allocation2] sm:$0xff] %vm251, %v243
        %253 = vst.msk [vmem:[#allocation2 + $0x8] sm:$0xff] %vm251, %v245
        %vm254 = vcmask 2048
        %255 = vst.msk [vmem:[#allocation2 + $0x10] sm:$0x7] %vm254, %v247
        %v256 = vld [vmem:[#allocation2] sm:$0xff]
        %v257 = vld [vmem:[#allocation2 + $0x8] sm:$0xff]
        %v258 = vld [vmem:[#allocation2 + $0x10] sm:$0x7]
        %262 = vrot.lane.b32.xlu0 %v256, 126
        %v263 = vpop.permute.xlu0 %262
        %264 = vrot.lane.b32.xlu0 %v257, 126
        %v265 = vpop.permute.xlu0 %264
        %266 = vrot.lane.b32.xlu0 %v258, 126
        %v267 = vpop.permute.xlu0 %266
        %vm271 = vcmask 15368
        %272 = vst.msk [vmem:[#allocation2] sm:$0xff] %vm271, %v263
        %273 = vst.msk [vmem:[#allocation2 + $0x8] sm:$0xff] %vm271, %v265
        %vm274 = vcmask 10248
        %275 = vst.msk [vmem:[#allocation2 + $0x10] sm:$0x7] %vm274, %v267
        %v276 = vld [vmem:[#allocation2] sm:$0xff]
        %v277 = vld [vmem:[#allocation2 + $0x8] sm:$0xff]
        %v278 = vld [vmem:[#allocation2 + $0x10] sm:$0x7]
        %282 = vrot.lane.b32.xlu0 %v276, 2
        %v283 = vpop.permute.xlu0 %282
        %284 = vrot.lane.b32.xlu0 %v277, 2
        %v285 = vpop.permute.xlu0 %284
        %286 = vrot.lane.b32.xlu0 %v278, 2
        %v287 = vpop.permute.xlu0 %286
        %vm291 = vcmask 154768
        %292 = vst.msk [vmem:[#allocation2] sm:$0xff] %vm291, %v283
        %293 = vst.msk [vmem:[#allocation2 + $0x8] sm:$0xff] %vm291, %v285
        %vm294 = vcmask 149648
        %295 = vst.msk [vmem:[#allocation2 + $0x10] sm:$0x7] %vm294, %v287
        %s296 = scalar_lea.vmem %s183, 32 [#allocation3]
        %v297 = vld [vmem:[%s296] sm:$0xff]
        %v298 = vld [vmem:[%s296 + $0x8] sm:$0xff]
        %301 = vrot.lane.b32.xlu0 %v297, 2
        %v302 = vpop.permute.xlu0 %301
        %303 = vrot.lane.b32.xlu0 %v298, 2
        %v304 = vpop.permute.xlu0 %303
        %s307 = scalar_lea.vmem [#allocation2], 24
        %308 = vst.msk [vmem:[%s307 + $0x2] sm:$0xff] %vm227, %v302
        %309 = vst.msk [vmem:[%s307 + $0xa] sm:$0xff] %vm227, %v304
        %310 = vst.msk [vmem:[%s307 - $0x2] sm:$0x4] %vm230, %v302
        %311 = vst.msk [vmem:[%s307] sm:$0x2] %vm232, %v302
        %312 = vst.msk [vmem:[%s307 + $0xc] sm:$0x40] %vm234, %v304
        %v313 = vld [vmem:[%s307] sm:$0xff]
        %v314 = vld [vmem:[%s307 + $0x8] sm:$0xff]
        %v315 = vld [vmem:[%s307 + $0x10] sm:$0x7]
        %319 = vrot.lane.b32.xlu0 %v313, 124
        %v320 = vpop.permute.xlu0 %319
        %321 = vrot.lane.b32.xlu0 %v314, 124
        %v322 = vpop.permute.xlu0 %321
        %323 = vrot.lane.b32.xlu0 %v315, 124
        %v324 = vpop.permute.xlu0 %323
        %328 = vst.msk [vmem:[%s307] sm:$0xff] %vm251, %v320
        %329 = vst.msk [vmem:[%s307 + $0x8] sm:$0xff] %vm251, %v322
        %330 = vst.msk [vmem:[%s307 + $0x10] sm:$0x7] %vm254, %v324
        %v331 = vld [vmem:[%s307] sm:$0xff]
        %v332 = vld [vmem:[%s307 + $0x8] sm:$0xff]
        %v333 = vld [vmem:[%s307 + $0x10] sm:$0x7]
        %337 = vrot.lane.b32.xlu0 %v331, 126
        %v338 = vpop.permute.xlu0 %337
        %339 = vrot.lane.b32.xlu0 %v332, 126
        %v340 = vpop.permute.xlu0 %339
        %341 = vrot.lane.b32.xlu0 %v333, 126
        %v342 = vpop.permute.xlu0 %341
        %346 = vst.msk [vmem:[%s307] sm:$0xff] %vm271, %v338
        %347 = vst.msk [vmem:[%s307 + $0x8] sm:$0xff] %vm271, %v340
        %348 = vst.msk [vmem:[%s307 + $0x10] sm:$0x7] %vm274, %v342
        %v349 = vld [vmem:[%s307] sm:$0xff]
        %v350 = vld [vmem:[%s307 + $0x8] sm:$0xff]
        %v351 = vld [vmem:[%s307 + $0x10] sm:$0x7]
        %355 = vrot.lane.b32.xlu0 %v349, 2
        %v356 = vpop.permute.xlu0 %355
        %357 = vrot.lane.b32.xlu0 %v350, 2
        %v358 = vpop.permute.xlu0 %357
        %359 = vrot.lane.b32.xlu0 %v351, 2
        %v360 = vpop.permute.xlu0 %359
        %364 = vst.msk [vmem:[%s307] sm:$0xff] %vm291, %v356
        %365 = vst.msk [vmem:[%s307 + $0x8] sm:$0xff] %vm291, %v358
        %366 = vst.msk [vmem:[%s307 + $0x10] sm:$0x7] %vm294, %v360
        %s367 = scalar_lea.vmem %s183, 64 [#allocation3]
        %v368 = vld [vmem:[%s367] sm:$0xff]
        %v369 = vld [vmem:[%s367 + $0x8] sm:$0xff]
        %372 = vrot.lane.b32.xlu0 %v368, 2
        %v373 = vpop.permute.xlu0 %372
        %374 = vrot.lane.b32.xlu0 %v369, 2
        %v375 = vpop.permute.xlu0 %374
        %s378 = scalar_lea.vmem [#allocation2], 48
        %379 = vst.msk [vmem:[%s378 + $0x2] sm:$0xff] %vm227, %v373
        %380 = vst.msk [vmem:[%s378 + $0xa] sm:$0xff] %vm227, %v375
        %381 = vst.msk [vmem:[%s378 - $0x2] sm:$0x4] %vm230, %v373
        %382 = vst.msk [vmem:[%s378] sm:$0x2] %vm232, %v373
        %383 = vst.msk [vmem:[%s378 + $0xc] sm:$0x40] %vm234, %v375
        %v384 = vld [vmem:[%s378] sm:$0xff]
        %v385 = vld [vmem:[%s378 + $0x8] sm:$0xff]
        %v386 = vld [vmem:[%s378 + $0x10] sm:$0x7]
        %390 = vrot.lane.b32.xlu0 %v384, 124
        %v391 = vpop.permute.xlu0 %390
        %392 = vrot.lane.b32.xlu0 %v385, 124
        %v393 = vpop.permute.xlu0 %392
        %394 = vrot.lane.b32.xlu0 %v386, 124
        %v395 = vpop.permute.xlu0 %394
        %399 = vst.msk [vmem:[%s378] sm:$0xff] %vm251, %v391
        %400 = vst.msk [vmem:[%s378 + $0x8] sm:$0xff] %vm251, %v393
        %401 = vst.msk [vmem:[%s378 + $0x10] sm:$0x7] %vm254, %v395
        %v402 = vld [vmem:[%s378] sm:$0xff]
        %v403 = vld [vmem:[%s378 + $0x8] sm:$0xff]
        %v404 = vld [vmem:[%s378 + $0x10] sm:$0x7]
        %408 = vrot.lane.b32.xlu0 %v402, 126
        %v409 = vpop.permute.xlu0 %408
        %410 = vrot.lane.b32.xlu0 %v403, 126
        %v411 = vpop.permute.xlu0 %410
        %412 = vrot.lane.b32.xlu0 %v404, 126
        %v413 = vpop.permute.xlu0 %412
        %417 = vst.msk [vmem:[%s378] sm:$0xff] %vm271, %v409
        %418 = vst.msk [vmem:[%s378 + $0x8] sm:$0xff] %vm271, %v411
        %419 = vst.msk [vmem:[%s378 + $0x10] sm:$0x7] %vm274, %v413
        %v420 = vld [vmem:[%s378] sm:$0xff]
        %v421 = vld [vmem:[%s378 + $0x8] sm:$0xff]
        %v422 = vld [vmem:[%s378 + $0x10] sm:$0x7]
        %426 = vrot.lane.b32.xlu0 %v420, 2
        %v427 = vpop.permute.xlu0 %426
        %428 = vrot.lane.b32.xlu0 %v421, 2
        %v429 = vpop.permute.xlu0 %428
        %430 = vrot.lane.b32.xlu0 %v422, 2
        %v431 = vpop.permute.xlu0 %430
        %435 = vst.msk [vmem:[%s378] sm:$0xff] %vm291, %v427
        %436 = vst.msk [vmem:[%s378 + $0x8] sm:$0xff] %vm291, %v429
        %437 = vst.msk [vmem:[%s378 + $0x10] sm:$0x7] %vm294, %v431
        %s438 = scalar_lea.vmem %s183, 96 [#allocation3]
        %v439 = vld [vmem:[%s438] sm:$0xff]
        %v440 = vld [vmem:[%s438 + $0x8] sm:$0xff]
        %443 = vrot.lane.b32.xlu0 %v439, 2
        %v444 = vpop.permute.xlu0 %443
        %445 = vrot.lane.b32.xlu0 %v440, 2
        %v446 = vpop.permute.xlu0 %445
        %s449 = scalar_lea.vmem [#allocation2], 72
        %450 = vst.msk [vmem:[%s449 + $0x2] sm:$0xff] %vm227, %v444
        %451 = vst.msk [vmem:[%s449 + $0xa] sm:$0xff] %vm227, %v446
        %452 = vst.msk [vmem:[%s449 - $0x2] sm:$0x4] %vm230, %v444
        %453 = vst.msk [vmem:[%s449] sm:$0x2] %vm232, %v444
        %454 = vst.msk [vmem:[%s449 + $0xc] sm:$0x40] %vm234, %v446
        %v455 = vld [vmem:[%s449] sm:$0xff]
        %v456 = vld [vmem:[%s449 + $0x8] sm:$0xff]
        %v457 = vld [vmem:[%s449 + $0x10] sm:$0x7]
        %461 = vrot.lane.b32.xlu0 %v455, 124
        %v462 = vpop.permute.xlu0 %461
        %463 = vrot.lane.b32.xlu0 %v456, 124
        %v464 = vpop.permute.xlu0 %463
        %465 = vrot.lane.b32.xlu0 %v457, 124
        %v466 = vpop.permute.xlu0 %465
        %470 = vst.msk [vmem:[%s449] sm:$0xff] %vm251, %v462
        %471 = vst.msk [vmem:[%s449 + $0x8] sm:$0xff] %vm251, %v464
        %472 = vst.msk [vmem:[%s449 + $0x10] sm:$0x7] %vm254, %v466
        %v473 = vld [vmem:[%s449] sm:$0xff]
        %v474 = vld [vmem:[%s449 + $0x8] sm:$0xff]
        %v475 = vld [vmem:[%s449 + $0x10] sm:$0x7]
        %479 = vrot.lane.b32.xlu0 %v473, 126
        %v480 = vpop.permute.xlu0 %479
        %481 = vrot.lane.b32.xlu0 %v474, 126
        %v482 = vpop.permute.xlu0 %481
        %483 = vrot.lane.b32.xlu0 %v475, 126
        %v484 = vpop.permute.xlu0 %483
        %488 = vst.msk [vmem:[%s449] sm:$0xff] %vm271, %v480
        %489 = vst.msk [vmem:[%s449 + $0x8] sm:$0xff] %vm271, %v482
        %490 = vst.msk [vmem:[%s449 + $0x10] sm:$0x7] %vm274, %v484
        %v491 = vld [vmem:[%s449] sm:$0xff]
        %v492 = vld [vmem:[%s449 + $0x8] sm:$0xff]
        %v493 = vld [vmem:[%s449 + $0x10] sm:$0x7]
        %497 = vrot.lane.b32.xlu0 %v491, 2
        %v498 = vpop.permute.xlu0 %497
        %499 = vrot.lane.b32.xlu0 %v492, 2
        %v500 = vpop.permute.xlu0 %499
        %501 = vrot.lane.b32.xlu0 %v493, 2
        %v502 = vpop.permute.xlu0 %501
        %506 = vst.msk [vmem:[%s449] sm:$0xff] %vm291, %v498
        %507 = vst.msk [vmem:[%s449 + $0x8] sm:$0xff] %vm291, %v500
        %508 = vst.msk [vmem:[%s449 + $0x10] sm:$0x7] %vm294, %v502
        %v509 = vld [vmem:[#allocation2] sm:$0xff]
        %v510 = vld [vmem:[#allocation2 + $0x8] sm:$0xff]
        %s511 = sld [smem:[#allocation8]]
        %v512 = vstv %s511
        %v513 = vmul.f32 %v512, %v509
        %v514 = vmul.f32 %v512, %v510
        %v515 = vadd.f32 %v513, 0.0
        %v516 = vadd.f32 %v514, 0.0
        %s517 = sld [smem:[#allocation8 + $0x40]]
        %v518 = vstv %s517
        %v519 = vmul.f32 %v518, %v509
        %v520 = vmul.f32 %v518, %v510
        %v521 = vadd.f32 %v519, 0.0
        %v522 = vadd.f32 %v520, 0.0
        %s523 = sld [smem:[#allocation8 + $0x80]]
        %v524 = vstv %s523
        %v525 = vmul.f32 %v524, %v509
        %v526 = vmul.f32 %v524, %v510
        %v527 = vadd.f32 %v525, 0.0
        %v528 = vadd.f32 %v526, 0.0
        %s529 = sld [smem:[#allocation8 + $0xc0]]
        %v530 = vstv %s529
        %v531 = vmul.f32 %v530, %v509
        %v532 = vmul.f32 %v530, %v510
        %v533 = vadd.f32 %v531, 0.0
        %v534 = vadd.f32 %v532, 0.0
        %s535 = sld [smem:[#allocation8 + $0x1]]
        %v536 = vstv %s535
        %v537 = vmul.f32 %v536, %v509
        %v538 = vmul.f32 %v536, %v510
        %541 = vrot.lane.b32.xlu0 %v537, 127
        %v542 = vpop.permute.xlu0 %541
        %543 = vrot.lane.b32.xlu0 %v538, 127
        %v544 = vpop.permute.xlu0 %543
        %v547 = vadd.f32 %v515, %v542
        %v548 = vadd.f32 %v516, %v544
        %s549 = sld [smem:[#allocation8 + $0x41]]
        %v550 = vstv %s549
        %v551 = vmul.f32 %v550, %v509
        %v552 = vmul.f32 %v550, %v510
        %555 = vrot.lane.b32.xlu0 %v551, 127
        %v556 = vpop.permute.xlu0 %555
        %557 = vrot.lane.b32.xlu0 %v552, 127
        %v558 = vpop.permute.xlu0 %557
        %v561 = vadd.f32 %v521, %v556
        %v562 = vadd.f32 %v522, %v558
        %s563 = sld [smem:[#allocation8 + $0x81]]
        %v564 = vstv %s563
        %v565 = vmul.f32 %v564, %v509
        %v566 = vmul.f32 %v564, %v510
        %569 = vrot.lane.b32.xlu0 %v565, 127
        %v570 = vpop.permute.xlu0 %569
        %571 = vrot.lane.b32.xlu0 %v566, 127
        %v572 = vpop.permute.xlu0 %571
        %v575 = vadd.f32 %v527, %v570
        %v576 = vadd.f32 %v528, %v572
        %s577 = sld [smem:[#allocation8 + $0xc1]]
        %v578 = vstv %s577
        %v579 = vmul.f32 %v578, %v509
        %v580 = vmul.f32 %v578, %v510
        %583 = vrot.lane.b32.xlu0 %v579, 127
        %v584 = vpop.permute.xlu0 %583
        %585 = vrot.lane.b32.xlu0 %v580, 127
        %v586 = vpop.permute.xlu0 %585
        %v589 = vadd.f32 %v533, %v584
        %v590 = vadd.f32 %v534, %v586
        %s591 = sld [smem:[#allocation8 + $0x2]]
        %v592 = vstv %s591
        %v593 = vmul.f32 %v592, %v509
        %v594 = vmul.f32 %v592, %v510
        %597 = vrot.lane.b32.xlu0 %v593, 126
        %v598 = vpop.permute.xlu0 %597
        %599 = vrot.lane.b32.xlu0 %v594, 126
        %v600 = vpop.permute.xlu0 %599
        %v603 = vadd.f32 %v547, %v598
        %v604 = vadd.f32 %v548, %v600
        %s605 = sld [smem:[#allocation8 + $0x42]]
        %v606 = vstv %s605
        %v607 = vmul.f32 %v606, %v509
        %v608 = vmul.f32 %v606, %v510
        %611 = vrot.lane.b32.xlu0 %v607, 126
        %v612 = vpop.permute.xlu0 %611
        %613 = vrot.lane.b32.xlu0 %v608, 126
        %v614 = vpop.permute.xlu0 %613
        %v617 = vadd.f32 %v561, %v612
        %v618 = vadd.f32 %v562, %v614
        %s619 = sld [smem:[#allocation8 + $0x82]]
        %v620 = vstv %s619
        %v621 = vmul.f32 %v620, %v509
        %v622 = vmul.f32 %v620, %v510
        %625 = vrot.lane.b32.xlu0 %v621, 126
        %v626 = vpop.permute.xlu0 %625
        %627 = vrot.lane.b32.xlu0 %v622, 126
        %v628 = vpop.permute.xlu0 %627
        %v631 = vadd.f32 %v575, %v626
        %v632 = vadd.f32 %v576, %v628
        %s633 = sld [smem:[#allocation8 + $0xc2]]
        %v634 = vstv %s633
        %v635 = vmul.f32 %v634, %v509
        %v636 = vmul.f32 %v634, %v510
        %639 = vrot.lane.b32.xlu0 %v635, 126
        %v640 = vpop.permute.xlu0 %639
        %641 = vrot.lane.b32.xlu0 %v636, 126
        %v642 = vpop.permute.xlu0 %641
        %v645 = vadd.f32 %v589, %v640
        %v646 = vadd.f32 %v590, %v642
        %s647 = sld [smem:[#allocation8 + $0x3]]
        %v648 = vstv %s647
        %v649 = vmul.f32 %v648, %v509
        %v650 = vmul.f32 %v648, %v510
        %653 = vrot.lane.b32.xlu0 %v649, 125
        %v654 = vpop.permute.xlu0 %653
        %655 = vrot.lane.b32.xlu0 %v650, 125
        %v656 = vpop.permute.xlu0 %655
        %v659 = vadd.f32 %v603, %v654
        %v660 = vadd.f32 %v604, %v656
        %s661 = sld [smem:[#allocation8 + $0x43]]
        %v662 = vstv %s661
        %v663 = vmul.f32 %v662, %v509
        %v664 = vmul.f32 %v662, %v510
        %667 = vrot.lane.b32.xlu0 %v663, 125
        %v668 = vpop.permute.xlu0 %667
        %669 = vrot.lane.b32.xlu0 %v664, 125
        %v670 = vpop.permute.xlu0 %669
        %v673 = vadd.f32 %v617, %v668
        %v674 = vadd.f32 %v618, %v670
        %s675 = sld [smem:[#allocation8 + $0x83]]
        %v676 = vstv %s675
        %v677 = vmul.f32 %v676, %v509
        %v678 = vmul.f32 %v676, %v510
        %681 = vrot.lane.b32.xlu0 %v677, 125
        %v682 = vpop.permute.xlu0 %681
        %683 = vrot.lane.b32.xlu0 %v678, 125
        %v684 = vpop.permute.xlu0 %683
        %v687 = vadd.f32 %v631, %v682
        %v688 = vadd.f32 %v632, %v684
        %s689 = sld [smem:[#allocation8 + $0xc3]]
        %v690 = vstv %s689
        %v691 = vmul.f32 %v690, %v509
        %v692 = vmul.f32 %v690, %v510
        %695 = vrot.lane.b32.xlu0 %v691, 125
        %v696 = vpop.permute.xlu0 %695
        %697 = vrot.lane.b32.xlu0 %v692, 125
        %v698 = vpop.permute.xlu0 %697
        %v701 = vadd.f32 %v645, %v696
        %v702 = vadd.f32 %v646, %v698
        %v703 = vld [vmem:[#allocation2 + $0x1] sm:$0xff]
        %v704 = vld [vmem:[#allocation2 + $0x9] sm:$0xff]
        %s705 = sld [smem:[#allocation8 + $0x4]]
        %v706 = vstv %s705
        %v707 = vmul.f32 %v706, %v703
        %v708 = vmul.f32 %v706, %v704
        %v709 = vadd.f32 %v659, %v707
        %v710 = vadd.f32 %v660, %v708
        %s711 = sld [smem:[#allocation8 + $0x44]]
        %v712 = vstv %s711
        %v713 = vmul.f32 %v712, %v703
        %v714 = vmul.f32 %v712, %v704
        %v715 = vadd.f32 %v673, %v713
        %v716 = vadd.f32 %v674, %v714
        %s717 = sld [smem:[#allocation8 + $0x84]]
        %v718 = vstv %s717
        %v719 = vmul.f32 %v718, %v703
        %v720 = vmul.f32 %v718, %v704
        %v721 = vadd.f32 %v687, %v719
        %v722 = vadd.f32 %v688, %v720
        %s723 = sld [smem:[#allocation8 + $0xc4]]
        %v724 = vstv %s723
        %v725 = vmul.f32 %v724, %v703
        %v726 = vmul.f32 %v724, %v704
        %v727 = vadd.f32 %v701, %v725
        %v728 = vadd.f32 %v702, %v726
        %s729 = sld [smem:[#allocation8 + $0x5]]
        %v730 = vstv %s729
        %v731 = vmul.f32 %v730, %v703
        %v732 = vmul.f32 %v730, %v704
        %735 = vrot.lane.b32.xlu0 %v731, 127
        %v736 = vpop.permute.xlu0 %735
        %737 = vrot.lane.b32.xlu0 %v732, 127
        %v738 = vpop.permute.xlu0 %737
        %v741 = vadd.f32 %v709, %v736
        %v742 = vadd.f32 %v710, %v738
        %s743 = sld [smem:[#allocation8 + $0x45]]
        %v744 = vstv %s743
        %v745 = vmul.f32 %v744, %v703
        %v746 = vmul.f32 %v744, %v704
        %749 = vrot.lane.b32.xlu0 %v745, 127
        %v750 = vpop.permute.xlu0 %749
        %751 = vrot.lane.b32.xlu0 %v746, 127
        %v752 = vpop.permute.xlu0 %751
        %v755 = vadd.f32 %v715, %v750
        %v756 = vadd.f32 %v716, %v752
        %s757 = sld [smem:[#allocation8 + $0x85]]
        %v758 = vstv %s757
        %v759 = vmul.f32 %v758, %v703
        %v760 = vmul.f32 %v758, %v704
        %763 = vrot.lane.b32.xlu0 %v759, 127
        %v764 = vpop.permute.xlu0 %763
        %765 = vrot.lane.b32.xlu0 %v760, 127
        %v766 = vpop.permute.xlu0 %765
        %v769 = vadd.f32 %v721, %v764
        %v770 = vadd.f32 %v722, %v766
        %s771 = sld [smem:[#allocation8 + $0xc5]]
        %v772 = vstv %s771
        %v773 = vmul.f32 %v772, %v703
        %v774 = vmul.f32 %v772, %v704
        %777 = vrot.lane.b32.xlu0 %v773, 127
        %v778 = vpop.permute.xlu0 %777
        %779 = vrot.lane.b32.xlu0 %v774, 127
        %v780 = vpop.permute.xlu0 %779
        %v783 = vadd.f32 %v727, %v778
        %v784 = vadd.f32 %v728, %v780
        %s785 = sld [smem:[#allocation8 + $0x6]]
        %v786 = vstv %s785
        %v787 = vmul.f32 %v786, %v703
        %v788 = vmul.f32 %v786, %v704
        %791 = vrot.lane.b32.xlu0 %v787, 126
        %v792 = vpop.permute.xlu0 %791
        %793 = vrot.lane.b32.xlu0 %v788, 126
        %v794 = vpop.permute.xlu0 %793
        %v797 = vadd.f32 %v741, %v792
        %v798 = vadd.f32 %v742, %v794
        %s799 = sld [smem:[#allocation8 + $0x46]]
        %v800 = vstv %s799
        %v801 = vmul.f32 %v800, %v703
        %v802 = vmul.f32 %v800, %v704
        %805 = vrot.lane.b32.xlu0 %v801, 126
        %v806 = vpop.permute.xlu0 %805
        %807 = vrot.lane.b32.xlu0 %v802, 126
        %v808 = vpop.permute.xlu0 %807
        %v811 = vadd.f32 %v755, %v806
        %v812 = vadd.f32 %v756, %v808
        %s813 = sld [smem:[#allocation8 + $0x86]]
        %v814 = vstv %s813
        %v815 = vmul.f32 %v814, %v703
        %v816 = vmul.f32 %v814, %v704
        %819 = vrot.lane.b32.xlu0 %v815, 126
        %v820 = vpop.permute.xlu0 %819
        %821 = vrot.lane.b32.xlu0 %v816, 126
        %v822 = vpop.permute.xlu0 %821
        %v825 = vadd.f32 %v769, %v820
        %v826 = vadd.f32 %v770, %v822
        %s827 = sld [smem:[#allocation8 + $0xc6]]
        %v828 = vstv %s827
        %v829 = vmul.f32 %v828, %v703
        %v830 = vmul.f32 %v828, %v704
        %833 = vrot.lane.b32.xlu0 %v829, 126
        %v834 = vpop.permute.xlu0 %833
        %835 = vrot.lane.b32.xlu0 %v830, 126
        %v836 = vpop.permute.xlu0 %835
        %v839 = vadd.f32 %v783, %v834
        %v840 = vadd.f32 %v784, %v836
        %s841 = sld [smem:[#allocation8 + $0x7]]
        %v842 = vstv %s841
        %v843 = vmul.f32 %v842, %v703
        %v844 = vmul.f32 %v842, %v704
        %847 = vrot.lane.b32.xlu0 %v843, 125
        %v848 = vpop.permute.xlu0 %847
        %849 = vrot.lane.b32.xlu0 %v844, 125
        %v850 = vpop.permute.xlu0 %849
        %v853 = vadd.f32 %v797, %v848
        %v854 = vadd.f32 %v798, %v850
        %s855 = sld [smem:[#allocation8 + $0x47]]
        %v856 = vstv %s855
        %v857 = vmul.f32 %v856, %v703
        %v858 = vmul.f32 %v856, %v704
        %861 = vrot.lane.b32.xlu0 %v857, 125
        %v862 = vpop.permute.xlu0 %861
        %863 = vrot.lane.b32.xlu0 %v858, 125
        %v864 = vpop.permute.xlu0 %863
        %v867 = vadd.f32 %v811, %v862
        %v868 = vadd.f32 %v812, %v864
        %s869 = sld [smem:[#allocation8 + $0x87]]
        %v870 = vstv %s869
        %v871 = vmul.f32 %v870, %v703
        %v872 = vmul.f32 %v870, %v704
        %875 = vrot.lane.b32.xlu0 %v871, 125
        %v876 = vpop.permute.xlu0 %875
        %877 = vrot.lane.b32.xlu0 %v872, 125
        %v878 = vpop.permute.xlu0 %877
        %v881 = vadd.f32 %v825, %v876
        %v882 = vadd.f32 %v826, %v878
        %s883 = sld [smem:[#allocation8 + $0xc7]]
        %v884 = vstv %s883
        %v885 = vmul.f32 %v884, %v703
        %v886 = vmul.f32 %v884, %v704
        %889 = vrot.lane.b32.xlu0 %v885, 125
        %v890 = vpop.permute.xlu0 %889
        %891 = vrot.lane.b32.xlu0 %v886, 125
        %v892 = vpop.permute.xlu0 %891
        %v895 = vadd.f32 %v839, %v890
        %v896 = vadd.f32 %v840, %v892
        %v897 = vld [vmem:[#allocation2 + $0x2] sm:$0xff]
        %v898 = vld [vmem:[#allocation2 + $0xa] sm:$0xff]
        %s899 = sld [smem:[#allocation8 + $0x8]]
        %v900 = vstv %s899
        %v901 = vmul.f32 %v900, %v897
        %v902 = vmul.f32 %v900, %v898
        %v903 = vadd.f32 %v853, %v901
        %v904 = vadd.f32 %v854, %v902
        %s905 = sld [smem:[#allocation8 + $0x48]]
        %v906 = vstv %s905
        %v907 = vmul.f32 %v906, %v897
        %v908 = vmul.f32 %v906, %v898
        %v909 = vadd.f32 %v867, %v907
        %v910 = vadd.f32 %v868, %v908
        %s911 = sld [smem:[#allocation8 + $0x88]]
        %v912 = vstv %s911
        %v913 = vmul.f32 %v912, %v897
        %v914 = vmul.f32 %v912, %v898
        %v915 = vadd.f32 %v881, %v913
        %v916 = vadd.f32 %v882, %v914
        %s917 = sld [smem:[#allocation8 + $0xc8]]
        %v918 = vstv %s917
        %v919 = vmul.f32 %v918, %v897
        %v920 = vmul.f32 %v918, %v898
        %v921 = vadd.f32 %v895, %v919
        %v922 = vadd.f32 %v896, %v920
        %s923 = sld [smem:[#allocation8 + $0x9]]
        %v924 = vstv %s923
        %v925 = vmul.f32 %v924, %v897
        %v926 = vmul.f32 %v924, %v898
        %929 = vrot.lane.b32.xlu0 %v925, 127
        %v930 = vpop.permute.xlu0 %929
        %931 = vrot.lane.b32.xlu0 %v926, 127
        %v932 = vpop.permute.xlu0 %931
        %v935 = vadd.f32 %v903, %v930
        %v936 = vadd.f32 %v904, %v932
        %s937 = sld [smem:[#allocation8 + $0x49]]
        %v938 = vstv %s937
        %v939 = vmul.f32 %v938, %v897
        %v940 = vmul.f32 %v938, %v898
        %943 = vrot.lane.b32.xlu0 %v939, 127
        %v944 = vpop.permute.xlu0 %943
        %945 = vrot.lane.b32.xlu0 %v940, 127
        %v946 = vpop.permute.xlu0 %945
        %v949 = vadd.f32 %v909, %v944
        %v950 = vadd.f32 %v910, %v946
        %s951 = sld [smem:[#allocation8 + $0x89]]
        %v952 = vstv %s951
        %v953 = vmul.f32 %v952, %v897
        %v954 = vmul.f32 %v952, %v898
        %957 = vrot.lane.b32.xlu0 %v953, 127
        %v958 = vpop.permute.xlu0 %957
        %959 = vrot.lane.b32.xlu0 %v954, 127
        %v960 = vpop.permute.xlu0 %959
        %v963 = vadd.f32 %v915, %v958
        %v964 = vadd.f32 %v916, %v960
        %s965 = sld [smem:[#allocation8 + $0xc9]]
        %v966 = vstv %s965
        %v967 = vmul.f32 %v966, %v897
        %v968 = vmul.f32 %v966, %v898
        %971 = vrot.lane.b32.xlu0 %v967, 127
        %v972 = vpop.permute.xlu0 %971
        %973 = vrot.lane.b32.xlu0 %v968, 127
        %v974 = vpop.permute.xlu0 %973
        %v977 = vadd.f32 %v921, %v972
        %v978 = vadd.f32 %v922, %v974
        %s979 = sld [smem:[#allocation8 + $0xa]]
        %v980 = vstv %s979
        %v981 = vmul.f32 %v980, %v897
        %v982 = vmul.f32 %v980, %v898
        %985 = vrot.lane.b32.xlu0 %v981, 126
        %v986 = vpop.permute.xlu0 %985
        %987 = vrot.lane.b32.xlu0 %v982, 126
        %v988 = vpop.permute.xlu0 %987
        %v991 = vadd.f32 %v935, %v986
        %v992 = vadd.f32 %v936, %v988
        %s993 = sld [smem:[#allocation8 + $0x4a]]
        %v994 = vstv %s993
        %v995 = vmul.f32 %v994, %v897
        %v996 = vmul.f32 %v994, %v898
        %999 = vrot.lane.b32.xlu0 %v995, 126
        %v1000 = vpop.permute.xlu0 %999
        %1001 = vrot.lane.b32.xlu0 %v996, 126
        %v1002 = vpop.permute.xlu0 %1001
        %v1005 = vadd.f32 %v949, %v1000
        %v1006 = vadd.f32 %v950, %v1002
        %s1007 = sld [smem:[#allocation8 + $0x8a]]
        %v1008 = vstv %s1007
        %v1009 = vmul.f32 %v1008, %v897
        %v1010 = vmul.f32 %v1008, %v898
        %1013 = vrot.lane.b32.xlu0 %v1009, 126
        %v1014 = vpop.permute.xlu0 %1013
        %1015 = vrot.lane.b32.xlu0 %v1010, 126
        %v1016 = vpop.permute.xlu0 %1015
        %v1019 = vadd.f32 %v963, %v1014
        %v1020 = vadd.f32 %v964, %v1016
        %s1021 = sld [smem:[#allocation8 + $0xca]]
        %v1022 = vstv %s1021
        %v1023 = vmul.f32 %v1022, %v897
        %v1024 = vmul.f32 %v1022, %v898
        %1027 = vrot.lane.b32.xlu0 %v1023, 126
        %v1028 = vpop.permute.xlu0 %1027
        %1029 = vrot.lane.b32.xlu0 %v1024, 126
        %v1030 = vpop.permute.xlu0 %1029
        %v1033 = vadd.f32 %v977, %v1028
        %v1034 = vadd.f32 %v978, %v1030
        %s1035 = sld [smem:[#allocation8 + $0xb]]
        %v1036 = vstv %s1035
        %v1037 = vmul.f32 %v1036, %v897
        %v1038 = vmul.f32 %v1036, %v898
        %1041 = vrot.lane.b32.xlu0 %v1037, 125
        %v1042 = vpop.permute.xlu0 %1041
        %1043 = vrot.lane.b32.xlu0 %v1038, 125
        %v1044 = vpop.permute.xlu0 %1043
        %v1047 = vadd.f32 %v991, %v1042
        %v1048 = vadd.f32 %v992, %v1044
        %s1049 = sld [smem:[#allocation8 + $0x4b]]
        %v1050 = vstv %s1049
        %v1051 = vmul.f32 %v1050, %v897
        %v1052 = vmul.f32 %v1050, %v898
        %1055 = vrot.lane.b32.xlu0 %v1051, 125
        %v1056 = vpop.permute.xlu0 %1055
        %1057 = vrot.lane.b32.xlu0 %v1052, 125
        %v1058 = vpop.permute.xlu0 %1057
        %v1061 = vadd.f32 %v1005, %v1056
        %v1062 = vadd.f32 %v1006, %v1058
        %s1063 = sld [smem:[#allocation8 + $0x8b]]
        %v1064 = vstv %s1063
        %v1065 = vmul.f32 %v1064, %v897
        %v1066 = vmul.f32 %v1064, %v898
        %1069 = vrot.lane.b32.xlu0 %v1065, 125
        %v1070 = vpop.permute.xlu0 %1069
        %1071 = vrot.lane.b32.xlu0 %v1066, 125
        %v1072 = vpop.permute.xlu0 %1071
        %v1075 = vadd.f32 %v1019, %v1070
        %v1076 = vadd.f32 %v1020, %v1072
        %s1077 = sld [smem:[#allocation8 + $0xcb]]
        %v1078 = vstv %s1077
        %v1079 = vmul.f32 %v1078, %v897
        %v1080 = vmul.f32 %v1078, %v898
        %1083 = vrot.lane.b32.xlu0 %v1079, 125
        %v1084 = vpop.permute.xlu0 %1083
        %1085 = vrot.lane.b32.xlu0 %v1080, 125
        %v1086 = vpop.permute.xlu0 %1085
        %v1089 = vadd.f32 %v1033, %v1084
        %v1090 = vadd.f32 %v1034, %v1086
        %v1091 = vld [vmem:[#allocation2 + $0x3] sm:$0xff]
        %v1092 = vld [vmem:[#allocation2 + $0xb] sm:$0xff]
        %s1093 = sld [smem:[#allocation8 + $0xc]]
        %v1094 = vstv %s1093
        %v1095 = vmul.f32 %v1094, %v1091
        %v1096 = vmul.f32 %v1094, %v1092
        %v1097 = vadd.f32 %v1047, %v1095
        %v1098 = vadd.f32 %v1048, %v1096
        %s1099 = sld [smem:[#allocation8 + $0x4c]]
        %v1100 = vstv %s1099
        %v1101 = vmul.f32 %v1100, %v1091
        %v1102 = vmul.f32 %v1100, %v1092
        %v1103 = vadd.f32 %v1061, %v1101
        %v1104 = vadd.f32 %v1062, %v1102
        %s1105 = sld [smem:[#allocation8 + $0x8c]]
        %v1106 = vstv %s1105
        %v1107 = vmul.f32 %v1106, %v1091
        %v1108 = vmul.f32 %v1106, %v1092
        %v1109 = vadd.f32 %v1075, %v1107
        %v1110 = vadd.f32 %v1076, %v1108
        %s1111 = sld [smem:[#allocation8 + $0xcc]]
        %v1112 = vstv %s1111
        %v1113 = vmul.f32 %v1112, %v1091
        %v1114 = vmul.f32 %v1112, %v1092
        %v1115 = vadd.f32 %v1089, %v1113
        %v1116 = vadd.f32 %v1090, %v1114
        %s1117 = sld [smem:[#allocation8 + $0xd]]
        %v1118 = vstv %s1117
        %v1119 = vmul.f32 %v1118, %v1091
        %v1120 = vmul.f32 %v1118, %v1092
        %1123 = vrot.lane.b32.xlu0 %v1119, 127
        %v1124 = vpop.permute.xlu0 %1123
        %1125 = vrot.lane.b32.xlu0 %v1120, 127
        %v1126 = vpop.permute.xlu0 %1125
        %v1129 = vadd.f32 %v1097, %v1124
        %v1130 = vadd.f32 %v1098, %v1126
        %s1131 = sld [smem:[#allocation8 + $0x4d]]
        %v1132 = vstv %s1131
        %v1133 = vmul.f32 %v1132, %v1091
        %v1134 = vmul.f32 %v1132, %v1092
        %1137 = vrot.lane.b32.xlu0 %v1133, 127
        %v1138 = vpop.permute.xlu0 %1137
        %1139 = vrot.lane.b32.xlu0 %v1134, 127
        %v1140 = vpop.permute.xlu0 %1139
        %v1143 = vadd.f32 %v1103, %v1138
        %v1144 = vadd.f32 %v1104, %v1140
        %s1145 = sld [smem:[#allocation8 + $0x8d]]
        %v1146 = vstv %s1145
        %v1147 = vmul.f32 %v1146, %v1091
        %v1148 = vmul.f32 %v1146, %v1092
        %1151 = vrot.lane.b32.xlu0 %v1147, 127
        %v1152 = vpop.permute.xlu0 %1151
        %1153 = vrot.lane.b32.xlu0 %v1148, 127
        %v1154 = vpop.permute.xlu0 %1153
        %v1157 = vadd.f32 %v1109, %v1152
        %v1158 = vadd.f32 %v1110, %v1154
        %s1159 = sld [smem:[#allocation8 + $0xcd]]
        %v1160 = vstv %s1159
        %v1161 = vmul.f32 %v1160, %v1091
        %v1162 = vmul.f32 %v1160, %v1092
        %1165 = vrot.lane.b32.xlu0 %v1161, 127
        %v1166 = vpop.permute.xlu0 %1165
        %1167 = vrot.lane.b32.xlu0 %v1162, 127
        %v1168 = vpop.permute.xlu0 %1167
        %v1171 = vadd.f32 %v1115, %v1166
        %v1172 = vadd.f32 %v1116, %v1168
        %s1173 = sld [smem:[#allocation8 + $0xe]]
        %v1174 = vstv %s1173
        %v1175 = vmul.f32 %v1174, %v1091
        %v1176 = vmul.f32 %v1174, %v1092
        %1179 = vrot.lane.b32.xlu0 %v1175, 126
        %v1180 = vpop.permute.xlu0 %1179
        %1181 = vrot.lane.b32.xlu0 %v1176, 126
        %v1182 = vpop.permute.xlu0 %1181
        %v1185 = vadd.f32 %v1129, %v1180
        %v1186 = vadd.f32 %v1130, %v1182
        %s1187 = sld [smem:[#allocation8 + $0x4e]]
        %v1188 = vstv %s1187
        %v1189 = vmul.f32 %v1188, %v1091
        %v1190 = vmul.f32 %v1188, %v1092
        %1193 = vrot.lane.b32.xlu0 %v1189, 126
        %v1194 = vpop.permute.xlu0 %1193
        %1195 = vrot.lane.b32.xlu0 %v1190, 126
        %v1196 = vpop.permute.xlu0 %1195
        %v1199 = vadd.f32 %v1143, %v1194
        %v1200 = vadd.f32 %v1144, %v1196
        %s1201 = sld [smem:[#allocation8 + $0x8e]]
        %v1202 = vstv %s1201
        %v1203 = vmul.f32 %v1202, %v1091
        %v1204 = vmul.f32 %v1202, %v1092
        %1207 = vrot.lane.b32.xlu0 %v1203, 126
        %v1208 = vpop.permute.xlu0 %1207
        %1209 = vrot.lane.b32.xlu0 %v1204, 126
        %v1210 = vpop.permute.xlu0 %1209
        %v1213 = vadd.f32 %v1157, %v1208
        %v1214 = vadd.f32 %v1158, %v1210
        %s1215 = sld [smem:[#allocation8 + $0xce]]
        %v1216 = vstv %s1215
        %v1217 = vmul.f32 %v1216, %v1091
        %v1218 = vmul.f32 %v1216, %v1092
        %1221 = vrot.lane.b32.xlu0 %v1217, 126
        %v1222 = vpop.permute.xlu0 %1221
        %1223 = vrot.lane.b32.xlu0 %v1218, 126
        %v1224 = vpop.permute.xlu0 %1223
        %v1227 = vadd.f32 %v1171, %v1222
        %v1228 = vadd.f32 %v1172, %v1224
        %s1229 = sld [smem:[#allocation8 + $0xf]]
        %v1230 = vstv %s1229
        %v1231 = vmul.f32 %v1230, %v1091
        %v1232 = vmul.f32 %v1230, %v1092
        %1235 = vrot.lane.b32.xlu0 %v1231, 125
        %v1236 = vpop.permute.xlu0 %1235
        %1237 = vrot.lane.b32.xlu0 %v1232, 125
        %v1238 = vpop.permute.xlu0 %1237
        %v1241 = vadd.f32 %v1185, %v1236
        %v1242 = vadd.f32 %v1186, %v1238
        %s1243 = sld [smem:[#allocation8 + $0x4f]]
        %v1244 = vstv %s1243
        %v1245 = vmul.f32 %v1244, %v1091
        %v1246 = vmul.f32 %v1244, %v1092
        %1249 = vrot.lane.b32.xlu0 %v1245, 125
        %v1250 = vpop.permute.xlu0 %1249
        %1251 = vrot.lane.b32.xlu0 %v1246, 125
        %v1252 = vpop.permute.xlu0 %1251
        %v1255 = vadd.f32 %v1199, %v1250
        %v1256 = vadd.f32 %v1200, %v1252
        %s1257 = sld [smem:[#allocation8 + $0x8f]]
        %v1258 = vstv %s1257
        %v1259 = vmul.f32 %v1258, %v1091
        %v1260 = vmul.f32 %v1258, %v1092
        %1263 = vrot.lane.b32.xlu0 %v1259, 125
        %v1264 = vpop.permute.xlu0 %1263
        %1265 = vrot.lane.b32.xlu0 %v1260, 125
        %v1266 = vpop.permute.xlu0 %1265
        %v1269 = vadd.f32 %v1213, %v1264
        %v1270 = vadd.f32 %v1214, %v1266
        %s1271 = sld [smem:[#allocation8 + $0xcf]]
        %v1272 = vstv %s1271
        %v1273 = vmul.f32 %v1272, %v1091
        %v1274 = vmul.f32 %v1272, %v1092
        %1277 = vrot.lane.b32.xlu0 %v1273, 125
        %v1278 = vpop.permute.xlu0 %1277
        %1279 = vrot.lane.b32.xlu0 %v1274, 125
        %v1280 = vpop.permute.xlu0 %1279
        %v1283 = vadd.f32 %v1227, %v1278
        %v1284 = vadd.f32 %v1228, %v1280
        %v1285 = vld [vmem:[%s307] sm:$0xff]
        %v1286 = vld [vmem:[%s307 + $0x8] sm:$0xff]
        %s1287 = sld [smem:[#allocation8 + $0x10]]
        %v1288 = vstv %s1287
        %v1289 = vmul.f32 %v1288, %v1285
        %v1290 = vmul.f32 %v1288, %v1286
        %v1291 = vadd.f32 %v1241, %v1289
        %v1292 = vadd.f32 %v1242, %v1290
        %s1293 = sld [smem:[#allocation8 + $0x50]]
        %v1294 = vstv %s1293
        %v1295 = vmul.f32 %v1294, %v1285
        %v1296 = vmul.f32 %v1294, %v1286
        %v1297 = vadd.f32 %v1255, %v1295
        %v1298 = vadd.f32 %v1256, %v1296
        %s1299 = sld [smem:[#allocation8 + $0x90]]
        %v1300 = vstv %s1299
        %v1301 = vmul.f32 %v1300, %v1285
        %v1302 = vmul.f32 %v1300, %v1286
        %v1303 = vadd.f32 %v1269, %v1301
        %v1304 = vadd.f32 %v1270, %v1302
        %s1305 = sld [smem:[#allocation8 + $0xd0]]
        %v1306 = vstv %s1305
        %v1307 = vmul.f32 %v1306, %v1285
        %v1308 = vmul.f32 %v1306, %v1286
        %v1309 = vadd.f32 %v1283, %v1307
        %v1310 = vadd.f32 %v1284, %v1308
        %s1311 = sld [smem:[#allocation8 + $0x11]]
        %v1312 = vstv %s1311
        %v1313 = vmul.f32 %v1312, %v1285
        %v1314 = vmul.f32 %v1312, %v1286
        %1317 = vrot.lane.b32.xlu0 %v1313, 127
        %v1318 = vpop.permute.xlu0 %1317
        %1319 = vrot.lane.b32.xlu0 %v1314, 127
        %v1320 = vpop.permute.xlu0 %1319
        %v1323 = vadd.f32 %v1291, %v1318
        %v1324 = vadd.f32 %v1292, %v1320
        %s1325 = sld [smem:[#allocation8 + $0x51]]
        %v1326 = vstv %s1325
        %v1327 = vmul.f32 %v1326, %v1285
        %v1328 = vmul.f32 %v1326, %v1286
        %1331 = vrot.lane.b32.xlu0 %v1327, 127
        %v1332 = vpop.permute.xlu0 %1331
        %1333 = vrot.lane.b32.xlu0 %v1328, 127
        %v1334 = vpop.permute.xlu0 %1333
        %v1337 = vadd.f32 %v1297, %v1332
        %v1338 = vadd.f32 %v1298, %v1334
        %s1339 = sld [smem:[#allocation8 + $0x91]]
        %v1340 = vstv %s1339
        %v1341 = vmul.f32 %v1340, %v1285
        %v1342 = vmul.f32 %v1340, %v1286
        %1345 = vrot.lane.b32.xlu0 %v1341, 127
        %v1346 = vpop.permute.xlu0 %1345
        %1347 = vrot.lane.b32.xlu0 %v1342, 127
        %v1348 = vpop.permute.xlu0 %1347
        %v1351 = vadd.f32 %v1303, %v1346
        %v1352 = vadd.f32 %v1304, %v1348
        %s1353 = sld [smem:[#allocation8 + $0xd1]]
        %v1354 = vstv %s1353
        %v1355 = vmul.f32 %v1354, %v1285
        %v1356 = vmul.f32 %v1354, %v1286
        %1359 = vrot.lane.b32.xlu0 %v1355, 127
        %v1360 = vpop.permute.xlu0 %1359
        %1361 = vrot.lane.b32.xlu0 %v1356, 127
        %v1362 = vpop.permute.xlu0 %1361
        %v1365 = vadd.f32 %v1309, %v1360
        %v1366 = vadd.f32 %v1310, %v1362
        %s1367 = sld [smem:[#allocation8 + $0x12]]
        %v1368 = vstv %s1367
        %v1369 = vmul.f32 %v1368, %v1285
        %v1370 = vmul.f32 %v1368, %v1286
        %1373 = vrot.lane.b32.xlu0 %v1369, 126
        %v1374 = vpop.permute.xlu0 %1373
        %1375 = vrot.lane.b32.xlu0 %v1370, 126
        %v1376 = vpop.permute.xlu0 %1375
        %v1379 = vadd.f32 %v1323, %v1374
        %v1380 = vadd.f32 %v1324, %v1376
        %s1381 = sld [smem:[#allocation8 + $0x52]]
        %v1382 = vstv %s1381
        %v1383 = vmul.f32 %v1382, %v1285
        %v1384 = vmul.f32 %v1382, %v1286
        %1387 = vrot.lane.b32.xlu0 %v1383, 126
        %v1388 = vpop.permute.xlu0 %1387
        %1389 = vrot.lane.b32.xlu0 %v1384, 126
        %v1390 = vpop.permute.xlu0 %1389
        %v1393 = vadd.f32 %v1337, %v1388
        %v1394 = vadd.f32 %v1338, %v1390
        %s1395 = sld [smem:[#allocation8 + $0x92]]
        %v1396 = vstv %s1395
        %v1397 = vmul.f32 %v1396, %v1285
        %v1398 = vmul.f32 %v1396, %v1286
        %1401 = vrot.lane.b32.xlu0 %v1397, 126
        %v1402 = vpop.permute.xlu0 %1401
        %1403 = vrot.lane.b32.xlu0 %v1398, 126
        %v1404 = vpop.permute.xlu0 %1403
        %v1407 = vadd.f32 %v1351, %v1402
        %v1408 = vadd.f32 %v1352, %v1404
        %s1409 = sld [smem:[#allocation8 + $0xd2]]
        %v1410 = vstv %s1409
        %v1411 = vmul.f32 %v1410, %v1285
        %v1412 = vmul.f32 %v1410, %v1286
        %1415 = vrot.lane.b32.xlu0 %v1411, 126
        %v1416 = vpop.permute.xlu0 %1415
        %1417 = vrot.lane.b32.xlu0 %v1412, 126
        %v1418 = vpop.permute.xlu0 %1417
        %v1421 = vadd.f32 %v1365, %v1416
        %v1422 = vadd.f32 %v1366, %v1418
        %s1423 = sld [smem:[#allocation8 + $0x13]]
        %v1424 = vstv %s1423
        %v1425 = vmul.f32 %v1424, %v1285
        %v1426 = vmul.f32 %v1424, %v1286
        %1429 = vrot.lane.b32.xlu0 %v1425, 125
        %v1430 = vpop.permute.xlu0 %1429
        %1431 = vrot.lane.b32.xlu0 %v1426, 125
        %v1432 = vpop.permute.xlu0 %1431
        %v1435 = vadd.f32 %v1379, %v1430
        %v1436 = vadd.f32 %v1380, %v1432
        %s1437 = sld [smem:[#allocation8 + $0x53]]
        %v1438 = vstv %s1437
        %v1439 = vmul.f32 %v1438, %v1285
        %v1440 = vmul.f32 %v1438, %v1286
        %1443 = vrot.lane.b32.xlu0 %v1439, 125
        %v1444 = vpop.permute.xlu0 %1443
        %1445 = vrot.lane.b32.xlu0 %v1440, 125
        %v1446 = vpop.permute.xlu0 %1445
        %v1449 = vadd.f32 %v1393, %v1444
        %v1450 = vadd.f32 %v1394, %v1446
        %s1451 = sld [smem:[#allocation8 + $0x93]]
        %v1452 = vstv %s1451
        %v1453 = vmul.f32 %v1452, %v1285
        %v1454 = vmul.f32 %v1452, %v1286
        %1457 = vrot.lane.b32.xlu0 %v1453, 125
        %v1458 = vpop.permute.xlu0 %1457
        %1459 = vrot.lane.b32.xlu0 %v1454, 125
        %v1460 = vpop.permute.xlu0 %1459
        %v1463 = vadd.f32 %v1407, %v1458
        %v1464 = vadd.f32 %v1408, %v1460
        %s1465 = sld [smem:[#allocation8 + $0xd3]]
        %v1466 = vstv %s1465
        %v1467 = vmul.f32 %v1466, %v1285
        %v1468 = vmul.f32 %v1466, %v1286
        %1471 = vrot.lane.b32.xlu0 %v1467, 125
        %v1472 = vpop.permute.xlu0 %1471
        %1473 = vrot.lane.b32.xlu0 %v1468, 125
        %v1474 = vpop.permute.xlu0 %1473
        %v1477 = vadd.f32 %v1421, %v1472
        %v1478 = vadd.f32 %v1422, %v1474
        %v1479 = vld [vmem:[%s307 + $0x1] sm:$0xff]
        %v1480 = vld [vmem:[%s307 + $0x9] sm:$0xff]
        %s1481 = sld [smem:[#allocation8 + $0x14]]
        %v1482 = vstv %s1481
        %v1483 = vmul.f32 %v1482, %v1479
        %v1484 = vmul.f32 %v1482, %v1480
        %v1485 = vadd.f32 %v1435, %v1483
        %v1486 = vadd.f32 %v1436, %v1484
        %s1487 = sld [smem:[#allocation8 + $0x54]]
        %v1488 = vstv %s1487
        %v1489 = vmul.f32 %v1488, %v1479
        %v1490 = vmul.f32 %v1488, %v1480
        %v1491 = vadd.f32 %v1449, %v1489
        %v1492 = vadd.f32 %v1450, %v1490
        %s1493 = sld [smem:[#allocation8 + $0x94]]
        %v1494 = vstv %s1493
        %v1495 = vmul.f32 %v1494, %v1479
        %v1496 = vmul.f32 %v1494, %v1480
        %v1497 = vadd.f32 %v1463, %v1495
        %v1498 = vadd.f32 %v1464, %v1496
        %s1499 = sld [smem:[#allocation8 + $0xd4]]
        %v1500 = vstv %s1499
        %v1501 = vmul.f32 %v1500, %v1479
        %v1502 = vmul.f32 %v1500, %v1480
        %v1503 = vadd.f32 %v1477, %v1501
        %v1504 = vadd.f32 %v1478, %v1502
        %s1505 = sld [smem:[#allocation8 + $0x15]]
        %v1506 = vstv %s1505
        %v1507 = vmul.f32 %v1506, %v1479
        %v1508 = vmul.f32 %v1506, %v1480
        %1511 = vrot.lane.b32.xlu0 %v1507, 127
        %v1512 = vpop.permute.xlu0 %1511
        %1513 = vrot.lane.b32.xlu0 %v1508, 127
        %v1514 = vpop.permute.xlu0 %1513
        %v1517 = vadd.f32 %v1485, %v1512
        %v1518 = vadd.f32 %v1486, %v1514
        %s1519 = sld [smem:[#allocation8 + $0x55]]
        %v1520 = vstv %s1519
        %v1521 = vmul.f32 %v1520, %v1479
        %v1522 = vmul.f32 %v1520, %v1480
        %1525 = vrot.lane.b32.xlu0 %v1521, 127
        %v1526 = vpop.permute.xlu0 %1525
        %1527 = vrot.lane.b32.xlu0 %v1522, 127
        %v1528 = vpop.permute.xlu0 %1527
        %v1531 = vadd.f32 %v1491, %v1526
        %v1532 = vadd.f32 %v1492, %v1528
        %s1533 = sld [smem:[#allocation8 + $0x95]]
        %v1534 = vstv %s1533
        %v1535 = vmul.f32 %v1534, %v1479
        %v1536 = vmul.f32 %v1534, %v1480
        %1539 = vrot.lane.b32.xlu0 %v1535, 127
        %v1540 = vpop.permute.xlu0 %1539
        %1541 = vrot.lane.b32.xlu0 %v1536, 127
        %v1542 = vpop.permute.xlu0 %1541
        %v1545 = vadd.f32 %v1497, %v1540
        %v1546 = vadd.f32 %v1498, %v1542
        %s1547 = sld [smem:[#allocation8 + $0xd5]]
        %v1548 = vstv %s1547
        %v1549 = vmul.f32 %v1548, %v1479
        %v1550 = vmul.f32 %v1548, %v1480
        %1553 = vrot.lane.b32.xlu0 %v1549, 127
        %v1554 = vpop.permute.xlu0 %1553
        %1555 = vrot.lane.b32.xlu0 %v1550, 127
        %v1556 = vpop.permute.xlu0 %1555
        %v1559 = vadd.f32 %v1503, %v1554
        %v1560 = vadd.f32 %v1504, %v1556
        %s1561 = sld [smem:[#allocation8 + $0x16]]
        %v1562 = vstv %s1561
        %v1563 = vmul.f32 %v1562, %v1479
        %v1564 = vmul.f32 %v1562, %v1480
        %1567 = vrot.lane.b32.xlu0 %v1563, 126
        %v1568 = vpop.permute.xlu0 %1567
        %1569 = vrot.lane.b32.xlu0 %v1564, 126
        %v1570 = vpop.permute.xlu0 %1569
        %v1573 = vadd.f32 %v1517, %v1568
        %v1574 = vadd.f32 %v1518, %v1570
        %s1575 = sld [smem:[#allocation8 + $0x56]]
        %v1576 = vstv %s1575
        %v1577 = vmul.f32 %v1576, %v1479
        %v1578 = vmul.f32 %v1576, %v1480
        %1581 = vrot.lane.b32.xlu0 %v1577, 126
        %v1582 = vpop.permute.xlu0 %1581
        %1583 = vrot.lane.b32.xlu0 %v1578, 126
        %v1584 = vpop.permute.xlu0 %1583
        %v1587 = vadd.f32 %v1531, %v1582
        %v1588 = vadd.f32 %v1532, %v1584
        %s1589 = sld [smem:[#allocation8 + $0x96]]
        %v1590 = vstv %s1589
        %v1591 = vmul.f32 %v1590, %v1479
        %v1592 = vmul.f32 %v1590, %v1480
        %1595 = vrot.lane.b32.xlu0 %v1591, 126
        %v1596 = vpop.permute.xlu0 %1595
        %1597 = vrot.lane.b32.xlu0 %v1592, 126
        %v1598 = vpop.permute.xlu0 %1597
        %v1601 = vadd.f32 %v1545, %v1596
        %v1602 = vadd.f32 %v1546, %v1598
        %s1603 = sld [smem:[#allocation8 + $0xd6]]
        %v1604 = vstv %s1603
        %v1605 = vmul.f32 %v1604, %v1479
        %v1606 = vmul.f32 %v1604, %v1480
        %1609 = vrot.lane.b32.xlu0 %v1605, 126
        %v1610 = vpop.permute.xlu0 %1609
        %1611 = vrot.lane.b32.xlu0 %v1606, 126
        %v1612 = vpop.permute.xlu0 %1611
        %v1615 = vadd.f32 %v1559, %v1610
        %v1616 = vadd.f32 %v1560, %v1612
        %s1617 = sld [smem:[#allocation8 + $0x17]]
        %v1618 = vstv %s1617
        %v1619 = vmul.f32 %v1618, %v1479
        %v1620 = vmul.f32 %v1618, %v1480
        %1623 = vrot.lane.b32.xlu0 %v1619, 125
        %v1624 = vpop.permute.xlu0 %1623
        %1625 = vrot.lane.b32.xlu0 %v1620, 125
        %v1626 = vpop.permute.xlu0 %1625
        %v1629 = vadd.f32 %v1573, %v1624
        %v1630 = vadd.f32 %v1574, %v1626
        %s1631 = sld [smem:[#allocation8 + $0x57]]
        %v1632 = vstv %s1631
        %v1633 = vmul.f32 %v1632, %v1479
        %v1634 = vmul.f32 %v1632, %v1480
        %1637 = vrot.lane.b32.xlu0 %v1633, 125
        %v1638 = vpop.permute.xlu0 %1637
        %1639 = vrot.lane.b32.xlu0 %v1634, 125
        %v1640 = vpop.permute.xlu0 %1639
        %v1643 = vadd.f32 %v1587, %v1638
        %v1644 = vadd.f32 %v1588, %v1640
        %s1645 = sld [smem:[#allocation8 + $0x97]]
        %v1646 = vstv %s1645
        %v1647 = vmul.f32 %v1646, %v1479
        %v1648 = vmul.f32 %v1646, %v1480
        %1651 = vrot.lane.b32.xlu0 %v1647, 125
        %v1652 = vpop.permute.xlu0 %1651
        %1653 = vrot.lane.b32.xlu0 %v1648, 125
        %v1654 = vpop.permute.xlu0 %1653
        %v1657 = vadd.f32 %v1601, %v1652
        %v1658 = vadd.f32 %v1602, %v1654
        %s1659 = sld [smem:[#allocation8 + $0xd7]]
        %v1660 = vstv %s1659
        %v1661 = vmul.f32 %v1660, %v1479
        %v1662 = vmul.f32 %v1660, %v1480
        %1665 = vrot.lane.b32.xlu0 %v1661, 125
        %v1666 = vpop.permute.xlu0 %1665
        %1667 = vrot.lane.b32.xlu0 %v1662, 125
        %v1668 = vpop.permute.xlu0 %1667
        %v1671 = vadd.f32 %v1615, %v1666
        %v1672 = vadd.f32 %v1616, %v1668
        %v1673 = vld [vmem:[%s307 + $0x2] sm:$0xff]
        %v1674 = vld [vmem:[%s307 + $0xa] sm:$0xff]
        %s1675 = sld [smem:[#allocation8 + $0x18]]
        %v1676 = vstv %s1675
        %v1677 = vmul.f32 %v1676, %v1673
        %v1678 = vmul.f32 %v1676, %v1674
        %v1679 = vadd.f32 %v1629, %v1677
        %v1680 = vadd.f32 %v1630, %v1678
        %s1681 = sld [smem:[#allocation8 + $0x58]]
        %v1682 = vstv %s1681
        %v1683 = vmul.f32 %v1682, %v1673
        %v1684 = vmul.f32 %v1682, %v1674
        %v1685 = vadd.f32 %v1643, %v1683
        %v1686 = vadd.f32 %v1644, %v1684
        %s1687 = sld [smem:[#allocation8 + $0x98]]
        %v1688 = vstv %s1687
        %v1689 = vmul.f32 %v1688, %v1673
        %v1690 = vmul.f32 %v1688, %v1674
        %v1691 = vadd.f32 %v1657, %v1689
        %v1692 = vadd.f32 %v1658, %v1690
        %s1693 = sld [smem:[#allocation8 + $0xd8]]
        %v1694 = vstv %s1693
        %v1695 = vmul.f32 %v1694, %v1673
        %v1696 = vmul.f32 %v1694, %v1674
        %v1697 = vadd.f32 %v1671, %v1695
        %v1698 = vadd.f32 %v1672, %v1696
        %s1699 = sld [smem:[#allocation8 + $0x19]]
        %v1700 = vstv %s1699
        %v1701 = vmul.f32 %v1700, %v1673
        %v1702 = vmul.f32 %v1700, %v1674
        %1705 = vrot.lane.b32.xlu0 %v1701, 127
        %v1706 = vpop.permute.xlu0 %1705
        %1707 = vrot.lane.b32.xlu0 %v1702, 127
        %v1708 = vpop.permute.xlu0 %1707
        %v1711 = vadd.f32 %v1679, %v1706
        %v1712 = vadd.f32 %v1680, %v1708
        %s1713 = sld [smem:[#allocation8 + $0x59]]
        %v1714 = vstv %s1713
        %v1715 = vmul.f32 %v1714, %v1673
        %v1716 = vmul.f32 %v1714, %v1674
        %1719 = vrot.lane.b32.xlu0 %v1715, 127
        %v1720 = vpop.permute.xlu0 %1719
        %1721 = vrot.lane.b32.xlu0 %v1716, 127
        %v1722 = vpop.permute.xlu0 %1721
        %v1725 = vadd.f32 %v1685, %v1720
        %v1726 = vadd.f32 %v1686, %v1722
        %s1727 = sld [smem:[#allocation8 + $0x99]]
        %v1728 = vstv %s1727
        %v1729 = vmul.f32 %v1728, %v1673
        %v1730 = vmul.f32 %v1728, %v1674
        %1733 = vrot.lane.b32.xlu0 %v1729, 127
        %v1734 = vpop.permute.xlu0 %1733
        %1735 = vrot.lane.b32.xlu0 %v1730, 127
        %v1736 = vpop.permute.xlu0 %1735
        %v1739 = vadd.f32 %v1691, %v1734
        %v1740 = vadd.f32 %v1692, %v1736
        %s1741 = sld [smem:[#allocation8 + $0xd9]]
        %v1742 = vstv %s1741
        %v1743 = vmul.f32 %v1742, %v1673
        %v1744 = vmul.f32 %v1742, %v1674
        %1747 = vrot.lane.b32.xlu0 %v1743, 127
        %v1748 = vpop.permute.xlu0 %1747
        %1749 = vrot.lane.b32.xlu0 %v1744, 127
        %v1750 = vpop.permute.xlu0 %1749
        %v1753 = vadd.f32 %v1697, %v1748
        %v1754 = vadd.f32 %v1698, %v1750
        %s1755 = sld [smem:[#allocation8 + $0x1a]]
        %v1756 = vstv %s1755
        %v1757 = vmul.f32 %v1756, %v1673
        %v1758 = vmul.f32 %v1756, %v1674
        %1761 = vrot.lane.b32.xlu0 %v1757, 126
        %v1762 = vpop.permute.xlu0 %1761
        %1763 = vrot.lane.b32.xlu0 %v1758, 126
        %v1764 = vpop.permute.xlu0 %1763
        %v1767 = vadd.f32 %v1711, %v1762
        %v1768 = vadd.f32 %v1712, %v1764
        %s1769 = sld [smem:[#allocation8 + $0x5a]]
        %v1770 = vstv %s1769
        %v1771 = vmul.f32 %v1770, %v1673
        %v1772 = vmul.f32 %v1770, %v1674
        %1775 = vrot.lane.b32.xlu0 %v1771, 126
        %v1776 = vpop.permute.xlu0 %1775
        %1777 = vrot.lane.b32.xlu0 %v1772, 126
        %v1778 = vpop.permute.xlu0 %1777
        %v1781 = vadd.f32 %v1725, %v1776
        %v1782 = vadd.f32 %v1726, %v1778
        %s1783 = sld [smem:[#allocation8 + $0x9a]]
        %v1784 = vstv %s1783
        %v1785 = vmul.f32 %v1784, %v1673
        %v1786 = vmul.f32 %v1784, %v1674
        %1789 = vrot.lane.b32.xlu0 %v1785, 126
        %v1790 = vpop.permute.xlu0 %1789
        %1791 = vrot.lane.b32.xlu0 %v1786, 126
        %v1792 = vpop.permute.xlu0 %1791
        %v1795 = vadd.f32 %v1739, %v1790
        %v1796 = vadd.f32 %v1740, %v1792
        %s1797 = sld [smem:[#allocation8 + $0xda]]
        %v1798 = vstv %s1797
        %v1799 = vmul.f32 %v1798, %v1673
        %v1800 = vmul.f32 %v1798, %v1674
        %1803 = vrot.lane.b32.xlu0 %v1799, 126
        %v1804 = vpop.permute.xlu0 %1803
        %1805 = vrot.lane.b32.xlu0 %v1800, 126
        %v1806 = vpop.permute.xlu0 %1805
        %v1809 = vadd.f32 %v1753, %v1804
        %v1810 = vadd.f32 %v1754, %v1806
        %s1811 = sld [smem:[#allocation8 + $0x1b]]
        %v1812 = vstv %s1811
        %v1813 = vmul.f32 %v1812, %v1673
        %v1814 = vmul.f32 %v1812, %v1674
        %1817 = vrot.lane.b32.xlu0 %v1813, 125
        %v1818 = vpop.permute.xlu0 %1817
        %1819 = vrot.lane.b32.xlu0 %v1814, 125
        %v1820 = vpop.permute.xlu0 %1819
        %v1823 = vadd.f32 %v1767, %v1818
        %v1824 = vadd.f32 %v1768, %v1820
        %s1825 = sld [smem:[#allocation8 + $0x5b]]
        %v1826 = vstv %s1825
        %v1827 = vmul.f32 %v1826, %v1673
        %v1828 = vmul.f32 %v1826, %v1674
        %1831 = vrot.lane.b32.xlu0 %v1827, 125
        %v1832 = vpop.permute.xlu0 %1831
        %1833 = vrot.lane.b32.xlu0 %v1828, 125
        %v1834 = vpop.permute.xlu0 %1833
        %v1837 = vadd.f32 %v1781, %v1832
        %v1838 = vadd.f32 %v1782, %v1834
        %s1839 = sld [smem:[#allocation8 + $0x9b]]
        %v1840 = vstv %s1839
        %v1841 = vmul.f32 %v1840, %v1673
        %v1842 = vmul.f32 %v1840, %v1674
        %1845 = vrot.lane.b32.xlu0 %v1841, 125
        %v1846 = vpop.permute.xlu0 %1845
        %1847 = vrot.lane.b32.xlu0 %v1842, 125
        %v1848 = vpop.permute.xlu0 %1847
        %v1851 = vadd.f32 %v1795, %v1846
        %v1852 = vadd.f32 %v1796, %v1848
        %s1853 = sld [smem:[#allocation8 + $0xdb]]
        %v1854 = vstv %s1853
        %v1855 = vmul.f32 %v1854, %v1673
        %v1856 = vmul.f32 %v1854, %v1674
        %1859 = vrot.lane.b32.xlu0 %v1855, 125
        %v1860 = vpop.permute.xlu0 %1859
        %1861 = vrot.lane.b32.xlu0 %v1856, 125
        %v1862 = vpop.permute.xlu0 %1861
        %v1865 = vadd.f32 %v1809, %v1860
        %v1866 = vadd.f32 %v1810, %v1862
        %v1867 = vld [vmem:[%s307 + $0x3] sm:$0xff]
        %v1868 = vld [vmem:[%s307 + $0xb] sm:$0xff]
        %s1869 = sld [smem:[#allocation8 + $0x1c]]
        %v1870 = vstv %s1869
        %v1871 = vmul.f32 %v1870, %v1867
        %v1872 = vmul.f32 %v1870, %v1868
        %v1873 = vadd.f32 %v1823, %v1871
        %v1874 = vadd.f32 %v1824, %v1872
        %s1875 = sld [smem:[#allocation8 + $0x5c]]
        %v1876 = vstv %s1875
        %v1877 = vmul.f32 %v1876, %v1867
        %v1878 = vmul.f32 %v1876, %v1868
        %v1879 = vadd.f32 %v1837, %v1877
        %v1880 = vadd.f32 %v1838, %v1878
        %s1881 = sld [smem:[#allocation8 + $0x9c]]
        %v1882 = vstv %s1881
        %v1883 = vmul.f32 %v1882, %v1867
        %v1884 = vmul.f32 %v1882, %v1868
        %v1885 = vadd.f32 %v1851, %v1883
        %v1886 = vadd.f32 %v1852, %v1884
        %s1887 = sld [smem:[#allocation8 + $0xdc]]
        %v1888 = vstv %s1887
        %v1889 = vmul.f32 %v1888, %v1867
        %v1890 = vmul.f32 %v1888, %v1868
        %v1891 = vadd.f32 %v1865, %v1889
        %v1892 = vadd.f32 %v1866, %v1890
        %s1893 = sld [smem:[#allocation8 + $0x1d]]
        %v1894 = vstv %s1893
        %v1895 = vmul.f32 %v1894, %v1867
        %v1896 = vmul.f32 %v1894, %v1868
        %1899 = vrot.lane.b32.xlu0 %v1895, 127
        %v1900 = vpop.permute.xlu0 %1899
        %1901 = vrot.lane.b32.xlu0 %v1896, 127
        %v1902 = vpop.permute.xlu0 %1901
        %v1905 = vadd.f32 %v1873, %v1900
        %v1906 = vadd.f32 %v1874, %v1902
        %s1907 = sld [smem:[#allocation8 + $0x5d]]
        %v1908 = vstv %s1907
        %v1909 = vmul.f32 %v1908, %v1867
        %v1910 = vmul.f32 %v1908, %v1868
        %1913 = vrot.lane.b32.xlu0 %v1909, 127
        %v1914 = vpop.permute.xlu0 %1913
        %1915 = vrot.lane.b32.xlu0 %v1910, 127
        %v1916 = vpop.permute.xlu0 %1915
        %v1919 = vadd.f32 %v1879, %v1914
        %v1920 = vadd.f32 %v1880, %v1916
        %s1921 = sld [smem:[#allocation8 + $0x9d]]
        %v1922 = vstv %s1921
        %v1923 = vmul.f32 %v1922, %v1867
        %v1924 = vmul.f32 %v1922, %v1868
        %1927 = vrot.lane.b32.xlu0 %v1923, 127
        %v1928 = vpop.permute.xlu0 %1927
        %1929 = vrot.lane.b32.xlu0 %v1924, 127
        %v1930 = vpop.permute.xlu0 %1929
        %v1933 = vadd.f32 %v1885, %v1928
        %v1934 = vadd.f32 %v1886, %v1930
        %s1935 = sld [smem:[#allocation8 + $0xdd]]
        %v1936 = vstv %s1935
        %v1937 = vmul.f32 %v1936, %v1867
        %v1938 = vmul.f32 %v1936, %v1868
        %1941 = vrot.lane.b32.xlu0 %v1937, 127
        %v1942 = vpop.permute.xlu0 %1941
        %1943 = vrot.lane.b32.xlu0 %v1938, 127
        %v1944 = vpop.permute.xlu0 %1943
        %v1947 = vadd.f32 %v1891, %v1942
        %v1948 = vadd.f32 %v1892, %v1944
        %s1949 = sld [smem:[#allocation8 + $0x1e]]
        %v1950 = vstv %s1949
        %v1951 = vmul.f32 %v1950, %v1867
        %v1952 = vmul.f32 %v1950, %v1868
        %1955 = vrot.lane.b32.xlu0 %v1951, 126
        %v1956 = vpop.permute.xlu0 %1955
        %1957 = vrot.lane.b32.xlu0 %v1952, 126
        %v1958 = vpop.permute.xlu0 %1957
        %v1961 = vadd.f32 %v1905, %v1956
        %v1962 = vadd.f32 %v1906, %v1958
        %s1963 = sld [smem:[#allocation8 + $0x5e]]
        %v1964 = vstv %s1963
        %v1965 = vmul.f32 %v1964, %v1867
        %v1966 = vmul.f32 %v1964, %v1868
        %1969 = vrot.lane.b32.xlu0 %v1965, 126
        %v1970 = vpop.permute.xlu0 %1969
        %1971 = vrot.lane.b32.xlu0 %v1966, 126
        %v1972 = vpop.permute.xlu0 %1971
        %v1975 = vadd.f32 %v1919, %v1970
        %v1976 = vadd.f32 %v1920, %v1972
        %s1977 = sld [smem:[#allocation8 + $0x9e]]
        %v1978 = vstv %s1977
        %v1979 = vmul.f32 %v1978, %v1867
        %v1980 = vmul.f32 %v1978, %v1868
        %1983 = vrot.lane.b32.xlu0 %v1979, 126
        %v1984 = vpop.permute.xlu0 %1983
        %1985 = vrot.lane.b32.xlu0 %v1980, 126
        %v1986 = vpop.permute.xlu0 %1985
        %v1989 = vadd.f32 %v1933, %v1984
        %v1990 = vadd.f32 %v1934, %v1986
        %s1991 = sld [smem:[#allocation8 + $0xde]]
        %v1992 = vstv %s1991
        %v1993 = vmul.f32 %v1992, %v1867
        %v1994 = vmul.f32 %v1992, %v1868
        %1997 = vrot.lane.b32.xlu0 %v1993, 126
        %v1998 = vpop.permute.xlu0 %1997
        %1999 = vrot.lane.b32.xlu0 %v1994, 126
        %v2000 = vpop.permute.xlu0 %1999
        %v2003 = vadd.f32 %v1947, %v1998
        %v2004 = vadd.f32 %v1948, %v2000
        %s2005 = sld [smem:[#allocation8 + $0x1f]]
        %v2006 = vstv %s2005
        %v2007 = vmul.f32 %v2006, %v1867
        %v2008 = vmul.f32 %v2006, %v1868
        %2011 = vrot.lane.b32.xlu0 %v2007, 125
        %v2012 = vpop.permute.xlu0 %2011
        %2013 = vrot.lane.b32.xlu0 %v2008, 125
        %v2014 = vpop.permute.xlu0 %2013
        %v2017 = vadd.f32 %v1961, %v2012
        %v2018 = vadd.f32 %v1962, %v2014
        %s2019 = sld [smem:[#allocation8 + $0x5f]]
        %v2020 = vstv %s2019
        %v2021 = vmul.f32 %v2020, %v1867
        %v2022 = vmul.f32 %v2020, %v1868
        %2025 = vrot.lane.b32.xlu0 %v2021, 125
        %v2026 = vpop.permute.xlu0 %2025
        %2027 = vrot.lane.b32.xlu0 %v2022, 125
        %v2028 = vpop.permute.xlu0 %2027
        %v2031 = vadd.f32 %v1975, %v2026
        %v2032 = vadd.f32 %v1976, %v2028
        %s2033 = sld [smem:[#allocation8 + $0x9f]]
        %v2034 = vstv %s2033
        %v2035 = vmul.f32 %v2034, %v1867
        %v2036 = vmul.f32 %v2034, %v1868
        %2039 = vrot.lane.b32.xlu0 %v2035, 125
        %v2040 = vpop.permute.xlu0 %2039
        %2041 = vrot.lane.b32.xlu0 %v2036, 125
        %v2042 = vpop.permute.xlu0 %2041
        %v2045 = vadd.f32 %v1989, %v2040
        %v2046 = vadd.f32 %v1990, %v2042
        %s2047 = sld [smem:[#allocation8 + $0xdf]]
        %v2048 = vstv %s2047
        %v2049 = vmul.f32 %v2048, %v1867
        %v2050 = vmul.f32 %v2048, %v1868
        %2053 = vrot.lane.b32.xlu0 %v2049, 125
        %v2054 = vpop.permute.xlu0 %2053
        %2055 = vrot.lane.b32.xlu0 %v2050, 125
        %v2056 = vpop.permute.xlu0 %2055
        %v2059 = vadd.f32 %v2003, %v2054
        %v2060 = vadd.f32 %v2004, %v2056
        %v2061 = vld [vmem:[%s378] sm:$0xff]
        %v2062 = vld [vmem:[%s378 + $0x8] sm:$0xff]
        %s2063 = sld [smem:[#allocation8 + $0x20]]
        %v2064 = vstv %s2063
        %v2065 = vmul.f32 %v2064, %v2061
        %v2066 = vmul.f32 %v2064, %v2062
        %v2067 = vadd.f32 %v2017, %v2065
        %v2068 = vadd.f32 %v2018, %v2066
        %s2069 = sld [smem:[#allocation8 + $0x60]]
        %v2070 = vstv %s2069
        %v2071 = vmul.f32 %v2070, %v2061
        %v2072 = vmul.f32 %v2070, %v2062
        %v2073 = vadd.f32 %v2031, %v2071
        %v2074 = vadd.f32 %v2032, %v2072
        %s2075 = sld [smem:[#allocation8 + $0xa0]]
        %v2076 = vstv %s2075
        %v2077 = vmul.f32 %v2076, %v2061
        %v2078 = vmul.f32 %v2076, %v2062
        %v2079 = vadd.f32 %v2045, %v2077
        %v2080 = vadd.f32 %v2046, %v2078
        %s2081 = sld [smem:[#allocation8 + $0xe0]]
        %v2082 = vstv %s2081
        %v2083 = vmul.f32 %v2082, %v2061
        %v2084 = vmul.f32 %v2082, %v2062
        %v2085 = vadd.f32 %v2059, %v2083
        %v2086 = vadd.f32 %v2060, %v2084
        %s2087 = sld [smem:[#allocation8 + $0x21]]
        %v2088 = vstv %s2087
        %v2089 = vmul.f32 %v2088, %v2061
        %v2090 = vmul.f32 %v2088, %v2062
        %2093 = vrot.lane.b32.xlu0 %v2089, 127
        %v2094 = vpop.permute.xlu0 %2093
        %2095 = vrot.lane.b32.xlu0 %v2090, 127
        %v2096 = vpop.permute.xlu0 %2095
        %v2099 = vadd.f32 %v2067, %v2094
        %v2100 = vadd.f32 %v2068, %v2096
        %s2101 = sld [smem:[#allocation8 + $0x61]]
        %v2102 = vstv %s2101
        %v2103 = vmul.f32 %v2102, %v2061
        %v2104 = vmul.f32 %v2102, %v2062
        %2107 = vrot.lane.b32.xlu0 %v2103, 127
        %v2108 = vpop.permute.xlu0 %2107
        %2109 = vrot.lane.b32.xlu0 %v2104, 127
        %v2110 = vpop.permute.xlu0 %2109
        %v2113 = vadd.f32 %v2073, %v2108
        %v2114 = vadd.f32 %v2074, %v2110
        %s2115 = sld [smem:[#allocation8 + $0xa1]]
        %v2116 = vstv %s2115
        %v2117 = vmul.f32 %v2116, %v2061
        %v2118 = vmul.f32 %v2116, %v2062
        %2121 = vrot.lane.b32.xlu0 %v2117, 127
        %v2122 = vpop.permute.xlu0 %2121
        %2123 = vrot.lane.b32.xlu0 %v2118, 127
        %v2124 = vpop.permute.xlu0 %2123
        %v2127 = vadd.f32 %v2079, %v2122
        %v2128 = vadd.f32 %v2080, %v2124
        %s2129 = sld [smem:[#allocation8 + $0xe1]]
        %v2130 = vstv %s2129
        %v2131 = vmul.f32 %v2130, %v2061
        %v2132 = vmul.f32 %v2130, %v2062
        %2135 = vrot.lane.b32.xlu0 %v2131, 127
        %v2136 = vpop.permute.xlu0 %2135
        %2137 = vrot.lane.b32.xlu0 %v2132, 127
        %v2138 = vpop.permute.xlu0 %2137
        %v2141 = vadd.f32 %v2085, %v2136
        %v2142 = vadd.f32 %v2086, %v2138
        %s2143 = sld [smem:[#allocation8 + $0x22]]
        %v2144 = vstv %s2143
        %v2145 = vmul.f32 %v2144, %v2061
        %v2146 = vmul.f32 %v2144, %v2062
        %2149 = vrot.lane.b32.xlu0 %v2145, 126
        %v2150 = vpop.permute.xlu0 %2149
        %2151 = vrot.lane.b32.xlu0 %v2146, 126
        %v2152 = vpop.permute.xlu0 %2151
        %v2155 = vadd.f32 %v2099, %v2150
        %v2156 = vadd.f32 %v2100, %v2152
        %s2157 = sld [smem:[#allocation8 + $0x62]]
        %v2158 = vstv %s2157
        %v2159 = vmul.f32 %v2158, %v2061
        %v2160 = vmul.f32 %v2158, %v2062
        %2163 = vrot.lane.b32.xlu0 %v2159, 126
        %v2164 = vpop.permute.xlu0 %2163
        %2165 = vrot.lane.b32.xlu0 %v2160, 126
        %v2166 = vpop.permute.xlu0 %2165
        %v2169 = vadd.f32 %v2113, %v2164
        %v2170 = vadd.f32 %v2114, %v2166
        %s2171 = sld [smem:[#allocation8 + $0xa2]]
        %v2172 = vstv %s2171
        %v2173 = vmul.f32 %v2172, %v2061
        %v2174 = vmul.f32 %v2172, %v2062
        %2177 = vrot.lane.b32.xlu0 %v2173, 126
        %v2178 = vpop.permute.xlu0 %2177
        %2179 = vrot.lane.b32.xlu0 %v2174, 126
        %v2180 = vpop.permute.xlu0 %2179
        %v2183 = vadd.f32 %v2127, %v2178
        %v2184 = vadd.f32 %v2128, %v2180
        %s2185 = sld [smem:[#allocation8 + $0xe2]]
        %v2186 = vstv %s2185
        %v2187 = vmul.f32 %v2186, %v2061
        %v2188 = vmul.f32 %v2186, %v2062
        %2191 = vrot.lane.b32.xlu0 %v2187, 126
        %v2192 = vpop.permute.xlu0 %2191
        %2193 = vrot.lane.b32.xlu0 %v2188, 126
        %v2194 = vpop.permute.xlu0 %2193
        %v2197 = vadd.f32 %v2141, %v2192
        %v2198 = vadd.f32 %v2142, %v2194
        %s2199 = sld [smem:[#allocation8 + $0x23]]
        %v2200 = vstv %s2199
        %v2201 = vmul.f32 %v2200, %v2061
        %v2202 = vmul.f32 %v2200, %v2062
        %2205 = vrot.lane.b32.xlu0 %v2201, 125
        %v2206 = vpop.permute.xlu0 %2205
        %2207 = vrot.lane.b32.xlu0 %v2202, 125
        %v2208 = vpop.permute.xlu0 %2207
        %v2211 = vadd.f32 %v2155, %v2206
        %v2212 = vadd.f32 %v2156, %v2208
        %s2213 = sld [smem:[#allocation8 + $0x63]]
        %v2214 = vstv %s2213
        %v2215 = vmul.f32 %v2214, %v2061
        %v2216 = vmul.f32 %v2214, %v2062
        %2219 = vrot.lane.b32.xlu0 %v2215, 125
        %v2220 = vpop.permute.xlu0 %2219
        %2221 = vrot.lane.b32.xlu0 %v2216, 125
        %v2222 = vpop.permute.xlu0 %2221
        %v2225 = vadd.f32 %v2169, %v2220
        %v2226 = vadd.f32 %v2170, %v2222
        %s2227 = sld [smem:[#allocation8 + $0xa3]]
        %v2228 = vstv %s2227
        %v2229 = vmul.f32 %v2228, %v2061
        %v2230 = vmul.f32 %v2228, %v2062
        %2233 = vrot.lane.b32.xlu0 %v2229, 125
        %v2234 = vpop.permute.xlu0 %2233
        %2235 = vrot.lane.b32.xlu0 %v2230, 125
        %v2236 = vpop.permute.xlu0 %2235
        %v2239 = vadd.f32 %v2183, %v2234
        %v2240 = vadd.f32 %v2184, %v2236
        %s2241 = sld [smem:[#allocation8 + $0xe3]]
        %v2242 = vstv %s2241
        %v2243 = vmul.f32 %v2242, %v2061
        %v2244 = vmul.f32 %v2242, %v2062
        %2247 = vrot.lane.b32.xlu0 %v2243, 125
        %v2248 = vpop.permute.xlu0 %2247
        %2249 = vrot.lane.b32.xlu0 %v2244, 125
        %v2250 = vpop.permute.xlu0 %2249
        %v2253 = vadd.f32 %v2197, %v2248
        %v2254 = vadd.f32 %v2198, %v2250
        %v2255 = vld [vmem:[%s378 + $0x1] sm:$0xff]
        %v2256 = vld [vmem:[%s378 + $0x9] sm:$0xff]
        %s2257 = sld [smem:[#allocation8 + $0x24]]
        %v2258 = vstv %s2257
        %v2259 = vmul.f32 %v2258, %v2255
        %v2260 = vmul.f32 %v2258, %v2256
        %v2261 = vadd.f32 %v2211, %v2259
        %v2262 = vadd.f32 %v2212, %v2260
        %s2263 = sld [smem:[#allocation8 + $0x64]]
        %v2264 = vstv %s2263
        %v2265 = vmul.f32 %v2264, %v2255
        %v2266 = vmul.f32 %v2264, %v2256
        %v2267 = vadd.f32 %v2225, %v2265
        %v2268 = vadd.f32 %v2226, %v2266
        %s2269 = sld [smem:[#allocation8 + $0xa4]]
        %v2270 = vstv %s2269
        %v2271 = vmul.f32 %v2270, %v2255
        %v2272 = vmul.f32 %v2270, %v2256
        %v2273 = vadd.f32 %v2239, %v2271
        %v2274 = vadd.f32 %v2240, %v2272
        %s2275 = sld [smem:[#allocation8 + $0xe4]]
        %v2276 = vstv %s2275
        %v2277 = vmul.f32 %v2276, %v2255
        %v2278 = vmul.f32 %v2276, %v2256
        %v2279 = vadd.f32 %v2253, %v2277
        %v2280 = vadd.f32 %v2254, %v2278
        %s2281 = sld [smem:[#allocation8 + $0x25]]
        %v2282 = vstv %s2281
        %v2283 = vmul.f32 %v2282, %v2255
        %v2284 = vmul.f32 %v2282, %v2256
        %2287 = vrot.lane.b32.xlu0 %v2283, 127
        %v2288 = vpop.permute.xlu0 %2287
        %2289 = vrot.lane.b32.xlu0 %v2284, 127
        %v2290 = vpop.permute.xlu0 %2289
        %v2293 = vadd.f32 %v2261, %v2288
        %v2294 = vadd.f32 %v2262, %v2290
        %s2295 = sld [smem:[#allocation8 + $0x65]]
        %v2296 = vstv %s2295
        %v2297 = vmul.f32 %v2296, %v2255
        %v2298 = vmul.f32 %v2296, %v2256
        %2301 = vrot.lane.b32.xlu0 %v2297, 127
        %v2302 = vpop.permute.xlu0 %2301
        %2303 = vrot.lane.b32.xlu0 %v2298, 127
        %v2304 = vpop.permute.xlu0 %2303
        %v2307 = vadd.f32 %v2267, %v2302
        %v2308 = vadd.f32 %v2268, %v2304
        %s2309 = sld [smem:[#allocation8 + $0xa5]]
        %v2310 = vstv %s2309
        %v2311 = vmul.f32 %v2310, %v2255
        %v2312 = vmul.f32 %v2310, %v2256
        %2315 = vrot.lane.b32.xlu0 %v2311, 127
        %v2316 = vpop.permute.xlu0 %2315
        %2317 = vrot.lane.b32.xlu0 %v2312, 127
        %v2318 = vpop.permute.xlu0 %2317
        %v2321 = vadd.f32 %v2273, %v2316
        %v2322 = vadd.f32 %v2274, %v2318
        %s2323 = sld [smem:[#allocation8 + $0xe5]]
        %v2324 = vstv %s2323
        %v2325 = vmul.f32 %v2324, %v2255
        %v2326 = vmul.f32 %v2324, %v2256
        %2329 = vrot.lane.b32.xlu0 %v2325, 127
        %v2330 = vpop.permute.xlu0 %2329
        %2331 = vrot.lane.b32.xlu0 %v2326, 127
        %v2332 = vpop.permute.xlu0 %2331
        %v2335 = vadd.f32 %v2279, %v2330
        %v2336 = vadd.f32 %v2280, %v2332
        %s2337 = sld [smem:[#allocation8 + $0x26]]
        %v2338 = vstv %s2337
        %v2339 = vmul.f32 %v2338, %v2255
        %v2340 = vmul.f32 %v2338, %v2256
        %2343 = vrot.lane.b32.xlu0 %v2339, 126
        %v2344 = vpop.permute.xlu0 %2343
        %2345 = vrot.lane.b32.xlu0 %v2340, 126
        %v2346 = vpop.permute.xlu0 %2345
        %v2349 = vadd.f32 %v2293, %v2344
        %v2350 = vadd.f32 %v2294, %v2346
        %s2351 = sld [smem:[#allocation8 + $0x66]]
        %v2352 = vstv %s2351
        %v2353 = vmul.f32 %v2352, %v2255
        %v2354 = vmul.f32 %v2352, %v2256
        %2357 = vrot.lane.b32.xlu0 %v2353, 126
        %v2358 = vpop.permute.xlu0 %2357
        %2359 = vrot.lane.b32.xlu0 %v2354, 126
        %v2360 = vpop.permute.xlu0 %2359
        %v2363 = vadd.f32 %v2307, %v2358
        %v2364 = vadd.f32 %v2308, %v2360
        %s2365 = sld [smem:[#allocation8 + $0xa6]]
        %v2366 = vstv %s2365
        %v2367 = vmul.f32 %v2366, %v2255
        %v2368 = vmul.f32 %v2366, %v2256
        %2371 = vrot.lane.b32.xlu0 %v2367, 126
        %v2372 = vpop.permute.xlu0 %2371
        %2373 = vrot.lane.b32.xlu0 %v2368, 126
        %v2374 = vpop.permute.xlu0 %2373
        %v2377 = vadd.f32 %v2321, %v2372
        %v2378 = vadd.f32 %v2322, %v2374
        %s2379 = sld [smem:[#allocation8 + $0xe6]]
        %v2380 = vstv %s2379
        %v2381 = vmul.f32 %v2380, %v2255
        %v2382 = vmul.f32 %v2380, %v2256
        %2385 = vrot.lane.b32.xlu0 %v2381, 126
        %v2386 = vpop.permute.xlu0 %2385
        %2387 = vrot.lane.b32.xlu0 %v2382, 126
        %v2388 = vpop.permute.xlu0 %2387
        %v2391 = vadd.f32 %v2335, %v2386
        %v2392 = vadd.f32 %v2336, %v2388
        %s2393 = sld [smem:[#allocation8 + $0x27]]
        %v2394 = vstv %s2393
        %v2395 = vmul.f32 %v2394, %v2255
        %v2396 = vmul.f32 %v2394, %v2256
        %2399 = vrot.lane.b32.xlu0 %v2395, 125
        %v2400 = vpop.permute.xlu0 %2399
        %2401 = vrot.lane.b32.xlu0 %v2396, 125
        %v2402 = vpop.permute.xlu0 %2401
        %v2405 = vadd.f32 %v2349, %v2400
        %v2406 = vadd.f32 %v2350, %v2402
        %s2407 = sld [smem:[#allocation8 + $0x67]]
        %v2408 = vstv %s2407
        %v2409 = vmul.f32 %v2408, %v2255
        %v2410 = vmul.f32 %v2408, %v2256
        %2413 = vrot.lane.b32.xlu0 %v2409, 125
        %v2414 = vpop.permute.xlu0 %2413
        %2415 = vrot.lane.b32.xlu0 %v2410, 125
        %v2416 = vpop.permute.xlu0 %2415
        %v2419 = vadd.f32 %v2363, %v2414
        %v2420 = vadd.f32 %v2364, %v2416
        %s2421 = sld [smem:[#allocation8 + $0xa7]]
        %v2422 = vstv %s2421
        %v2423 = vmul.f32 %v2422, %v2255
        %v2424 = vmul.f32 %v2422, %v2256
        %2427 = vrot.lane.b32.xlu0 %v2423, 125
        %v2428 = vpop.permute.xlu0 %2427
        %2429 = vrot.lane.b32.xlu0 %v2424, 125
        %v2430 = vpop.permute.xlu0 %2429
        %v2433 = vadd.f32 %v2377, %v2428
        %v2434 = vadd.f32 %v2378, %v2430
        %s2435 = sld [smem:[#allocation8 + $0xe7]]
        %v2436 = vstv %s2435
        %v2437 = vmul.f32 %v2436, %v2255
        %v2438 = vmul.f32 %v2436, %v2256
        %2441 = vrot.lane.b32.xlu0 %v2437, 125
        %v2442 = vpop.permute.xlu0 %2441
        %2443 = vrot.lane.b32.xlu0 %v2438, 125
        %v2444 = vpop.permute.xlu0 %2443
        %v2447 = vadd.f32 %v2391, %v2442
        %v2448 = vadd.f32 %v2392, %v2444
        %v2449 = vld [vmem:[%s378 + $0x2] sm:$0xff]
        %v2450 = vld [vmem:[%s378 + $0xa] sm:$0xff]
        %s2451 = sld [smem:[#allocation8 + $0x28]]
        %v2452 = vstv %s2451
        %v2453 = vmul.f32 %v2452, %v2449
        %v2454 = vmul.f32 %v2452, %v2450
        %v2455 = vadd.f32 %v2405, %v2453
        %v2456 = vadd.f32 %v2406, %v2454
        %s2457 = sld [smem:[#allocation8 + $0x68]]
        %v2458 = vstv %s2457
        %v2459 = vmul.f32 %v2458, %v2449
        %v2460 = vmul.f32 %v2458, %v2450
        %v2461 = vadd.f32 %v2419, %v2459
        %v2462 = vadd.f32 %v2420, %v2460
        %s2463 = sld [smem:[#allocation8 + $0xa8]]
        %v2464 = vstv %s2463
        %v2465 = vmul.f32 %v2464, %v2449
        %v2466 = vmul.f32 %v2464, %v2450
        %v2467 = vadd.f32 %v2433, %v2465
        %v2468 = vadd.f32 %v2434, %v2466
        %s2469 = sld [smem:[#allocation8 + $0xe8]]
        %v2470 = vstv %s2469
        %v2471 = vmul.f32 %v2470, %v2449
        %v2472 = vmul.f32 %v2470, %v2450
        %v2473 = vadd.f32 %v2447, %v2471
        %v2474 = vadd.f32 %v2448, %v2472
        %s2475 = sld [smem:[#allocation8 + $0x29]]
        %v2476 = vstv %s2475
        %v2477 = vmul.f32 %v2476, %v2449
        %v2478 = vmul.f32 %v2476, %v2450
        %2481 = vrot.lane.b32.xlu0 %v2477, 127
        %v2482 = vpop.permute.xlu0 %2481
        %2483 = vrot.lane.b32.xlu0 %v2478, 127
        %v2484 = vpop.permute.xlu0 %2483
        %v2487 = vadd.f32 %v2455, %v2482
        %v2488 = vadd.f32 %v2456, %v2484
        %s2489 = sld [smem:[#allocation8 + $0x69]]
        %v2490 = vstv %s2489
        %v2491 = vmul.f32 %v2490, %v2449
        %v2492 = vmul.f32 %v2490, %v2450
        %2495 = vrot.lane.b32.xlu0 %v2491, 127
        %v2496 = vpop.permute.xlu0 %2495
        %2497 = vrot.lane.b32.xlu0 %v2492, 127
        %v2498 = vpop.permute.xlu0 %2497
        %v2501 = vadd.f32 %v2461, %v2496
        %v2502 = vadd.f32 %v2462, %v2498
        %s2503 = sld [smem:[#allocation8 + $0xa9]]
        %v2504 = vstv %s2503
        %v2505 = vmul.f32 %v2504, %v2449
        %v2506 = vmul.f32 %v2504, %v2450
        %2509 = vrot.lane.b32.xlu0 %v2505, 127
        %v2510 = vpop.permute.xlu0 %2509
        %2511 = vrot.lane.b32.xlu0 %v2506, 127
        %v2512 = vpop.permute.xlu0 %2511
        %v2515 = vadd.f32 %v2467, %v2510
        %v2516 = vadd.f32 %v2468, %v2512
        %s2517 = sld [smem:[#allocation8 + $0xe9]]
        %v2518 = vstv %s2517
        %v2519 = vmul.f32 %v2518, %v2449
        %v2520 = vmul.f32 %v2518, %v2450
        %2523 = vrot.lane.b32.xlu0 %v2519, 127
        %v2524 = vpop.permute.xlu0 %2523
        %2525 = vrot.lane.b32.xlu0 %v2520, 127
        %v2526 = vpop.permute.xlu0 %2525
        %v2529 = vadd.f32 %v2473, %v2524
        %v2530 = vadd.f32 %v2474, %v2526
        %s2531 = sld [smem:[#allocation8 + $0x2a]]
        %v2532 = vstv %s2531
        %v2533 = vmul.f32 %v2532, %v2449
        %v2534 = vmul.f32 %v2532, %v2450
        %2537 = vrot.lane.b32.xlu0 %v2533, 126
        %v2538 = vpop.permute.xlu0 %2537
        %2539 = vrot.lane.b32.xlu0 %v2534, 126
        %v2540 = vpop.permute.xlu0 %2539
        %v2543 = vadd.f32 %v2487, %v2538
        %v2544 = vadd.f32 %v2488, %v2540
        %s2545 = sld [smem:[#allocation8 + $0x6a]]
        %v2546 = vstv %s2545
        %v2547 = vmul.f32 %v2546, %v2449
        %v2548 = vmul.f32 %v2546, %v2450
        %2551 = vrot.lane.b32.xlu0 %v2547, 126
        %v2552 = vpop.permute.xlu0 %2551
        %2553 = vrot.lane.b32.xlu0 %v2548, 126
        %v2554 = vpop.permute.xlu0 %2553
        %v2557 = vadd.f32 %v2501, %v2552
        %v2558 = vadd.f32 %v2502, %v2554
        %s2559 = sld [smem:[#allocation8 + $0xaa]]
        %v2560 = vstv %s2559
        %v2561 = vmul.f32 %v2560, %v2449
        %v2562 = vmul.f32 %v2560, %v2450
        %2565 = vrot.lane.b32.xlu0 %v2561, 126
        %v2566 = vpop.permute.xlu0 %2565
        %2567 = vrot.lane.b32.xlu0 %v2562, 126
        %v2568 = vpop.permute.xlu0 %2567
        %v2571 = vadd.f32 %v2515, %v2566
        %v2572 = vadd.f32 %v2516, %v2568
        %s2573 = sld [smem:[#allocation8 + $0xea]]
        %v2574 = vstv %s2573
        %v2575 = vmul.f32 %v2574, %v2449
        %v2576 = vmul.f32 %v2574, %v2450
        %2579 = vrot.lane.b32.xlu0 %v2575, 126
        %v2580 = vpop.permute.xlu0 %2579
        %2581 = vrot.lane.b32.xlu0 %v2576, 126
        %v2582 = vpop.permute.xlu0 %2581
        %v2585 = vadd.f32 %v2529, %v2580
        %v2586 = vadd.f32 %v2530, %v2582
        %s2587 = sld [smem:[#allocation8 + $0x2b]]
        %v2588 = vstv %s2587
        %v2589 = vmul.f32 %v2588, %v2449
        %v2590 = vmul.f32 %v2588, %v2450
        %2593 = vrot.lane.b32.xlu0 %v2589, 125
        %v2594 = vpop.permute.xlu0 %2593
        %2595 = vrot.lane.b32.xlu0 %v2590, 125
        %v2596 = vpop.permute.xlu0 %2595
        %v2599 = vadd.f32 %v2543, %v2594
        %v2600 = vadd.f32 %v2544, %v2596
        %s2601 = sld [smem:[#allocation8 + $0x6b]]
        %v2602 = vstv %s2601
        %v2603 = vmul.f32 %v2602, %v2449
        %v2604 = vmul.f32 %v2602, %v2450
        %2607 = vrot.lane.b32.xlu0 %v2603, 125
        %v2608 = vpop.permute.xlu0 %2607
        %2609 = vrot.lane.b32.xlu0 %v2604, 125
        %v2610 = vpop.permute.xlu0 %2609
        %v2613 = vadd.f32 %v2557, %v2608
        %v2614 = vadd.f32 %v2558, %v2610
        %s2615 = sld [smem:[#allocation8 + $0xab]]
        %v2616 = vstv %s2615
        %v2617 = vmul.f32 %v2616, %v2449
        %v2618 = vmul.f32 %v2616, %v2450
        %2621 = vrot.lane.b32.xlu0 %v2617, 125
        %v2622 = vpop.permute.xlu0 %2621
        %2623 = vrot.lane.b32.xlu0 %v2618, 125
        %v2624 = vpop.permute.xlu0 %2623
        %v2627 = vadd.f32 %v2571, %v2622
        %v2628 = vadd.f32 %v2572, %v2624
        %s2629 = sld [smem:[#allocation8 + $0xeb]]
        %v2630 = vstv %s2629
        %v2631 = vmul.f32 %v2630, %v2449
        %v2632 = vmul.f32 %v2630, %v2450
        %2635 = vrot.lane.b32.xlu0 %v2631, 125
        %v2636 = vpop.permute.xlu0 %2635
        %2637 = vrot.lane.b32.xlu0 %v2632, 125
        %v2638 = vpop.permute.xlu0 %2637
        %v2641 = vadd.f32 %v2585, %v2636
        %v2642 = vadd.f32 %v2586, %v2638
        %v2643 = vld [vmem:[%s378 + $0x3] sm:$0xff]
        %v2644 = vld [vmem:[%s378 + $0xb] sm:$0xff]
        %s2645 = sld [smem:[#allocation8 + $0x2c]]
        %v2646 = vstv %s2645
        %v2647 = vmul.f32 %v2646, %v2643
        %v2648 = vmul.f32 %v2646, %v2644
        %v2649 = vadd.f32 %v2599, %v2647
        %v2650 = vadd.f32 %v2600, %v2648
        %s2651 = sld [smem:[#allocation8 + $0x6c]]
        %v2652 = vstv %s2651
        %v2653 = vmul.f32 %v2652, %v2643
        %v2654 = vmul.f32 %v2652, %v2644
        %v2655 = vadd.f32 %v2613, %v2653
        %v2656 = vadd.f32 %v2614, %v2654
        %s2657 = sld [smem:[#allocation8 + $0xac]]
        %v2658 = vstv %s2657
        %v2659 = vmul.f32 %v2658, %v2643
        %v2660 = vmul.f32 %v2658, %v2644
        %v2661 = vadd.f32 %v2627, %v2659
        %v2662 = vadd.f32 %v2628, %v2660
        %s2663 = sld [smem:[#allocation8 + $0xec]]
        %v2664 = vstv %s2663
        %v2665 = vmul.f32 %v2664, %v2643
        %v2666 = vmul.f32 %v2664, %v2644
        %v2667 = vadd.f32 %v2641, %v2665
        %v2668 = vadd.f32 %v2642, %v2666
        %s2669 = sld [smem:[#allocation8 + $0x2d]]
        %v2670 = vstv %s2669
        %v2671 = vmul.f32 %v2670, %v2643
        %v2672 = vmul.f32 %v2670, %v2644
        %2675 = vrot.lane.b32.xlu0 %v2671, 127
        %v2676 = vpop.permute.xlu0 %2675
        %2677 = vrot.lane.b32.xlu0 %v2672, 127
        %v2678 = vpop.permute.xlu0 %2677
        %v2681 = vadd.f32 %v2649, %v2676
        %v2682 = vadd.f32 %v2650, %v2678
        %s2683 = sld [smem:[#allocation8 + $0x6d]]
        %v2684 = vstv %s2683
        %v2685 = vmul.f32 %v2684, %v2643
        %v2686 = vmul.f32 %v2684, %v2644
        %2689 = vrot.lane.b32.xlu0 %v2685, 127
        %v2690 = vpop.permute.xlu0 %2689
        %2691 = vrot.lane.b32.xlu0 %v2686, 127
        %v2692 = vpop.permute.xlu0 %2691
        %v2695 = vadd.f32 %v2655, %v2690
        %v2696 = vadd.f32 %v2656, %v2692
        %s2697 = sld [smem:[#allocation8 + $0xad]]
        %v2698 = vstv %s2697
        %v2699 = vmul.f32 %v2698, %v2643
        %v2700 = vmul.f32 %v2698, %v2644
        %2703 = vrot.lane.b32.xlu0 %v2699, 127
        %v2704 = vpop.permute.xlu0 %2703
        %2705 = vrot.lane.b32.xlu0 %v2700, 127
        %v2706 = vpop.permute.xlu0 %2705
        %v2709 = vadd.f32 %v2661, %v2704
        %v2710 = vadd.f32 %v2662, %v2706
        %s2711 = sld [smem:[#allocation8 + $0xed]]
        %v2712 = vstv %s2711
        %v2713 = vmul.f32 %v2712, %v2643
        %v2714 = vmul.f32 %v2712, %v2644
        %2717 = vrot.lane.b32.xlu0 %v2713, 127
        %v2718 = vpop.permute.xlu0 %2717
        %2719 = vrot.lane.b32.xlu0 %v2714, 127
        %v2720 = vpop.permute.xlu0 %2719
        %v2723 = vadd.f32 %v2667, %v2718
        %v2724 = vadd.f32 %v2668, %v2720
        %s2725 = sld [smem:[#allocation8 + $0x2e]]
        %v2726 = vstv %s2725
        %v2727 = vmul.f32 %v2726, %v2643
        %v2728 = vmul.f32 %v2726, %v2644
        %2731 = vrot.lane.b32.xlu0 %v2727, 126
        %v2732 = vpop.permute.xlu0 %2731
        %2733 = vrot.lane.b32.xlu0 %v2728, 126
        %v2734 = vpop.permute.xlu0 %2733
        %v2737 = vadd.f32 %v2681, %v2732
        %v2738 = vadd.f32 %v2682, %v2734
        %s2739 = sld [smem:[#allocation8 + $0x6e]]
        %v2740 = vstv %s2739
        %v2741 = vmul.f32 %v2740, %v2643
        %v2742 = vmul.f32 %v2740, %v2644
        %2745 = vrot.lane.b32.xlu0 %v2741, 126
        %v2746 = vpop.permute.xlu0 %2745
        %2747 = vrot.lane.b32.xlu0 %v2742, 126
        %v2748 = vpop.permute.xlu0 %2747
        %v2751 = vadd.f32 %v2695, %v2746
        %v2752 = vadd.f32 %v2696, %v2748
        %s2753 = sld [smem:[#allocation8 + $0xae]]
        %v2754 = vstv %s2753
        %v2755 = vmul.f32 %v2754, %v2643
        %v2756 = vmul.f32 %v2754, %v2644
        %2759 = vrot.lane.b32.xlu0 %v2755, 126
        %v2760 = vpop.permute.xlu0 %2759
        %2761 = vrot.lane.b32.xlu0 %v2756, 126
        %v2762 = vpop.permute.xlu0 %2761
        %v2765 = vadd.f32 %v2709, %v2760
        %v2766 = vadd.f32 %v2710, %v2762
        %s2767 = sld [smem:[#allocation8 + $0xee]]
        %v2768 = vstv %s2767
        %v2769 = vmul.f32 %v2768, %v2643
        %v2770 = vmul.f32 %v2768, %v2644
        %2773 = vrot.lane.b32.xlu0 %v2769, 126
        %v2774 = vpop.permute.xlu0 %2773
        %2775 = vrot.lane.b32.xlu0 %v2770, 126
        %v2776 = vpop.permute.xlu0 %2775
        %v2779 = vadd.f32 %v2723, %v2774
        %v2780 = vadd.f32 %v2724, %v2776
        %s2781 = sld [smem:[#allocation8 + $0x2f]]
        %v2782 = vstv %s2781
        %v2783 = vmul.f32 %v2782, %v2643
        %v2784 = vmul.f32 %v2782, %v2644
        %2787 = vrot.lane.b32.xlu0 %v2783, 125
        %v2788 = vpop.permute.xlu0 %2787
        %2789 = vrot.lane.b32.xlu0 %v2784, 125
        %v2790 = vpop.permute.xlu0 %2789
        %v2793 = vadd.f32 %v2737, %v2788
        %v2794 = vadd.f32 %v2738, %v2790
        %s2795 = sld [smem:[#allocation8 + $0x6f]]
        %v2796 = vstv %s2795
        %v2797 = vmul.f32 %v2796, %v2643
        %v2798 = vmul.f32 %v2796, %v2644
        %2801 = vrot.lane.b32.xlu0 %v2797, 125
        %v2802 = vpop.permute.xlu0 %2801
        %2803 = vrot.lane.b32.xlu0 %v2798, 125
        %v2804 = vpop.permute.xlu0 %2803
        %v2807 = vadd.f32 %v2751, %v2802
        %v2808 = vadd.f32 %v2752, %v2804
        %s2809 = sld [smem:[#allocation8 + $0xaf]]
        %v2810 = vstv %s2809
        %v2811 = vmul.f32 %v2810, %v2643
        %v2812 = vmul.f32 %v2810, %v2644
        %2815 = vrot.lane.b32.xlu0 %v2811, 125
        %v2816 = vpop.permute.xlu0 %2815
        %2817 = vrot.lane.b32.xlu0 %v2812, 125
        %v2818 = vpop.permute.xlu0 %2817
        %v2821 = vadd.f32 %v2765, %v2816
        %v2822 = vadd.f32 %v2766, %v2818
        %s2823 = sld [smem:[#allocation8 + $0xef]]
        %v2824 = vstv %s2823
        %v2825 = vmul.f32 %v2824, %v2643
        %v2826 = vmul.f32 %v2824, %v2644
        %2829 = vrot.lane.b32.xlu0 %v2825, 125
        %v2830 = vpop.permute.xlu0 %2829
        %2831 = vrot.lane.b32.xlu0 %v2826, 125
        %v2832 = vpop.permute.xlu0 %2831
        %v2835 = vadd.f32 %v2779, %v2830
        %v2836 = vadd.f32 %v2780, %v2832
        %v2837 = vld [vmem:[%s449] sm:$0xff]
        %v2838 = vld [vmem:[%s449 + $0x8] sm:$0xff]
        %s2839 = sld [smem:[#allocation8 + $0x30]]
        %v2840 = vstv %s2839
        %v2841 = vmul.f32 %v2840, %v2837
        %v2842 = vmul.f32 %v2840, %v2838
        %v2843 = vadd.f32 %v2793, %v2841
        %v2844 = vadd.f32 %v2794, %v2842
        %s2845 = sld [smem:[#allocation8 + $0x70]]
        %v2846 = vstv %s2845
        %v2847 = vmul.f32 %v2846, %v2837
        %v2848 = vmul.f32 %v2846, %v2838
        %v2849 = vadd.f32 %v2807, %v2847
        %v2850 = vadd.f32 %v2808, %v2848
        %s2851 = sld [smem:[#allocation8 + $0xb0]]
        %v2852 = vstv %s2851
        %v2853 = vmul.f32 %v2852, %v2837
        %v2854 = vmul.f32 %v2852, %v2838
        %v2855 = vadd.f32 %v2821, %v2853
        %v2856 = vadd.f32 %v2822, %v2854
        %s2857 = sld [smem:[#allocation8 + $0xf0]]
        %v2858 = vstv %s2857
        %v2859 = vmul.f32 %v2858, %v2837
        %v2860 = vmul.f32 %v2858, %v2838
        %v2861 = vadd.f32 %v2835, %v2859
        %v2862 = vadd.f32 %v2836, %v2860
        %s2863 = sld [smem:[#allocation8 + $0x31]]
        %v2864 = vstv %s2863
        %v2865 = vmul.f32 %v2864, %v2837
        %v2866 = vmul.f32 %v2864, %v2838
        %2869 = vrot.lane.b32.xlu0 %v2865, 127
        %v2870 = vpop.permute.xlu0 %2869
        %2871 = vrot.lane.b32.xlu0 %v2866, 127
        %v2872 = vpop.permute.xlu0 %2871
        %v2875 = vadd.f32 %v2843, %v2870
        %v2876 = vadd.f32 %v2844, %v2872
        %s2877 = sld [smem:[#allocation8 + $0x71]]
        %v2878 = vstv %s2877
        %v2879 = vmul.f32 %v2878, %v2837
        %v2880 = vmul.f32 %v2878, %v2838
        %2883 = vrot.lane.b32.xlu0 %v2879, 127
        %v2884 = vpop.permute.xlu0 %2883
        %2885 = vrot.lane.b32.xlu0 %v2880, 127
        %v2886 = vpop.permute.xlu0 %2885
        %v2889 = vadd.f32 %v2849, %v2884
        %v2890 = vadd.f32 %v2850, %v2886
        %s2891 = sld [smem:[#allocation8 + $0xb1]]
        %v2892 = vstv %s2891
        %v2893 = vmul.f32 %v2892, %v2837
        %v2894 = vmul.f32 %v2892, %v2838
        %2897 = vrot.lane.b32.xlu0 %v2893, 127
        %v2898 = vpop.permute.xlu0 %2897
        %2899 = vrot.lane.b32.xlu0 %v2894, 127
        %v2900 = vpop.permute.xlu0 %2899
        %v2903 = vadd.f32 %v2855, %v2898
        %v2904 = vadd.f32 %v2856, %v2900
        %s2905 = sld [smem:[#allocation8 + $0xf1]]
        %v2906 = vstv %s2905
        %v2907 = vmul.f32 %v2906, %v2837
        %v2908 = vmul.f32 %v2906, %v2838
        %2911 = vrot.lane.b32.xlu0 %v2907, 127
        %v2912 = vpop.permute.xlu0 %2911
        %2913 = vrot.lane.b32.xlu0 %v2908, 127
        %v2914 = vpop.permute.xlu0 %2913
        %v2917 = vadd.f32 %v2861, %v2912
        %v2918 = vadd.f32 %v2862, %v2914
        %s2919 = sld [smem:[#allocation8 + $0x32]]
        %v2920 = vstv %s2919
        %v2921 = vmul.f32 %v2920, %v2837
        %v2922 = vmul.f32 %v2920, %v2838
        %2925 = vrot.lane.b32.xlu0 %v2921, 126
        %v2926 = vpop.permute.xlu0 %2925
        %2927 = vrot.lane.b32.xlu0 %v2922, 126
        %v2928 = vpop.permute.xlu0 %2927
        %v2931 = vadd.f32 %v2875, %v2926
        %v2932 = vadd.f32 %v2876, %v2928
        %s2933 = sld [smem:[#allocation8 + $0x72]]
        %v2934 = vstv %s2933
        %v2935 = vmul.f32 %v2934, %v2837
        %v2936 = vmul.f32 %v2934, %v2838
        %2939 = vrot.lane.b32.xlu0 %v2935, 126
        %v2940 = vpop.permute.xlu0 %2939
        %2941 = vrot.lane.b32.xlu0 %v2936, 126
        %v2942 = vpop.permute.xlu0 %2941
        %v2945 = vadd.f32 %v2889, %v2940
        %v2946 = vadd.f32 %v2890, %v2942
        %s2947 = sld [smem:[#allocation8 + $0xb2]]
        %v2948 = vstv %s2947
        %v2949 = vmul.f32 %v2948, %v2837
        %v2950 = vmul.f32 %v2948, %v2838
        %2953 = vrot.lane.b32.xlu0 %v2949, 126
        %v2954 = vpop.permute.xlu0 %2953
        %2955 = vrot.lane.b32.xlu0 %v2950, 126
        %v2956 = vpop.permute.xlu0 %2955
        %v2959 = vadd.f32 %v2903, %v2954
        %v2960 = vadd.f32 %v2904, %v2956
        %s2961 = sld [smem:[#allocation8 + $0xf2]]
        %v2962 = vstv %s2961
        %v2963 = vmul.f32 %v2962, %v2837
        %v2964 = vmul.f32 %v2962, %v2838
        %2967 = vrot.lane.b32.xlu0 %v2963, 126
        %v2968 = vpop.permute.xlu0 %2967
        %2969 = vrot.lane.b32.xlu0 %v2964, 126
        %v2970 = vpop.permute.xlu0 %2969
        %v2973 = vadd.f32 %v2917, %v2968
        %v2974 = vadd.f32 %v2918, %v2970
        %s2975 = sld [smem:[#allocation8 + $0x33]]
        %v2976 = vstv %s2975
        %v2977 = vmul.f32 %v2976, %v2837
        %v2978 = vmul.f32 %v2976, %v2838
        %2981 = vrot.lane.b32.xlu0 %v2977, 125
        %v2982 = vpop.permute.xlu0 %2981
        %2983 = vrot.lane.b32.xlu0 %v2978, 125
        %v2984 = vpop.permute.xlu0 %2983
        %v2987 = vadd.f32 %v2931, %v2982
        %v2988 = vadd.f32 %v2932, %v2984
        %s2989 = sld [smem:[#allocation8 + $0x73]]
        %v2990 = vstv %s2989
        %v2991 = vmul.f32 %v2990, %v2837
        %v2992 = vmul.f32 %v2990, %v2838
        %2995 = vrot.lane.b32.xlu0 %v2991, 125
        %v2996 = vpop.permute.xlu0 %2995
        %2997 = vrot.lane.b32.xlu0 %v2992, 125
        %v2998 = vpop.permute.xlu0 %2997
        %v3001 = vadd.f32 %v2945, %v2996
        %v3002 = vadd.f32 %v2946, %v2998
        %s3003 = sld [smem:[#allocation8 + $0xb3]]
        %v3004 = vstv %s3003
        %v3005 = vmul.f32 %v3004, %v2837
        %v3006 = vmul.f32 %v3004, %v2838
        %3009 = vrot.lane.b32.xlu0 %v3005, 125
        %v3010 = vpop.permute.xlu0 %3009
        %3011 = vrot.lane.b32.xlu0 %v3006, 125
        %v3012 = vpop.permute.xlu0 %3011
        %v3015 = vadd.f32 %v2959, %v3010
        %v3016 = vadd.f32 %v2960, %v3012
        %s3017 = sld [smem:[#allocation8 + $0xf3]]
        %v3018 = vstv %s3017
        %v3019 = vmul.f32 %v3018, %v2837
        %v3020 = vmul.f32 %v3018, %v2838
        %3023 = vrot.lane.b32.xlu0 %v3019, 125
        %v3024 = vpop.permute.xlu0 %3023
        %3025 = vrot.lane.b32.xlu0 %v3020, 125
        %v3026 = vpop.permute.xlu0 %3025
        %v3029 = vadd.f32 %v2973, %v3024
        %v3030 = vadd.f32 %v2974, %v3026
        %v3031 = vld [vmem:[%s449 + $0x1] sm:$0xff]
        %v3032 = vld [vmem:[%s449 + $0x9] sm:$0xff]
        %s3033 = sld [smem:[#allocation8 + $0x34]]
        %v3034 = vstv %s3033
        %v3035 = vmul.f32 %v3034, %v3031
        %v3036 = vmul.f32 %v3034, %v3032
        %v3037 = vadd.f32 %v2987, %v3035
        %v3038 = vadd.f32 %v2988, %v3036
        %s3039 = sld [smem:[#allocation8 + $0x74]]
        %v3040 = vstv %s3039
        %v3041 = vmul.f32 %v3040, %v3031
        %v3042 = vmul.f32 %v3040, %v3032
        %v3043 = vadd.f32 %v3001, %v3041
        %v3044 = vadd.f32 %v3002, %v3042
        %s3045 = sld [smem:[#allocation8 + $0xb4]]
        %v3046 = vstv %s3045
        %v3047 = vmul.f32 %v3046, %v3031
        %v3048 = vmul.f32 %v3046, %v3032
        %v3049 = vadd.f32 %v3015, %v3047
        %v3050 = vadd.f32 %v3016, %v3048
        %s3051 = sld [smem:[#allocation8 + $0xf4]]
        %v3052 = vstv %s3051
        %v3053 = vmul.f32 %v3052, %v3031
        %v3054 = vmul.f32 %v3052, %v3032
        %v3055 = vadd.f32 %v3029, %v3053
        %v3056 = vadd.f32 %v3030, %v3054
        %s3057 = sld [smem:[#allocation8 + $0x35]]
        %v3058 = vstv %s3057
        %v3059 = vmul.f32 %v3058, %v3031
        %v3060 = vmul.f32 %v3058, %v3032
        %3063 = vrot.lane.b32.xlu0 %v3059, 127
        %v3064 = vpop.permute.xlu0 %3063
        %3065 = vrot.lane.b32.xlu0 %v3060, 127
        %v3066 = vpop.permute.xlu0 %3065
        %v3069 = vadd.f32 %v3037, %v3064
        %v3070 = vadd.f32 %v3038, %v3066
        %s3071 = sld [smem:[#allocation8 + $0x75]]
        %v3072 = vstv %s3071
        %v3073 = vmul.f32 %v3072, %v3031
        %v3074 = vmul.f32 %v3072, %v3032
        %3077 = vrot.lane.b32.xlu0 %v3073, 127
        %v3078 = vpop.permute.xlu0 %3077
        %3079 = vrot.lane.b32.xlu0 %v3074, 127
        %v3080 = vpop.permute.xlu0 %3079
        %v3083 = vadd.f32 %v3043, %v3078
        %v3084 = vadd.f32 %v3044, %v3080
        %s3085 = sld [smem:[#allocation8 + $0xb5]]
        %v3086 = vstv %s3085
        %v3087 = vmul.f32 %v3086, %v3031
        %v3088 = vmul.f32 %v3086, %v3032
        %3091 = vrot.lane.b32.xlu0 %v3087, 127
        %v3092 = vpop.permute.xlu0 %3091
        %3093 = vrot.lane.b32.xlu0 %v3088, 127
        %v3094 = vpop.permute.xlu0 %3093
        %v3097 = vadd.f32 %v3049, %v3092
        %v3098 = vadd.f32 %v3050, %v3094
        %s3099 = sld [smem:[#allocation8 + $0xf5]]
        %v3100 = vstv %s3099
        %v3101 = vmul.f32 %v3100, %v3031
        %v3102 = vmul.f32 %v3100, %v3032
        %3105 = vrot.lane.b32.xlu0 %v3101, 127
        %v3106 = vpop.permute.xlu0 %3105
        %3107 = vrot.lane.b32.xlu0 %v3102, 127
        %v3108 = vpop.permute.xlu0 %3107
        %v3111 = vadd.f32 %v3055, %v3106
        %v3112 = vadd.f32 %v3056, %v3108
        %s3113 = sld [smem:[#allocation8 + $0x36]]
        %v3114 = vstv %s3113
        %v3115 = vmul.f32 %v3114, %v3031
        %v3116 = vmul.f32 %v3114, %v3032
        %3119 = vrot.lane.b32.xlu0 %v3115, 126
        %v3120 = vpop.permute.xlu0 %3119
        %3121 = vrot.lane.b32.xlu0 %v3116, 126
        %v3122 = vpop.permute.xlu0 %3121
        %v3125 = vadd.f32 %v3069, %v3120
        %v3126 = vadd.f32 %v3070, %v3122
        %s3127 = sld [smem:[#allocation8 + $0x76]]
        %v3128 = vstv %s3127
        %v3129 = vmul.f32 %v3128, %v3031
        %v3130 = vmul.f32 %v3128, %v3032
        %3133 = vrot.lane.b32.xlu0 %v3129, 126
        %v3134 = vpop.permute.xlu0 %3133
        %3135 = vrot.lane.b32.xlu0 %v3130, 126
        %v3136 = vpop.permute.xlu0 %3135
        %v3139 = vadd.f32 %v3083, %v3134
        %v3140 = vadd.f32 %v3084, %v3136
        %s3141 = sld [smem:[#allocation8 + $0xb6]]
        %v3142 = vstv %s3141
        %v3143 = vmul.f32 %v3142, %v3031
        %v3144 = vmul.f32 %v3142, %v3032
        %3147 = vrot.lane.b32.xlu0 %v3143, 126
        %v3148 = vpop.permute.xlu0 %3147
        %3149 = vrot.lane.b32.xlu0 %v3144, 126
        %v3150 = vpop.permute.xlu0 %3149
        %v3153 = vadd.f32 %v3097, %v3148
        %v3154 = vadd.f32 %v3098, %v3150
        %s3155 = sld [smem:[#allocation8 + $0xf6]]
        %v3156 = vstv %s3155
        %v3157 = vmul.f32 %v3156, %v3031
        %v3158 = vmul.f32 %v3156, %v3032
        %3161 = vrot.lane.b32.xlu0 %v3157, 126
        %v3162 = vpop.permute.xlu0 %3161
        %3163 = vrot.lane.b32.xlu0 %v3158, 126
        %v3164 = vpop.permute.xlu0 %3163
        %v3167 = vadd.f32 %v3111, %v3162
        %v3168 = vadd.f32 %v3112, %v3164
        %s3169 = sld [smem:[#allocation8 + $0x37]]
        %v3170 = vstv %s3169
        %v3171 = vmul.f32 %v3170, %v3031
        %v3172 = vmul.f32 %v3170, %v3032
        %3175 = vrot.lane.b32.xlu0 %v3171, 125
        %v3176 = vpop.permute.xlu0 %3175
        %3177 = vrot.lane.b32.xlu0 %v3172, 125
        %v3178 = vpop.permute.xlu0 %3177
        %v3181 = vadd.f32 %v3125, %v3176
        %v3182 = vadd.f32 %v3126, %v3178
        %s3183 = sld [smem:[#allocation8 + $0x77]]
        %v3184 = vstv %s3183
        %v3185 = vmul.f32 %v3184, %v3031
        %v3186 = vmul.f32 %v3184, %v3032
        %3189 = vrot.lane.b32.xlu0 %v3185, 125
        %v3190 = vpop.permute.xlu0 %3189
        %3191 = vrot.lane.b32.xlu0 %v3186, 125
        %v3192 = vpop.permute.xlu0 %3191
        %v3195 = vadd.f32 %v3139, %v3190
        %v3196 = vadd.f32 %v3140, %v3192
        %s3197 = sld [smem:[#allocation8 + $0xb7]]
        %v3198 = vstv %s3197
        %v3199 = vmul.f32 %v3198, %v3031
        %v3200 = vmul.f32 %v3198, %v3032
        %3203 = vrot.lane.b32.xlu0 %v3199, 125
        %v3204 = vpop.permute.xlu0 %3203
        %3205 = vrot.lane.b32.xlu0 %v3200, 125
        %v3206 = vpop.permute.xlu0 %3205
        %v3209 = vadd.f32 %v3153, %v3204
        %v3210 = vadd.f32 %v3154, %v3206
        %s3211 = sld [smem:[#allocation8 + $0xf7]]
        %v3212 = vstv %s3211
        %v3213 = vmul.f32 %v3212, %v3031
        %v3214 = vmul.f32 %v3212, %v3032
        %3217 = vrot.lane.b32.xlu0 %v3213, 125
        %v3218 = vpop.permute.xlu0 %3217
        %3219 = vrot.lane.b32.xlu0 %v3214, 125
        %v3220 = vpop.permute.xlu0 %3219
        %v3223 = vadd.f32 %v3167, %v3218
        %v3224 = vadd.f32 %v3168, %v3220
        %v3225 = vld [vmem:[%s449 + $0x2] sm:$0xff]
        %v3226 = vld [vmem:[%s449 + $0xa] sm:$0xff]
        %s3227 = sld [smem:[#allocation8 + $0x38]]
        %v3228 = vstv %s3227
        %v3229 = vmul.f32 %v3228, %v3225
        %v3230 = vmul.f32 %v3228, %v3226
        %v3231 = vadd.f32 %v3181, %v3229
        %v3232 = vadd.f32 %v3182, %v3230
        %s3233 = sld [smem:[#allocation8 + $0x78]]
        %v3234 = vstv %s3233
        %v3235 = vmul.f32 %v3234, %v3225
        %v3236 = vmul.f32 %v3234, %v3226
        %v3237 = vadd.f32 %v3195, %v3235
        %v3238 = vadd.f32 %v3196, %v3236
        %s3239 = sld [smem:[#allocation8 + $0xb8]]
        %v3240 = vstv %s3239
        %v3241 = vmul.f32 %v3240, %v3225
        %v3242 = vmul.f32 %v3240, %v3226
        %v3243 = vadd.f32 %v3209, %v3241
        %v3244 = vadd.f32 %v3210, %v3242
        %s3245 = sld [smem:[#allocation8 + $0xf8]]
        %v3246 = vstv %s3245
        %v3247 = vmul.f32 %v3246, %v3225
        %v3248 = vmul.f32 %v3246, %v3226
        %v3249 = vadd.f32 %v3223, %v3247
        %v3250 = vadd.f32 %v3224, %v3248
        %s3251 = sld [smem:[#allocation8 + $0x39]]
        %v3252 = vstv %s3251
        %v3253 = vmul.f32 %v3252, %v3225
        %v3254 = vmul.f32 %v3252, %v3226
        %3257 = vrot.lane.b32.xlu0 %v3253, 127
        %v3258 = vpop.permute.xlu0 %3257
        %3259 = vrot.lane.b32.xlu0 %v3254, 127
        %v3260 = vpop.permute.xlu0 %3259
        %v3263 = vadd.f32 %v3231, %v3258
        %v3264 = vadd.f32 %v3232, %v3260
        %s3265 = sld [smem:[#allocation8 + $0x79]]
        %v3266 = vstv %s3265
        %v3267 = vmul.f32 %v3266, %v3225
        %v3268 = vmul.f32 %v3266, %v3226
        %3271 = vrot.lane.b32.xlu0 %v3267, 127
        %v3272 = vpop.permute.xlu0 %3271
        %3273 = vrot.lane.b32.xlu0 %v3268, 127
        %v3274 = vpop.permute.xlu0 %3273
        %v3277 = vadd.f32 %v3237, %v3272
        %v3278 = vadd.f32 %v3238, %v3274
        %s3279 = sld [smem:[#allocation8 + $0xb9]]
        %v3280 = vstv %s3279
        %v3281 = vmul.f32 %v3280, %v3225
        %v3282 = vmul.f32 %v3280, %v3226
        %3285 = vrot.lane.b32.xlu0 %v3281, 127
        %v3286 = vpop.permute.xlu0 %3285
        %3287 = vrot.lane.b32.xlu0 %v3282, 127
        %v3288 = vpop.permute.xlu0 %3287
        %v3291 = vadd.f32 %v3243, %v3286
        %v3292 = vadd.f32 %v3244, %v3288
        %s3293 = sld [smem:[#allocation8 + $0xf9]]
        %v3294 = vstv %s3293
        %v3295 = vmul.f32 %v3294, %v3225
        %v3296 = vmul.f32 %v3294, %v3226
        %3299 = vrot.lane.b32.xlu0 %v3295, 127
        %v3300 = vpop.permute.xlu0 %3299
        %3301 = vrot.lane.b32.xlu0 %v3296, 127
        %v3302 = vpop.permute.xlu0 %3301
        %v3305 = vadd.f32 %v3249, %v3300
        %v3306 = vadd.f32 %v3250, %v3302
        %s3307 = sld [smem:[#allocation8 + $0x3a]]
        %v3308 = vstv %s3307
        %v3309 = vmul.f32 %v3308, %v3225
        %v3310 = vmul.f32 %v3308, %v3226
        %3313 = vrot.lane.b32.xlu0 %v3309, 126
        %v3314 = vpop.permute.xlu0 %3313
        %3315 = vrot.lane.b32.xlu0 %v3310, 126
        %v3316 = vpop.permute.xlu0 %3315
        %v3319 = vadd.f32 %v3263, %v3314
        %v3320 = vadd.f32 %v3264, %v3316
        %s3321 = sld [smem:[#allocation8 + $0x7a]]
        %v3322 = vstv %s3321
        %v3323 = vmul.f32 %v3322, %v3225
        %v3324 = vmul.f32 %v3322, %v3226
        %3327 = vrot.lane.b32.xlu0 %v3323, 126
        %v3328 = vpop.permute.xlu0 %3327
        %3329 = vrot.lane.b32.xlu0 %v3324, 126
        %v3330 = vpop.permute.xlu0 %3329
        %v3333 = vadd.f32 %v3277, %v3328
        %v3334 = vadd.f32 %v3278, %v3330
        %s3335 = sld [smem:[#allocation8 + $0xba]]
        %v3336 = vstv %s3335
        %v3337 = vmul.f32 %v3336, %v3225
        %v3338 = vmul.f32 %v3336, %v3226
        %3341 = vrot.lane.b32.xlu0 %v3337, 126
        %v3342 = vpop.permute.xlu0 %3341
        %3343 = vrot.lane.b32.xlu0 %v3338, 126
        %v3344 = vpop.permute.xlu0 %3343
        %v3347 = vadd.f32 %v3291, %v3342
        %v3348 = vadd.f32 %v3292, %v3344
        %s3349 = sld [smem:[#allocation8 + $0xfa]]
        %v3350 = vstv %s3349
        %v3351 = vmul.f32 %v3350, %v3225
        %v3352 = vmul.f32 %v3350, %v3226
        %3355 = vrot.lane.b32.xlu0 %v3351, 126
        %v3356 = vpop.permute.xlu0 %3355
        %3357 = vrot.lane.b32.xlu0 %v3352, 126
        %v3358 = vpop.permute.xlu0 %3357
        %v3361 = vadd.f32 %v3305, %v3356
        %v3362 = vadd.f32 %v3306, %v3358
        %s3363 = sld [smem:[#allocation8 + $0x3b]]
        %v3364 = vstv %s3363
        %v3365 = vmul.f32 %v3364, %v3225
        %v3366 = vmul.f32 %v3364, %v3226
        %3369 = vrot.lane.b32.xlu0 %v3365, 125
        %v3370 = vpop.permute.xlu0 %3369
        %3371 = vrot.lane.b32.xlu0 %v3366, 125
        %v3372 = vpop.permute.xlu0 %3371
        %v3375 = vadd.f32 %v3319, %v3370
        %v3376 = vadd.f32 %v3320, %v3372
        %s3377 = sld [smem:[#allocation8 + $0x7b]]
        %v3378 = vstv %s3377
        %v3379 = vmul.f32 %v3378, %v3225
        %v3380 = vmul.f32 %v3378, %v3226
        %3383 = vrot.lane.b32.xlu0 %v3379, 125
        %v3384 = vpop.permute.xlu0 %3383
        %3385 = vrot.lane.b32.xlu0 %v3380, 125
        %v3386 = vpop.permute.xlu0 %3385
        %v3389 = vadd.f32 %v3333, %v3384
        %v3390 = vadd.f32 %v3334, %v3386
        %s3391 = sld [smem:[#allocation8 + $0xbb]]
        %v3392 = vstv %s3391
        %v3393 = vmul.f32 %v3392, %v3225
        %v3394 = vmul.f32 %v3392, %v3226
        %3397 = vrot.lane.b32.xlu0 %v3393, 125
        %v3398 = vpop.permute.xlu0 %3397
        %3399 = vrot.lane.b32.xlu0 %v3394, 125
        %v3400 = vpop.permute.xlu0 %3399
        %v3403 = vadd.f32 %v3347, %v3398
        %v3404 = vadd.f32 %v3348, %v3400
        %s3405 = sld [smem:[#allocation8 + $0xfb]]
        %v3406 = vstv %s3405
        %v3407 = vmul.f32 %v3406, %v3225
        %v3408 = vmul.f32 %v3406, %v3226
        %3411 = vrot.lane.b32.xlu0 %v3407, 125
        %v3412 = vpop.permute.xlu0 %3411
        %3413 = vrot.lane.b32.xlu0 %v3408, 125
        %v3414 = vpop.permute.xlu0 %3413
        %v3417 = vadd.f32 %v3361, %v3412
        %v3418 = vadd.f32 %v3362, %v3414
        %v3419 = vld [vmem:[%s449 + $0x3] sm:$0xff]
        %v3420 = vld [vmem:[%s449 + $0xb] sm:$0xff]
        %s3421 = sld [smem:[#allocation8 + $0x3c]]
        %v3422 = vstv %s3421
        %v3423 = vmul.f32 %v3422, %v3419
        %v3424 = vmul.f32 %v3422, %v3420
        %v3425 = vadd.f32 %v3375, %v3423
        %v3426 = vadd.f32 %v3376, %v3424
        %s3427 = sld [smem:[#allocation8 + $0x7c]]
        %v3428 = vstv %s3427
        %v3429 = vmul.f32 %v3428, %v3419
        %v3430 = vmul.f32 %v3428, %v3420
        %v3431 = vadd.f32 %v3389, %v3429
        %v3432 = vadd.f32 %v3390, %v3430
        %s3433 = sld [smem:[#allocation8 + $0xbc]]
        %v3434 = vstv %s3433
        %v3435 = vmul.f32 %v3434, %v3419
        %v3436 = vmul.f32 %v3434, %v3420
        %v3437 = vadd.f32 %v3403, %v3435
        %v3438 = vadd.f32 %v3404, %v3436
        %s3439 = sld [smem:[#allocation8 + $0xfc]]
        %v3440 = vstv %s3439
        %v3441 = vmul.f32 %v3440, %v3419
        %v3442 = vmul.f32 %v3440, %v3420
        %v3443 = vadd.f32 %v3417, %v3441
        %v3444 = vadd.f32 %v3418, %v3442
        %s3445 = sld [smem:[#allocation8 + $0x3d]]
        %v3446 = vstv %s3445
        %v3447 = vmul.f32 %v3446, %v3419
        %v3448 = vmul.f32 %v3446, %v3420
        %3451 = vrot.lane.b32.xlu0 %v3447, 127
        %v3452 = vpop.permute.xlu0 %3451
        %3453 = vrot.lane.b32.xlu0 %v3448, 127
        %v3454 = vpop.permute.xlu0 %3453
        %v3457 = vadd.f32 %v3425, %v3452
        %v3458 = vadd.f32 %v3426, %v3454
        %s3459 = sld [smem:[#allocation8 + $0x7d]]
        %v3460 = vstv %s3459
        %v3461 = vmul.f32 %v3460, %v3419
        %v3462 = vmul.f32 %v3460, %v3420
        %3465 = vrot.lane.b32.xlu0 %v3461, 127
        %v3466 = vpop.permute.xlu0 %3465
        %3467 = vrot.lane.b32.xlu0 %v3462, 127
        %v3468 = vpop.permute.xlu0 %3467
        %v3471 = vadd.f32 %v3431, %v3466
        %v3472 = vadd.f32 %v3432, %v3468
        %s3473 = sld [smem:[#allocation8 + $0xbd]]
        %v3474 = vstv %s3473
        %v3475 = vmul.f32 %v3474, %v3419
        %v3476 = vmul.f32 %v3474, %v3420
        %3479 = vrot.lane.b32.xlu0 %v3475, 127
        %v3480 = vpop.permute.xlu0 %3479
        %3481 = vrot.lane.b32.xlu0 %v3476, 127
        %v3482 = vpop.permute.xlu0 %3481
        %v3485 = vadd.f32 %v3437, %v3480
        %v3486 = vadd.f32 %v3438, %v3482
        %s3487 = sld [smem:[#allocation8 + $0xfd]]
        %v3488 = vstv %s3487
        %v3489 = vmul.f32 %v3488, %v3419
        %v3490 = vmul.f32 %v3488, %v3420
        %3493 = vrot.lane.b32.xlu0 %v3489, 127
        %v3494 = vpop.permute.xlu0 %3493
        %3495 = vrot.lane.b32.xlu0 %v3490, 127
        %v3496 = vpop.permute.xlu0 %3495
        %v3499 = vadd.f32 %v3443, %v3494
        %v3500 = vadd.f32 %v3444, %v3496
        %s3501 = sld [smem:[#allocation8 + $0x3e]]
        %v3502 = vstv %s3501
        %v3503 = vmul.f32 %v3502, %v3419
        %v3504 = vmul.f32 %v3502, %v3420
        %3507 = vrot.lane.b32.xlu0 %v3503, 126
        %v3508 = vpop.permute.xlu0 %3507
        %3509 = vrot.lane.b32.xlu0 %v3504, 126
        %v3510 = vpop.permute.xlu0 %3509
        %v3513 = vadd.f32 %v3457, %v3508
        %v3514 = vadd.f32 %v3458, %v3510
        %s3515 = sld [smem:[#allocation8 + $0x7e]]
        %v3516 = vstv %s3515
        %v3517 = vmul.f32 %v3516, %v3419
        %v3518 = vmul.f32 %v3516, %v3420
        %3521 = vrot.lane.b32.xlu0 %v3517, 126
        %v3522 = vpop.permute.xlu0 %3521
        %3523 = vrot.lane.b32.xlu0 %v3518, 126
        %v3524 = vpop.permute.xlu0 %3523
        %v3527 = vadd.f32 %v3471, %v3522
        %v3528 = vadd.f32 %v3472, %v3524
        %s3529 = sld [smem:[#allocation8 + $0xbe]]
        %v3530 = vstv %s3529
        %v3531 = vmul.f32 %v3530, %v3419
        %v3532 = vmul.f32 %v3530, %v3420
        %3535 = vrot.lane.b32.xlu0 %v3531, 126
        %v3536 = vpop.permute.xlu0 %3535
        %3537 = vrot.lane.b32.xlu0 %v3532, 126
        %v3538 = vpop.permute.xlu0 %3537
        %v3541 = vadd.f32 %v3485, %v3536
        %v3542 = vadd.f32 %v3486, %v3538
        %s3543 = sld [smem:[#allocation8 + $0xfe]]
        %v3544 = vstv %s3543
        %v3545 = vmul.f32 %v3544, %v3419
        %v3546 = vmul.f32 %v3544, %v3420
        %3549 = vrot.lane.b32.xlu0 %v3545, 126
        %v3550 = vpop.permute.xlu0 %3549
        %3551 = vrot.lane.b32.xlu0 %v3546, 126
        %v3552 = vpop.permute.xlu0 %3551
        %v3555 = vadd.f32 %v3499, %v3550
        %v3556 = vadd.f32 %v3500, %v3552
        %s3557 = sld [smem:[#allocation8 + $0x3f]]
        %v3558 = vstv %s3557
        %v3559 = vmul.f32 %v3558, %v3419
        %v3560 = vmul.f32 %v3558, %v3420
        %3563 = vrot.lane.b32.xlu0 %v3559, 125
        %v3564 = vpop.permute.xlu0 %3563
        %3565 = vrot.lane.b32.xlu0 %v3560, 125
        %v3566 = vpop.permute.xlu0 %3565
        %v3569 = vadd.f32 %v3513, %v3564
        %v3570 = vadd.f32 %v3514, %v3566
        %s3571 = sld [smem:[#allocation8 + $0x7f]]
        %v3572 = vstv %s3571
        %v3573 = vmul.f32 %v3572, %v3419
        %v3574 = vmul.f32 %v3572, %v3420
        %3577 = vrot.lane.b32.xlu0 %v3573, 125
        %v3578 = vpop.permute.xlu0 %3577
        %3579 = vrot.lane.b32.xlu0 %v3574, 125
        %v3580 = vpop.permute.xlu0 %3579
        %v3583 = vadd.f32 %v3527, %v3578
        %v3584 = vadd.f32 %v3528, %v3580
        %s3585 = sld [smem:[#allocation8 + $0xbf]]
        %v3586 = vstv %s3585
        %v3587 = vmul.f32 %v3586, %v3419
        %v3588 = vmul.f32 %v3586, %v3420
        %3591 = vrot.lane.b32.xlu0 %v3587, 125
        %v3592 = vpop.permute.xlu0 %3591
        %3593 = vrot.lane.b32.xlu0 %v3588, 125
        %v3594 = vpop.permute.xlu0 %3593
        %v3597 = vadd.f32 %v3541, %v3592
        %v3598 = vadd.f32 %v3542, %v3594
        %s3599 = sld [smem:[#allocation8 + $0xff]]
        %v3600 = vstv %s3599
        %v3601 = vmul.f32 %v3600, %v3419
        %v3602 = vmul.f32 %v3600, %v3420
        %3605 = vrot.lane.b32.xlu0 %v3601, 125
        %v3606 = vpop.permute.xlu0 %3605
        %3607 = vrot.lane.b32.xlu0 %v3602, 125
        %v3608 = vpop.permute.xlu0 %3607
        %v3611 = vadd.f32 %v3555, %v3606
        %v3612 = vadd.f32 %v3556, %v3608
        %v3613 = vtanh.pop %v3569
        %v3614 = vtanh.pop %v3570
        %v3615 = vtanh.pop %v3583
        %v3616 = vtanh.pop %v3584
        %v3617 = vtanh.pop %v3597
        %v3618 = vtanh.pop %v3598
        %v3619 = vtanh.pop %v3611
        %v3620 = vtanh.pop %v3612
        %s3621 = scalar_lea.vmem %s183, 16 [#allocation3]
        %v3622 = vld [vmem:[%s3621] sm:$0xff]
        %v3623 = vld [vmem:[%s3621 + $0x8] sm:$0xff]
        %v3624 = vsub.f32 %v3622, %v3613
        %v3625 = vsub.f32 %v3623, %v3614
        %s3626 = scalar_lea.vmem %s183, 48 [#allocation3]
        %v3627 = vld [vmem:[%s3626] sm:$0xff]
        %v3628 = vld [vmem:[%s3626 + $0x8] sm:$0xff]
        %v3629 = vsub.f32 %v3627, %v3615
        %v3630 = vsub.f32 %v3628, %v3616
        %s3631 = scalar_lea.vmem %s183, 80 [#allocation3]
        %v3632 = vld [vmem:[%s3631] sm:$0xff]
        %v3633 = vld [vmem:[%s3631 + $0x8] sm:$0xff]
        %v3634 = vsub.f32 %v3632, %v3617
        %v3635 = vsub.f32 %v3633, %v3618
        %s3636 = scalar_lea.vmem %s183, 112 [#allocation3]
        %v3637 = vld [vmem:[%s3636] sm:$0xff]
        %v3638 = vld [vmem:[%s3636 + $0x8] sm:$0xff]
        %v3639 = vsub.f32 %v3637, %v3619
        %v3640 = vsub.f32 %v3638, %v3620
        %3643 = vrot.lane.b32.xlu0 %v3624, 2
        %v3644 = vpop.permute.xlu0 %3643
        %3645 = vrot.lane.b32.xlu0 %v3625, 2
        %v3646 = vpop.permute.xlu0 %3645
        %3649 = vst.msk [vmem:[#allocation2 + $0x2] sm:$0xff] %vm227, %v3644
        %3650 = vst.msk [vmem:[#allocation2 + $0xa] sm:$0xff] %vm227, %v3646
        %3651 = vst.msk [vmem:[#allocation2 - $0x2] sm:$0x4] %vm230, %v3644
        %3652 = vst.msk [vmem:[#allocation2] sm:$0x2] %vm232, %v3644
        %3653 = vst.msk [vmem:[#allocation2 + $0xc] sm:$0x40] %vm234, %v3646
        %v3654 = vld [vmem:[#allocation2] sm:$0xff]
        %v3655 = vld [vmem:[#allocation2 + $0x8] sm:$0xff]
        %v3656 = vld [vmem:[#allocation2 + $0x10] sm:$0x7]
        %3660 = vrot.lane.b32.xlu0 %v3654, 124
        %v3661 = vpop.permute.xlu0 %3660
        %3662 = vrot.lane.b32.xlu0 %v3655, 124
        %v3663 = vpop.permute.xlu0 %3662
        %3664 = vrot.lane.b32.xlu0 %v3656, 124
        %v3665 = vpop.permute.xlu0 %3664
        %3669 = vst.msk [vmem:[#allocation2] sm:$0xff] %vm251, %v3661
        %3670 = vst.msk [vmem:[#allocation2 + $0x8] sm:$0xff] %vm251, %v3663
        %3671 = vst.msk [vmem:[#allocation2 + $0x10] sm:$0x7] %vm254, %v3665
        %v3672 = vld [vmem:[#allocation2] sm:$0xff]
        %v3673 = vld [vmem:[#allocation2 + $0x8] sm:$0xff]
        %v3674 = vld [vmem:[#allocation2 + $0x10] sm:$0x7]
        %3678 = vrot.lane.b32.xlu0 %v3672, 126
        %v3679 = vpop.permute.xlu0 %3678
        %3680 = vrot.lane.b32.xlu0 %v3673, 126
        %v3681 = vpop.permute.xlu0 %3680
        %3682 = vrot.lane.b32.xlu0 %v3674, 126
        %v3683 = vpop.permute.xlu0 %3682
        %3687 = vst.msk [vmem:[#allocation2] sm:$0xff] %vm271, %v3679
        %3688 = vst.msk [vmem:[#allocation2 + $0x8] sm:$0xff] %vm271, %v3681
        %3689 = vst.msk [vmem:[#allocation2 + $0x10] sm:$0x7] %vm274, %v3683
        %v3690 = vld [vmem:[#allocation2] sm:$0xff]
        %v3691 = vld [vmem:[#allocation2 + $0x8] sm:$0xff]
        %v3692 = vld [vmem:[#allocation2 + $0x10] sm:$0x7]
        %3696 = vrot.lane.b32.xlu0 %v3690, 2
        %v3697 = vpop.permute.xlu0 %3696
        %3698 = vrot.lane.b32.xlu0 %v3691, 2
        %v3699 = vpop.permute.xlu0 %3698
        %3700 = vrot.lane.b32.xlu0 %v3692, 2
        %v3701 = vpop.permute.xlu0 %3700
        %3705 = vst.msk [vmem:[#allocation2] sm:$0xff] %vm291, %v3697
        %3706 = vst.msk [vmem:[#allocation2 + $0x8] sm:$0xff] %vm291, %v3699
        %3707 = vst.msk [vmem:[#allocation2 + $0x10] sm:$0x7] %vm294, %v3701
        %3710 = vrot.lane.b32.xlu0 %v3629, 2
        %v3711 = vpop.permute.xlu0 %3710
        %3712 = vrot.lane.b32.xlu0 %v3630, 2
        %v3713 = vpop.permute.xlu0 %3712
        %3716 = vst.msk [vmem:[%s307 + $0x2] sm:$0xff] %vm227, %v3711
        %3717 = vst.msk [vmem:[%s307 + $0xa] sm:$0xff] %vm227, %v3713
        %3718 = vst.msk [vmem:[%s307 - $0x2] sm:$0x4] %vm230, %v3711
        %3719 = vst.msk [vmem:[%s307] sm:$0x2] %vm232, %v3711
        %3720 = vst.msk [vmem:[%s307 + $0xc] sm:$0x40] %vm234, %v3713
        %v3721 = vld [vmem:[%s307] sm:$0xff]
        %v3722 = vld [vmem:[%s307 + $0x8] sm:$0xff]
        %v3723 = vld [vmem:[%s307 + $0x10] sm:$0x7]
        %3727 = vrot.lane.b32.xlu0 %v3721, 124
        %v3728 = vpop.permute.xlu0 %3727
        %3729 = vrot.lane.b32.xlu0 %v3722, 124
        %v3730 = vpop.permute.xlu0 %3729
        %3731 = vrot.lane.b32.xlu0 %v3723, 124
        %v3732 = vpop.permute.xlu0 %3731
        %3736 = vst.msk [vmem:[%s307] sm:$0xff] %vm251, %v3728
        %3737 = vst.msk [vmem:[%s307 + $0x8] sm:$0xff] %vm251, %v3730
        %3738 = vst.msk [vmem:[%s307 + $0x10] sm:$0x7] %vm254, %v3732
        %v3739 = vld [vmem:[%s307] sm:$0xff]
        %v3740 = vld [vmem:[%s307 + $0x8] sm:$0xff]
        %v3741 = vld [vmem:[%s307 + $0x10] sm:$0x7]
        %3745 = vrot.lane.b32.xlu0 %v3739, 126
        %v3746 = vpop.permute.xlu0 %3745
        %3747 = vrot.lane.b32.xlu0 %v3740, 126
        %v3748 = vpop.permute.xlu0 %3747
        %3749 = vrot.lane.b32.xlu0 %v3741, 126
        %v3750 = vpop.permute.xlu0 %3749
        %3754 = vst.msk [vmem:[%s307] sm:$0xff] %vm271, %v3746
        %3755 = vst.msk [vmem:[%s307 + $0x8] sm:$0xff] %vm271, %v3748
        %3756 = vst.msk [vmem:[%s307 + $0x10] sm:$0x7] %vm274, %v3750
        %v3757 = vld [vmem:[%s307] sm:$0xff]
        %v3758 = vld [vmem:[%s307 + $0x8] sm:$0xff]
        %v3759 = vld [vmem:[%s307 + $0x10] sm:$0x7]
        %3763 = vrot.lane.b32.xlu0 %v3757, 2
        %v3764 = vpop.permute.xlu0 %3763
        %3765 = vrot.lane.b32.xlu0 %v3758, 2
        %v3766 = vpop.permute.xlu0 %3765
        %3767 = vrot.lane.b32.xlu0 %v3759, 2
        %v3768 = vpop.permute.xlu0 %3767
        %3772 = vst.msk [vmem:[%s307] sm:$0xff] %vm291, %v3764
        %3773 = vst.msk [vmem:[%s307 + $0x8] sm:$0xff] %vm291, %v3766
        %3774 = vst.msk [vmem:[%s307 + $0x10] sm:$0x7] %vm294, %v3768
        %3777 = vrot.lane.b32.xlu0 %v3634, 2
        %v3778 = vpop.permute.xlu0 %3777
        %3779 = vrot.lane.b32.xlu0 %v3635, 2
        %v3780 = vpop.permute.xlu0 %3779
        %3783 = vst.msk [vmem:[%s378 + $0x2] sm:$0xff] %vm227, %v3778
        %3784 = vst.msk [vmem:[%s378 + $0xa] sm:$0xff] %vm227, %v3780
        %3785 = vst.msk [vmem:[%s378 - $0x2] sm:$0x4] %vm230, %v3778
        %3786 = vst.msk [vmem:[%s378] sm:$0x2] %vm232, %v3778
        %3787 = vst.msk [vmem:[%s378 + $0xc] sm:$0x40] %vm234, %v3780
        %v3788 = vld [vmem:[%s378] sm:$0xff]
        %v3789 = vld [vmem:[%s378 + $0x8] sm:$0xff]
        %v3790 = vld [vmem:[%s378 + $0x10] sm:$0x7]
        %3794 = vrot.lane.b32.xlu0 %v3788, 124
        %v3795 = vpop.permute.xlu0 %3794
        %3796 = vrot.lane.b32.xlu0 %v3789, 124
        %v3797 = vpop.permute.xlu0 %3796
        %3798 = vrot.lane.b32.xlu0 %v3790, 124
        %v3799 = vpop.permute.xlu0 %3798
        %3803 = vst.msk [vmem:[%s378] sm:$0xff] %vm251, %v3795
        %3804 = vst.msk [vmem:[%s378 + $0x8] sm:$0xff] %vm251, %v3797
        %3805 = vst.msk [vmem:[%s378 + $0x10] sm:$0x7] %vm254, %v3799
        %v3806 = vld [vmem:[%s378] sm:$0xff]
        %v3807 = vld [vmem:[%s378 + $0x8] sm:$0xff]
        %v3808 = vld [vmem:[%s378 + $0x10] sm:$0x7]
        %3812 = vrot.lane.b32.xlu0 %v3806, 126
        %v3813 = vpop.permute.xlu0 %3812
        %3814 = vrot.lane.b32.xlu0 %v3807, 126
        %v3815 = vpop.permute.xlu0 %3814
        %3816 = vrot.lane.b32.xlu0 %v3808, 126
        %v3817 = vpop.permute.xlu0 %3816
        %3821 = vst.msk [vmem:[%s378] sm:$0xff] %vm271, %v3813
        %3822 = vst.msk [vmem:[%s378 + $0x8] sm:$0xff] %vm271, %v3815
        %3823 = vst.msk [vmem:[%s378 + $0x10] sm:$0x7] %vm274, %v3817
        %v3824 = vld [vmem:[%s378] sm:$0xff]
        %v3825 = vld [vmem:[%s378 + $0x8] sm:$0xff]
        %v3826 = vld [vmem:[%s378 + $0x10] sm:$0x7]
        %3830 = vrot.lane.b32.xlu0 %v3824, 2
        %v3831 = vpop.permute.xlu0 %3830
        %3832 = vrot.lane.b32.xlu0 %v3825, 2
        %v3833 = vpop.permute.xlu0 %3832
        %3834 = vrot.lane.b32.xlu0 %v3826, 2
        %v3835 = vpop.permute.xlu0 %3834
        %3839 = vst.msk [vmem:[%s378] sm:$0xff] %vm291, %v3831
        %3840 = vst.msk [vmem:[%s378 + $0x8] sm:$0xff] %vm291, %v3833
        %3841 = vst.msk [vmem:[%s378 + $0x10] sm:$0x7] %vm294, %v3835
        %3844 = vrot.lane.b32.xlu0 %v3639, 2
        %v3845 = vpop.permute.xlu0 %3844
        %3846 = vrot.lane.b32.xlu0 %v3640, 2
        %v3847 = vpop.permute.xlu0 %3846
        %3850 = vst.msk [vmem:[%s449 + $0x2] sm:$0xff] %vm227, %v3845
        %3851 = vst.msk [vmem:[%s449 + $0xa] sm:$0xff] %vm227, %v3847
        %3852 = vst.msk [vmem:[%s449 - $0x2] sm:$0x4] %vm230, %v3845
        %3853 = vst.msk [vmem:[%s449] sm:$0x2] %vm232, %v3845
        %3854 = vst.msk [vmem:[%s449 + $0xc] sm:$0x40] %vm234, %v3847
        %v3855 = vld [vmem:[%s449] sm:$0xff]
        %v3856 = vld [vmem:[%s449 + $0x8] sm:$0xff]
        %v3857 = vld [vmem:[%s449 + $0x10] sm:$0x7]
        %3861 = vrot.lane.b32.xlu0 %v3855, 124
        %v3862 = vpop.permute.xlu0 %3861
        %3863 = vrot.lane.b32.xlu0 %v3856, 124
        %v3864 = vpop.permute.xlu0 %3863
        %3865 = vrot.lane.b32.xlu0 %v3857, 124
        %v3866 = vpop.permute.xlu0 %3865
        %3870 = vst.msk [vmem:[%s449] sm:$0xff] %vm251, %v3862
        %3871 = vst.msk [vmem:[%s449 + $0x8] sm:$0xff] %vm251, %v3864
        %3872 = vst.msk [vmem:[%s449 + $0x10] sm:$0x7] %vm254, %v3866
        %v3873 = vld [vmem:[%s449] sm:$0xff]
        %v3874 = vld [vmem:[%s449 + $0x8] sm:$0xff]
        %v3875 = vld [vmem:[%s449 + $0x10] sm:$0x7]
        %3879 = vrot.lane.b32.xlu0 %v3873, 126
        %v3880 = vpop.permute.xlu0 %3879
        %3881 = vrot.lane.b32.xlu0 %v3874, 126
        %v3882 = vpop.permute.xlu0 %3881
        %3883 = vrot.lane.b32.xlu0 %v3875, 126
        %v3884 = vpop.permute.xlu0 %3883
        %3888 = vst.msk [vmem:[%s449] sm:$0xff] %vm271, %v3880
        %3889 = vst.msk [vmem:[%s449 + $0x8] sm:$0xff] %vm271, %v3882
        %3890 = vst.msk [vmem:[%s449 + $0x10] sm:$0x7] %vm274, %v3884
        %v3891 = vld [vmem:[%s449] sm:$0xff]
        %v3892 = vld [vmem:[%s449 + $0x8] sm:$0xff]
        %v3893 = vld [vmem:[%s449 + $0x10] sm:$0x7]
        %3897 = vrot.lane.b32.xlu0 %v3891, 2
        %v3898 = vpop.permute.xlu0 %3897
        %3899 = vrot.lane.b32.xlu0 %v3892, 2
        %v3900 = vpop.permute.xlu0 %3899
        %3901 = vrot.lane.b32.xlu0 %v3893, 2
        %v3902 = vpop.permute.xlu0 %3901
        %3906 = vst.msk [vmem:[%s449] sm:$0xff] %vm291, %v3898
        %3907 = vst.msk [vmem:[%s449 + $0x8] sm:$0xff] %vm291, %v3900
        %3908 = vst.msk [vmem:[%s449 + $0x10] sm:$0x7] %vm294, %v3902
        %v3909 = vld [vmem:[#allocation2] sm:$0xff]
        %v3910 = vld [vmem:[#allocation2 + $0x8] sm:$0xff]
        %s3911 = sld [smem:[#allocation9]]
        %v3912 = vstv %s3911
        %v3913 = vmul.f32 %v3912, %v3909
        %v3914 = vmul.f32 %v3912, %v3910
        %v3915 = vadd.f32 %v3913, 0.0
        %v3916 = vadd.f32 %v3914, 0.0
        %s3917 = sld [smem:[#allocation9 + $0x40]]
        %v3918 = vstv %s3917
        %v3919 = vmul.f32 %v3918, %v3909
        %v3920 = vmul.f32 %v3918, %v3910
        %v3921 = vadd.f32 %v3919, 0.0
        %v3922 = vadd.f32 %v3920, 0.0
        %s3923 = sld [smem:[#allocation9 + $0x80]]
        %v3924 = vstv %s3923
        %v3925 = vmul.f32 %v3924, %v3909
        %v3926 = vmul.f32 %v3924, %v3910
        %v3927 = vadd.f32 %v3925, 0.0
        %v3928 = vadd.f32 %v3926, 0.0
        %s3929 = sld [smem:[#allocation9 + $0xc0]]
        %v3930 = vstv %s3929
        %v3931 = vmul.f32 %v3930, %v3909
        %v3932 = vmul.f32 %v3930, %v3910
        %v3933 = vadd.f32 %v3931, 0.0
        %v3934 = vadd.f32 %v3932, 0.0
        %s3935 = sld [smem:[#allocation9 + $0x1]]
        %v3936 = vstv %s3935
        %v3937 = vmul.f32 %v3936, %v3909
        %v3938 = vmul.f32 %v3936, %v3910
        %3941 = vrot.lane.b32.xlu0 %v3937, 127
        %v3942 = vpop.permute.xlu0 %3941
        %3943 = vrot.lane.b32.xlu0 %v3938, 127
        %v3944 = vpop.permute.xlu0 %3943
        %v3947 = vadd.f32 %v3915, %v3942
        %v3948 = vadd.f32 %v3916, %v3944
        %s3949 = sld [smem:[#allocation9 + $0x41]]
        %v3950 = vstv %s3949
        %v3951 = vmul.f32 %v3950, %v3909
        %v3952 = vmul.f32 %v3950, %v3910
        %3955 = vrot.lane.b32.xlu0 %v3951, 127
        %v3956 = vpop.permute.xlu0 %3955
        %3957 = vrot.lane.b32.xlu0 %v3952, 127
        %v3958 = vpop.permute.xlu0 %3957
        %v3961 = vadd.f32 %v3921, %v3956
        %v3962 = vadd.f32 %v3922, %v3958
        %s3963 = sld [smem:[#allocation9 + $0x81]]
        %v3964 = vstv %s3963
        %v3965 = vmul.f32 %v3964, %v3909
        %v3966 = vmul.f32 %v3964, %v3910
        %3969 = vrot.lane.b32.xlu0 %v3965, 127
        %v3970 = vpop.permute.xlu0 %3969
        %3971 = vrot.lane.b32.xlu0 %v3966, 127
        %v3972 = vpop.permute.xlu0 %3971
        %v3975 = vadd.f32 %v3927, %v3970
        %v3976 = vadd.f32 %v3928, %v3972
        %s3977 = sld [smem:[#allocation9 + $0xc1]]
        %v3978 = vstv %s3977
        %v3979 = vmul.f32 %v3978, %v3909
        %v3980 = vmul.f32 %v3978, %v3910
        %3983 = vrot.lane.b32.xlu0 %v3979, 127
        %v3984 = vpop.permute.xlu0 %3983
        %3985 = vrot.lane.b32.xlu0 %v3980, 127
        %v3986 = vpop.permute.xlu0 %3985
        %v3989 = vadd.f32 %v3933, %v3984
        %v3990 = vadd.f32 %v3934, %v3986
        %s3991 = sld [smem:[#allocation9 + $0x2]]
        %v3992 = vstv %s3991
        %v3993 = vmul.f32 %v3992, %v3909
        %v3994 = vmul.f32 %v3992, %v3910
        %3997 = vrot.lane.b32.xlu0 %v3993, 126
        %v3998 = vpop.permute.xlu0 %3997
        %3999 = vrot.lane.b32.xlu0 %v3994, 126
        %v4000 = vpop.permute.xlu0 %3999
        %v4003 = vadd.f32 %v3947, %v3998
        %v4004 = vadd.f32 %v3948, %v4000
        %s4005 = sld [smem:[#allocation9 + $0x42]]
        %v4006 = vstv %s4005
        %v4007 = vmul.f32 %v4006, %v3909
        %v4008 = vmul.f32 %v4006, %v3910
        %4011 = vrot.lane.b32.xlu0 %v4007, 126
        %v4012 = vpop.permute.xlu0 %4011
        %4013 = vrot.lane.b32.xlu0 %v4008, 126
        %v4014 = vpop.permute.xlu0 %4013
        %v4017 = vadd.f32 %v3961, %v4012
        %v4018 = vadd.f32 %v3962, %v4014
        %s4019 = sld [smem:[#allocation9 + $0x82]]
        %v4020 = vstv %s4019
        %v4021 = vmul.f32 %v4020, %v3909
        %v4022 = vmul.f32 %v4020, %v3910
        %4025 = vrot.lane.b32.xlu0 %v4021, 126
        %v4026 = vpop.permute.xlu0 %4025
        %4027 = vrot.lane.b32.xlu0 %v4022, 126
        %v4028 = vpop.permute.xlu0 %4027
        %v4031 = vadd.f32 %v3975, %v4026
        %v4032 = vadd.f32 %v3976, %v4028
        %s4033 = sld [smem:[#allocation9 + $0xc2]]
        %v4034 = vstv %s4033
        %v4035 = vmul.f32 %v4034, %v3909
        %v4036 = vmul.f32 %v4034, %v3910
        %4039 = vrot.lane.b32.xlu0 %v4035, 126
        %v4040 = vpop.permute.xlu0 %4039
        %4041 = vrot.lane.b32.xlu0 %v4036, 126
        %v4042 = vpop.permute.xlu0 %4041
        %v4045 = vadd.f32 %v3989, %v4040
        %v4046 = vadd.f32 %v3990, %v4042
        %s4047 = sld [smem:[#allocation9 + $0x3]]
        %v4048 = vstv %s4047
        %v4049 = vmul.f32 %v4048, %v3909
        %v4050 = vmul.f32 %v4048, %v3910
        %4053 = vrot.lane.b32.xlu0 %v4049, 125
        %v4054 = vpop.permute.xlu0 %4053
        %4055 = vrot.lane.b32.xlu0 %v4050, 125
        %v4056 = vpop.permute.xlu0 %4055
        %v4059 = vadd.f32 %v4003, %v4054
        %v4060 = vadd.f32 %v4004, %v4056
        %s4061 = sld [smem:[#allocation9 + $0x43]]
        %v4062 = vstv %s4061
        %v4063 = vmul.f32 %v4062, %v3909
        %v4064 = vmul.f32 %v4062, %v3910
        %4067 = vrot.lane.b32.xlu0 %v4063, 125
        %v4068 = vpop.permute.xlu0 %4067
        %4069 = vrot.lane.b32.xlu0 %v4064, 125
        %v4070 = vpop.permute.xlu0 %4069
        %v4073 = vadd.f32 %v4017, %v4068
        %v4074 = vadd.f32 %v4018, %v4070
        %s4075 = sld [smem:[#allocation9 + $0x83]]
        %v4076 = vstv %s4075
        %v4077 = vmul.f32 %v4076, %v3909
        %v4078 = vmul.f32 %v4076, %v3910
        %4081 = vrot.lane.b32.xlu0 %v4077, 125
        %v4082 = vpop.permute.xlu0 %4081
        %4083 = vrot.lane.b32.xlu0 %v4078, 125
        %v4084 = vpop.permute.xlu0 %4083
        %v4087 = vadd.f32 %v4031, %v4082
        %v4088 = vadd.f32 %v4032, %v4084
        %s4089 = sld [smem:[#allocation9 + $0xc3]]
        %v4090 = vstv %s4089
        %v4091 = vmul.f32 %v4090, %v3909
        %v4092 = vmul.f32 %v4090, %v3910
        %4095 = vrot.lane.b32.xlu0 %v4091, 125
        %v4096 = vpop.permute.xlu0 %4095
        %4097 = vrot.lane.b32.xlu0 %v4092, 125
        %v4098 = vpop.permute.xlu0 %4097
        %v4101 = vadd.f32 %v4045, %v4096
        %v4102 = vadd.f32 %v4046, %v4098
        %v4103 = vld [vmem:[#allocation2 + $0x1] sm:$0xff]
        %v4104 = vld [vmem:[#allocation2 + $0x9] sm:$0xff]
        %s4105 = sld [smem:[#allocation9 + $0x4]]
        %v4106 = vstv %s4105
        %v4107 = vmul.f32 %v4106, %v4103
        %v4108 = vmul.f32 %v4106, %v4104
        %v4109 = vadd.f32 %v4059, %v4107
        %v4110 = vadd.f32 %v4060, %v4108
        %s4111 = sld [smem:[#allocation9 + $0x44]]
        %v4112 = vstv %s4111
        %v4113 = vmul.f32 %v4112, %v4103
        %v4114 = vmul.f32 %v4112, %v4104
        %v4115 = vadd.f32 %v4073, %v4113
        %v4116 = vadd.f32 %v4074, %v4114
        %s4117 = sld [smem:[#allocation9 + $0x84]]
        %v4118 = vstv %s4117
        %v4119 = vmul.f32 %v4118, %v4103
        %v4120 = vmul.f32 %v4118, %v4104
        %v4121 = vadd.f32 %v4087, %v4119
        %v4122 = vadd.f32 %v4088, %v4120
        %s4123 = sld [smem:[#allocation9 + $0xc4]]
        %v4124 = vstv %s4123
        %v4125 = vmul.f32 %v4124, %v4103
        %v4126 = vmul.f32 %v4124, %v4104
        %v4127 = vadd.f32 %v4101, %v4125
        %v4128 = vadd.f32 %v4102, %v4126
        %s4129 = sld [smem:[#allocation9 + $0x5]]
        %v4130 = vstv %s4129
        %v4131 = vmul.f32 %v4130, %v4103
        %v4132 = vmul.f32 %v4130, %v4104
        %4135 = vrot.lane.b32.xlu0 %v4131, 127
        %v4136 = vpop.permute.xlu0 %4135
        %4137 = vrot.lane.b32.xlu0 %v4132, 127
        %v4138 = vpop.permute.xlu0 %4137
        %v4141 = vadd.f32 %v4109, %v4136
        %v4142 = vadd.f32 %v4110, %v4138
        %s4143 = sld [smem:[#allocation9 + $0x45]]
        %v4144 = vstv %s4143
        %v4145 = vmul.f32 %v4144, %v4103
        %v4146 = vmul.f32 %v4144, %v4104
        %4149 = vrot.lane.b32.xlu0 %v4145, 127
        %v4150 = vpop.permute.xlu0 %4149
        %4151 = vrot.lane.b32.xlu0 %v4146, 127
        %v4152 = vpop.permute.xlu0 %4151
        %v4155 = vadd.f32 %v4115, %v4150
        %v4156 = vadd.f32 %v4116, %v4152
        %s4157 = sld [smem:[#allocation9 + $0x85]]
        %v4158 = vstv %s4157
        %v4159 = vmul.f32 %v4158, %v4103
        %v4160 = vmul.f32 %v4158, %v4104
        %4163 = vrot.lane.b32.xlu0 %v4159, 127
        %v4164 = vpop.permute.xlu0 %4163
        %4165 = vrot.lane.b32.xlu0 %v4160, 127
        %v4166 = vpop.permute.xlu0 %4165
        %v4169 = vadd.f32 %v4121, %v4164
        %v4170 = vadd.f32 %v4122, %v4166
        %s4171 = sld [smem:[#allocation9 + $0xc5]]
        %v4172 = vstv %s4171
        %v4173 = vmul.f32 %v4172, %v4103
        %v4174 = vmul.f32 %v4172, %v4104
        %4177 = vrot.lane.b32.xlu0 %v4173, 127
        %v4178 = vpop.permute.xlu0 %4177
        %4179 = vrot.lane.b32.xlu0 %v4174, 127
        %v4180 = vpop.permute.xlu0 %4179
        %v4183 = vadd.f32 %v4127, %v4178
        %v4184 = vadd.f32 %v4128, %v4180
        %s4185 = sld [smem:[#allocation9 + $0x6]]
        %v4186 = vstv %s4185
        %v4187 = vmul.f32 %v4186, %v4103
        %v4188 = vmul.f32 %v4186, %v4104
        %4191 = vrot.lane.b32.xlu0 %v4187, 126
        %v4192 = vpop.permute.xlu0 %4191
        %4193 = vrot.lane.b32.xlu0 %v4188, 126
        %v4194 = vpop.permute.xlu0 %4193
        %v4197 = vadd.f32 %v4141, %v4192
        %v4198 = vadd.f32 %v4142, %v4194
        %s4199 = sld [smem:[#allocation9 + $0x46]]
        %v4200 = vstv %s4199
        %v4201 = vmul.f32 %v4200, %v4103
        %v4202 = vmul.f32 %v4200, %v4104
        %4205 = vrot.lane.b32.xlu0 %v4201, 126
        %v4206 = vpop.permute.xlu0 %4205
        %4207 = vrot.lane.b32.xlu0 %v4202, 126
        %v4208 = vpop.permute.xlu0 %4207
        %v4211 = vadd.f32 %v4155, %v4206
        %v4212 = vadd.f32 %v4156, %v4208
        %s4213 = sld [smem:[#allocation9 + $0x86]]
        %v4214 = vstv %s4213
        %v4215 = vmul.f32 %v4214, %v4103
        %v4216 = vmul.f32 %v4214, %v4104
        %4219 = vrot.lane.b32.xlu0 %v4215, 126
        %v4220 = vpop.permute.xlu0 %4219
        %4221 = vrot.lane.b32.xlu0 %v4216, 126
        %v4222 = vpop.permute.xlu0 %4221
        %v4225 = vadd.f32 %v4169, %v4220
        %v4226 = vadd.f32 %v4170, %v4222
        %s4227 = sld [smem:[#allocation9 + $0xc6]]
        %v4228 = vstv %s4227
        %v4229 = vmul.f32 %v4228, %v4103
        %v4230 = vmul.f32 %v4228, %v4104
        %4233 = vrot.lane.b32.xlu0 %v4229, 126
        %v4234 = vpop.permute.xlu0 %4233
        %4235 = vrot.lane.b32.xlu0 %v4230, 126
        %v4236 = vpop.permute.xlu0 %4235
        %v4239 = vadd.f32 %v4183, %v4234
        %v4240 = vadd.f32 %v4184, %v4236
        %s4241 = sld [smem:[#allocation9 + $0x7]]
        %v4242 = vstv %s4241
        %v4243 = vmul.f32 %v4242, %v4103
        %v4244 = vmul.f32 %v4242, %v4104
        %4247 = vrot.lane.b32.xlu0 %v4243, 125
        %v4248 = vpop.permute.xlu0 %4247
        %4249 = vrot.lane.b32.xlu0 %v4244, 125
        %v4250 = vpop.permute.xlu0 %4249
        %v4253 = vadd.f32 %v4197, %v4248
        %v4254 = vadd.f32 %v4198, %v4250
        %s4255 = sld [smem:[#allocation9 + $0x47]]
        %v4256 = vstv %s4255
        %v4257 = vmul.f32 %v4256, %v4103
        %v4258 = vmul.f32 %v4256, %v4104
        %4261 = vrot.lane.b32.xlu0 %v4257, 125
        %v4262 = vpop.permute.xlu0 %4261
        %4263 = vrot.lane.b32.xlu0 %v4258, 125
        %v4264 = vpop.permute.xlu0 %4263
        %v4267 = vadd.f32 %v4211, %v4262
        %v4268 = vadd.f32 %v4212, %v4264
        %s4269 = sld [smem:[#allocation9 + $0x87]]
        %v4270 = vstv %s4269
        %v4271 = vmul.f32 %v4270, %v4103
        %v4272 = vmul.f32 %v4270, %v4104
        %4275 = vrot.lane.b32.xlu0 %v4271, 125
        %v4276 = vpop.permute.xlu0 %4275
        %4277 = vrot.lane.b32.xlu0 %v4272, 125
        %v4278 = vpop.permute.xlu0 %4277
        %v4281 = vadd.f32 %v4225, %v4276
        %v4282 = vadd.f32 %v4226, %v4278
        %s4283 = sld [smem:[#allocation9 + $0xc7]]
        %v4284 = vstv %s4283
        %v4285 = vmul.f32 %v4284, %v4103
        %v4286 = vmul.f32 %v4284, %v4104
        %4289 = vrot.lane.b32.xlu0 %v4285, 125
        %v4290 = vpop.permute.xlu0 %4289
        %4291 = vrot.lane.b32.xlu0 %v4286, 125
        %v4292 = vpop.permute.xlu0 %4291
        %v4295 = vadd.f32 %v4239, %v4290
        %v4296 = vadd.f32 %v4240, %v4292
        %v4297 = vld [vmem:[#allocation2 + $0x2] sm:$0xff]
        %v4298 = vld [vmem:[#allocation2 + $0xa] sm:$0xff]
        %s4299 = sld [smem:[#allocation9 + $0x8]]
        %v4300 = vstv %s4299
        %v4301 = vmul.f32 %v4300, %v4297
        %v4302 = vmul.f32 %v4300, %v4298
        %v4303 = vadd.f32 %v4253, %v4301
        %v4304 = vadd.f32 %v4254, %v4302
        %s4305 = sld [smem:[#allocation9 + $0x48]]
        %v4306 = vstv %s4305
        %v4307 = vmul.f32 %v4306, %v4297
        %v4308 = vmul.f32 %v4306, %v4298
        %v4309 = vadd.f32 %v4267, %v4307
        %v4310 = vadd.f32 %v4268, %v4308
        %s4311 = sld [smem:[#allocation9 + $0x88]]
        %v4312 = vstv %s4311
        %v4313 = vmul.f32 %v4312, %v4297
        %v4314 = vmul.f32 %v4312, %v4298
        %v4315 = vadd.f32 %v4281, %v4313
        %v4316 = vadd.f32 %v4282, %v4314
        %s4317 = sld [smem:[#allocation9 + $0xc8]]
        %v4318 = vstv %s4317
        %v4319 = vmul.f32 %v4318, %v4297
        %v4320 = vmul.f32 %v4318, %v4298
        %v4321 = vadd.f32 %v4295, %v4319
        %v4322 = vadd.f32 %v4296, %v4320
        %s4323 = sld [smem:[#allocation9 + $0x9]]
        %v4324 = vstv %s4323
        %v4325 = vmul.f32 %v4324, %v4297
        %v4326 = vmul.f32 %v4324, %v4298
        %4329 = vrot.lane.b32.xlu0 %v4325, 127
        %v4330 = vpop.permute.xlu0 %4329
        %4331 = vrot.lane.b32.xlu0 %v4326, 127
        %v4332 = vpop.permute.xlu0 %4331
        %v4335 = vadd.f32 %v4303, %v4330
        %v4336 = vadd.f32 %v4304, %v4332
        %s4337 = sld [smem:[#allocation9 + $0x49]]
        %v4338 = vstv %s4337
        %v4339 = vmul.f32 %v4338, %v4297
        %v4340 = vmul.f32 %v4338, %v4298
        %4343 = vrot.lane.b32.xlu0 %v4339, 127
        %v4344 = vpop.permute.xlu0 %4343
        %4345 = vrot.lane.b32.xlu0 %v4340, 127
        %v4346 = vpop.permute.xlu0 %4345
        %v4349 = vadd.f32 %v4309, %v4344
        %v4350 = vadd.f32 %v4310, %v4346
        %s4351 = sld [smem:[#allocation9 + $0x89]]
        %v4352 = vstv %s4351
        %v4353 = vmul.f32 %v4352, %v4297
        %v4354 = vmul.f32 %v4352, %v4298
        %4357 = vrot.lane.b32.xlu0 %v4353, 127
        %v4358 = vpop.permute.xlu0 %4357
        %4359 = vrot.lane.b32.xlu0 %v4354, 127
        %v4360 = vpop.permute.xlu0 %4359
        %v4363 = vadd.f32 %v4315, %v4358
        %v4364 = vadd.f32 %v4316, %v4360
        %s4365 = sld [smem:[#allocation9 + $0xc9]]
        %v4366 = vstv %s4365
        %v4367 = vmul.f32 %v4366, %v4297
        %v4368 = vmul.f32 %v4366, %v4298
        %4371 = vrot.lane.b32.xlu0 %v4367, 127
        %v4372 = vpop.permute.xlu0 %4371
        %4373 = vrot.lane.b32.xlu0 %v4368, 127
        %v4374 = vpop.permute.xlu0 %4373
        %v4377 = vadd.f32 %v4321, %v4372
        %v4378 = vadd.f32 %v4322, %v4374
        %s4379 = sld [smem:[#allocation9 + $0xa]]
        %v4380 = vstv %s4379
        %v4381 = vmul.f32 %v4380, %v4297
        %v4382 = vmul.f32 %v4380, %v4298
        %4385 = vrot.lane.b32.xlu0 %v4381, 126
        %v4386 = vpop.permute.xlu0 %4385
        %4387 = vrot.lane.b32.xlu0 %v4382, 126
        %v4388 = vpop.permute.xlu0 %4387
        %v4391 = vadd.f32 %v4335, %v4386
        %v4392 = vadd.f32 %v4336, %v4388
        %s4393 = sld [smem:[#allocation9 + $0x4a]]
        %v4394 = vstv %s4393
        %v4395 = vmul.f32 %v4394, %v4297
        %v4396 = vmul.f32 %v4394, %v4298
        %4399 = vrot.lane.b32.xlu0 %v4395, 126
        %v4400 = vpop.permute.xlu0 %4399
        %4401 = vrot.lane.b32.xlu0 %v4396, 126
        %v4402 = vpop.permute.xlu0 %4401
        %v4405 = vadd.f32 %v4349, %v4400
        %v4406 = vadd.f32 %v4350, %v4402
        %s4407 = sld [smem:[#allocation9 + $0x8a]]
        %v4408 = vstv %s4407
        %v4409 = vmul.f32 %v4408, %v4297
        %v4410 = vmul.f32 %v4408, %v4298
        %4413 = vrot.lane.b32.xlu0 %v4409, 126
        %v4414 = vpop.permute.xlu0 %4413
        %4415 = vrot.lane.b32.xlu0 %v4410, 126
        %v4416 = vpop.permute.xlu0 %4415
        %v4419 = vadd.f32 %v4363, %v4414
        %v4420 = vadd.f32 %v4364, %v4416
        %s4421 = sld [smem:[#allocation9 + $0xca]]
        %v4422 = vstv %s4421
        %v4423 = vmul.f32 %v4422, %v4297
        %v4424 = vmul.f32 %v4422, %v4298
        %4427 = vrot.lane.b32.xlu0 %v4423, 126
        %v4428 = vpop.permute.xlu0 %4427
        %4429 = vrot.lane.b32.xlu0 %v4424, 126
        %v4430 = vpop.permute.xlu0 %4429
        %v4433 = vadd.f32 %v4377, %v4428
        %v4434 = vadd.f32 %v4378, %v4430
        %s4435 = sld [smem:[#allocation9 + $0xb]]
        %v4436 = vstv %s4435
        %v4437 = vmul.f32 %v4436, %v4297
        %v4438 = vmul.f32 %v4436, %v4298
        %4441 = vrot.lane.b32.xlu0 %v4437, 125
        %v4442 = vpop.permute.xlu0 %4441
        %4443 = vrot.lane.b32.xlu0 %v4438, 125
        %v4444 = vpop.permute.xlu0 %4443
        %v4447 = vadd.f32 %v4391, %v4442
        %v4448 = vadd.f32 %v4392, %v4444
        %s4449 = sld [smem:[#allocation9 + $0x4b]]
        %v4450 = vstv %s4449
        %v4451 = vmul.f32 %v4450, %v4297
        %v4452 = vmul.f32 %v4450, %v4298
        %4455 = vrot.lane.b32.xlu0 %v4451, 125
        %v4456 = vpop.permute.xlu0 %4455
        %4457 = vrot.lane.b32.xlu0 %v4452, 125
        %v4458 = vpop.permute.xlu0 %4457
        %v4461 = vadd.f32 %v4405, %v4456
        %v4462 = vadd.f32 %v4406, %v4458
        %s4463 = sld [smem:[#allocation9 + $0x8b]]
        %v4464 = vstv %s4463
        %v4465 = vmul.f32 %v4464, %v4297
        %v4466 = vmul.f32 %v4464, %v4298
        %4469 = vrot.lane.b32.xlu0 %v4465, 125
        %v4470 = vpop.permute.xlu0 %4469
        %4471 = vrot.lane.b32.xlu0 %v4466, 125
        %v4472 = vpop.permute.xlu0 %4471
        %v4475 = vadd.f32 %v4419, %v4470
        %v4476 = vadd.f32 %v4420, %v4472
        %s4477 = sld [smem:[#allocation9 + $0xcb]]
        %v4478 = vstv %s4477
        %v4479 = vmul.f32 %v4478, %v4297
        %v4480 = vmul.f32 %v4478, %v4298
        %4483 = vrot.lane.b32.xlu0 %v4479, 125
        %v4484 = vpop.permute.xlu0 %4483
        %4485 = vrot.lane.b32.xlu0 %v4480, 125
        %v4486 = vpop.permute.xlu0 %4485
        %v4489 = vadd.f32 %v4433, %v4484
        %v4490 = vadd.f32 %v4434, %v4486
        %v4491 = vld [vmem:[#allocation2 + $0x3] sm:$0xff]
        %v4492 = vld [vmem:[#allocation2 + $0xb] sm:$0xff]
        %s4493 = sld [smem:[#allocation9 + $0xc]]
        %v4494 = vstv %s4493
        %v4495 = vmul.f32 %v4494, %v4491
        %v4496 = vmul.f32 %v4494, %v4492
        %v4497 = vadd.f32 %v4447, %v4495
        %v4498 = vadd.f32 %v4448, %v4496
        %s4499 = sld [smem:[#allocation9 + $0x4c]]
        %v4500 = vstv %s4499
        %v4501 = vmul.f32 %v4500, %v4491
        %v4502 = vmul.f32 %v4500, %v4492
        %v4503 = vadd.f32 %v4461, %v4501
        %v4504 = vadd.f32 %v4462, %v4502
        %s4505 = sld [smem:[#allocation9 + $0x8c]]
        %v4506 = vstv %s4505
        %v4507 = vmul.f32 %v4506, %v4491
        %v4508 = vmul.f32 %v4506, %v4492
        %v4509 = vadd.f32 %v4475, %v4507
        %v4510 = vadd.f32 %v4476, %v4508
        %s4511 = sld [smem:[#allocation9 + $0xcc]]
        %v4512 = vstv %s4511
        %v4513 = vmul.f32 %v4512, %v4491
        %v4514 = vmul.f32 %v4512, %v4492
        %v4515 = vadd.f32 %v4489, %v4513
        %v4516 = vadd.f32 %v4490, %v4514
        %s4517 = sld [smem:[#allocation9 + $0xd]]
        %v4518 = vstv %s4517
        %v4519 = vmul.f32 %v4518, %v4491
        %v4520 = vmul.f32 %v4518, %v4492
        %4523 = vrot.lane.b32.xlu0 %v4519, 127
        %v4524 = vpop.permute.xlu0 %4523
        %4525 = vrot.lane.b32.xlu0 %v4520, 127
        %v4526 = vpop.permute.xlu0 %4525
        %v4529 = vadd.f32 %v4497, %v4524
        %v4530 = vadd.f32 %v4498, %v4526
        %s4531 = sld [smem:[#allocation9 + $0x4d]]
        %v4532 = vstv %s4531
        %v4533 = vmul.f32 %v4532, %v4491
        %v4534 = vmul.f32 %v4532, %v4492
        %4537 = vrot.lane.b32.xlu0 %v4533, 127
        %v4538 = vpop.permute.xlu0 %4537
        %4539 = vrot.lane.b32.xlu0 %v4534, 127
        %v4540 = vpop.permute.xlu0 %4539
        %v4543 = vadd.f32 %v4503, %v4538
        %v4544 = vadd.f32 %v4504, %v4540
        %s4545 = sld [smem:[#allocation9 + $0x8d]]
        %v4546 = vstv %s4545
        %v4547 = vmul.f32 %v4546, %v4491
        %v4548 = vmul.f32 %v4546, %v4492
        %4551 = vrot.lane.b32.xlu0 %v4547, 127
        %v4552 = vpop.permute.xlu0 %4551
        %4553 = vrot.lane.b32.xlu0 %v4548, 127
        %v4554 = vpop.permute.xlu0 %4553
        %v4557 = vadd.f32 %v4509, %v4552
        %v4558 = vadd.f32 %v4510, %v4554
        %s4559 = sld [smem:[#allocation9 + $0xcd]]
        %v4560 = vstv %s4559
        %v4561 = vmul.f32 %v4560, %v4491
        %v4562 = vmul.f32 %v4560, %v4492
        %4565 = vrot.lane.b32.xlu0 %v4561, 127
        %v4566 = vpop.permute.xlu0 %4565
        %4567 = vrot.lane.b32.xlu0 %v4562, 127
        %v4568 = vpop.permute.xlu0 %4567
        %v4571 = vadd.f32 %v4515, %v4566
        %v4572 = vadd.f32 %v4516, %v4568
        %s4573 = sld [smem:[#allocation9 + $0xe]]
        %v4574 = vstv %s4573
        %v4575 = vmul.f32 %v4574, %v4491
        %v4576 = vmul.f32 %v4574, %v4492
        %4579 = vrot.lane.b32.xlu0 %v4575, 126
        %v4580 = vpop.permute.xlu0 %4579
        %4581 = vrot.lane.b32.xlu0 %v4576, 126
        %v4582 = vpop.permute.xlu0 %4581
        %v4585 = vadd.f32 %v4529, %v4580
        %v4586 = vadd.f32 %v4530, %v4582
        %s4587 = sld [smem:[#allocation9 + $0x4e]]
        %v4588 = vstv %s4587
        %v4589 = vmul.f32 %v4588, %v4491
        %v4590 = vmul.f32 %v4588, %v4492
        %4593 = vrot.lane.b32.xlu0 %v4589, 126
        %v4594 = vpop.permute.xlu0 %4593
        %4595 = vrot.lane.b32.xlu0 %v4590, 126
        %v4596 = vpop.permute.xlu0 %4595
        %v4599 = vadd.f32 %v4543, %v4594
        %v4600 = vadd.f32 %v4544, %v4596
        %s4601 = sld [smem:[#allocation9 + $0x8e]]
        %v4602 = vstv %s4601
        %v4603 = vmul.f32 %v4602, %v4491
        %v4604 = vmul.f32 %v4602, %v4492
        %4607 = vrot.lane.b32.xlu0 %v4603, 126
        %v4608 = vpop.permute.xlu0 %4607
        %4609 = vrot.lane.b32.xlu0 %v4604, 126
        %v4610 = vpop.permute.xlu0 %4609
        %v4613 = vadd.f32 %v4557, %v4608
        %v4614 = vadd.f32 %v4558, %v4610
        %s4615 = sld [smem:[#allocation9 + $0xce]]
        %v4616 = vstv %s4615
        %v4617 = vmul.f32 %v4616, %v4491
        %v4618 = vmul.f32 %v4616, %v4492
        %4621 = vrot.lane.b32.xlu0 %v4617, 126
        %v4622 = vpop.permute.xlu0 %4621
        %4623 = vrot.lane.b32.xlu0 %v4618, 126
        %v4624 = vpop.permute.xlu0 %4623
        %v4627 = vadd.f32 %v4571, %v4622
        %v4628 = vadd.f32 %v4572, %v4624
        %s4629 = sld [smem:[#allocation9 + $0xf]]
        %v4630 = vstv %s4629
        %v4631 = vmul.f32 %v4630, %v4491
        %v4632 = vmul.f32 %v4630, %v4492
        %4635 = vrot.lane.b32.xlu0 %v4631, 125
        %v4636 = vpop.permute.xlu0 %4635
        %4637 = vrot.lane.b32.xlu0 %v4632, 125
        %v4638 = vpop.permute.xlu0 %4637
        %v4641 = vadd.f32 %v4585, %v4636
        %v4642 = vadd.f32 %v4586, %v4638
        %s4643 = sld [smem:[#allocation9 + $0x4f]]
        %v4644 = vstv %s4643
        %v4645 = vmul.f32 %v4644, %v4491
        %v4646 = vmul.f32 %v4644, %v4492
        %4649 = vrot.lane.b32.xlu0 %v4645, 125
        %v4650 = vpop.permute.xlu0 %4649
        %4651 = vrot.lane.b32.xlu0 %v4646, 125
        %v4652 = vpop.permute.xlu0 %4651
        %v4655 = vadd.f32 %v4599, %v4650
        %v4656 = vadd.f32 %v4600, %v4652
        %s4657 = sld [smem:[#allocation9 + $0x8f]]
        %v4658 = vstv %s4657
        %v4659 = vmul.f32 %v4658, %v4491
        %v4660 = vmul.f32 %v4658, %v4492
        %4663 = vrot.lane.b32.xlu0 %v4659, 125
        %v4664 = vpop.permute.xlu0 %4663
        %4665 = vrot.lane.b32.xlu0 %v4660, 125
        %v4666 = vpop.permute.xlu0 %4665
        %v4669 = vadd.f32 %v4613, %v4664
        %v4670 = vadd.f32 %v4614, %v4666
        %s4671 = sld [smem:[#allocation9 + $0xcf]]
        %v4672 = vstv %s4671
        %v4673 = vmul.f32 %v4672, %v4491
        %v4674 = vmul.f32 %v4672, %v4492
        %4677 = vrot.lane.b32.xlu0 %v4673, 125
        %v4678 = vpop.permute.xlu0 %4677
        %4679 = vrot.lane.b32.xlu0 %v4674, 125
        %v4680 = vpop.permute.xlu0 %4679
        %v4683 = vadd.f32 %v4627, %v4678
        %v4684 = vadd.f32 %v4628, %v4680
        %v4685 = vld [vmem:[%s307] sm:$0xff]
        %v4686 = vld [vmem:[%s307 + $0x8] sm:$0xff]
        %s4687 = sld [smem:[#allocation9 + $0x10]]
        %v4688 = vstv %s4687
        %v4689 = vmul.f32 %v4688, %v4685
        %v4690 = vmul.f32 %v4688, %v4686
        %v4691 = vadd.f32 %v4641, %v4689
        %v4692 = vadd.f32 %v4642, %v4690
        %s4693 = sld [smem:[#allocation9 + $0x50]]
        %v4694 = vstv %s4693
        %v4695 = vmul.f32 %v4694, %v4685
        %v4696 = vmul.f32 %v4694, %v4686
        %v4697 = vadd.f32 %v4655, %v4695
        %v4698 = vadd.f32 %v4656, %v4696
        %s4699 = sld [smem:[#allocation9 + $0x90]]
        %v4700 = vstv %s4699
        %v4701 = vmul.f32 %v4700, %v4685
        %v4702 = vmul.f32 %v4700, %v4686
        %v4703 = vadd.f32 %v4669, %v4701
        %v4704 = vadd.f32 %v4670, %v4702
        %s4705 = sld [smem:[#allocation9 + $0xd0]]
        %v4706 = vstv %s4705
        %v4707 = vmul.f32 %v4706, %v4685
        %v4708 = vmul.f32 %v4706, %v4686
        %v4709 = vadd.f32 %v4683, %v4707
        %v4710 = vadd.f32 %v4684, %v4708
        %s4711 = sld [smem:[#allocation9 + $0x11]]
        %v4712 = vstv %s4711
        %v4713 = vmul.f32 %v4712, %v4685
        %v4714 = vmul.f32 %v4712, %v4686
        %4717 = vrot.lane.b32.xlu0 %v4713, 127
        %v4718 = vpop.permute.xlu0 %4717
        %4719 = vrot.lane.b32.xlu0 %v4714, 127
        %v4720 = vpop.permute.xlu0 %4719
        %v4723 = vadd.f32 %v4691, %v4718
        %v4724 = vadd.f32 %v4692, %v4720
        %s4725 = sld [smem:[#allocation9 + $0x51]]
        %v4726 = vstv %s4725
        %v4727 = vmul.f32 %v4726, %v4685
        %v4728 = vmul.f32 %v4726, %v4686
        %4731 = vrot.lane.b32.xlu0 %v4727, 127
        %v4732 = vpop.permute.xlu0 %4731
        %4733 = vrot.lane.b32.xlu0 %v4728, 127
        %v4734 = vpop.permute.xlu0 %4733
        %v4737 = vadd.f32 %v4697, %v4732
        %v4738 = vadd.f32 %v4698, %v4734
        %s4739 = sld [smem:[#allocation9 + $0x91]]
        %v4740 = vstv %s4739
        %v4741 = vmul.f32 %v4740, %v4685
        %v4742 = vmul.f32 %v4740, %v4686
        %4745 = vrot.lane.b32.xlu0 %v4741, 127
        %v4746 = vpop.permute.xlu0 %4745
        %4747 = vrot.lane.b32.xlu0 %v4742, 127
        %v4748 = vpop.permute.xlu0 %4747
        %v4751 = vadd.f32 %v4703, %v4746
        %v4752 = vadd.f32 %v4704, %v4748
        %s4753 = sld [smem:[#allocation9 + $0xd1]]
        %v4754 = vstv %s4753
        %v4755 = vmul.f32 %v4754, %v4685
        %v4756 = vmul.f32 %v4754, %v4686
        %4759 = vrot.lane.b32.xlu0 %v4755, 127
        %v4760 = vpop.permute.xlu0 %4759
        %4761 = vrot.lane.b32.xlu0 %v4756, 127
        %v4762 = vpop.permute.xlu0 %4761
        %v4765 = vadd.f32 %v4709, %v4760
        %v4766 = vadd.f32 %v4710, %v4762
        %s4767 = sld [smem:[#allocation9 + $0x12]]
        %v4768 = vstv %s4767
        %v4769 = vmul.f32 %v4768, %v4685
        %v4770 = vmul.f32 %v4768, %v4686
        %4773 = vrot.lane.b32.xlu0 %v4769, 126
        %v4774 = vpop.permute.xlu0 %4773
        %4775 = vrot.lane.b32.xlu0 %v4770, 126
        %v4776 = vpop.permute.xlu0 %4775
        %v4779 = vadd.f32 %v4723, %v4774
        %v4780 = vadd.f32 %v4724, %v4776
        %s4781 = sld [smem:[#allocation9 + $0x52]]
        %v4782 = vstv %s4781
        %v4783 = vmul.f32 %v4782, %v4685
        %v4784 = vmul.f32 %v4782, %v4686
        %4787 = vrot.lane.b32.xlu0 %v4783, 126
        %v4788 = vpop.permute.xlu0 %4787
        %4789 = vrot.lane.b32.xlu0 %v4784, 126
        %v4790 = vpop.permute.xlu0 %4789
        %v4793 = vadd.f32 %v4737, %v4788
        %v4794 = vadd.f32 %v4738, %v4790
        %s4795 = sld [smem:[#allocation9 + $0x92]]
        %v4796 = vstv %s4795
        %v4797 = vmul.f32 %v4796, %v4685
        %v4798 = vmul.f32 %v4796, %v4686
        %4801 = vrot.lane.b32.xlu0 %v4797, 126
        %v4802 = vpop.permute.xlu0 %4801
        %4803 = vrot.lane.b32.xlu0 %v4798, 126
        %v4804 = vpop.permute.xlu0 %4803
        %v4807 = vadd.f32 %v4751, %v4802
        %v4808 = vadd.f32 %v4752, %v4804
        %s4809 = sld [smem:[#allocation9 + $0xd2]]
        %v4810 = vstv %s4809
        %v4811 = vmul.f32 %v4810, %v4685
        %v4812 = vmul.f32 %v4810, %v4686
        %4815 = vrot.lane.b32.xlu0 %v4811, 126
        %v4816 = vpop.permute.xlu0 %4815
        %4817 = vrot.lane.b32.xlu0 %v4812, 126
        %v4818 = vpop.permute.xlu0 %4817
        %v4821 = vadd.f32 %v4765, %v4816
        %v4822 = vadd.f32 %v4766, %v4818
        %s4823 = sld [smem:[#allocation9 + $0x13]]
        %v4824 = vstv %s4823
        %v4825 = vmul.f32 %v4824, %v4685
        %v4826 = vmul.f32 %v4824, %v4686
        %4829 = vrot.lane.b32.xlu0 %v4825, 125
        %v4830 = vpop.permute.xlu0 %4829
        %4831 = vrot.lane.b32.xlu0 %v4826, 125
        %v4832 = vpop.permute.xlu0 %4831
        %v4835 = vadd.f32 %v4779, %v4830
        %v4836 = vadd.f32 %v4780, %v4832
        %s4837 = sld [smem:[#allocation9 + $0x53]]
        %v4838 = vstv %s4837
        %v4839 = vmul.f32 %v4838, %v4685
        %v4840 = vmul.f32 %v4838, %v4686
        %4843 = vrot.lane.b32.xlu0 %v4839, 125
        %v4844 = vpop.permute.xlu0 %4843
        %4845 = vrot.lane.b32.xlu0 %v4840, 125
        %v4846 = vpop.permute.xlu0 %4845
        %v4849 = vadd.f32 %v4793, %v4844
        %v4850 = vadd.f32 %v4794, %v4846
        %s4851 = sld [smem:[#allocation9 + $0x93]]
        %v4852 = vstv %s4851
        %v4853 = vmul.f32 %v4852, %v4685
        %v4854 = vmul.f32 %v4852, %v4686
        %4857 = vrot.lane.b32.xlu0 %v4853, 125
        %v4858 = vpop.permute.xlu0 %4857
        %4859 = vrot.lane.b32.xlu0 %v4854, 125
        %v4860 = vpop.permute.xlu0 %4859
        %v4863 = vadd.f32 %v4807, %v4858
        %v4864 = vadd.f32 %v4808, %v4860
        %s4865 = sld [smem:[#allocation9 + $0xd3]]
        %v4866 = vstv %s4865
        %v4867 = vmul.f32 %v4866, %v4685
        %v4868 = vmul.f32 %v4866, %v4686
        %4871 = vrot.lane.b32.xlu0 %v4867, 125
        %v4872 = vpop.permute.xlu0 %4871
        %4873 = vrot.lane.b32.xlu0 %v4868, 125
        %v4874 = vpop.permute.xlu0 %4873
        %v4877 = vadd.f32 %v4821, %v4872
        %v4878 = vadd.f32 %v4822, %v4874
        %v4879 = vld [vmem:[%s307 + $0x1] sm:$0xff]
        %v4880 = vld [vmem:[%s307 + $0x9] sm:$0xff]
        %s4881 = sld [smem:[#allocation9 + $0x14]]
        %v4882 = vstv %s4881
        %v4883 = vmul.f32 %v4882, %v4879
        %v4884 = vmul.f32 %v4882, %v4880
        %v4885 = vadd.f32 %v4835, %v4883
        %v4886 = vadd.f32 %v4836, %v4884
        %s4887 = sld [smem:[#allocation9 + $0x54]]
        %v4888 = vstv %s4887
        %v4889 = vmul.f32 %v4888, %v4879
        %v4890 = vmul.f32 %v4888, %v4880
        %v4891 = vadd.f32 %v4849, %v4889
        %v4892 = vadd.f32 %v4850, %v4890
        %s4893 = sld [smem:[#allocation9 + $0x94]]
        %v4894 = vstv %s4893
        %v4895 = vmul.f32 %v4894, %v4879
        %v4896 = vmul.f32 %v4894, %v4880
        %v4897 = vadd.f32 %v4863, %v4895
        %v4898 = vadd.f32 %v4864, %v4896
        %s4899 = sld [smem:[#allocation9 + $0xd4]]
        %v4900 = vstv %s4899
        %v4901 = vmul.f32 %v4900, %v4879
        %v4902 = vmul.f32 %v4900, %v4880
        %v4903 = vadd.f32 %v4877, %v4901
        %v4904 = vadd.f32 %v4878, %v4902
        %s4905 = sld [smem:[#allocation9 + $0x15]]
        %v4906 = vstv %s4905
        %v4907 = vmul.f32 %v4906, %v4879
        %v4908 = vmul.f32 %v4906, %v4880
        %4911 = vrot.lane.b32.xlu0 %v4907, 127
        %v4912 = vpop.permute.xlu0 %4911
        %4913 = vrot.lane.b32.xlu0 %v4908, 127
        %v4914 = vpop.permute.xlu0 %4913
        %v4917 = vadd.f32 %v4885, %v4912
        %v4918 = vadd.f32 %v4886, %v4914
        %s4919 = sld [smem:[#allocation9 + $0x55]]
        %v4920 = vstv %s4919
        %v4921 = vmul.f32 %v4920, %v4879
        %v4922 = vmul.f32 %v4920, %v4880
        %4925 = vrot.lane.b32.xlu0 %v4921, 127
        %v4926 = vpop.permute.xlu0 %4925
        %4927 = vrot.lane.b32.xlu0 %v4922, 127
        %v4928 = vpop.permute.xlu0 %4927
        %v4931 = vadd.f32 %v4891, %v4926
        %v4932 = vadd.f32 %v4892, %v4928
        %s4933 = sld [smem:[#allocation9 + $0x95]]
        %v4934 = vstv %s4933
        %v4935 = vmul.f32 %v4934, %v4879
        %v4936 = vmul.f32 %v4934, %v4880
        %4939 = vrot.lane.b32.xlu0 %v4935, 127
        %v4940 = vpop.permute.xlu0 %4939
        %4941 = vrot.lane.b32.xlu0 %v4936, 127
        %v4942 = vpop.permute.xlu0 %4941
        %v4945 = vadd.f32 %v4897, %v4940
        %v4946 = vadd.f32 %v4898, %v4942
        %s4947 = sld [smem:[#allocation9 + $0xd5]]
        %v4948 = vstv %s4947
        %v4949 = vmul.f32 %v4948, %v4879
        %v4950 = vmul.f32 %v4948, %v4880
        %4953 = vrot.lane.b32.xlu0 %v4949, 127
        %v4954 = vpop.permute.xlu0 %4953
        %4955 = vrot.lane.b32.xlu0 %v4950, 127
        %v4956 = vpop.permute.xlu0 %4955
        %v4959 = vadd.f32 %v4903, %v4954
        %v4960 = vadd.f32 %v4904, %v4956
        %s4961 = sld [smem:[#allocation9 + $0x16]]
        %v4962 = vstv %s4961
        %v4963 = vmul.f32 %v4962, %v4879
        %v4964 = vmul.f32 %v4962, %v4880
        %4967 = vrot.lane.b32.xlu0 %v4963, 126
        %v4968 = vpop.permute.xlu0 %4967
        %4969 = vrot.lane.b32.xlu0 %v4964, 126
        %v4970 = vpop.permute.xlu0 %4969
        %v4973 = vadd.f32 %v4917, %v4968
        %v4974 = vadd.f32 %v4918, %v4970
        %s4975 = sld [smem:[#allocation9 + $0x56]]
        %v4976 = vstv %s4975
        %v4977 = vmul.f32 %v4976, %v4879
        %v4978 = vmul.f32 %v4976, %v4880
        %4981 = vrot.lane.b32.xlu0 %v4977, 126
        %v4982 = vpop.permute.xlu0 %4981
        %4983 = vrot.lane.b32.xlu0 %v4978, 126
        %v4984 = vpop.permute.xlu0 %4983
        %v4987 = vadd.f32 %v4931, %v4982
        %v4988 = vadd.f32 %v4932, %v4984
        %s4989 = sld [smem:[#allocation9 + $0x96]]
        %v4990 = vstv %s4989
        %v4991 = vmul.f32 %v4990, %v4879
        %v4992 = vmul.f32 %v4990, %v4880
        %4995 = vrot.lane.b32.xlu0 %v4991, 126
        %v4996 = vpop.permute.xlu0 %4995
        %4997 = vrot.lane.b32.xlu0 %v4992, 126
        %v4998 = vpop.permute.xlu0 %4997
        %v5001 = vadd.f32 %v4945, %v4996
        %v5002 = vadd.f32 %v4946, %v4998
        %s5003 = sld [smem:[#allocation9 + $0xd6]]
        %v5004 = vstv %s5003
        %v5005 = vmul.f32 %v5004, %v4879
        %v5006 = vmul.f32 %v5004, %v4880
        %5009 = vrot.lane.b32.xlu0 %v5005, 126
        %v5010 = vpop.permute.xlu0 %5009
        %5011 = vrot.lane.b32.xlu0 %v5006, 126
        %v5012 = vpop.permute.xlu0 %5011
        %v5015 = vadd.f32 %v4959, %v5010
        %v5016 = vadd.f32 %v4960, %v5012
        %s5017 = sld [smem:[#allocation9 + $0x17]]
        %v5018 = vstv %s5017
        %v5019 = vmul.f32 %v5018, %v4879
        %v5020 = vmul.f32 %v5018, %v4880
        %5023 = vrot.lane.b32.xlu0 %v5019, 125
        %v5024 = vpop.permute.xlu0 %5023
        %5025 = vrot.lane.b32.xlu0 %v5020, 125
        %v5026 = vpop.permute.xlu0 %5025
        %v5029 = vadd.f32 %v4973, %v5024
        %v5030 = vadd.f32 %v4974, %v5026
        %s5031 = sld [smem:[#allocation9 + $0x57]]
        %v5032 = vstv %s5031
        %v5033 = vmul.f32 %v5032, %v4879
        %v5034 = vmul.f32 %v5032, %v4880
        %5037 = vrot.lane.b32.xlu0 %v5033, 125
        %v5038 = vpop.permute.xlu0 %5037
        %5039 = vrot.lane.b32.xlu0 %v5034, 125
        %v5040 = vpop.permute.xlu0 %5039
        %v5043 = vadd.f32 %v4987, %v5038
        %v5044 = vadd.f32 %v4988, %v5040
        %s5045 = sld [smem:[#allocation9 + $0x97]]
        %v5046 = vstv %s5045
        %v5047 = vmul.f32 %v5046, %v4879
        %v5048 = vmul.f32 %v5046, %v4880
        %5051 = vrot.lane.b32.xlu0 %v5047, 125
        %v5052 = vpop.permute.xlu0 %5051
        %5053 = vrot.lane.b32.xlu0 %v5048, 125
        %v5054 = vpop.permute.xlu0 %5053
        %v5057 = vadd.f32 %v5001, %v5052
        %v5058 = vadd.f32 %v5002, %v5054
        %s5059 = sld [smem:[#allocation9 + $0xd7]]
        %v5060 = vstv %s5059
        %v5061 = vmul.f32 %v5060, %v4879
        %v5062 = vmul.f32 %v5060, %v4880
        %5065 = vrot.lane.b32.xlu0 %v5061, 125
        %v5066 = vpop.permute.xlu0 %5065
        %5067 = vrot.lane.b32.xlu0 %v5062, 125
        %v5068 = vpop.permute.xlu0 %5067
        %v5071 = vadd.f32 %v5015, %v5066
        %v5072 = vadd.f32 %v5016, %v5068
        %v5073 = vld [vmem:[%s307 + $0x2] sm:$0xff]
        %v5074 = vld [vmem:[%s307 + $0xa] sm:$0xff]
        %s5075 = sld [smem:[#allocation9 + $0x18]]
        %v5076 = vstv %s5075
        %v5077 = vmul.f32 %v5076, %v5073
        %v5078 = vmul.f32 %v5076, %v5074
        %v5079 = vadd.f32 %v5029, %v5077
        %v5080 = vadd.f32 %v5030, %v5078
        %s5081 = sld [smem:[#allocation9 + $0x58]]
        %v5082 = vstv %s5081
        %v5083 = vmul.f32 %v5082, %v5073
        %v5084 = vmul.f32 %v5082, %v5074
        %v5085 = vadd.f32 %v5043, %v5083
        %v5086 = vadd.f32 %v5044, %v5084
        %s5087 = sld [smem:[#allocation9 + $0x98]]
        %v5088 = vstv %s5087
        %v5089 = vmul.f32 %v5088, %v5073
        %v5090 = vmul.f32 %v5088, %v5074
        %v5091 = vadd.f32 %v5057, %v5089
        %v5092 = vadd.f32 %v5058, %v5090
        %s5093 = sld [smem:[#allocation9 + $0xd8]]
        %v5094 = vstv %s5093
        %v5095 = vmul.f32 %v5094, %v5073
        %v5096 = vmul.f32 %v5094, %v5074
        %v5097 = vadd.f32 %v5071, %v5095
        %v5098 = vadd.f32 %v5072, %v5096
        %s5099 = sld [smem:[#allocation9 + $0x19]]
        %v5100 = vstv %s5099
        %v5101 = vmul.f32 %v5100, %v5073
        %v5102 = vmul.f32 %v5100, %v5074
        %5105 = vrot.lane.b32.xlu0 %v5101, 127
        %v5106 = vpop.permute.xlu0 %5105
        %5107 = vrot.lane.b32.xlu0 %v5102, 127
        %v5108 = vpop.permute.xlu0 %5107
        %v5111 = vadd.f32 %v5079, %v5106
        %v5112 = vadd.f32 %v5080, %v5108
        %s5113 = sld [smem:[#allocation9 + $0x59]]
        %v5114 = vstv %s5113
        %v5115 = vmul.f32 %v5114, %v5073
        %v5116 = vmul.f32 %v5114, %v5074
        %5119 = vrot.lane.b32.xlu0 %v5115, 127
        %v5120 = vpop.permute.xlu0 %5119
        %5121 = vrot.lane.b32.xlu0 %v5116, 127
        %v5122 = vpop.permute.xlu0 %5121
        %v5125 = vadd.f32 %v5085, %v5120
        %v5126 = vadd.f32 %v5086, %v5122
        %s5127 = sld [smem:[#allocation9 + $0x99]]
        %v5128 = vstv %s5127
        %v5129 = vmul.f32 %v5128, %v5073
        %v5130 = vmul.f32 %v5128, %v5074
        %5133 = vrot.lane.b32.xlu0 %v5129, 127
        %v5134 = vpop.permute.xlu0 %5133
        %5135 = vrot.lane.b32.xlu0 %v5130, 127
        %v5136 = vpop.permute.xlu0 %5135
        %v5139 = vadd.f32 %v5091, %v5134
        %v5140 = vadd.f32 %v5092, %v5136
        %s5141 = sld [smem:[#allocation9 + $0xd9]]
        %v5142 = vstv %s5141
        %v5143 = vmul.f32 %v5142, %v5073
        %v5144 = vmul.f32 %v5142, %v5074
        %5147 = vrot.lane.b32.xlu0 %v5143, 127
        %v5148 = vpop.permute.xlu0 %5147
        %5149 = vrot.lane.b32.xlu0 %v5144, 127
        %v5150 = vpop.permute.xlu0 %5149
        %v5153 = vadd.f32 %v5097, %v5148
        %v5154 = vadd.f32 %v5098, %v5150
        %s5155 = sld [smem:[#allocation9 + $0x1a]]
        %v5156 = vstv %s5155
        %v5157 = vmul.f32 %v5156, %v5073
        %v5158 = vmul.f32 %v5156, %v5074
        %5161 = vrot.lane.b32.xlu0 %v5157, 126
        %v5162 = vpop.permute.xlu0 %5161
        %5163 = vrot.lane.b32.xlu0 %v5158, 126
        %v5164 = vpop.permute.xlu0 %5163
        %v5167 = vadd.f32 %v5111, %v5162
        %v5168 = vadd.f32 %v5112, %v5164
        %s5169 = sld [smem:[#allocation9 + $0x5a]]
        %v5170 = vstv %s5169
        %v5171 = vmul.f32 %v5170, %v5073
        %v5172 = vmul.f32 %v5170, %v5074
        %5175 = vrot.lane.b32.xlu0 %v5171, 126
        %v5176 = vpop.permute.xlu0 %5175
        %5177 = vrot.lane.b32.xlu0 %v5172, 126
        %v5178 = vpop.permute.xlu0 %5177
        %v5181 = vadd.f32 %v5125, %v5176
        %v5182 = vadd.f32 %v5126, %v5178
        %s5183 = sld [smem:[#allocation9 + $0x9a]]
        %v5184 = vstv %s5183
        %v5185 = vmul.f32 %v5184, %v5073
        %v5186 = vmul.f32 %v5184, %v5074
        %5189 = vrot.lane.b32.xlu0 %v5185, 126
        %v5190 = vpop.permute.xlu0 %5189
        %5191 = vrot.lane.b32.xlu0 %v5186, 126
        %v5192 = vpop.permute.xlu0 %5191
        %v5195 = vadd.f32 %v5139, %v5190
        %v5196 = vadd.f32 %v5140, %v5192
        %s5197 = sld [smem:[#allocation9 + $0xda]]
        %v5198 = vstv %s5197
        %v5199 = vmul.f32 %v5198, %v5073
        %v5200 = vmul.f32 %v5198, %v5074
        %5203 = vrot.lane.b32.xlu0 %v5199, 126
        %v5204 = vpop.permute.xlu0 %5203
        %5205 = vrot.lane.b32.xlu0 %v5200, 126
        %v5206 = vpop.permute.xlu0 %5205
        %v5209 = vadd.f32 %v5153, %v5204
        %v5210 = vadd.f32 %v5154, %v5206
        %s5211 = sld [smem:[#allocation9 + $0x1b]]
        %v5212 = vstv %s5211
        %v5213 = vmul.f32 %v5212, %v5073
        %v5214 = vmul.f32 %v5212, %v5074
        %5217 = vrot.lane.b32.xlu0 %v5213, 125
        %v5218 = vpop.permute.xlu0 %5217
        %5219 = vrot.lane.b32.xlu0 %v5214, 125
        %v5220 = vpop.permute.xlu0 %5219
        %v5223 = vadd.f32 %v5167, %v5218
        %v5224 = vadd.f32 %v5168, %v5220
        %s5225 = sld [smem:[#allocation9 + $0x5b]]
        %v5226 = vstv %s5225
        %v5227 = vmul.f32 %v5226, %v5073
        %v5228 = vmul.f32 %v5226, %v5074
        %5231 = vrot.lane.b32.xlu0 %v5227, 125
        %v5232 = vpop.permute.xlu0 %5231
        %5233 = vrot.lane.b32.xlu0 %v5228, 125
        %v5234 = vpop.permute.xlu0 %5233
        %v5237 = vadd.f32 %v5181, %v5232
        %v5238 = vadd.f32 %v5182, %v5234
        %s5239 = sld [smem:[#allocation9 + $0x9b]]
        %v5240 = vstv %s5239
        %v5241 = vmul.f32 %v5240, %v5073
        %v5242 = vmul.f32 %v5240, %v5074
        %5245 = vrot.lane.b32.xlu0 %v5241, 125
        %v5246 = vpop.permute.xlu0 %5245
        %5247 = vrot.lane.b32.xlu0 %v5242, 125
        %v5248 = vpop.permute.xlu0 %5247
        %v5251 = vadd.f32 %v5195, %v5246
        %v5252 = vadd.f32 %v5196, %v5248
        %s5253 = sld [smem:[#allocation9 + $0xdb]]
        %v5254 = vstv %s5253
        %v5255 = vmul.f32 %v5254, %v5073
        %v5256 = vmul.f32 %v5254, %v5074
        %5259 = vrot.lane.b32.xlu0 %v5255, 125
        %v5260 = vpop.permute.xlu0 %5259
        %5261 = vrot.lane.b32.xlu0 %v5256, 125
        %v5262 = vpop.permute.xlu0 %5261
        %v5265 = vadd.f32 %v5209, %v5260
        %v5266 = vadd.f32 %v5210, %v5262
        %v5267 = vld [vmem:[%s307 + $0x3] sm:$0xff]
        %v5268 = vld [vmem:[%s307 + $0xb] sm:$0xff]
        %s5269 = sld [smem:[#allocation9 + $0x1c]]
        %v5270 = vstv %s5269
        %v5271 = vmul.f32 %v5270, %v5267
        %v5272 = vmul.f32 %v5270, %v5268
        %v5273 = vadd.f32 %v5223, %v5271
        %v5274 = vadd.f32 %v5224, %v5272
        %s5275 = sld [smem:[#allocation9 + $0x5c]]
        %v5276 = vstv %s5275
        %v5277 = vmul.f32 %v5276, %v5267
        %v5278 = vmul.f32 %v5276, %v5268
        %v5279 = vadd.f32 %v5237, %v5277
        %v5280 = vadd.f32 %v5238, %v5278
        %s5281 = sld [smem:[#allocation9 + $0x9c]]
        %v5282 = vstv %s5281
        %v5283 = vmul.f32 %v5282, %v5267
        %v5284 = vmul.f32 %v5282, %v5268
        %v5285 = vadd.f32 %v5251, %v5283
        %v5286 = vadd.f32 %v5252, %v5284
        %s5287 = sld [smem:[#allocation9 + $0xdc]]
        %v5288 = vstv %s5287
        %v5289 = vmul.f32 %v5288, %v5267
        %v5290 = vmul.f32 %v5288, %v5268
        %v5291 = vadd.f32 %v5265, %v5289
        %v5292 = vadd.f32 %v5266, %v5290
        %s5293 = sld [smem:[#allocation9 + $0x1d]]
        %v5294 = vstv %s5293
        %v5295 = vmul.f32 %v5294, %v5267
        %v5296 = vmul.f32 %v5294, %v5268
        %5299 = vrot.lane.b32.xlu0 %v5295, 127
        %v5300 = vpop.permute.xlu0 %5299
        %5301 = vrot.lane.b32.xlu0 %v5296, 127
        %v5302 = vpop.permute.xlu0 %5301
        %v5305 = vadd.f32 %v5273, %v5300
        %v5306 = vadd.f32 %v5274, %v5302
        %s5307 = sld [smem:[#allocation9 + $0x5d]]
        %v5308 = vstv %s5307
        %v5309 = vmul.f32 %v5308, %v5267
        %v5310 = vmul.f32 %v5308, %v5268
        %5313 = vrot.lane.b32.xlu0 %v5309, 127
        %v5314 = vpop.permute.xlu0 %5313
        %5315 = vrot.lane.b32.xlu0 %v5310, 127
        %v5316 = vpop.permute.xlu0 %5315
        %v5319 = vadd.f32 %v5279, %v5314
        %v5320 = vadd.f32 %v5280, %v5316
        %s5321 = sld [smem:[#allocation9 + $0x9d]]
        %v5322 = vstv %s5321
        %v5323 = vmul.f32 %v5322, %v5267
        %v5324 = vmul.f32 %v5322, %v5268
        %5327 = vrot.lane.b32.xlu0 %v5323, 127
        %v5328 = vpop.permute.xlu0 %5327
        %5329 = vrot.lane.b32.xlu0 %v5324, 127
        %v5330 = vpop.permute.xlu0 %5329
        %v5333 = vadd.f32 %v5285, %v5328
        %v5334 = vadd.f32 %v5286, %v5330
        %s5335 = sld [smem:[#allocation9 + $0xdd]]
        %v5336 = vstv %s5335
        %v5337 = vmul.f32 %v5336, %v5267
        %v5338 = vmul.f32 %v5336, %v5268
        %5341 = vrot.lane.b32.xlu0 %v5337, 127
        %v5342 = vpop.permute.xlu0 %5341
        %5343 = vrot.lane.b32.xlu0 %v5338, 127
        %v5344 = vpop.permute.xlu0 %5343
        %v5347 = vadd.f32 %v5291, %v5342
        %v5348 = vadd.f32 %v5292, %v5344
        %s5349 = sld [smem:[#allocation9 + $0x1e]]
        %v5350 = vstv %s5349
        %v5351 = vmul.f32 %v5350, %v5267
        %v5352 = vmul.f32 %v5350, %v5268
        %5355 = vrot.lane.b32.xlu0 %v5351, 126
        %v5356 = vpop.permute.xlu0 %5355
        %5357 = vrot.lane.b32.xlu0 %v5352, 126
        %v5358 = vpop.permute.xlu0 %5357
        %v5361 = vadd.f32 %v5305, %v5356
        %v5362 = vadd.f32 %v5306, %v5358
        %s5363 = sld [smem:[#allocation9 + $0x5e]]
        %v5364 = vstv %s5363
        %v5365 = vmul.f32 %v5364, %v5267
        %v5366 = vmul.f32 %v5364, %v5268
        %5369 = vrot.lane.b32.xlu0 %v5365, 126
        %v5370 = vpop.permute.xlu0 %5369
        %5371 = vrot.lane.b32.xlu0 %v5366, 126
        %v5372 = vpop.permute.xlu0 %5371
        %v5375 = vadd.f32 %v5319, %v5370
        %v5376 = vadd.f32 %v5320, %v5372
        %s5377 = sld [smem:[#allocation9 + $0x9e]]
        %v5378 = vstv %s5377
        %v5379 = vmul.f32 %v5378, %v5267
        %v5380 = vmul.f32 %v5378, %v5268
        %5383 = vrot.lane.b32.xlu0 %v5379, 126
        %v5384 = vpop.permute.xlu0 %5383
        %5385 = vrot.lane.b32.xlu0 %v5380, 126
        %v5386 = vpop.permute.xlu0 %5385
        %v5389 = vadd.f32 %v5333, %v5384
        %v5390 = vadd.f32 %v5334, %v5386
        %s5391 = sld [smem:[#allocation9 + $0xde]]
        %v5392 = vstv %s5391
        %v5393 = vmul.f32 %v5392, %v5267
        %v5394 = vmul.f32 %v5392, %v5268
        %5397 = vrot.lane.b32.xlu0 %v5393, 126
        %v5398 = vpop.permute.xlu0 %5397
        %5399 = vrot.lane.b32.xlu0 %v5394, 126
        %v5400 = vpop.permute.xlu0 %5399
        %v5403 = vadd.f32 %v5347, %v5398
        %v5404 = vadd.f32 %v5348, %v5400
        %s5405 = sld [smem:[#allocation9 + $0x1f]]
        %v5406 = vstv %s5405
        %v5407 = vmul.f32 %v5406, %v5267
        %v5408 = vmul.f32 %v5406, %v5268
        %5411 = vrot.lane.b32.xlu0 %v5407, 125
        %v5412 = vpop.permute.xlu0 %5411
        %5413 = vrot.lane.b32.xlu0 %v5408, 125
        %v5414 = vpop.permute.xlu0 %5413
        %v5417 = vadd.f32 %v5361, %v5412
        %v5418 = vadd.f32 %v5362, %v5414
        %s5419 = sld [smem:[#allocation9 + $0x5f]]
        %v5420 = vstv %s5419
        %v5421 = vmul.f32 %v5420, %v5267
        %v5422 = vmul.f32 %v5420, %v5268
        %5425 = vrot.lane.b32.xlu0 %v5421, 125
        %v5426 = vpop.permute.xlu0 %5425
        %5427 = vrot.lane.b32.xlu0 %v5422, 125
        %v5428 = vpop.permute.xlu0 %5427
        %v5431 = vadd.f32 %v5375, %v5426
        %v5432 = vadd.f32 %v5376, %v5428
        %s5433 = sld [smem:[#allocation9 + $0x9f]]
        %v5434 = vstv %s5433
        %v5435 = vmul.f32 %v5434, %v5267
        %v5436 = vmul.f32 %v5434, %v5268
        %5439 = vrot.lane.b32.xlu0 %v5435, 125
        %v5440 = vpop.permute.xlu0 %5439
        %5441 = vrot.lane.b32.xlu0 %v5436, 125
        %v5442 = vpop.permute.xlu0 %5441
        %v5445 = vadd.f32 %v5389, %v5440
        %v5446 = vadd.f32 %v5390, %v5442
        %s5447 = sld [smem:[#allocation9 + $0xdf]]
        %v5448 = vstv %s5447
        %v5449 = vmul.f32 %v5448, %v5267
        %v5450 = vmul.f32 %v5448, %v5268
        %5453 = vrot.lane.b32.xlu0 %v5449, 125
        %v5454 = vpop.permute.xlu0 %5453
        %5455 = vrot.lane.b32.xlu0 %v5450, 125
        %v5456 = vpop.permute.xlu0 %5455
        %v5459 = vadd.f32 %v5403, %v5454
        %v5460 = vadd.f32 %v5404, %v5456
        %v5461 = vld [vmem:[%s378] sm:$0xff]
        %v5462 = vld [vmem:[%s378 + $0x8] sm:$0xff]
        %s5463 = sld [smem:[#allocation9 + $0x20]]
        %v5464 = vstv %s5463
        %v5465 = vmul.f32 %v5464, %v5461
        %v5466 = vmul.f32 %v5464, %v5462
        %v5467 = vadd.f32 %v5417, %v5465
        %v5468 = vadd.f32 %v5418, %v5466
        %s5469 = sld [smem:[#allocation9 + $0x60]]
        %v5470 = vstv %s5469
        %v5471 = vmul.f32 %v5470, %v5461
        %v5472 = vmul.f32 %v5470, %v5462
        %v5473 = vadd.f32 %v5431, %v5471
        %v5474 = vadd.f32 %v5432, %v5472
        %s5475 = sld [smem:[#allocation9 + $0xa0]]
        %v5476 = vstv %s5475
        %v5477 = vmul.f32 %v5476, %v5461
        %v5478 = vmul.f32 %v5476, %v5462
        %v5479 = vadd.f32 %v5445, %v5477
        %v5480 = vadd.f32 %v5446, %v5478
        %s5481 = sld [smem:[#allocation9 + $0xe0]]
        %v5482 = vstv %s5481
        %v5483 = vmul.f32 %v5482, %v5461
        %v5484 = vmul.f32 %v5482, %v5462
        %v5485 = vadd.f32 %v5459, %v5483
        %v5486 = vadd.f32 %v5460, %v5484
        %s5487 = sld [smem:[#allocation9 + $0x21]]
        %v5488 = vstv %s5487
        %v5489 = vmul.f32 %v5488, %v5461
        %v5490 = vmul.f32 %v5488, %v5462
        %5493 = vrot.lane.b32.xlu0 %v5489, 127
        %v5494 = vpop.permute.xlu0 %5493
        %5495 = vrot.lane.b32.xlu0 %v5490, 127
        %v5496 = vpop.permute.xlu0 %5495
        %v5499 = vadd.f32 %v5467, %v5494
        %v5500 = vadd.f32 %v5468, %v5496
        %s5501 = sld [smem:[#allocation9 + $0x61]]
        %v5502 = vstv %s5501
        %v5503 = vmul.f32 %v5502, %v5461
        %v5504 = vmul.f32 %v5502, %v5462
        %5507 = vrot.lane.b32.xlu0 %v5503, 127
        %v5508 = vpop.permute.xlu0 %5507
        %5509 = vrot.lane.b32.xlu0 %v5504, 127
        %v5510 = vpop.permute.xlu0 %5509
        %v5513 = vadd.f32 %v5473, %v5508
        %v5514 = vadd.f32 %v5474, %v5510
        %s5515 = sld [smem:[#allocation9 + $0xa1]]
        %v5516 = vstv %s5515
        %v5517 = vmul.f32 %v5516, %v5461
        %v5518 = vmul.f32 %v5516, %v5462
        %5521 = vrot.lane.b32.xlu0 %v5517, 127
        %v5522 = vpop.permute.xlu0 %5521
        %5523 = vrot.lane.b32.xlu0 %v5518, 127
        %v5524 = vpop.permute.xlu0 %5523
        %v5527 = vadd.f32 %v5479, %v5522
        %v5528 = vadd.f32 %v5480, %v5524
        %s5529 = sld [smem:[#allocation9 + $0xe1]]
        %v5530 = vstv %s5529
        %v5531 = vmul.f32 %v5530, %v5461
        %v5532 = vmul.f32 %v5530, %v5462
        %5535 = vrot.lane.b32.xlu0 %v5531, 127
        %v5536 = vpop.permute.xlu0 %5535
        %5537 = vrot.lane.b32.xlu0 %v5532, 127
        %v5538 = vpop.permute.xlu0 %5537
        %v5541 = vadd.f32 %v5485, %v5536
        %v5542 = vadd.f32 %v5486, %v5538
        %s5543 = sld [smem:[#allocation9 + $0x22]]
        %v5544 = vstv %s5543
        %v5545 = vmul.f32 %v5544, %v5461
        %v5546 = vmul.f32 %v5544, %v5462
        %5549 = vrot.lane.b32.xlu0 %v5545, 126
        %v5550 = vpop.permute.xlu0 %5549
        %5551 = vrot.lane.b32.xlu0 %v5546, 126
        %v5552 = vpop.permute.xlu0 %5551
        %v5555 = vadd.f32 %v5499, %v5550
        %v5556 = vadd.f32 %v5500, %v5552
        %s5557 = sld [smem:[#allocation9 + $0x62]]
        %v5558 = vstv %s5557
        %v5559 = vmul.f32 %v5558, %v5461
        %v5560 = vmul.f32 %v5558, %v5462
        %5563 = vrot.lane.b32.xlu0 %v5559, 126
        %v5564 = vpop.permute.xlu0 %5563
        %5565 = vrot.lane.b32.xlu0 %v5560, 126
        %v5566 = vpop.permute.xlu0 %5565
        %v5569 = vadd.f32 %v5513, %v5564
        %v5570 = vadd.f32 %v5514, %v5566
        %s5571 = sld [smem:[#allocation9 + $0xa2]]
        %v5572 = vstv %s5571
        %v5573 = vmul.f32 %v5572, %v5461
        %v5574 = vmul.f32 %v5572, %v5462
        %5577 = vrot.lane.b32.xlu0 %v5573, 126
        %v5578 = vpop.permute.xlu0 %5577
        %5579 = vrot.lane.b32.xlu0 %v5574, 126
        %v5580 = vpop.permute.xlu0 %5579
        %v5583 = vadd.f32 %v5527, %v5578
        %v5584 = vadd.f32 %v5528, %v5580
        %s5585 = sld [smem:[#allocation9 + $0xe2]]
        %v5586 = vstv %s5585
        %v5587 = vmul.f32 %v5586, %v5461
        %v5588 = vmul.f32 %v5586, %v5462
        %5591 = vrot.lane.b32.xlu0 %v5587, 126
        %v5592 = vpop.permute.xlu0 %5591
        %5593 = vrot.lane.b32.xlu0 %v5588, 126
        %v5594 = vpop.permute.xlu0 %5593
        %v5597 = vadd.f32 %v5541, %v5592
        %v5598 = vadd.f32 %v5542, %v5594
        %s5599 = sld [smem:[#allocation9 + $0x23]]
        %v5600 = vstv %s5599
        %v5601 = vmul.f32 %v5600, %v5461
        %v5602 = vmul.f32 %v5600, %v5462
        %5605 = vrot.lane.b32.xlu0 %v5601, 125
        %v5606 = vpop.permute.xlu0 %5605
        %5607 = vrot.lane.b32.xlu0 %v5602, 125
        %v5608 = vpop.permute.xlu0 %5607
        %v5611 = vadd.f32 %v5555, %v5606
        %v5612 = vadd.f32 %v5556, %v5608
        %s5613 = sld [smem:[#allocation9 + $0x63]]
        %v5614 = vstv %s5613
        %v5615 = vmul.f32 %v5614, %v5461
        %v5616 = vmul.f32 %v5614, %v5462
        %5619 = vrot.lane.b32.xlu0 %v5615, 125
        %v5620 = vpop.permute.xlu0 %5619
        %5621 = vrot.lane.b32.xlu0 %v5616, 125
        %v5622 = vpop.permute.xlu0 %5621
        %v5625 = vadd.f32 %v5569, %v5620
        %v5626 = vadd.f32 %v5570, %v5622
        %s5627 = sld [smem:[#allocation9 + $0xa3]]
        %v5628 = vstv %s5627
        %v5629 = vmul.f32 %v5628, %v5461
        %v5630 = vmul.f32 %v5628, %v5462
        %5633 = vrot.lane.b32.xlu0 %v5629, 125
        %v5634 = vpop.permute.xlu0 %5633
        %5635 = vrot.lane.b32.xlu0 %v5630, 125
        %v5636 = vpop.permute.xlu0 %5635
        %v5639 = vadd.f32 %v5583, %v5634
        %v5640 = vadd.f32 %v5584, %v5636
        %s5641 = sld [smem:[#allocation9 + $0xe3]]
        %v5642 = vstv %s5641
        %v5643 = vmul.f32 %v5642, %v5461
        %v5644 = vmul.f32 %v5642, %v5462
        %5647 = vrot.lane.b32.xlu0 %v5643, 125
        %v5648 = vpop.permute.xlu0 %5647
        %5649 = vrot.lane.b32.xlu0 %v5644, 125
        %v5650 = vpop.permute.xlu0 %5649
        %v5653 = vadd.f32 %v5597, %v5648
        %v5654 = vadd.f32 %v5598, %v5650
        %v5655 = vld [vmem:[%s378 + $0x1] sm:$0xff]
        %v5656 = vld [vmem:[%s378 + $0x9] sm:$0xff]
        %s5657 = sld [smem:[#allocation9 + $0x24]]
        %v5658 = vstv %s5657
        %v5659 = vmul.f32 %v5658, %v5655
        %v5660 = vmul.f32 %v5658, %v5656
        %v5661 = vadd.f32 %v5611, %v5659
        %v5662 = vadd.f32 %v5612, %v5660
        %s5663 = sld [smem:[#allocation9 + $0x64]]
        %v5664 = vstv %s5663
        %v5665 = vmul.f32 %v5664, %v5655
        %v5666 = vmul.f32 %v5664, %v5656
        %v5667 = vadd.f32 %v5625, %v5665
        %v5668 = vadd.f32 %v5626, %v5666
        %s5669 = sld [smem:[#allocation9 + $0xa4]]
        %v5670 = vstv %s5669
        %v5671 = vmul.f32 %v5670, %v5655
        %v5672 = vmul.f32 %v5670, %v5656
        %v5673 = vadd.f32 %v5639, %v5671
        %v5674 = vadd.f32 %v5640, %v5672
        %s5675 = sld [smem:[#allocation9 + $0xe4]]
        %v5676 = vstv %s5675
        %v5677 = vmul.f32 %v5676, %v5655
        %v5678 = vmul.f32 %v5676, %v5656
        %v5679 = vadd.f32 %v5653, %v5677
        %v5680 = vadd.f32 %v5654, %v5678
        %s5681 = sld [smem:[#allocation9 + $0x25]]
        %v5682 = vstv %s5681
        %v5683 = vmul.f32 %v5682, %v5655
        %v5684 = vmul.f32 %v5682, %v5656
        %5687 = vrot.lane.b32.xlu0 %v5683, 127
        %v5688 = vpop.permute.xlu0 %5687
        %5689 = vrot.lane.b32.xlu0 %v5684, 127
        %v5690 = vpop.permute.xlu0 %5689
        %v5693 = vadd.f32 %v5661, %v5688
        %v5694 = vadd.f32 %v5662, %v5690
        %s5695 = sld [smem:[#allocation9 + $0x65]]
        %v5696 = vstv %s5695
        %v5697 = vmul.f32 %v5696, %v5655
        %v5698 = vmul.f32 %v5696, %v5656
        %5701 = vrot.lane.b32.xlu0 %v5697, 127
        %v5702 = vpop.permute.xlu0 %5701
        %5703 = vrot.lane.b32.xlu0 %v5698, 127
        %v5704 = vpop.permute.xlu0 %5703
        %v5707 = vadd.f32 %v5667, %v5702
        %v5708 = vadd.f32 %v5668, %v5704
        %s5709 = sld [smem:[#allocation9 + $0xa5]]
        %v5710 = vstv %s5709
        %v5711 = vmul.f32 %v5710, %v5655
        %v5712 = vmul.f32 %v5710, %v5656
        %5715 = vrot.lane.b32.xlu0 %v5711, 127
        %v5716 = vpop.permute.xlu0 %5715
        %5717 = vrot.lane.b32.xlu0 %v5712, 127
        %v5718 = vpop.permute.xlu0 %5717
        %v5721 = vadd.f32 %v5673, %v5716
        %v5722 = vadd.f32 %v5674, %v5718
        %s5723 = sld [smem:[#allocation9 + $0xe5]]
        %v5724 = vstv %s5723
        %v5725 = vmul.f32 %v5724, %v5655
        %v5726 = vmul.f32 %v5724, %v5656
        %5729 = vrot.lane.b32.xlu0 %v5725, 127
        %v5730 = vpop.permute.xlu0 %5729
        %5731 = vrot.lane.b32.xlu0 %v5726, 127
        %v5732 = vpop.permute.xlu0 %5731
        %v5735 = vadd.f32 %v5679, %v5730
        %v5736 = vadd.f32 %v5680, %v5732
        %s5737 = sld [smem:[#allocation9 + $0x26]]
        %v5738 = vstv %s5737
        %v5739 = vmul.f32 %v5738, %v5655
        %v5740 = vmul.f32 %v5738, %v5656
        %5743 = vrot.lane.b32.xlu0 %v5739, 126
        %v5744 = vpop.permute.xlu0 %5743
        %5745 = vrot.lane.b32.xlu0 %v5740, 126
        %v5746 = vpop.permute.xlu0 %5745
        %v5749 = vadd.f32 %v5693, %v5744
        %v5750 = vadd.f32 %v5694, %v5746
        %s5751 = sld [smem:[#allocation9 + $0x66]]
        %v5752 = vstv %s5751
        %v5753 = vmul.f32 %v5752, %v5655
        %v5754 = vmul.f32 %v5752, %v5656
        %5757 = vrot.lane.b32.xlu0 %v5753, 126
        %v5758 = vpop.permute.xlu0 %5757
        %5759 = vrot.lane.b32.xlu0 %v5754, 126
        %v5760 = vpop.permute.xlu0 %5759
        %v5763 = vadd.f32 %v5707, %v5758
        %v5764 = vadd.f32 %v5708, %v5760
        %s5765 = sld [smem:[#allocation9 + $0xa6]]
        %v5766 = vstv %s5765
        %v5767 = vmul.f32 %v5766, %v5655
        %v5768 = vmul.f32 %v5766, %v5656
        %5771 = vrot.lane.b32.xlu0 %v5767, 126
        %v5772 = vpop.permute.xlu0 %5771
        %5773 = vrot.lane.b32.xlu0 %v5768, 126
        %v5774 = vpop.permute.xlu0 %5773
        %v5777 = vadd.f32 %v5721, %v5772
        %v5778 = vadd.f32 %v5722, %v5774
        %s5779 = sld [smem:[#allocation9 + $0xe6]]
        %v5780 = vstv %s5779
        %v5781 = vmul.f32 %v5780, %v5655
        %v5782 = vmul.f32 %v5780, %v5656
        %5785 = vrot.lane.b32.xlu0 %v5781, 126
        %v5786 = vpop.permute.xlu0 %5785
        %5787 = vrot.lane.b32.xlu0 %v5782, 126
        %v5788 = vpop.permute.xlu0 %5787
        %v5791 = vadd.f32 %v5735, %v5786
        %v5792 = vadd.f32 %v5736, %v5788
        %s5793 = sld [smem:[#allocation9 + $0x27]]
        %v5794 = vstv %s5793
        %v5795 = vmul.f32 %v5794, %v5655
        %v5796 = vmul.f32 %v5794, %v5656
        %5799 = vrot.lane.b32.xlu0 %v5795, 125
        %v5800 = vpop.permute.xlu0 %5799
        %5801 = vrot.lane.b32.xlu0 %v5796, 125
        %v5802 = vpop.permute.xlu0 %5801
        %v5805 = vadd.f32 %v5749, %v5800
        %v5806 = vadd.f32 %v5750, %v5802
        %s5807 = sld [smem:[#allocation9 + $0x67]]
        %v5808 = vstv %s5807
        %v5809 = vmul.f32 %v5808, %v5655
        %v5810 = vmul.f32 %v5808, %v5656
        %5813 = vrot.lane.b32.xlu0 %v5809, 125
        %v5814 = vpop.permute.xlu0 %5813
        %5815 = vrot.lane.b32.xlu0 %v5810, 125
        %v5816 = vpop.permute.xlu0 %5815
        %v5819 = vadd.f32 %v5763, %v5814
        %v5820 = vadd.f32 %v5764, %v5816
        %s5821 = sld [smem:[#allocation9 + $0xa7]]
        %v5822 = vstv %s5821
        %v5823 = vmul.f32 %v5822, %v5655
        %v5824 = vmul.f32 %v5822, %v5656
        %5827 = vrot.lane.b32.xlu0 %v5823, 125
        %v5828 = vpop.permute.xlu0 %5827
        %5829 = vrot.lane.b32.xlu0 %v5824, 125
        %v5830 = vpop.permute.xlu0 %5829
        %v5833 = vadd.f32 %v5777, %v5828
        %v5834 = vadd.f32 %v5778, %v5830
        %s5835 = sld [smem:[#allocation9 + $0xe7]]
        %v5836 = vstv %s5835
        %v5837 = vmul.f32 %v5836, %v5655
        %v5838 = vmul.f32 %v5836, %v5656
        %5841 = vrot.lane.b32.xlu0 %v5837, 125
        %v5842 = vpop.permute.xlu0 %5841
        %5843 = vrot.lane.b32.xlu0 %v5838, 125
        %v5844 = vpop.permute.xlu0 %5843
        %v5847 = vadd.f32 %v5791, %v5842
        %v5848 = vadd.f32 %v5792, %v5844
        %v5849 = vld [vmem:[%s378 + $0x2] sm:$0xff]
        %v5850 = vld [vmem:[%s378 + $0xa] sm:$0xff]
        %s5851 = sld [smem:[#allocation9 + $0x28]]
        %v5852 = vstv %s5851
        %v5853 = vmul.f32 %v5852, %v5849
        %v5854 = vmul.f32 %v5852, %v5850
        %v5855 = vadd.f32 %v5805, %v5853
        %v5856 = vadd.f32 %v5806, %v5854
        %s5857 = sld [smem:[#allocation9 + $0x68]]
        %v5858 = vstv %s5857
        %v5859 = vmul.f32 %v5858, %v5849
        %v5860 = vmul.f32 %v5858, %v5850
        %v5861 = vadd.f32 %v5819, %v5859
        %v5862 = vadd.f32 %v5820, %v5860
        %s5863 = sld [smem:[#allocation9 + $0xa8]]
        %v5864 = vstv %s5863
        %v5865 = vmul.f32 %v5864, %v5849
        %v5866 = vmul.f32 %v5864, %v5850
        %v5867 = vadd.f32 %v5833, %v5865
        %v5868 = vadd.f32 %v5834, %v5866
        %s5869 = sld [smem:[#allocation9 + $0xe8]]
        %v5870 = vstv %s5869
        %v5871 = vmul.f32 %v5870, %v5849
        %v5872 = vmul.f32 %v5870, %v5850
        %v5873 = vadd.f32 %v5847, %v5871
        %v5874 = vadd.f32 %v5848, %v5872
        %s5875 = sld [smem:[#allocation9 + $0x29]]
        %v5876 = vstv %s5875
        %v5877 = vmul.f32 %v5876, %v5849
        %v5878 = vmul.f32 %v5876, %v5850
        %5881 = vrot.lane.b32.xlu0 %v5877, 127
        %v5882 = vpop.permute.xlu0 %5881
        %5883 = vrot.lane.b32.xlu0 %v5878, 127
        %v5884 = vpop.permute.xlu0 %5883
        %v5887 = vadd.f32 %v5855, %v5882
        %v5888 = vadd.f32 %v5856, %v5884
        %s5889 = sld [smem:[#allocation9 + $0x69]]
        %v5890 = vstv %s5889
        %v5891 = vmul.f32 %v5890, %v5849
        %v5892 = vmul.f32 %v5890, %v5850
        %5895 = vrot.lane.b32.xlu0 %v5891, 127
        %v5896 = vpop.permute.xlu0 %5895
        %5897 = vrot.lane.b32.xlu0 %v5892, 127
        %v5898 = vpop.permute.xlu0 %5897
        %v5901 = vadd.f32 %v5861, %v5896
        %v5902 = vadd.f32 %v5862, %v5898
        %s5903 = sld [smem:[#allocation9 + $0xa9]]
        %v5904 = vstv %s5903
        %v5905 = vmul.f32 %v5904, %v5849
        %v5906 = vmul.f32 %v5904, %v5850
        %5909 = vrot.lane.b32.xlu0 %v5905, 127
        %v5910 = vpop.permute.xlu0 %5909
        %5911 = vrot.lane.b32.xlu0 %v5906, 127
        %v5912 = vpop.permute.xlu0 %5911
        %v5915 = vadd.f32 %v5867, %v5910
        %v5916 = vadd.f32 %v5868, %v5912
        %s5917 = sld [smem:[#allocation9 + $0xe9]]
        %v5918 = vstv %s5917
        %v5919 = vmul.f32 %v5918, %v5849
        %v5920 = vmul.f32 %v5918, %v5850
        %5923 = vrot.lane.b32.xlu0 %v5919, 127
        %v5924 = vpop.permute.xlu0 %5923
        %5925 = vrot.lane.b32.xlu0 %v5920, 127
        %v5926 = vpop.permute.xlu0 %5925
        %v5929 = vadd.f32 %v5873, %v5924
        %v5930 = vadd.f32 %v5874, %v5926
        %s5931 = sld [smem:[#allocation9 + $0x2a]]
        %v5932 = vstv %s5931
        %v5933 = vmul.f32 %v5932, %v5849
        %v5934 = vmul.f32 %v5932, %v5850
        %5937 = vrot.lane.b32.xlu0 %v5933, 126
        %v5938 = vpop.permute.xlu0 %5937
        %5939 = vrot.lane.b32.xlu0 %v5934, 126
        %v5940 = vpop.permute.xlu0 %5939
        %v5943 = vadd.f32 %v5887, %v5938
        %v5944 = vadd.f32 %v5888, %v5940
        %s5945 = sld [smem:[#allocation9 + $0x6a]]
        %v5946 = vstv %s5945
        %v5947 = vmul.f32 %v5946, %v5849
        %v5948 = vmul.f32 %v5946, %v5850
        %5951 = vrot.lane.b32.xlu0 %v5947, 126
        %v5952 = vpop.permute.xlu0 %5951
        %5953 = vrot.lane.b32.xlu0 %v5948, 126
        %v5954 = vpop.permute.xlu0 %5953
        %v5957 = vadd.f32 %v5901, %v5952
        %v5958 = vadd.f32 %v5902, %v5954
        %s5959 = sld [smem:[#allocation9 + $0xaa]]
        %v5960 = vstv %s5959
        %v5961 = vmul.f32 %v5960, %v5849
        %v5962 = vmul.f32 %v5960, %v5850
        %5965 = vrot.lane.b32.xlu0 %v5961, 126
        %v5966 = vpop.permute.xlu0 %5965
        %5967 = vrot.lane.b32.xlu0 %v5962, 126
        %v5968 = vpop.permute.xlu0 %5967
        %v5971 = vadd.f32 %v5915, %v5966
        %v5972 = vadd.f32 %v5916, %v5968
        %s5973 = sld [smem:[#allocation9 + $0xea]]
        %v5974 = vstv %s5973
        %v5975 = vmul.f32 %v5974, %v5849
        %v5976 = vmul.f32 %v5974, %v5850
        %5979 = vrot.lane.b32.xlu0 %v5975, 126
        %v5980 = vpop.permute.xlu0 %5979
        %5981 = vrot.lane.b32.xlu0 %v5976, 126
        %v5982 = vpop.permute.xlu0 %5981
        %v5985 = vadd.f32 %v5929, %v5980
        %v5986 = vadd.f32 %v5930, %v5982
        %s5987 = sld [smem:[#allocation9 + $0x2b]]
        %v5988 = vstv %s5987
        %v5989 = vmul.f32 %v5988, %v5849
        %v5990 = vmul.f32 %v5988, %v5850
        %5993 = vrot.lane.b32.xlu0 %v5989, 125
        %v5994 = vpop.permute.xlu0 %5993
        %5995 = vrot.lane.b32.xlu0 %v5990, 125
        %v5996 = vpop.permute.xlu0 %5995
        %v5999 = vadd.f32 %v5943, %v5994
        %v6000 = vadd.f32 %v5944, %v5996
        %s6001 = sld [smem:[#allocation9 + $0x6b]]
        %v6002 = vstv %s6001
        %v6003 = vmul.f32 %v6002, %v5849
        %v6004 = vmul.f32 %v6002, %v5850
        %6007 = vrot.lane.b32.xlu0 %v6003, 125
        %v6008 = vpop.permute.xlu0 %6007
        %6009 = vrot.lane.b32.xlu0 %v6004, 125
        %v6010 = vpop.permute.xlu0 %6009
        %v6013 = vadd.f32 %v5957, %v6008
        %v6014 = vadd.f32 %v5958, %v6010
        %s6015 = sld [smem:[#allocation9 + $0xab]]
        %v6016 = vstv %s6015
        %v6017 = vmul.f32 %v6016, %v5849
        %v6018 = vmul.f32 %v6016, %v5850
        %6021 = vrot.lane.b32.xlu0 %v6017, 125
        %v6022 = vpop.permute.xlu0 %6021
        %6023 = vrot.lane.b32.xlu0 %v6018, 125
        %v6024 = vpop.permute.xlu0 %6023
        %v6027 = vadd.f32 %v5971, %v6022
        %v6028 = vadd.f32 %v5972, %v6024
        %s6029 = sld [smem:[#allocation9 + $0xeb]]
        %v6030 = vstv %s6029
        %v6031 = vmul.f32 %v6030, %v5849
        %v6032 = vmul.f32 %v6030, %v5850
        %6035 = vrot.lane.b32.xlu0 %v6031, 125
        %v6036 = vpop.permute.xlu0 %6035
        %6037 = vrot.lane.b32.xlu0 %v6032, 125
        %v6038 = vpop.permute.xlu0 %6037
        %v6041 = vadd.f32 %v5985, %v6036
        %v6042 = vadd.f32 %v5986, %v6038
        %v6043 = vld [vmem:[%s378 + $0x3] sm:$0xff]
        %v6044 = vld [vmem:[%s378 + $0xb] sm:$0xff]
        %s6045 = sld [smem:[#allocation9 + $0x2c]]
        %v6046 = vstv %s6045
        %v6047 = vmul.f32 %v6046, %v6043
        %v6048 = vmul.f32 %v6046, %v6044
        %v6049 = vadd.f32 %v5999, %v6047
        %v6050 = vadd.f32 %v6000, %v6048
        %s6051 = sld [smem:[#allocation9 + $0x6c]]
        %v6052 = vstv %s6051
        %v6053 = vmul.f32 %v6052, %v6043
        %v6054 = vmul.f32 %v6052, %v6044
        %v6055 = vadd.f32 %v6013, %v6053
        %v6056 = vadd.f32 %v6014, %v6054
        %s6057 = sld [smem:[#allocation9 + $0xac]]
        %v6058 = vstv %s6057
        %v6059 = vmul.f32 %v6058, %v6043
        %v6060 = vmul.f32 %v6058, %v6044
        %v6061 = vadd.f32 %v6027, %v6059
        %v6062 = vadd.f32 %v6028, %v6060
        %s6063 = sld [smem:[#allocation9 + $0xec]]
        %v6064 = vstv %s6063
        %v6065 = vmul.f32 %v6064, %v6043
        %v6066 = vmul.f32 %v6064, %v6044
        %v6067 = vadd.f32 %v6041, %v6065
        %v6068 = vadd.f32 %v6042, %v6066
        %s6069 = sld [smem:[#allocation9 + $0x2d]]
        %v6070 = vstv %s6069
        %v6071 = vmul.f32 %v6070, %v6043
        %v6072 = vmul.f32 %v6070, %v6044
        %6075 = vrot.lane.b32.xlu0 %v6071, 127
        %v6076 = vpop.permute.xlu0 %6075
        %6077 = vrot.lane.b32.xlu0 %v6072, 127
        %v6078 = vpop.permute.xlu0 %6077
        %v6081 = vadd.f32 %v6049, %v6076
        %v6082 = vadd.f32 %v6050, %v6078
        %s6083 = sld [smem:[#allocation9 + $0x6d]]
        %v6084 = vstv %s6083
        %v6085 = vmul.f32 %v6084, %v6043
        %v6086 = vmul.f32 %v6084, %v6044
        %6089 = vrot.lane.b32.xlu0 %v6085, 127
        %v6090 = vpop.permute.xlu0 %6089
        %6091 = vrot.lane.b32.xlu0 %v6086, 127
        %v6092 = vpop.permute.xlu0 %6091
        %v6095 = vadd.f32 %v6055, %v6090
        %v6096 = vadd.f32 %v6056, %v6092
        %s6097 = sld [smem:[#allocation9 + $0xad]]
        %v6098 = vstv %s6097
        %v6099 = vmul.f32 %v6098, %v6043
        %v6100 = vmul.f32 %v6098, %v6044
        %6103 = vrot.lane.b32.xlu0 %v6099, 127
        %v6104 = vpop.permute.xlu0 %6103
        %6105 = vrot.lane.b32.xlu0 %v6100, 127
        %v6106 = vpop.permute.xlu0 %6105
        %v6109 = vadd.f32 %v6061, %v6104
        %v6110 = vadd.f32 %v6062, %v6106
        %s6111 = sld [smem:[#allocation9 + $0xed]]
        %v6112 = vstv %s6111
        %v6113 = vmul.f32 %v6112, %v6043
        %v6114 = vmul.f32 %v6112, %v6044
        %6117 = vrot.lane.b32.xlu0 %v6113, 127
        %v6118 = vpop.permute.xlu0 %6117
        %6119 = vrot.lane.b32.xlu0 %v6114, 127
        %v6120 = vpop.permute.xlu0 %6119
        %v6123 = vadd.f32 %v6067, %v6118
        %v6124 = vadd.f32 %v6068, %v6120
        %s6125 = sld [smem:[#allocation9 + $0x2e]]
        %v6126 = vstv %s6125
        %v6127 = vmul.f32 %v6126, %v6043
        %v6128 = vmul.f32 %v6126, %v6044
        %6131 = vrot.lane.b32.xlu0 %v6127, 126
        %v6132 = vpop.permute.xlu0 %6131
        %6133 = vrot.lane.b32.xlu0 %v6128, 126
        %v6134 = vpop.permute.xlu0 %6133
        %v6137 = vadd.f32 %v6081, %v6132
        %v6138 = vadd.f32 %v6082, %v6134
        %s6139 = sld [smem:[#allocation9 + $0x6e]]
        %v6140 = vstv %s6139
        %v6141 = vmul.f32 %v6140, %v6043
        %v6142 = vmul.f32 %v6140, %v6044
        %6145 = vrot.lane.b32.xlu0 %v6141, 126
        %v6146 = vpop.permute.xlu0 %6145
        %6147 = vrot.lane.b32.xlu0 %v6142, 126
        %v6148 = vpop.permute.xlu0 %6147
        %v6151 = vadd.f32 %v6095, %v6146
        %v6152 = vadd.f32 %v6096, %v6148
        %s6153 = sld [smem:[#allocation9 + $0xae]]
        %v6154 = vstv %s6153
        %v6155 = vmul.f32 %v6154, %v6043
        %v6156 = vmul.f32 %v6154, %v6044
        %6159 = vrot.lane.b32.xlu0 %v6155, 126
        %v6160 = vpop.permute.xlu0 %6159
        %6161 = vrot.lane.b32.xlu0 %v6156, 126
        %v6162 = vpop.permute.xlu0 %6161
        %v6165 = vadd.f32 %v6109, %v6160
        %v6166 = vadd.f32 %v6110, %v6162
        %s6167 = sld [smem:[#allocation9 + $0xee]]
        %v6168 = vstv %s6167
        %v6169 = vmul.f32 %v6168, %v6043
        %v6170 = vmul.f32 %v6168, %v6044
        %6173 = vrot.lane.b32.xlu0 %v6169, 126
        %v6174 = vpop.permute.xlu0 %6173
        %6175 = vrot.lane.b32.xlu0 %v6170, 126
        %v6176 = vpop.permute.xlu0 %6175
        %v6179 = vadd.f32 %v6123, %v6174
        %v6180 = vadd.f32 %v6124, %v6176
        %s6181 = sld [smem:[#allocation9 + $0x2f]]
        %v6182 = vstv %s6181
        %v6183 = vmul.f32 %v6182, %v6043
        %v6184 = vmul.f32 %v6182, %v6044
        %6187 = vrot.lane.b32.xlu0 %v6183, 125
        %v6188 = vpop.permute.xlu0 %6187
        %6189 = vrot.lane.b32.xlu0 %v6184, 125
        %v6190 = vpop.permute.xlu0 %6189
        %v6193 = vadd.f32 %v6137, %v6188
        %v6194 = vadd.f32 %v6138, %v6190
        %s6195 = sld [smem:[#allocation9 + $0x6f]]
        %v6196 = vstv %s6195
        %v6197 = vmul.f32 %v6196, %v6043
        %v6198 = vmul.f32 %v6196, %v6044
        %6201 = vrot.lane.b32.xlu0 %v6197, 125
        %v6202 = vpop.permute.xlu0 %6201
        %6203 = vrot.lane.b32.xlu0 %v6198, 125
        %v6204 = vpop.permute.xlu0 %6203
        %v6207 = vadd.f32 %v6151, %v6202
        %v6208 = vadd.f32 %v6152, %v6204
        %s6209 = sld [smem:[#allocation9 + $0xaf]]
        %v6210 = vstv %s6209
        %v6211 = vmul.f32 %v6210, %v6043
        %v6212 = vmul.f32 %v6210, %v6044
        %6215 = vrot.lane.b32.xlu0 %v6211, 125
        %v6216 = vpop.permute.xlu0 %6215
        %6217 = vrot.lane.b32.xlu0 %v6212, 125
        %v6218 = vpop.permute.xlu0 %6217
        %v6221 = vadd.f32 %v6165, %v6216
        %v6222 = vadd.f32 %v6166, %v6218
        %s6223 = sld [smem:[#allocation9 + $0xef]]
        %v6224 = vstv %s6223
        %v6225 = vmul.f32 %v6224, %v6043
        %v6226 = vmul.f32 %v6224, %v6044
        %6229 = vrot.lane.b32.xlu0 %v6225, 125
        %v6230 = vpop.permute.xlu0 %6229
        %6231 = vrot.lane.b32.xlu0 %v6226, 125
        %v6232 = vpop.permute.xlu0 %6231
        %v6235 = vadd.f32 %v6179, %v6230
        %v6236 = vadd.f32 %v6180, %v6232
        %v6237 = vld [vmem:[%s449] sm:$0xff]
        %v6238 = vld [vmem:[%s449 + $0x8] sm:$0xff]
        %s6239 = sld [smem:[#allocation9 + $0x30]]
        %v6240 = vstv %s6239
        %v6241 = vmul.f32 %v6240, %v6237
        %v6242 = vmul.f32 %v6240, %v6238
        %v6243 = vadd.f32 %v6193, %v6241
        %v6244 = vadd.f32 %v6194, %v6242
        %s6245 = sld [smem:[#allocation9 + $0x70]]
        %v6246 = vstv %s6245
        %v6247 = vmul.f32 %v6246, %v6237
        %v6248 = vmul.f32 %v6246, %v6238
        %v6249 = vadd.f32 %v6207, %v6247
        %v6250 = vadd.f32 %v6208, %v6248
        %s6251 = sld [smem:[#allocation9 + $0xb0]]
        %v6252 = vstv %s6251
        %v6253 = vmul.f32 %v6252, %v6237
        %v6254 = vmul.f32 %v6252, %v6238
        %v6255 = vadd.f32 %v6221, %v6253
        %v6256 = vadd.f32 %v6222, %v6254
        %s6257 = sld [smem:[#allocation9 + $0xf0]]
        %v6258 = vstv %s6257
        %v6259 = vmul.f32 %v6258, %v6237
        %v6260 = vmul.f32 %v6258, %v6238
        %v6261 = vadd.f32 %v6235, %v6259
        %v6262 = vadd.f32 %v6236, %v6260
        %s6263 = sld [smem:[#allocation9 + $0x31]]
        %v6264 = vstv %s6263
        %v6265 = vmul.f32 %v6264, %v6237
        %v6266 = vmul.f32 %v6264, %v6238
        %6269 = vrot.lane.b32.xlu0 %v6265, 127
        %v6270 = vpop.permute.xlu0 %6269
        %6271 = vrot.lane.b32.xlu0 %v6266, 127
        %v6272 = vpop.permute.xlu0 %6271
        %v6275 = vadd.f32 %v6243, %v6270
        %v6276 = vadd.f32 %v6244, %v6272
        %s6277 = sld [smem:[#allocation9 + $0x71]]
        %v6278 = vstv %s6277
        %v6279 = vmul.f32 %v6278, %v6237
        %v6280 = vmul.f32 %v6278, %v6238
        %6283 = vrot.lane.b32.xlu0 %v6279, 127
        %v6284 = vpop.permute.xlu0 %6283
        %6285 = vrot.lane.b32.xlu0 %v6280, 127
        %v6286 = vpop.permute.xlu0 %6285
        %v6289 = vadd.f32 %v6249, %v6284
        %v6290 = vadd.f32 %v6250, %v6286
        %s6291 = sld [smem:[#allocation9 + $0xb1]]
        %v6292 = vstv %s6291
        %v6293 = vmul.f32 %v6292, %v6237
        %v6294 = vmul.f32 %v6292, %v6238
        %6297 = vrot.lane.b32.xlu0 %v6293, 127
        %v6298 = vpop.permute.xlu0 %6297
        %6299 = vrot.lane.b32.xlu0 %v6294, 127
        %v6300 = vpop.permute.xlu0 %6299
        %v6303 = vadd.f32 %v6255, %v6298
        %v6304 = vadd.f32 %v6256, %v6300
        %s6305 = sld [smem:[#allocation9 + $0xf1]]
        %v6306 = vstv %s6305
        %v6307 = vmul.f32 %v6306, %v6237
        %v6308 = vmul.f32 %v6306, %v6238
        %6311 = vrot.lane.b32.xlu0 %v6307, 127
        %v6312 = vpop.permute.xlu0 %6311
        %6313 = vrot.lane.b32.xlu0 %v6308, 127
        %v6314 = vpop.permute.xlu0 %6313
        %v6317 = vadd.f32 %v6261, %v6312
        %v6318 = vadd.f32 %v6262, %v6314
        %s6319 = sld [smem:[#allocation9 + $0x32]]
        %v6320 = vstv %s6319
        %v6321 = vmul.f32 %v6320, %v6237
        %v6322 = vmul.f32 %v6320, %v6238
        %6325 = vrot.lane.b32.xlu0 %v6321, 126
        %v6326 = vpop.permute.xlu0 %6325
        %6327 = vrot.lane.b32.xlu0 %v6322, 126
        %v6328 = vpop.permute.xlu0 %6327
        %v6331 = vadd.f32 %v6275, %v6326
        %v6332 = vadd.f32 %v6276, %v6328
        %s6333 = sld [smem:[#allocation9 + $0x72]]
        %v6334 = vstv %s6333
        %v6335 = vmul.f32 %v6334, %v6237
        %v6336 = vmul.f32 %v6334, %v6238
        %6339 = vrot.lane.b32.xlu0 %v6335, 126
        %v6340 = vpop.permute.xlu0 %6339
        %6341 = vrot.lane.b32.xlu0 %v6336, 126
        %v6342 = vpop.permute.xlu0 %6341
        %v6345 = vadd.f32 %v6289, %v6340
        %v6346 = vadd.f32 %v6290, %v6342
        %s6347 = sld [smem:[#allocation9 + $0xb2]]
        %v6348 = vstv %s6347
        %v6349 = vmul.f32 %v6348, %v6237
        %v6350 = vmul.f32 %v6348, %v6238
        %6353 = vrot.lane.b32.xlu0 %v6349, 126
        %v6354 = vpop.permute.xlu0 %6353
        %6355 = vrot.lane.b32.xlu0 %v6350, 126
        %v6356 = vpop.permute.xlu0 %6355
        %v6359 = vadd.f32 %v6303, %v6354
        %v6360 = vadd.f32 %v6304, %v6356
        %s6361 = sld [smem:[#allocation9 + $0xf2]]
        %v6362 = vstv %s6361
        %v6363 = vmul.f32 %v6362, %v6237
        %v6364 = vmul.f32 %v6362, %v6238
        %6367 = vrot.lane.b32.xlu0 %v6363, 126
        %v6368 = vpop.permute.xlu0 %6367
        %6369 = vrot.lane.b32.xlu0 %v6364, 126
        %v6370 = vpop.permute.xlu0 %6369
        %v6373 = vadd.f32 %v6317, %v6368
        %v6374 = vadd.f32 %v6318, %v6370
        %s6375 = sld [smem:[#allocation9 + $0x33]]
        %v6376 = vstv %s6375
        %v6377 = vmul.f32 %v6376, %v6237
        %v6378 = vmul.f32 %v6376, %v6238
        %6381 = vrot.lane.b32.xlu0 %v6377, 125
        %v6382 = vpop.permute.xlu0 %6381
        %6383 = vrot.lane.b32.xlu0 %v6378, 125
        %v6384 = vpop.permute.xlu0 %6383
        %v6387 = vadd.f32 %v6331, %v6382
        %v6388 = vadd.f32 %v6332, %v6384
        %s6389 = sld [smem:[#allocation9 + $0x73]]
        %v6390 = vstv %s6389
        %v6391 = vmul.f32 %v6390, %v6237
        %v6392 = vmul.f32 %v6390, %v6238
        %6395 = vrot.lane.b32.xlu0 %v6391, 125
        %v6396 = vpop.permute.xlu0 %6395
        %6397 = vrot.lane.b32.xlu0 %v6392, 125
        %v6398 = vpop.permute.xlu0 %6397
        %v6401 = vadd.f32 %v6345, %v6396
        %v6402 = vadd.f32 %v6346, %v6398
        %s6403 = sld [smem:[#allocation9 + $0xb3]]
        %v6404 = vstv %s6403
        %v6405 = vmul.f32 %v6404, %v6237
        %v6406 = vmul.f32 %v6404, %v6238
        %6409 = vrot.lane.b32.xlu0 %v6405, 125
        %v6410 = vpop.permute.xlu0 %6409
        %6411 = vrot.lane.b32.xlu0 %v6406, 125
        %v6412 = vpop.permute.xlu0 %6411
        %v6415 = vadd.f32 %v6359, %v6410
        %v6416 = vadd.f32 %v6360, %v6412
        %s6417 = sld [smem:[#allocation9 + $0xf3]]
        %v6418 = vstv %s6417
        %v6419 = vmul.f32 %v6418, %v6237
        %v6420 = vmul.f32 %v6418, %v6238
        %6423 = vrot.lane.b32.xlu0 %v6419, 125
        %v6424 = vpop.permute.xlu0 %6423
        %6425 = vrot.lane.b32.xlu0 %v6420, 125
        %v6426 = vpop.permute.xlu0 %6425
        %v6429 = vadd.f32 %v6373, %v6424
        %v6430 = vadd.f32 %v6374, %v6426
        %v6431 = vld [vmem:[%s449 + $0x1] sm:$0xff]
        %v6432 = vld [vmem:[%s449 + $0x9] sm:$0xff]
        %s6433 = sld [smem:[#allocation9 + $0x34]]
        %v6434 = vstv %s6433
        %v6435 = vmul.f32 %v6434, %v6431
        %v6436 = vmul.f32 %v6434, %v6432
        %v6437 = vadd.f32 %v6387, %v6435
        %v6438 = vadd.f32 %v6388, %v6436
        %s6439 = sld [smem:[#allocation9 + $0x74]]
        %v6440 = vstv %s6439
        %v6441 = vmul.f32 %v6440, %v6431
        %v6442 = vmul.f32 %v6440, %v6432
        %v6443 = vadd.f32 %v6401, %v6441
        %v6444 = vadd.f32 %v6402, %v6442
        %s6445 = sld [smem:[#allocation9 + $0xb4]]
        %v6446 = vstv %s6445
        %v6447 = vmul.f32 %v6446, %v6431
        %v6448 = vmul.f32 %v6446, %v6432
        %v6449 = vadd.f32 %v6415, %v6447
        %v6450 = vadd.f32 %v6416, %v6448
        %s6451 = sld [smem:[#allocation9 + $0xf4]]
        %v6452 = vstv %s6451
        %v6453 = vmul.f32 %v6452, %v6431
        %v6454 = vmul.f32 %v6452, %v6432
        %v6455 = vadd.f32 %v6429, %v6453
        %v6456 = vadd.f32 %v6430, %v6454
        %s6457 = sld [smem:[#allocation9 + $0x35]]
        %v6458 = vstv %s6457
        %v6459 = vmul.f32 %v6458, %v6431
        %v6460 = vmul.f32 %v6458, %v6432
        %6463 = vrot.lane.b32.xlu0 %v6459, 127
        %v6464 = vpop.permute.xlu0 %6463
        %6465 = vrot.lane.b32.xlu0 %v6460, 127
        %v6466 = vpop.permute.xlu0 %6465
        %v6469 = vadd.f32 %v6437, %v6464
        %v6470 = vadd.f32 %v6438, %v6466
        %s6471 = sld [smem:[#allocation9 + $0x75]]
        %v6472 = vstv %s6471
        %v6473 = vmul.f32 %v6472, %v6431
        %v6474 = vmul.f32 %v6472, %v6432
        %6477 = vrot.lane.b32.xlu0 %v6473, 127
        %v6478 = vpop.permute.xlu0 %6477
        %6479 = vrot.lane.b32.xlu0 %v6474, 127
        %v6480 = vpop.permute.xlu0 %6479
        %v6483 = vadd.f32 %v6443, %v6478
        %v6484 = vadd.f32 %v6444, %v6480
        %s6485 = sld [smem:[#allocation9 + $0xb5]]
        %v6486 = vstv %s6485
        %v6487 = vmul.f32 %v6486, %v6431
        %v6488 = vmul.f32 %v6486, %v6432
        %6491 = vrot.lane.b32.xlu0 %v6487, 127
        %v6492 = vpop.permute.xlu0 %6491
        %6493 = vrot.lane.b32.xlu0 %v6488, 127
        %v6494 = vpop.permute.xlu0 %6493
        %v6497 = vadd.f32 %v6449, %v6492
        %v6498 = vadd.f32 %v6450, %v6494
        %s6499 = sld [smem:[#allocation9 + $0xf5]]
        %v6500 = vstv %s6499
        %v6501 = vmul.f32 %v6500, %v6431
        %v6502 = vmul.f32 %v6500, %v6432
        %6505 = vrot.lane.b32.xlu0 %v6501, 127
        %v6506 = vpop.permute.xlu0 %6505
        %6507 = vrot.lane.b32.xlu0 %v6502, 127
        %v6508 = vpop.permute.xlu0 %6507
        %v6511 = vadd.f32 %v6455, %v6506
        %v6512 = vadd.f32 %v6456, %v6508
        %s6513 = sld [smem:[#allocation9 + $0x36]]
        %v6514 = vstv %s6513
        %v6515 = vmul.f32 %v6514, %v6431
        %v6516 = vmul.f32 %v6514, %v6432
        %6519 = vrot.lane.b32.xlu0 %v6515, 126
        %v6520 = vpop.permute.xlu0 %6519
        %6521 = vrot.lane.b32.xlu0 %v6516, 126
        %v6522 = vpop.permute.xlu0 %6521
        %v6525 = vadd.f32 %v6469, %v6520
        %v6526 = vadd.f32 %v6470, %v6522
        %s6527 = sld [smem:[#allocation9 + $0x76]]
        %v6528 = vstv %s6527
        %v6529 = vmul.f32 %v6528, %v6431
        %v6530 = vmul.f32 %v6528, %v6432
        %6533 = vrot.lane.b32.xlu0 %v6529, 126
        %v6534 = vpop.permute.xlu0 %6533
        %6535 = vrot.lane.b32.xlu0 %v6530, 126
        %v6536 = vpop.permute.xlu0 %6535
        %v6539 = vadd.f32 %v6483, %v6534
        %v6540 = vadd.f32 %v6484, %v6536
        %s6541 = sld [smem:[#allocation9 + $0xb6]]
        %v6542 = vstv %s6541
        %v6543 = vmul.f32 %v6542, %v6431
        %v6544 = vmul.f32 %v6542, %v6432
        %6547 = vrot.lane.b32.xlu0 %v6543, 126
        %v6548 = vpop.permute.xlu0 %6547
        %6549 = vrot.lane.b32.xlu0 %v6544, 126
        %v6550 = vpop.permute.xlu0 %6549
        %v6553 = vadd.f32 %v6497, %v6548
        %v6554 = vadd.f32 %v6498, %v6550
        %s6555 = sld [smem:[#allocation9 + $0xf6]]
        %v6556 = vstv %s6555
        %v6557 = vmul.f32 %v6556, %v6431
        %v6558 = vmul.f32 %v6556, %v6432
        %6561 = vrot.lane.b32.xlu0 %v6557, 126
        %v6562 = vpop.permute.xlu0 %6561
        %6563 = vrot.lane.b32.xlu0 %v6558, 126
        %v6564 = vpop.permute.xlu0 %6563
        %v6567 = vadd.f32 %v6511, %v6562
        %v6568 = vadd.f32 %v6512, %v6564
        %s6569 = sld [smem:[#allocation9 + $0x37]]
        %v6570 = vstv %s6569
        %v6571 = vmul.f32 %v6570, %v6431
        %v6572 = vmul.f32 %v6570, %v6432
        %6575 = vrot.lane.b32.xlu0 %v6571, 125
        %v6576 = vpop.permute.xlu0 %6575
        %6577 = vrot.lane.b32.xlu0 %v6572, 125
        %v6578 = vpop.permute.xlu0 %6577
        %v6581 = vadd.f32 %v6525, %v6576
        %v6582 = vadd.f32 %v6526, %v6578
        %s6583 = sld [smem:[#allocation9 + $0x77]]
        %v6584 = vstv %s6583
        %v6585 = vmul.f32 %v6584, %v6431
        %v6586 = vmul.f32 %v6584, %v6432
        %6589 = vrot.lane.b32.xlu0 %v6585, 125
        %v6590 = vpop.permute.xlu0 %6589
        %6591 = vrot.lane.b32.xlu0 %v6586, 125
        %v6592 = vpop.permute.xlu0 %6591
        %v6595 = vadd.f32 %v6539, %v6590
        %v6596 = vadd.f32 %v6540, %v6592
        %s6597 = sld [smem:[#allocation9 + $0xb7]]
        %v6598 = vstv %s6597
        %v6599 = vmul.f32 %v6598, %v6431
        %v6600 = vmul.f32 %v6598, %v6432
        %6603 = vrot.lane.b32.xlu0 %v6599, 125
        %v6604 = vpop.permute.xlu0 %6603
        %6605 = vrot.lane.b32.xlu0 %v6600, 125
        %v6606 = vpop.permute.xlu0 %6605
        %v6609 = vadd.f32 %v6553, %v6604
        %v6610 = vadd.f32 %v6554, %v6606
        %s6611 = sld [smem:[#allocation9 + $0xf7]]
        %v6612 = vstv %s6611
        %v6613 = vmul.f32 %v6612, %v6431
        %v6614 = vmul.f32 %v6612, %v6432
        %6617 = vrot.lane.b32.xlu0 %v6613, 125
        %v6618 = vpop.permute.xlu0 %6617
        %6619 = vrot.lane.b32.xlu0 %v6614, 125
        %v6620 = vpop.permute.xlu0 %6619
        %v6623 = vadd.f32 %v6567, %v6618
        %v6624 = vadd.f32 %v6568, %v6620
        %v6625 = vld [vmem:[%s449 + $0x2] sm:$0xff]
        %v6626 = vld [vmem:[%s449 + $0xa] sm:$0xff]
        %s6627 = sld [smem:[#allocation9 + $0x38]]
        %v6628 = vstv %s6627
        %v6629 = vmul.f32 %v6628, %v6625
        %v6630 = vmul.f32 %v6628, %v6626
        %v6631 = vadd.f32 %v6581, %v6629
        %v6632 = vadd.f32 %v6582, %v6630
        %s6633 = sld [smem:[#allocation9 + $0x78]]
        %v6634 = vstv %s6633
        %v6635 = vmul.f32 %v6634, %v6625
        %v6636 = vmul.f32 %v6634, %v6626
        %v6637 = vadd.f32 %v6595, %v6635
        %v6638 = vadd.f32 %v6596, %v6636
        %s6639 = sld [smem:[#allocation9 + $0xb8]]
        %v6640 = vstv %s6639
        %v6641 = vmul.f32 %v6640, %v6625
        %v6642 = vmul.f32 %v6640, %v6626
        %v6643 = vadd.f32 %v6609, %v6641
        %v6644 = vadd.f32 %v6610, %v6642
        %s6645 = sld [smem:[#allocation9 + $0xf8]]
        %v6646 = vstv %s6645
        %v6647 = vmul.f32 %v6646, %v6625
        %v6648 = vmul.f32 %v6646, %v6626
        %v6649 = vadd.f32 %v6623, %v6647
        %v6650 = vadd.f32 %v6624, %v6648
        %s6651 = sld [smem:[#allocation9 + $0x39]]
        %v6652 = vstv %s6651
        %v6653 = vmul.f32 %v6652, %v6625
        %v6654 = vmul.f32 %v6652, %v6626
        %6657 = vrot.lane.b32.xlu0 %v6653, 127
        %v6658 = vpop.permute.xlu0 %6657
        %6659 = vrot.lane.b32.xlu0 %v6654, 127
        %v6660 = vpop.permute.xlu0 %6659
        %v6663 = vadd.f32 %v6631, %v6658
        %v6664 = vadd.f32 %v6632, %v6660
        %s6665 = sld [smem:[#allocation9 + $0x79]]
        %v6666 = vstv %s6665
        %v6667 = vmul.f32 %v6666, %v6625
        %v6668 = vmul.f32 %v6666, %v6626
        %6671 = vrot.lane.b32.xlu0 %v6667, 127
        %v6672 = vpop.permute.xlu0 %6671
        %6673 = vrot.lane.b32.xlu0 %v6668, 127
        %v6674 = vpop.permute.xlu0 %6673
        %v6677 = vadd.f32 %v6637, %v6672
        %v6678 = vadd.f32 %v6638, %v6674
        %s6679 = sld [smem:[#allocation9 + $0xb9]]
        %v6680 = vstv %s6679
        %v6681 = vmul.f32 %v6680, %v6625
        %v6682 = vmul.f32 %v6680, %v6626
        %6685 = vrot.lane.b32.xlu0 %v6681, 127
        %v6686 = vpop.permute.xlu0 %6685
        %6687 = vrot.lane.b32.xlu0 %v6682, 127
        %v6688 = vpop.permute.xlu0 %6687
        %v6691 = vadd.f32 %v6643, %v6686
        %v6692 = vadd.f32 %v6644, %v6688
        %s6693 = sld [smem:[#allocation9 + $0xf9]]
        %v6694 = vstv %s6693
        %v6695 = vmul.f32 %v6694, %v6625
        %v6696 = vmul.f32 %v6694, %v6626
        %6699 = vrot.lane.b32.xlu0 %v6695, 127
        %v6700 = vpop.permute.xlu0 %6699
        %6701 = vrot.lane.b32.xlu0 %v6696, 127
        %v6702 = vpop.permute.xlu0 %6701
        %v6705 = vadd.f32 %v6649, %v6700
        %v6706 = vadd.f32 %v6650, %v6702
        %s6707 = sld [smem:[#allocation9 + $0x3a]]
        %v6708 = vstv %s6707
        %v6709 = vmul.f32 %v6708, %v6625
        %v6710 = vmul.f32 %v6708, %v6626
        %6713 = vrot.lane.b32.xlu0 %v6709, 126
        %v6714 = vpop.permute.xlu0 %6713
        %6715 = vrot.lane.b32.xlu0 %v6710, 126
        %v6716 = vpop.permute.xlu0 %6715
        %v6719 = vadd.f32 %v6663, %v6714
        %v6720 = vadd.f32 %v6664, %v6716
        %s6721 = sld [smem:[#allocation9 + $0x7a]]
        %v6722 = vstv %s6721
        %v6723 = vmul.f32 %v6722, %v6625
        %v6724 = vmul.f32 %v6722, %v6626
        %6727 = vrot.lane.b32.xlu0 %v6723, 126
        %v6728 = vpop.permute.xlu0 %6727
        %6729 = vrot.lane.b32.xlu0 %v6724, 126
        %v6730 = vpop.permute.xlu0 %6729
        %v6733 = vadd.f32 %v6677, %v6728
        %v6734 = vadd.f32 %v6678, %v6730
        %s6735 = sld [smem:[#allocation9 + $0xba]]
        %v6736 = vstv %s6735
        %v6737 = vmul.f32 %v6736, %v6625
        %v6738 = vmul.f32 %v6736, %v6626
        %6741 = vrot.lane.b32.xlu0 %v6737, 126
        %v6742 = vpop.permute.xlu0 %6741
        %6743 = vrot.lane.b32.xlu0 %v6738, 126
        %v6744 = vpop.permute.xlu0 %6743
        %v6747 = vadd.f32 %v6691, %v6742
        %v6748 = vadd.f32 %v6692, %v6744
        %s6749 = sld [smem:[#allocation9 + $0xfa]]
        %v6750 = vstv %s6749
        %v6751 = vmul.f32 %v6750, %v6625
        %v6752 = vmul.f32 %v6750, %v6626
        %6755 = vrot.lane.b32.xlu0 %v6751, 126
        %v6756 = vpop.permute.xlu0 %6755
        %6757 = vrot.lane.b32.xlu0 %v6752, 126
        %v6758 = vpop.permute.xlu0 %6757
        %v6761 = vadd.f32 %v6705, %v6756
        %v6762 = vadd.f32 %v6706, %v6758
        %s6763 = sld [smem:[#allocation9 + $0x3b]]
        %v6764 = vstv %s6763
        %v6765 = vmul.f32 %v6764, %v6625
        %v6766 = vmul.f32 %v6764, %v6626
        %6769 = vrot.lane.b32.xlu0 %v6765, 125
        %v6770 = vpop.permute.xlu0 %6769
        %6771 = vrot.lane.b32.xlu0 %v6766, 125
        %v6772 = vpop.permute.xlu0 %6771
        %v6775 = vadd.f32 %v6719, %v6770
        %v6776 = vadd.f32 %v6720, %v6772
        %s6777 = sld [smem:[#allocation9 + $0x7b]]
        %v6778 = vstv %s6777
        %v6779 = vmul.f32 %v6778, %v6625
        %v6780 = vmul.f32 %v6778, %v6626
        %6783 = vrot.lane.b32.xlu0 %v6779, 125
        %v6784 = vpop.permute.xlu0 %6783
        %6785 = vrot.lane.b32.xlu0 %v6780, 125
        %v6786 = vpop.permute.xlu0 %6785
        %v6789 = vadd.f32 %v6733, %v6784
        %v6790 = vadd.f32 %v6734, %v6786
        %s6791 = sld [smem:[#allocation9 + $0xbb]]
        %v6792 = vstv %s6791
        %v6793 = vmul.f32 %v6792, %v6625
        %v6794 = vmul.f32 %v6792, %v6626
        %6797 = vrot.lane.b32.xlu0 %v6793, 125
        %v6798 = vpop.permute.xlu0 %6797
        %6799 = vrot.lane.b32.xlu0 %v6794, 125
        %v6800 = vpop.permute.xlu0 %6799
        %v6803 = vadd.f32 %v6747, %v6798
        %v6804 = vadd.f32 %v6748, %v6800
        %s6805 = sld [smem:[#allocation9 + $0xfb]]
        %v6806 = vstv %s6805
        %v6807 = vmul.f32 %v6806, %v6625
        %v6808 = vmul.f32 %v6806, %v6626
        %6811 = vrot.lane.b32.xlu0 %v6807, 125
        %v6812 = vpop.permute.xlu0 %6811
        %6813 = vrot.lane.b32.xlu0 %v6808, 125
        %v6814 = vpop.permute.xlu0 %6813
        %v6817 = vadd.f32 %v6761, %v6812
        %v6818 = vadd.f32 %v6762, %v6814
        %v6819 = vld [vmem:[%s449 + $0x3] sm:$0xff]
        %v6820 = vld [vmem:[%s449 + $0xb] sm:$0xff]
        %s6821 = sld [smem:[#allocation9 + $0x3c]]
        %v6822 = vstv %s6821
        %v6823 = vmul.f32 %v6822, %v6819
        %v6824 = vmul.f32 %v6822, %v6820
        %v6825 = vadd.f32 %v6775, %v6823
        %v6826 = vadd.f32 %v6776, %v6824
        %s6827 = sld [smem:[#allocation9 + $0x7c]]
        %v6828 = vstv %s6827
        %v6829 = vmul.f32 %v6828, %v6819
        %v6830 = vmul.f32 %v6828, %v6820
        %v6831 = vadd.f32 %v6789, %v6829
        %v6832 = vadd.f32 %v6790, %v6830
        %s6833 = sld [smem:[#allocation9 + $0xbc]]
        %v6834 = vstv %s6833
        %v6835 = vmul.f32 %v6834, %v6819
        %v6836 = vmul.f32 %v6834, %v6820
        %v6837 = vadd.f32 %v6803, %v6835
        %v6838 = vadd.f32 %v6804, %v6836
        %s6839 = sld [smem:[#allocation9 + $0xfc]]
        %v6840 = vstv %s6839
        %v6841 = vmul.f32 %v6840, %v6819
        %v6842 = vmul.f32 %v6840, %v6820
        %v6843 = vadd.f32 %v6817, %v6841
        %v6844 = vadd.f32 %v6818, %v6842
        %s6845 = sld [smem:[#allocation9 + $0x3d]]
        %v6846 = vstv %s6845
        %v6847 = vmul.f32 %v6846, %v6819
        %v6848 = vmul.f32 %v6846, %v6820
        %6851 = vrot.lane.b32.xlu0 %v6847, 127
        %v6852 = vpop.permute.xlu0 %6851
        %6853 = vrot.lane.b32.xlu0 %v6848, 127
        %v6854 = vpop.permute.xlu0 %6853
        %v6857 = vadd.f32 %v6825, %v6852
        %v6858 = vadd.f32 %v6826, %v6854
        %s6859 = sld [smem:[#allocation9 + $0x7d]]
        %v6860 = vstv %s6859
        %v6861 = vmul.f32 %v6860, %v6819
        %v6862 = vmul.f32 %v6860, %v6820
        %6865 = vrot.lane.b32.xlu0 %v6861, 127
        %v6866 = vpop.permute.xlu0 %6865
        %6867 = vrot.lane.b32.xlu0 %v6862, 127
        %v6868 = vpop.permute.xlu0 %6867
        %v6871 = vadd.f32 %v6831, %v6866
        %v6872 = vadd.f32 %v6832, %v6868
        %s6873 = sld [smem:[#allocation9 + $0xbd]]
        %v6874 = vstv %s6873
        %v6875 = vmul.f32 %v6874, %v6819
        %v6876 = vmul.f32 %v6874, %v6820
        %6879 = vrot.lane.b32.xlu0 %v6875, 127
        %v6880 = vpop.permute.xlu0 %6879
        %6881 = vrot.lane.b32.xlu0 %v6876, 127
        %v6882 = vpop.permute.xlu0 %6881
        %v6885 = vadd.f32 %v6837, %v6880
        %v6886 = vadd.f32 %v6838, %v6882
        %s6887 = sld [smem:[#allocation9 + $0xfd]]
        %v6888 = vstv %s6887
        %v6889 = vmul.f32 %v6888, %v6819
        %v6890 = vmul.f32 %v6888, %v6820
        %6893 = vrot.lane.b32.xlu0 %v6889, 127
        %v6894 = vpop.permute.xlu0 %6893
        %6895 = vrot.lane.b32.xlu0 %v6890, 127
        %v6896 = vpop.permute.xlu0 %6895
        %v6899 = vadd.f32 %v6843, %v6894
        %v6900 = vadd.f32 %v6844, %v6896
        %s6901 = sld [smem:[#allocation9 + $0x3e]]
        %v6902 = vstv %s6901
        %v6903 = vmul.f32 %v6902, %v6819
        %v6904 = vmul.f32 %v6902, %v6820
        %6907 = vrot.lane.b32.xlu0 %v6903, 126
        %v6908 = vpop.permute.xlu0 %6907
        %6909 = vrot.lane.b32.xlu0 %v6904, 126
        %v6910 = vpop.permute.xlu0 %6909
        %v6913 = vadd.f32 %v6857, %v6908
        %v6914 = vadd.f32 %v6858, %v6910
        %s6915 = sld [smem:[#allocation9 + $0x7e]]
        %v6916 = vstv %s6915
        %v6917 = vmul.f32 %v6916, %v6819
        %v6918 = vmul.f32 %v6916, %v6820
        %6921 = vrot.lane.b32.xlu0 %v6917, 126
        %v6922 = vpop.permute.xlu0 %6921
        %6923 = vrot.lane.b32.xlu0 %v6918, 126
        %v6924 = vpop.permute.xlu0 %6923
        %v6927 = vadd.f32 %v6871, %v6922
        %v6928 = vadd.f32 %v6872, %v6924
        %s6929 = sld [smem:[#allocation9 + $0xbe]]
        %v6930 = vstv %s6929
        %v6931 = vmul.f32 %v6930, %v6819
        %v6932 = vmul.f32 %v6930, %v6820
        %6935 = vrot.lane.b32.xlu0 %v6931, 126
        %v6936 = vpop.permute.xlu0 %6935
        %6937 = vrot.lane.b32.xlu0 %v6932, 126
        %v6938 = vpop.permute.xlu0 %6937
        %v6941 = vadd.f32 %v6885, %v6936
        %v6942 = vadd.f32 %v6886, %v6938
        %s6943 = sld [smem:[#allocation9 + $0xfe]]
        %v6944 = vstv %s6943
        %v6945 = vmul.f32 %v6944, %v6819
        %v6946 = vmul.f32 %v6944, %v6820
        %6949 = vrot.lane.b32.xlu0 %v6945, 126
        %v6950 = vpop.permute.xlu0 %6949
        %6951 = vrot.lane.b32.xlu0 %v6946, 126
        %v6952 = vpop.permute.xlu0 %6951
        %v6955 = vadd.f32 %v6899, %v6950
        %v6956 = vadd.f32 %v6900, %v6952
        %s6957 = sld [smem:[#allocation9 + $0x3f]]
        %v6958 = vstv %s6957
        %v6959 = vmul.f32 %v6958, %v6819
        %v6960 = vmul.f32 %v6958, %v6820
        %6963 = vrot.lane.b32.xlu0 %v6959, 125
        %v6964 = vpop.permute.xlu0 %6963
        %6965 = vrot.lane.b32.xlu0 %v6960, 125
        %v6966 = vpop.permute.xlu0 %6965
        %v6969 = vadd.f32 %v6913, %v6964
        %v6970 = vadd.f32 %v6914, %v6966
        %s6971 = sld [smem:[#allocation9 + $0x7f]]
        %v6972 = vstv %s6971
        %v6973 = vmul.f32 %v6972, %v6819
        %v6974 = vmul.f32 %v6972, %v6820
        %6977 = vrot.lane.b32.xlu0 %v6973, 125
        %v6978 = vpop.permute.xlu0 %6977
        %6979 = vrot.lane.b32.xlu0 %v6974, 125
        %v6980 = vpop.permute.xlu0 %6979
        %v6983 = vadd.f32 %v6927, %v6978
        %v6984 = vadd.f32 %v6928, %v6980
        %s6985 = sld [smem:[#allocation9 + $0xbf]]
        %v6986 = vstv %s6985
        %v6987 = vmul.f32 %v6986, %v6819
        %v6988 = vmul.f32 %v6986, %v6820
        %6991 = vrot.lane.b32.xlu0 %v6987, 125
        %v6992 = vpop.permute.xlu0 %6991
        %6993 = vrot.lane.b32.xlu0 %v6988, 125
        %v6994 = vpop.permute.xlu0 %6993
        %v6997 = vadd.f32 %v6941, %v6992
        %v6998 = vadd.f32 %v6942, %v6994
        %s6999 = sld [smem:[#allocation9 + $0xff]]
        %v7000 = vstv %s6999
        %v7001 = vmul.f32 %v7000, %v6819
        %v7002 = vmul.f32 %v7000, %v6820
        %7005 = vrot.lane.b32.xlu0 %v7001, 125
        %v7006 = vpop.permute.xlu0 %7005
        %7007 = vrot.lane.b32.xlu0 %v7002, 125
        %v7008 = vpop.permute.xlu0 %7007
        %v7011 = vadd.f32 %v6955, %v7006
        %v7012 = vadd.f32 %v6956, %v7008
        %v7013 = vtanh.pop %v6969
        %v7014 = vtanh.pop %v6970
        %v7015 = vtanh.pop %v6983
        %v7016 = vtanh.pop %v6984
        %v7017 = vtanh.pop %v6997
        %v7018 = vtanh.pop %v6998
        %v7019 = vtanh.pop %v7011
        %v7020 = vtanh.pop %v7012
        %v7021 = vld [vmem:[%s183] sm:$0xff]
        %v7022 = vld [vmem:[%s183 + $0x8] sm:$0xff]
        %v7023 = vadd.f32 %v7021, %v7013
        %v7024 = vadd.f32 %v7022, %v7014
        %v7025 = vmul.f32 %v7023, 0.6043678
        %v7026 = vmul.f32 %v7024, 0.6043678
        %vm7027 = vcmask 130048
        %7028 = vst.msk [vmem:[%s214] sm:$0xff] %vm7027, %v7025
        %7029 = vst.msk [vmem:[%s214 + $0x8] sm:$0xff] %vm7027, %v7026
        %v7030 = vmul.f32 %v3624, 0.2913126
        %v7031 = vmul.f32 %v3625, 0.2913126
        %s7032 = scalar_lea.vmem %s214, 16 [#allocation10]
        %7033 = vst.msk [vmem:[%s7032] sm:$0xff] %vm7027, %v7030
        %7034 = vst.msk [vmem:[%s7032 + $0x8] sm:$0xff] %vm7027, %v7031
        %v7035 = vld [vmem:[%s296] sm:$0xff]
        %v7036 = vld [vmem:[%s296 + $0x8] sm:$0xff]
        %v7037 = vadd.f32 %v7035, %v7015
        %v7038 = vadd.f32 %v7036, %v7016
        %v7039 = vmul.f32 %v7037, 0.6043678
        %v7040 = vmul.f32 %v7038, 0.6043678
        %s7041 = scalar_lea.vmem %s214, 32 [#allocation10]
        %7042 = vst.msk [vmem:[%s7041] sm:$0xff] %vm7027, %v7039
        %7043 = vst.msk [vmem:[%s7041 + $0x8] sm:$0xff] %vm7027, %v7040
        %v7044 = vmul.f32 %v3629, 0.2913126
        %v7045 = vmul.f32 %v3630, 0.2913126
        %s7046 = scalar_lea.vmem %s214, 48 [#allocation10]
        %7047 = vst.msk [vmem:[%s7046] sm:$0xff] %vm7027, %v7044
        %7048 = vst.msk [vmem:[%s7046 + $0x8] sm:$0xff] %vm7027, %v7045
        %v7049 = vld [vmem:[%s367] sm:$0xff]
        %v7050 = vld [vmem:[%s367 + $0x8] sm:$0xff]
        %v7051 = vadd.f32 %v7049, %v7017
        %v7052 = vadd.f32 %v7050, %v7018
        %v7053 = vmul.f32 %v7051, 0.6043678
        %v7054 = vmul.f32 %v7052, 0.6043678
        %s7055 = scalar_lea.vmem %s214, 64 [#allocation10]
        %7056 = vst.msk [vmem:[%s7055] sm:$0xff] %vm7027, %v7053
        %7057 = vst.msk [vmem:[%s7055 + $0x8] sm:$0xff] %vm7027, %v7054
        %v7058 = vmul.f32 %v3634, 0.2913126
        %v7059 = vmul.f32 %v3635, 0.2913126
        %s7060 = scalar_lea.vmem %s214, 80 [#allocation10]
        %7061 = vst.msk [vmem:[%s7060] sm:$0xff] %vm7027, %v7058
        %7062 = vst.msk [vmem:[%s7060 + $0x8] sm:$0xff] %vm7027, %v7059
        %v7063 = vld [vmem:[%s438] sm:$0xff]
        %v7064 = vld [vmem:[%s438 + $0x8] sm:$0xff]
        %v7065 = vadd.f32 %v7063, %v7019
        %v7066 = vadd.f32 %v7064, %v7020
        %v7067 = vmul.f32 %v7065, 0.6043678
        %v7068 = vmul.f32 %v7066, 0.6043678
        %s7069 = scalar_lea.vmem %s214, 96 [#allocation10]
        %7070 = vst.msk [vmem:[%s7069] sm:$0xff] %vm7027, %v7067
        %7071 = vst.msk [vmem:[%s7069 + $0x8] sm:$0xff] %vm7027, %v7068
        %v7072 = vmul.f32 %v3639, 0.2913126
        %v7073 = vmul.f32 %v3640, 0.2913126
        %s7074 = scalar_lea.vmem %s214, 112 [#allocation10]
        %7075 = vst.msk [vmem:[%s7074] sm:$0xff] %vm7027, %v7072
        %7076 = vst.msk [vmem:[%s7074 + $0x8] sm:$0xff] %vm7027, %v7073
        %s7077 = sand.u32 %s98, 1
        %s7078 = scalar_lea.sflag [#allocation5], %s7077
        %s7079 = sand.u32 %s98, 1
        %s7080 = smul.addr %s7079, 128
        %s7081 = scalar_lea.vmem [#allocation10], %s7080
        // Predicated region
        $region45: #{tpu_custom_call.1} parent=31 // pred_check
          %p7082 = pneg %p108
        $region46: #{tpu_custom_call.1} parent=31 // pred_check_branch
          %7084 = sbr.rel (%p7082) target = $region48
        $region47: #{tpu_custom_call.1} parent=31 // pred_region
          %s7085 = smul.u32 4, %s22
          %s7087 = ssub.s32 2048, 2048
          %7088 = vsyncadd %s7078, %s7087
          %s7089 = smul.addr %s7085, 4
          %s7090 = smul.addr %s7089, 128
          %s7091 = scalar_lea.hbm %s3, %s7090
          %s7092 = sshll.u32 %s7081, 4
          %s7093 = int_to_ptr.vmem [resolvable:$true] %s7092
          %7098 = dma.vmem_to_hbm [thread:$0]  %s7093, 2048, %s7091, %s7078, 128, 128, 8
        $region48: #{tpu_custom_call.1} parent=31 // pred_fallthru
          _
      $region32: #{tpu_custom_call.1} parent=5 // pred_fallthru
        _
      %p7099 = scmp.le.s32.totalorder 2, %s17
      // Predicated region
      $region49: #{tpu_custom_call.1} parent=5 // pred_check
        %p7100 = pneg %p7099
      $region50: #{tpu_custom_call.1} parent=5 // pred_check_branch
        %7102 = sbr.rel (%p7100) target = $region52
      $region51: #{tpu_custom_call.1} parent=5 // pred_region
        %s7103 = ssub.s32 %s17, 2
        // Predicated region
        $region53: #{tpu_custom_call.1} parent=51 // pred_check
          %p7104 = pneg %p114
        $region54: #{tpu_custom_call.1} parent=51 // pred_check_branch
          %7106 = sbr.rel (%p7104) target = $region56
        $region55: #{tpu_custom_call.1} parent=51 // pred_region
          %s7107 = sand.u32 %s99, 1
          %s7108 = scalar_lea.sflag [#allocation5], %s7107
          %s7109 = sand.u32 %s99, 1
          %s7110 = smul.addr %s7109, 128
          %s7111 = scalar_lea.vmem [#allocation10], %s7110
          %7112 = dma.done %s7108, 2048
        $region56: #{tpu_custom_call.1} parent=51 // pred_fallthru
          _
      $region52: #{tpu_custom_call.1} parent=5 // pred_fallthru
        _
    $region6: #{tpu_custom_call.1} parent=1 // loop_footer
      %s21 = sadd.s32 1, %s17
    $region7: #{tpu_custom_call.1} parent=1 // loop_footer_branch
      %16 = sbr.rel target = $region3
    $region8: #{tpu_custom_call.1} parent=1 // loop_exit
      _
    %7113 = vsyncpa [#allocation4], 1
    %s7114 = scalar_lea.sflag [#allocation4], 1
    %7115 = vsyncpa %s7114, 1
    %7116 = vsyncpa [#allocation5], 1
    %s7117 = scalar_lea.sflag [#allocation5], 1
    %7118 = vsyncpa %s7117, 1
    %7119 = vsyncpa [#allocation6], 1
    %s7120 = scalar_lea.sflag [#allocation6], 1
    %7121 = vsyncpa %s7120, 1
    %7122 = vsyncpa [#allocation7], 1
    %s7123 = scalar_lea.sflag [#allocation7], 1
    %7124 = vsyncpa %s7123, 1

</llo_original>
